<compile_context>
chip_gen: v5e
topology: v5e:2x2
jax: 0.10.0
libtpu: 0.0.40
codegen_flags: <defaults>
</compile_context>

<pallas_src>
import functools

import jax
import jax.numpy as jnp
from jax.experimental import pallas as pl
from jax.experimental.pallas import tpu as pltpu

EPS = 1e-5
NEG_SLOPE = 0.2
# Scoped-VMEM default is 16 MiB on v5e and 32 MiB on v6e/v7x; use the 16 MiB minimum as
# the bump threshold so big tiles are never silently left without a limit on v5e.
_MIN_SCOPED_VMEM_DEFAULT = 16 * 1024 * 1024


# ----------------------------- tiling / VMEM budgeting -----------------------------

def _vmem_capacity_bytes():
    """Physical per-core VMEM (128 MiB v5e/v6e, 64 MiB v7x); conservative fallback."""
    try:
        cap = getattr(pltpu.get_tpu_info(), "vmem_capacity_bytes", None)
        if cap:
            return int(cap)
    except Exception:  # e.g. interpret mode
        pass
    return 64 * 1024 * 1024


def _tile_footprint_bytes(tile_n, in_dim, out_dim, x_bytes, mm_bytes, out_bytes):
    est = 2 * tile_n * in_dim * x_bytes                    # double-buffered x tile
    est += 2 * tile_n * out_dim * out_bytes                # double-buffered out tile
    est += 2 * (in_dim + out_dim) * out_dim * mm_bytes     # resident W1/W2 (2 bufs each)
    est += 2 * 6 * out_dim * 4                             # packed b1/gain/bias vectors
    est += 5 * tile_n * max(in_dim, out_dim) * 4           # f32 intermediates (h, hn, a, h2, out)
    return est


def _pick_tile_n_and_vmem_limit(N, in_dim, out_dim, x_bytes, mm_bytes, out_bytes,
                                tile_n=None):
    cap = int(0.8 * _vmem_capacity_bytes())   # never request ~all of physical VMEM (v7x!)
    if tile_n is None:
        # Prefer 512-1024-row slabs (>=85% of HBM roofline vs ~29% at 128 rows); shrink
        # to fit the VMEM budget / divide N instead of requesting more VMEM.
        for cand in (1024, 512, 256, 128, 64, 32, 16, 8):
            if cand <= N and N % cand == 0 and _tile_footprint_bytes(
                    cand, in_dim, out_dim, x_bytes, mm_bytes, out_bytes) <= cap:
                tile_n = cand
                break
        else:
            tile_n = N                         # tiny N: single full-extent tile
    tile_n = min(tile_n, N)
    assert N % tile_n == 0, f"N={N} must be a multiple of tile_n={tile_n}"

    est = _tile_footprint_bytes(tile_n, in_dim, out_dim, x_bytes, mm_bytes, out_bytes)
    vmem_limit = None
    if est > _MIN_SCOPED_VMEM_DEFAULT:
        vmem_limit = int(min(cap, est * 1.5))
    return tile_n, vmem_limit


# ----------------------------------- kernel -----------------------------------

def fused_film_block_kernel(x_ref, w1_ref, w2_ref, vec_ref, o_ref, *, skip):
    # x_ref:   (1, tile_n, in_dim)  native dtype; cast in-register (no wrapper cast pass)
    # w1_ref:  (in_dim, out_dim)    matmul dtype, resident across the whole grid
    # w2_ref:  (out_dim, out_dim)   matmul dtype, resident across the whole grid
    # vec_ref: (1, 6, out_dim)      f32 rows: [b1_1, gain1, bias1, b1_2, gain2, bias2]
    # o_ref:   (1, tile_n, out_dim)
    x = x_ref[0]                                           # (tile_n, in_dim)
    vec = vec_ref[0]                                       # (6, out_dim) f32
    mm_dtype = w1_ref.dtype

    # ---- FiLM layer 1: Linear (MXU, f32 acc) -> LayerNorm -> gain/bias -> LeakyReLU ----
    h = jnp.dot(x.astype(mm_dtype), w1_ref[...],
                preferred_element_type=jnp.float32) + vec[0:1, :]
    mean = jnp.mean(h, axis=-1, keepdims=True)
    var = jnp.maximum(jnp.mean(h * h, axis=-1, keepdims=True) - mean * mean, 0.0)
    hn = (h - mean) * jax.lax.rsqrt(var + EPS)
    a = hn * vec[1:2, :] + vec[2:3, :]
    a = jnp.where(a >= 0, a, NEG_SLOPE * a)                # stays f32 in VMEM (no HBM trip)

    # ---- FiLM layer 2 (cast the f32 activation only at the MXU input) ----
    h2 = jnp.dot(a.astype(mm_dtype), w2_ref[...],
                 preferred_element_type=jnp.float32) + vec[3:4, :]
    mean2 = jnp.mean(h2, axis=-1, keepdims=True)
    var2 = jnp.maximum(jnp.mean(h2 * h2, axis=-1, keepdims=True) - mean2 * mean2, 0.0)
    hn2 = (h2 - mean2) * jax.lax.rsqrt(var2 + EPS)
    out = hn2 * vec[4:5, :] + vec[5:6, :]
    out = jnp.where(out >= 0, out, NEG_SLOPE * out)

    if skip:  # static Python bool; wrapper guarantees in_dim == out_dim here
        out = out + x.astype(jnp.float32)

    o_ref[0] = out.astype(o_ref.dtype)


# ----------------------------------- wrapper -----------------------------------

def _pack_film_vectors(style0, style1, params, out_dim):
    """Hoisted style matmuls + layer biases, packed into one (B, 6, out_dim) f32 array."""
    p1, p2 = params["film1"], params["film2"]
    s0 = style0.astype(jnp.float32)
    s1 = style1.astype(jnp.float32)
    B = style0.shape[0]
    gain1 = s0 @ p1["wg"].astype(jnp.float32) + p1["bg"] + 1.0
    bias1 = s0 @ p1["wb"].astype(jnp.float32) + p1["bb"]
    gain2 = s1 @ p2["wg"].astype(jnp.float32) + p2["bg"] + 1.0
    bias2 = s1 @ p2["wb"].astype(jnp.float32) + p2["bb"]
    b1 = jnp.broadcast_to(p1["b1"].astype(jnp.float32), (B, out_dim))
    b2 = jnp.broadcast_to(p2["b1"].astype(jnp.float32), (B, out_dim))
    return jnp.stack([b1, gain1, bias1, b2, gain2, bias2], axis=1).astype(jnp.float32)


def film_block(x, style0, style1, params, *, skip=False, tile_n=None,
               matmul_dtype=jnp.bfloat16, out_dtype=None):
    """FiLMBlock.forward: film2(film1(x, style0), style1) [+ x if skip and dims match].

    x: (B, N, in_dim); style0/style1: (B, style_dim)  ->  (B, N, out_dim)
    """
    B, N, in_dim = x.shape
    out_dim = params["film1"]["w1"].shape[1]
    assert params["film2"]["w1"].shape == (out_dim, out_dim)
    out_dtype = x.dtype if out_dtype is None else out_dtype
    do_skip = bool(skip) and (out_dim == in_dim)

    vec = _pack_film_vectors(style0, style1, params, out_dim)   # (B, 6, out_dim) f32
    w1 = params["film1"]["w1"].astype(matmul_dtype)
    w2 = params["film2"]["w1"].astype(matmul_dtype)

    tile_n, vmem_limit = _pick_tile_n_and_vmem_limit(
        N, in_dim, out_dim,
        x_bytes=jnp.dtype(x.dtype).itemsize,
        mm_bytes=jnp.dtype(matmul_dtype).itemsize,
        out_bytes=jnp.dtype(out_dtype).itemsize,
        tile_n=tile_n)

    grid_spec = pltpu.PrefetchScalarGridSpec(
        num_scalar_prefetch=0,
        grid=(B, N // tile_n),
        in_specs=[
            pl.BlockSpec((1, tile_n, in_dim), lambda b, n: (b, n, 0)),
            # NOTE: at CIPS-3D-scale hidden dims (512-1024) add
            # pipeline_mode=pl.Buffered(1) on the two weight specs (constant index_map
            # -> second buffer is dead weight); irrelevant at 128-wide demo dims.
            pl.BlockSpec((in_dim, out_dim), lambda b, n: (0, 0)),
            pl.BlockSpec((out_dim, out_dim), lambda b, n: (0, 0)),
            pl.BlockSpec((1, 6, out_dim), lambda b, n: (b, 0, 0)),
        ],
        out_specs=pl.BlockSpec((1, tile_n, out_dim), lambda b, n: (b, n, 0)),
    )

    compiler_kwargs = dict(dimension_semantics=("parallel", "parallel"))
    if vmem_limit is not None:
        compiler_kwargs["vmem_limit_bytes"] = vmem_limit

    return pl.pallas_call(
        functools.partial(fused_film_block_kernel, skip=do_skip),
        out_shape=jax.ShapeDtypeStruct((B, N, out_dim), out_dtype),
        grid_spec=grid_spec,
        compiler_params=pltpu.CompilerParams(**compiler_kwargs),
    )(x, w1, w2, vec)


# ----------------------------- parameters & reference -----------------------------

def _init_layer(key, in_dim, out_dim, style_dim):
    k1, k2, k3, k4, k5, k6 = jax.random.split(key, 6)
    s1 = 1.0 / jnp.sqrt(in_dim)
    s2 = 1.0 / jnp.sqrt(style_dim)
    return {
        "w1": jax.random.uniform(k1, (in_dim, out_dim), jnp.float32, -s1, s1),
        "b1": jax.random.uniform(k2, (out_dim,), jnp.float32, -s1, s1),
        "wg": jax.random.uniform(k3, (style_dim, out_dim), jnp.float32, -s2, s2),
        "bg": jax.random.uniform(k4, (out_dim,), jnp.float32, -s2, s2),
        "wb": jax.random.uniform(k5, (style_dim, out_dim), jnp.float32, -s2, s2),
        "bb": jax.random.uniform(k6, (out_dim,), jnp.float32, -s2, s2),
    }


def init_film_block_params(key, in_dim, out_dim, style_dim):
    k1, k2 = jax.random.split(key)
    return {"film1": _init_layer(k1, in_dim, out_dim, style_dim),
            "film2": _init_layer(k2, out_dim, out_dim, style_dim)}


def film_layer_ref(x, style, p):
    h = x @ p["w1"] + p["b1"]
    mean = jnp.mean(h, axis=-1, keepdims=True)
    var = jnp.mean((h - mean) ** 2, axis=-1, keepdims=True)
    hn = (h - mean) / jnp.sqrt(var + EPS)
    gain = style @ p["wg"] + p["bg"] + 1.0
    bias = style @ p["wb"] + p["bb"]
    out = hn * gain[:, None, :] + bias[:, None, :]
    return jnp.where(out >= 0, out, NEG_SLOPE * out)


def film_block_ref(x, style0, style1, p, skip=False):
    h = film_layer_ref(x, style0, p["film1"])
    out = film_layer_ref(h, style1, p["film2"])
    if skip and out.shape[-1] == x.shape[-1]:
        out = out + x
    return out


if __name__ == "__main__":
    # Lane-dense channel dims (multiples of 128 -> unmasked vst); N large enough that
    # the auto-tiler picks a 1024-row slab and the grid still has several steps.
    B, N = 2, 2048
    in_dim, out_dim, style_dim = 128, 128, 128

    key = jax.random.PRNGKey(0)
    kx, ks0, ks1, kp = jax.random.split(key, 4)
    x = jax.random.normal(kx, (B, N, in_dim), jnp.float32)
    style0 = jax.random.normal(ks0, (B, style_dim), jnp.float32)
    style1 = jax.random.normal(ks1, (B, style_dim), jnp.float32)
    params = init_film_block_params(kp, in_dim, out_dim, style_dim)

    ref = film_block_ref(x, style0, style1, params, skip=True)

    # f32 matmul path: tight check against the pure-JAX reference.
    out_f32 = jax.block_until_ready(
        film_block(x, style0, style1, params, skip=True, matmul_dtype=jnp.float32))
    assert out_f32.shape == (B, N, out_dim)
    assert jnp.allclose(out_f32, ref, atol=3e-3, rtol=3e-3), "f32 kernel mismatch vs reference"

    # bf16 matmul path (recommended: the op is HBM-bandwidth-bound; weights / MXU inputs
    # are bf16, while LN / FiLM / skip math and the inter-layer activation stay f32 in VMEM).
    out_bf16 = jax.block_until_ready(
        film_block(x, style0, style1, params, skip=True, matmul_dtype=jnp.bfloat16))
    assert out_bf16.shape == (B, N, out_dim)
    assert bool(jnp.all(jnp.isfinite(out_bf16)))
    assert jnp.allclose(out_bf16, ref, atol=2.5e-1, rtol=1e-1), "bf16 kernel diverged from reference"

    print("KERNEL_OK")
</pallas_src>

<mosaic_0001>
module attributes {stable_mosaic.version = 11 : i64} {
  func.func @fused_film_block_kernel(%arg0: i32, %arg1: i32, %arg2: memref<1x1024x128xf32, #tpu.memory_space<vmem>>, %arg3: memref<128x128xf32, #tpu.memory_space<vmem>>, %arg4: memref<128x128xf32, #tpu.memory_space<vmem>>, %arg5: memref<1x6x128xf32, #tpu.memory_space<vmem>>, %arg6: memref<1x1024x128xf32, #tpu.memory_space<vmem>>) attributes {dimension_semantics = [#tpu.dimension_semantics<parallel>, #tpu.dimension_semantics<parallel>], iteration_bounds = array<i64: 2, 2>, scalar_prefetch = 0 : i64, scratch_operands = 0 : i64, tpu.core_type = #tpu.core_type<tc>, window_params = [{transform_indices = @transform_0, window_bounds = array<i64: 1, 1024, 128>}, {pipeline_mode = #tpu.pipeline_mode<synchronous>, transform_indices = @transform_1, window_bounds = array<i64: 128, 128>}, {pipeline_mode = #tpu.pipeline_mode<synchronous>, transform_indices = @transform_2, window_bounds = array<i64: 128, 128>}, {transform_indices = @transform_3, window_bounds = array<i64: 1, 6, 128>}, {transform_indices = @transform_4, window_bounds = array<i64: 1, 1024, 128>}]} {
    %c0 = arith.constant 0 : index
    %c0_0 = arith.constant 0 : index
    %c0_1 = arith.constant 0 : index
    %0 = vector.load %arg2[%c0, %c0_0, %c0_1] : memref<1x1024x128xf32, #tpu.memory_space<vmem>>, vector<1x1024x128xf32>
    %1 = vector.shape_cast %0 : vector<1x1024x128xf32> to vector<1024x128xf32>
    %c0_2 = arith.constant 0 : index
    %c0_3 = arith.constant 0 : index
    %c0_4 = arith.constant 0 : index
    %2 = vector.load %arg5[%c0_2, %c0_3, %c0_4] : memref<1x6x128xf32, #tpu.memory_space<vmem>>, vector<1x6x128xf32>
    %3 = vector.shape_cast %2 : vector<1x6x128xf32> to vector<6x128xf32>
    %c0_5 = arith.constant 0 : index
    %c0_6 = arith.constant 0 : index
    %4 = vector.load %arg3[%c0_5, %c0_6] : memref<128x128xf32, #tpu.memory_space<vmem>>, vector<128x128xf32>
    %cst = arith.constant dense<0.000000e+00> : vector<1024x128xf32>
    %5 = tpu.matmul %1, %4, %cst {dimension_numbers = #tpu.dot_dimension_numbers<[1], [0], [0], [1], [0, 0, 1, 1], [], []>} : vector<1024x128xf32>, vector<128x128xf32>, vector<1024x128xf32> -> vector<1024x128xf32>
    %6 = vector.extract_strided_slice %3 {offsets = [0, 0], sizes = [1, 128], strides = [1, 1]} : vector<6x128xf32> to vector<1x128xf32>
    %7 = vector.broadcast %6 : vector<1x128xf32> to vector<1024x128xf32>
    %8 = arith.addf %5, %7 : vector<1024x128xf32>
    %cst_7 = arith.constant dense<0.000000e+00> : vector<1024xf32>
    %9 = vector.multi_reduction <add>, %8, %cst_7 [1] : vector<1024x128xf32> to vector<1024xf32>
    %10 = vector.shape_cast %9 : vector<1024xf32> to vector<1024x1xf32>
    %cst_8 = arith.constant 1.280000e+02 : f32
    %11 = vector.broadcast %cst_8 : f32 to vector<1024x1xf32>
    %12 = arith.divf %10, %11 : vector<1024x1xf32>
    %13 = arith.mulf %8, %8 : vector<1024x128xf32>
    %cst_9 = arith.constant dense<0.000000e+00> : vector<1024xf32>
    %14 = vector.multi_reduction <add>, %13, %cst_9 [1] : vector<1024x128xf32> to vector<1024xf32>
    %15 = vector.shape_cast %14 : vector<1024xf32> to vector<1024x1xf32>
    %cst_10 = arith.constant 1.280000e+02 : f32
    %16 = vector.broadcast %cst_10 : f32 to vector<1024x1xf32>
    %17 = arith.divf %15, %16 : vector<1024x1xf32>
    %18 = arith.mulf %12, %12 : vector<1024x1xf32>
    %19 = arith.subf %17, %18 : vector<1024x1xf32>
    %cst_11 = arith.constant 0.000000e+00 : f32
    %20 = vector.broadcast %cst_11 : f32 to vector<1024x1xf32>
    %21 = arith.maximumf %19, %20 : vector<1024x1xf32>
    %22 = vector.broadcast %12 : vector<1024x1xf32> to vector<1024x128xf32>
    %23 = arith.subf %8, %22 : vector<1024x128xf32>
    %cst_12 = arith.constant 9.99999974E-6 : f32
    %24 = vector.broadcast %cst_12 : f32 to vector<1024x1xf32>
    %25 = arith.addf %21, %24 : vector<1024x1xf32>
    %26 = math.rsqrt %25 : vector<1024x1xf32>
    %27 = vector.broadcast %26 : vector<1024x1xf32> to vector<1024x128xf32>
    %28 = arith.mulf %23, %27 : vector<1024x128xf32>
    %29 = vector.extract_strided_slice %3 {offsets = [1, 0], sizes = [1, 128], strides = [1, 1]} : vector<6x128xf32> to vector<1x128xf32>
    %30 = vector.broadcast %29 : vector<1x128xf32> to vector<1024x128xf32>
    %31 = arith.mulf %28, %30 : vector<1024x128xf32>
    %32 = vector.extract_strided_slice %3 {offsets = [2, 0], sizes = [1, 128], strides = [1, 1]} : vector<6x128xf32> to vector<1x128xf32>
    %33 = vector.broadcast %32 : vector<1x128xf32> to vector<1024x128xf32>
    %34 = arith.addf %31, %33 : vector<1024x128xf32>
    %cst_13 = arith.constant 0.000000e+00 : f32
    %35 = vector.broadcast %cst_13 : f32 to vector<1024x128xf32>
    %36 = arith.cmpf oge, %34, %35 : vector<1024x128xf32>
    %cst_14 = arith.constant 2.000000e-01 : f32
    %37 = vector.broadcast %cst_14 : f32 to vector<1024x128xf32>
    %38 = arith.mulf %37, %34 : vector<1024x128xf32>
    %39 = arith.select %36, %34, %38 : vector<1024x128xi1>, vector<1024x128xf32>
    %c0_15 = arith.constant 0 : index
    %c0_16 = arith.constant 0 : index
    %40 = vector.load %arg4[%c0_15, %c0_16] : memref<128x128xf32, #tpu.memory_space<vmem>>, vector<128x128xf32>
    %cst_17 = arith.constant dense<0.000000e+00> : vector<1024x128xf32>
    %41 = tpu.matmul %39, %40, %cst_17 {dimension_numbers = #tpu.dot_dimension_numbers<[1], [0], [0], [1], [0, 0, 1, 1], [], []>} : vector<1024x128xf32>, vector<128x128xf32>, vector<1024x128xf32> -> vector<1024x128xf32>
    %42 = vector.extract_strided_slice %3 {offsets = [3, 0], sizes = [1, 128], strides = [1, 1]} : vector<6x128xf32> to vector<1x128xf32>
    %43 = vector.broadcast %42 : vector<1x128xf32> to vector<1024x128xf32>
    %44 = arith.addf %41, %43 : vector<1024x128xf32>
    %cst_18 = arith.constant dense<0.000000e+00> : vector<1024xf32>
    %45 = vector.multi_reduction <add>, %44, %cst_18 [1] : vector<1024x128xf32> to vector<1024xf32>
    %46 = vector.shape_cast %45 : vector<1024xf32> to vector<1024x1xf32>
    %cst_19 = arith.constant 1.280000e+02 : f32
    %47 = vector.broadcast %cst_19 : f32 to vector<1024x1xf32>
    %48 = arith.divf %46, %47 : vector<1024x1xf32>
    %49 = arith.mulf %44, %44 : vector<1024x128xf32>
    %cst_20 = arith.constant dense<0.000000e+00> : vector<1024xf32>
    %50 = vector.multi_reduction <add>, %49, %cst_20 [1] : vector<1024x128xf32> to vector<1024xf32>
    %51 = vector.shape_cast %50 : vector<1024xf32> to vector<1024x1xf32>
    %cst_21 = arith.constant 1.280000e+02 : f32
    %52 = vector.broadcast %cst_21 : f32 to vector<1024x1xf32>
    %53 = arith.divf %51, %52 : vector<1024x1xf32>
    %54 = arith.mulf %48, %48 : vector<1024x1xf32>
    %55 = arith.subf %53, %54 : vector<1024x1xf32>
    %cst_22 = arith.constant 0.000000e+00 : f32
    %56 = vector.broadcast %cst_22 : f32 to vector<1024x1xf32>
    %57 = arith.maximumf %55, %56 : vector<1024x1xf32>
    %58 = vector.broadcast %48 : vector<1024x1xf32> to vector<1024x128xf32>
    %59 = arith.subf %44, %58 : vector<1024x128xf32>
    %cst_23 = arith.constant 9.99999974E-6 : f32
    %60 = vector.broadcast %cst_23 : f32 to vector<1024x1xf32>
    %61 = arith.addf %57, %60 : vector<1024x1xf32>
    %62 = math.rsqrt %61 : vector<1024x1xf32>
    %63 = vector.broadcast %62 : vector<1024x1xf32> to vector<1024x128xf32>
    %64 = arith.mulf %59, %63 : vector<1024x128xf32>
    %65 = vector.extract_strided_slice %3 {offsets = [4, 0], sizes = [1, 128], strides = [1, 1]} : vector<6x128xf32> to vector<1x128xf32>
    %66 = vector.broadcast %65 : vector<1x128xf32> to vector<1024x128xf32>
    %67 = arith.mulf %64, %66 : vector<1024x128xf32>
    %68 = vector.extract_strided_slice %3 {offsets = [5, 0], sizes = [1, 128], strides = [1, 1]} : vector<6x128xf32> to vector<1x128xf32>
    %69 = vector.broadcast %68 : vector<1x128xf32> to vector<1024x128xf32>
    %70 = arith.addf %67, %69 : vector<1024x128xf32>
    %cst_24 = arith.constant 0.000000e+00 : f32
    %71 = vector.broadcast %cst_24 : f32 to vector<1024x128xf32>
    %72 = arith.cmpf oge, %70, %71 : vector<1024x128xf32>
    %cst_25 = arith.constant 2.000000e-01 : f32
    %73 = vector.broadcast %cst_25 : f32 to vector<1024x128xf32>
    %74 = arith.mulf %73, %70 : vector<1024x128xf32>
    %75 = arith.select %72, %70, %74 : vector<1024x128xi1>, vector<1024x128xf32>
    %76 = arith.addf %75, %1 : vector<1024x128xf32>
    %c0_26 = arith.constant 0 : index
    %c0_27 = arith.constant 0 : index
    %c0_28 = arith.constant 0 : index
    %77 = vector.load %arg6[%c0_26, %c0_27, %c0_28] : memref<1x1024x128xf32, #tpu.memory_space<vmem>>, vector<1x1024x128xf32>
    %78 = vector.shape_cast %77 : vector<1x1024x128xf32> to vector<1024x128xf32>
    %79 = vector.shape_cast %76 : vector<1024x128xf32> to vector<1x1024x128xf32>
    tpu.vector_store %arg6[%c0_26, %c0_27, %c0_28], %79 {strides = array<i32>} : memref<1x1024x128xf32, #tpu.memory_space<vmem>>, vector<1x1024x128xf32>,
    return
  }
  func.func @transform_0(%arg0: i32, %arg1: i32) -> (i32, i32, i32) {
    %c0_i32 = arith.constant 0 : i32
    %c0_i32_0 = arith.constant 0 : i32
    return %arg0, %arg1, %c0_i32 : i32, i32, i32
  }
  func.func @transform_1(%arg0: i32, %arg1: i32) -> (i32, i32) {
    %c0_i32 = arith.constant 0 : i32
    %c0_i32_0 = arith.constant 0 : i32
    %c0_i32_1 = arith.constant 0 : i32
    return %c0_i32, %c0_i32_0 : i32, i32
  }
  func.func @transform_2(%arg0: i32, %arg1: i32) -> (i32, i32) {
    %c0_i32 = arith.constant 0 : i32
    %c0_i32_0 = arith.constant 0 : i32
    %c0_i32_1 = arith.constant 0 : i32
    return %c0_i32, %c0_i32_0 : i32, i32
  }
  func.func @transform_3(%arg0: i32, %arg1: i32) -> (i32, i32, i32) {
    %c0_i32 = arith.constant 0 : i32
    %c0_i32_0 = arith.constant 0 : i32
    %c0_i32_1 = arith.constant 0 : i32
    return %arg0, %c0_i32, %c0_i32_0 : i32, i32, i32
  }
  func.func @transform_4(%arg0: i32, %arg1: i32) -> (i32, i32, i32) {
    %c0_i32 = arith.constant 0 : i32
    %c0_i32_0 = arith.constant 0 : i32
    return %arg0, %arg1, %c0_i32 : i32, i32, i32
  }
}

</mosaic_0001>

<llo_original>
// kernel: tpu_custom_call.1
$region0: #{tpu_custom_call.1}
  #allocation0 [shape = 'u32[]', space=smem, size = 0x4, offset = 0x4, fixed_abs, tag = 'smem constant byte address 0x4 - core index']
  #allocation1 [shape = 'u32[72,128]{1,0:T(1,128)}', space=vmem, size = 0x9000, scoped, tag = 'internal scratch']
  %s0 = inlined_call_operand.hbm [shape: f32[2,2048,128], index: 0, kind: input, shape index: {}]
  %s1 = inlined_call_operand.hbm [shape: f32[128,128], index: 1, kind: input, shape index: {}]
  %s2 = inlined_call_operand.hbm [shape: f32[128,128], index: 2, kind: input, shape index: {}]
  %s3 = inlined_call_operand.vmem [shape: f32[2,6,128], index: 3, kind: input, shape index: {}]
  %s4 = inlined_call_operand.hbm [shape: f32[2,2048,128], index: 4, kind: output, shape index: {}]
  %s5 = sld [smem:[#allocation0]]
  $region61: #{tpu_custom_call.1} parent=0
    _
  %s7 = ssub.s32 1, %s5
  %s8 = scalar_select 0, %s7, %s5
  $region1: #{tpu_custom_call.1} parent=0
    #allocation2 [shape = 'u8[1048576]{0}', space=vmem, size = 0x100000, scoped, tag = 'input window, operand 0']
    #allocation3 [shape = 's32[2]{0}', space=sflag, size = 0x8, scoped, tag = 'scoped memory for tpu_custom_call.1']
    #allocation4 [shape = 's32[2]{0}', space=sflag, size = 0x8, scoped, tag = 'scoped memory for tpu_custom_call.1']
    #allocation5 [shape = 'u8[65536]{0}', space=vmem, size = 0x10000, scoped, tag = 'input window, operand 1, single buffered']
    #allocation6 [shape = 's32[1]{0}', space=sflag, size = 0x4, scoped, tag = 'scoped memory for tpu_custom_call.1']
    #allocation7 [shape = 'u8[65536]{0}', space=vmem, size = 0x10000, scoped, tag = 'input window, operand 2, single buffered']
    #allocation8 [shape = 'u8[1048576]{0}', space=vmem, size = 0x100000, scoped, tag = 'output window, operand 0']
    %9 = vsyncpa [#allocation3], 0
    %s10 = scalar_lea.sflag [#allocation3], 1
    %11 = vsyncpa %s10, 0
    %12 = vsyncpa [#allocation6], 0
    %13 = vsyncpa [#allocation4], 0
    %s14 = scalar_lea.sflag [#allocation4], 1
    %15 = vsyncpa %s14, 0
    loop: start=0, step=1, limit=6
    $region2: #{tpu_custom_call.1} parent=1 // loop_pre_header
      _
    $region3: #{tpu_custom_call.1} parent=1 // loop_header
      %s17 = sphi 0, %s21
      %p18 = scmp.ge.s32.totalorder %s17, 6
      %s24 = sphi 0, %s36
      %s25 = sphi 0, %s32
      %s26 = sphi 0, %s24
      %s27 = sphi 0, %s25
      %s28 = sphi 0, %s26
      %s29 = sphi 0, %s27
      %s41 = sphi 0, %s43
      %s44 = sphi 0, %s41
      %s45 = sphi 0, %s44
      %s61 = sphi 0, %s45
      %s65 = sphi 0, %s65
      %s67 = sphi 0, %s65
      %s68 = sphi 0, %s67
      %s82 = sphi 0, %s68
      %s86 = sphi 0, %s86
      %s88 = sphi 0, %s86
      %s89 = sphi 0, %s88
      %s103 = sphi 0, %s89
      %s109 = sphi 0, %s111
      %s112 = sphi 0, %s109
      %s113 = sphi 0, %s112
      %s129 = sphi 0, %s113
      %s137 = sphi 0, %s139
      %s140 = sphi 0, %s137
      %s141 = sphi 0, %s140
      %s157 = sphi 0, %s141
    $region4: #{tpu_custom_call.1} parent=1 // loop_header_branch
      %20 = sbr.rel (%p18) target = $region8
    $region5: #{tpu_custom_call.1} parent=1 // loop_body
      %s22 = ssub.s32 %s17, 1
      %s23 = ssub.s32 %s17, 2
      %s30 = sadd.s32 1, %s25
      %p31 = scmp.ge.s32.totalorder %s30, 2
      %s32 = scalar_select %p31, 0, %s30
      %s33 = sadd.s32 1, %s24
      %s34 = scalar_select %p31, %s33, %s24
      %p35 = scmp.ge.s32.totalorder %s34, 2
      %s36 = scalar_select %p35, 0, %s34
      %s37 = ssub.s32 %s24, %s36
      %s38 = ssub.s32 %s25, %s32
      %s39 = sor.u32 %s37, %s38
      %p40 = scmp.eq.s32.totalorder %s39, 0
      %s42 = sadd.s32 %s41, 1
      %s43 = scalar_select %p40, %s41, %s42
      %p46 = pneg %p40
      %p47 = scmp.eq.s32.totalorder %s17, 3
      %p48 = por %p46, %p47
      %p49 = scmp.ne.s32.totalorder %s41, %s44
      %p50 = scmp.eq.s32.totalorder %s17, 0
      %p51 = por %p49, %p50
      %p52 = scmp.ne.s32.totalorder %s41, %s44
      %p53 = scmp.eq.s32.totalorder %s22, 3
      %p54 = por %p52, %p53
      %p55 = scmp.ne.s32.totalorder %s44, %s45
      %p56 = scmp.eq.s32.totalorder %s22, 0
      %p57 = por %p55, %p56
      %p58 = scmp.ne.s32.totalorder %s44, %s45
      %p59 = scmp.eq.s32.totalorder %s23, 3
      %p60 = por %p58, %p59
      %p62 = scmp.ne.s32.totalorder %s45, %s61
      %p63 = scmp.eq.s32.totalorder %s23, 0
      %p64 = por %p62, %p63
      %s66 = sadd.s32 %s65, 1
      %p69 = scmp.eq.s32.totalorder %s17, 3
      %p70 = scmp.ne.s32.totalorder %s65, %s67
      %p71 = scmp.eq.s32.totalorder %s17, 0
      %p72 = por %p70, %p71
      %p73 = scmp.ne.s32.totalorder %s65, %s67
      %p74 = scmp.eq.s32.totalorder %s22, 3
      %p75 = por %p73, %p74
      %p76 = scmp.ne.s32.totalorder %s67, %s68
      %p77 = scmp.eq.s32.totalorder %s22, 0
      %p78 = por %p76, %p77
      %p79 = scmp.ne.s32.totalorder %s67, %s68
      %p80 = scmp.eq.s32.totalorder %s23, 3
      %p81 = por %p79, %p80
      %p83 = scmp.ne.s32.totalorder %s68, %s82
      %p84 = scmp.eq.s32.totalorder %s23, 0
      %p85 = por %p83, %p84
      %s87 = sadd.s32 %s86, 1
      %p90 = scmp.eq.s32.totalorder %s17, 3
      %p91 = scmp.ne.s32.totalorder %s86, %s88
      %p92 = scmp.eq.s32.totalorder %s17, 0
      %p93 = por %p91, %p92
      %p94 = scmp.ne.s32.totalorder %s86, %s88
      %p95 = scmp.eq.s32.totalorder %s22, 3
      %p96 = por %p94, %p95
      %p97 = scmp.ne.s32.totalorder %s88, %s89
      %p98 = scmp.eq.s32.totalorder %s22, 0
      %p99 = por %p97, %p98
      %p100 = scmp.ne.s32.totalorder %s88, %s89
      %p101 = scmp.eq.s32.totalorder %s23, 3
      %p102 = por %p100, %p101
      %p104 = scmp.ne.s32.totalorder %s89, %s103
      %p105 = scmp.eq.s32.totalorder %s23, 0
      %p106 = por %p104, %p105
      %s107 = ssub.s32 %s24, %s36
      %p108 = scmp.eq.s32.totalorder %s107, 0
      %s110 = sadd.s32 %s109, 1
      %s111 = scalar_select %p108, %s109, %s110
      %p114 = pneg %p108
      %p115 = scmp.eq.s32.totalorder %s17, 3
      %p116 = por %p114, %p115
      %p117 = scmp.ne.s32.totalorder %s109, %s112
      %p118 = scmp.eq.s32.totalorder %s17, 0
      %p119 = por %p117, %p118
      %p120 = scmp.ne.s32.totalorder %s109, %s112
      %p121 = scmp.eq.s32.totalorder %s22, 3
      %p122 = por %p120, %p121
      %p123 = scmp.ne.s32.totalorder %s112, %s113
      %p124 = scmp.eq.s32.totalorder %s22, 0
      %p125 = por %p123, %p124
      %p126 = scmp.ne.s32.totalorder %s112, %s113
      %p127 = scmp.eq.s32.totalorder %s23, 3
      %p128 = por %p126, %p127
      %p130 = scmp.ne.s32.totalorder %s113, %s129
      %p131 = scmp.eq.s32.totalorder %s23, 0
      %p132 = por %p130, %p131
      %s133 = ssub.s32 %s24, %s36
      %s134 = ssub.s32 %s25, %s32
      %s135 = sor.u32 %s133, %s134
      %p136 = scmp.eq.s32.totalorder %s135, 0
      %s138 = sadd.s32 %s137, 1
      %s139 = scalar_select %p136, %s137, %s138
      %p142 = pneg %p136
      %p143 = scmp.eq.s32.totalorder %s17, 3
      %p144 = por %p142, %p143
      %p145 = scmp.ne.s32.totalorder %s137, %s140
      %p146 = scmp.eq.s32.totalorder %s17, 0
      %p147 = por %p145, %p146
      %p148 = scmp.ne.s32.totalorder %s137, %s140
      %p149 = scmp.eq.s32.totalorder %s22, 3
      %p150 = por %p148, %p149
      %p151 = scmp.ne.s32.totalorder %s140, %s141
      %p152 = scmp.eq.s32.totalorder %s22, 0
      %p153 = por %p151, %p152
      %p154 = scmp.ne.s32.totalorder %s140, %s141
      %p155 = scmp.eq.s32.totalorder %s23, 3
      %p156 = por %p154, %p155
      %p158 = scmp.ne.s32.totalorder %s141, %s157
      %p159 = scmp.eq.s32.totalorder %s23, 0
      %p160 = por %p158, %p159
      %p161 = scmp.le.s32.totalorder 1, %s17
      %p162 = scmp.lt.s32.totalorder %s17, 5
      %p163 = pnand %p161, %p162
      %p164 = pneg %p163
      // Predicated region
      $region9: #{tpu_custom_call.1} parent=5 // pred_check
        _
      $region10: #{tpu_custom_call.1} parent=5 // pred_check_branch
        %166 = sbr.rel (%p163) target = $region12
      $region11: #{tpu_custom_call.1} parent=5 // pred_region
        %s167 = ssub.s32 %s17, 1
        // Predicated region
        $region13: #{tpu_custom_call.1} parent=11 // pred_check
          %p168 = pneg %p78
        $region14: #{tpu_custom_call.1} parent=11 // pred_check_branch
          %170 = sbr.rel (%p168) target = $region16
        $region15: #{tpu_custom_call.1} parent=11 // pred_region
          %172 = vsyncadd [#allocation6], 0
          %s173 = sshll.u32 %s1, 4
          %s174 = int_to_ptr.hbm [resolvable:$true] %s173
          %s175 = sshll.u32 [#allocation5], 4
          %s176 = int_to_ptr.vmem [resolvable:$true] %s175
          %181 = dma.hbm_to_vmem [thread:$0]  %s174, 2048, %s176, [#allocation6], 128, 128, 8
        $region16: #{tpu_custom_call.1} parent=11 // pred_fallthru
          _
        // Predicated region
        $region17: #{tpu_custom_call.1} parent=11 // pred_check
          %p182 = pneg %p99
        $region18: #{tpu_custom_call.1} parent=11 // pred_check_branch
          %184 = sbr.rel (%p182) target = $region20
        $region19: #{tpu_custom_call.1} parent=11 // pred_region
          %186 = vsyncadd [#allocation6], 0
          %s187 = sshll.u32 %s2, 4
          %s188 = int_to_ptr.hbm [resolvable:$true] %s187
          %s189 = sshll.u32 [#allocation7], 4
          %s190 = int_to_ptr.vmem [resolvable:$true] %s189
          %195 = dma.hbm_to_vmem [thread:$0]  %s188, 2048, %s190, [#allocation6], 128, 128, 8
        $region20: #{tpu_custom_call.1} parent=11 // pred_fallthru
          _
      $region12: #{tpu_custom_call.1} parent=5 // pred_fallthru
        _
      %p196 = scmp.lt.s32.totalorder %s17, 4
      // Predicated region
      $region21: #{tpu_custom_call.1} parent=5 // pred_check
        %p197 = pneg %p196
      $region22: #{tpu_custom_call.1} parent=5 // pred_check_branch
        %199 = sbr.rel (%p197) target = $region24
      $region23: #{tpu_custom_call.1} parent=5 // pred_region
        // Predicated region
        $region25: #{tpu_custom_call.1} parent=23 // pred_check
          %p200 = pneg %p51
        $region26: #{tpu_custom_call.1} parent=23 // pred_check_branch
          %202 = sbr.rel (%p200) target = $region28
        $region27: #{tpu_custom_call.1} parent=23 // pred_region
          %s203 = sand.u32 %s41, 1
          %s204 = scalar_lea.sflag [#allocation3], %s203
          %s205 = sand.u32 %s41, 1
          %s206 = smul.addr %s205, 1024
          %s207 = scalar_lea.vmem [#allocation2], %s206
          %s208 = smul.u32 128, %s25
          %210 = vsyncadd %s204, 0
          %s211 = smul.addr %s24, 256
          %s212 = sadd.s32 %s208, %s211
          %s213 = smul.addr %s212, 8
          %s214 = scalar_lea.hbm %s0, %s213
          %s215 = sshll.u32 %s214, 4
          %s216 = int_to_ptr.hbm [resolvable:$true] %s215
          %s217 = sshll.u32 %s207, 4
          %s218 = int_to_ptr.vmem [resolvable:$true] %s217
          %223 = dma.hbm_to_vmem [thread:$0]  %s216, 16384, %s218, %s204, 128, 128, 8
        $region28: #{tpu_custom_call.1} parent=23 // pred_fallthru
          _
        // Predicated region
        $region29: #{tpu_custom_call.1} parent=23 // pred_check
          %p224 = pneg %p119
        $region30: #{tpu_custom_call.1} parent=23 // pred_check_branch
          %226 = sbr.rel (%p224) target = $region32
        $region31: #{tpu_custom_call.1} parent=23 // pred_region
          %p227 = scmp.lt.s32.totalorder %s24, 1
          %s228 = scalar_select %p227, %s24, 1
          %s229 = smul.addr %s228, 8
          %s230 = scalar_lea.vmem %s3, %s229
        $region32: #{tpu_custom_call.1} parent=23 // pred_fallthru
          _
      $region24: #{tpu_custom_call.1} parent=5 // pred_fallthru
        _
      %p231 = scmp.le.s32.totalorder 1, %s17
      %p232 = scmp.lt.s32.totalorder %s17, 5
      %p233 = pnand %p231, %p232
      %p234 = pneg %p233
      // Predicated region
      $region33: #{tpu_custom_call.1} parent=5 // pred_check
        _
      $region34: #{tpu_custom_call.1} parent=5 // pred_check_branch
        %236 = sbr.rel (%p233) target = $region36
      $region35: #{tpu_custom_call.1} parent=5 // pred_region
        %s237 = ssub.s32 %s17, 1
        %s238 = sand.u32 %s44, 1
        %s239 = scalar_lea.sflag [#allocation3], %s238
        %s240 = sand.u32 %s44, 1
        %s241 = smul.addr %s240, 1024
        %s242 = scalar_lea.vmem [#allocation2], %s241
        // Predicated region
        $region37: #{tpu_custom_call.1} parent=35 // pred_check
          %p243 = pneg %p57
        $region38: #{tpu_custom_call.1} parent=35 // pred_check_branch
          %245 = sbr.rel (%p243) target = $region40
        $region39: #{tpu_custom_call.1} parent=35 // pred_region
          %247 = dma.done %s239, 16384
        $region40: #{tpu_custom_call.1} parent=35 // pred_fallthru
          _
        // Predicated region
        $region41: #{tpu_custom_call.1} parent=35 // pred_check
          %p248 = pneg %p78
        $region42: #{tpu_custom_call.1} parent=35 // pred_check_branch
          %250 = sbr.rel (%p248) target = $region44
        $region43: #{tpu_custom_call.1} parent=35 // pred_region
          %252 = dma.done [#allocation6], 2048
        $region44: #{tpu_custom_call.1} parent=35 // pred_fallthru
          _
        // Predicated region
        $region45: #{tpu_custom_call.1} parent=35 // pred_check
          %p253 = pneg %p99
        $region46: #{tpu_custom_call.1} parent=35 // pred_check_branch
          %255 = sbr.rel (%p253) target = $region48
        $region47: #{tpu_custom_call.1} parent=35 // pred_region
          %257 = dma.done [#allocation6], 2048
        $region48: #{tpu_custom_call.1} parent=35 // pred_fallthru
          _
        %s258 = sand.u32 %s44, 1
        %s259 = scalar_lea.sflag [#allocation3], %s258
        %s260 = sand.u32 %s44, 1
        %s261 = smul.addr %s260, 1024
        %s262 = scalar_lea.vmem [#allocation2], %s261
        %p263 = pneg %p57
        %p264 = pneg %p54
        %p265 = pneg %p78
        %p266 = pneg %p75
        %p267 = pneg %p99
        %p268 = pneg %p96
        %p269 = scmp.lt.s32.totalorder %s26, 1
        %s270 = scalar_select %p269, %s26, 1
        %s271 = smul.addr %s270, 8
        %s272 = scalar_lea.vmem %s3, %s271
        %p273 = pneg %p125
        %p274 = pneg %p122
        %p275 = pneg %p153
        %p276 = pneg %p150
        %s277 = sand.u32 %s140, 1
        %s278 = scalar_lea.sflag [#allocation4], %s277
        %s279 = sand.u32 %s140, 1
        %s280 = smul.addr %s279, 1024
        %s281 = scalar_lea.vmem [#allocation8], %s280
        %s282 = smul.u32 128, %s27
        %p283 = scmp.lt.s32.totalorder %s26, 1
        %s284 = scalar_select %p283, %s26, 1
        %s285 = smul.addr %s284, 8
        %s286 = scalar_lea.vmem %s3, %s285
        %s287 = smul.u32 128, %s27
        %v288 = vld [vmem:[%s242] sm:$0xff]
        %v289 = vld [vmem:[%s242 + $0x8] sm:$0xff]
        %v290 = vld [vmem:[%s242 + $0x10] sm:$0xff]
        %v291 = vld [vmem:[%s242 + $0x18] sm:$0xff]
        %v292 = vld [vmem:[%s242 + $0x20] sm:$0xff]
        %v293 = vld [vmem:[%s242 + $0x28] sm:$0xff]
        %v294 = vld [vmem:[%s242 + $0x30] sm:$0xff]
        %v295 = vld [vmem:[%s242 + $0x38] sm:$0xff]
        %v296 = vld [vmem:[%s242 + $0x40] sm:$0xff]
        %v297 = vld [vmem:[%s242 + $0x48] sm:$0xff]
        %v298 = vld [vmem:[%s242 + $0x50] sm:$0xff]
        %v299 = vld [vmem:[%s242 + $0x58] sm:$0xff]
        %v300 = vld [vmem:[%s242 + $0x60] sm:$0xff]
        %v301 = vld [vmem:[%s242 + $0x68] sm:$0xff]
        %v302 = vld [vmem:[%s242 + $0x70] sm:$0xff]
        %v303 = vld [vmem:[%s242 + $0x78] sm:$0xff]
        %v304 = vld [vmem:[%s242 + $0x80] sm:$0xff]
        %v305 = vld [vmem:[%s242 + $0x88] sm:$0xff]
        %v306 = vld [vmem:[%s242 + $0x90] sm:$0xff]
        %v307 = vld [vmem:[%s242 + $0x98] sm:$0xff]
        %v308 = vld [vmem:[%s242 + $0xa0] sm:$0xff]
        %v309 = vld [vmem:[%s242 + $0xa8] sm:$0xff]
        %v310 = vld [vmem:[%s242 + $0xb0] sm:$0xff]
        %v311 = vld [vmem:[%s242 + $0xb8] sm:$0xff]
        %v312 = vld [vmem:[%s242 + $0xc0] sm:$0xff]
        %v313 = vld [vmem:[%s242 + $0xc8] sm:$0xff]
        %v314 = vld [vmem:[%s242 + $0xd0] sm:$0xff]
        %v315 = vld [vmem:[%s242 + $0xd8] sm:$0xff]
        %v316 = vld [vmem:[%s242 + $0xe0] sm:$0xff]
        %v317 = vld [vmem:[%s242 + $0xe8] sm:$0xff]
        %v318 = vld [vmem:[%s242 + $0xf0] sm:$0xff]
        %v319 = vld [vmem:[%s242 + $0xf8] sm:$0xff]
        %v320 = vld [vmem:[%s242 + $0x100] sm:$0xff]
        %v321 = vld [vmem:[%s242 + $0x108] sm:$0xff]
        %v322 = vld [vmem:[%s242 + $0x110] sm:$0xff]
        %v323 = vld [vmem:[%s242 + $0x118] sm:$0xff]
        %v324 = vld [vmem:[%s242 + $0x120] sm:$0xff]
        %v325 = vld [vmem:[%s242 + $0x128] sm:$0xff]
        %v326 = vld [vmem:[%s242 + $0x130] sm:$0xff]
        %v327 = vld [vmem:[%s242 + $0x138] sm:$0xff]
        %v328 = vld [vmem:[%s242 + $0x140] sm:$0xff]
        %v329 = vld [vmem:[%s242 + $0x148] sm:$0xff]
        %v330 = vld [vmem:[%s242 + $0x150] sm:$0xff]
        %v331 = vld [vmem:[%s242 + $0x158] sm:$0xff]
        %v332 = vld [vmem:[%s242 + $0x160] sm:$0xff]
        %v333 = vld [vmem:[%s242 + $0x168] sm:$0xff]
        %v334 = vld [vmem:[%s242 + $0x170] sm:$0xff]
        %v335 = vld [vmem:[%s242 + $0x178] sm:$0xff]
        %v336 = vld [vmem:[%s242 + $0x180] sm:$0xff]
        %v337 = vld [vmem:[%s242 + $0x188] sm:$0xff]
        %v338 = vld [vmem:[%s242 + $0x190] sm:$0xff]
        %v339 = vld [vmem:[%s242 + $0x198] sm:$0xff]
        %v340 = vld [vmem:[%s242 + $0x1a0] sm:$0xff]
        %v341 = vld [vmem:[%s242 + $0x1a8] sm:$0xff]
        %v342 = vld [vmem:[%s242 + $0x1b0] sm:$0xff]
        %v343 = vld [vmem:[%s242 + $0x1b8] sm:$0xff]
        %v344 = vld [vmem:[%s242 + $0x1c0] sm:$0xff]
        %v345 = vld [vmem:[%s242 + $0x1c8] sm:$0xff]
        %v346 = vld [vmem:[%s242 + $0x1d0] sm:$0xff]
        %v347 = vld [vmem:[%s242 + $0x1d8] sm:$0xff]
        %v348 = vld [vmem:[%s242 + $0x1e0] sm:$0xff]
        %v349 = vld [vmem:[%s242 + $0x1e8] sm:$0xff]
        %v350 = vld [vmem:[%s242 + $0x1f0] sm:$0xff]
        %v351 = vld [vmem:[%s242 + $0x1f8] sm:$0xff]
        %v352 = vld [vmem:[%s242 + $0x200] sm:$0xff]
        %v353 = vld [vmem:[%s242 + $0x208] sm:$0xff]
        %v354 = vld [vmem:[%s242 + $0x210] sm:$0xff]
        %v355 = vld [vmem:[%s242 + $0x218] sm:$0xff]
        %v356 = vld [vmem:[%s242 + $0x220] sm:$0xff]
        %v357 = vld [vmem:[%s242 + $0x228] sm:$0xff]
        %v358 = vld [vmem:[%s242 + $0x230] sm:$0xff]
        %v359 = vld [vmem:[%s242 + $0x238] sm:$0xff]
        %v360 = vld [vmem:[%s242 + $0x240] sm:$0xff]
        %v361 = vld [vmem:[%s242 + $0x248] sm:$0xff]
        %v362 = vld [vmem:[%s242 + $0x250] sm:$0xff]
        %v363 = vld [vmem:[%s242 + $0x258] sm:$0xff]
        %v364 = vld [vmem:[%s242 + $0x260] sm:$0xff]
        %v365 = vld [vmem:[%s242 + $0x268] sm:$0xff]
        %v366 = vld [vmem:[%s242 + $0x270] sm:$0xff]
        %v367 = vld [vmem:[%s242 + $0x278] sm:$0xff]
        %v368 = vld [vmem:[%s242 + $0x280] sm:$0xff]
        %v369 = vld [vmem:[%s242 + $0x288] sm:$0xff]
        %v370 = vld [vmem:[%s242 + $0x290] sm:$0xff]
        %v371 = vld [vmem:[%s242 + $0x298] sm:$0xff]
        %v372 = vld [vmem:[%s242 + $0x2a0] sm:$0xff]
        %v373 = vld [vmem:[%s242 + $0x2a8] sm:$0xff]
        %v374 = vld [vmem:[%s242 + $0x2b0] sm:$0xff]
        %v375 = vld [vmem:[%s242 + $0x2b8] sm:$0xff]
        %v376 = vld [vmem:[%s242 + $0x2c0] sm:$0xff]
        %v377 = vld [vmem:[%s242 + $0x2c8] sm:$0xff]
        %v378 = vld [vmem:[%s242 + $0x2d0] sm:$0xff]
        %v379 = vld [vmem:[%s242 + $0x2d8] sm:$0xff]
        %v380 = vld [vmem:[%s242 + $0x2e0] sm:$0xff]
        %v381 = vld [vmem:[%s242 + $0x2e8] sm:$0xff]
        %v382 = vld [vmem:[%s242 + $0x2f0] sm:$0xff]
        %v383 = vld [vmem:[%s242 + $0x2f8] sm:$0xff]
        %v384 = vld [vmem:[%s242 + $0x300] sm:$0xff]
        %v385 = vld [vmem:[%s242 + $0x308] sm:$0xff]
        %v386 = vld [vmem:[%s242 + $0x310] sm:$0xff]
        %v387 = vld [vmem:[%s242 + $0x318] sm:$0xff]
        %v388 = vld [vmem:[%s242 + $0x320] sm:$0xff]
        %v389 = vld [vmem:[%s242 + $0x328] sm:$0xff]
        %v390 = vld [vmem:[%s242 + $0x330] sm:$0xff]
        %v391 = vld [vmem:[%s242 + $0x338] sm:$0xff]
        %v392 = vld [vmem:[%s242 + $0x340] sm:$0xff]
        %v393 = vld [vmem:[%s242 + $0x348] sm:$0xff]
        %v394 = vld [vmem:[%s242 + $0x350] sm:$0xff]
        %v395 = vld [vmem:[%s242 + $0x358] sm:$0xff]
        %v396 = vld [vmem:[%s242 + $0x360] sm:$0xff]
        %v397 = vld [vmem:[%s242 + $0x368] sm:$0xff]
        %v398 = vld [vmem:[%s242 + $0x370] sm:$0xff]
        %v399 = vld [vmem:[%s242 + $0x378] sm:$0xff]
        %v400 = vld [vmem:[%s242 + $0x380] sm:$0xff]
        %v401 = vld [vmem:[%s242 + $0x388] sm:$0xff]
        %v402 = vld [vmem:[%s242 + $0x390] sm:$0xff]
        %v403 = vld [vmem:[%s242 + $0x398] sm:$0xff]
        %v404 = vld [vmem:[%s242 + $0x3a0] sm:$0xff]
        %v405 = vld [vmem:[%s242 + $0x3a8] sm:$0xff]
        %v406 = vld [vmem:[%s242 + $0x3b0] sm:$0xff]
        %v407 = vld [vmem:[%s242 + $0x3b8] sm:$0xff]
        %v408 = vld [vmem:[%s242 + $0x3c0] sm:$0xff]
        %v409 = vld [vmem:[%s242 + $0x3c8] sm:$0xff]
        %v410 = vld [vmem:[%s242 + $0x3d0] sm:$0xff]
        %v411 = vld [vmem:[%s242 + $0x3d8] sm:$0xff]
        %v412 = vld [vmem:[%s242 + $0x3e0] sm:$0xff]
        %v413 = vld [vmem:[%s242 + $0x3e8] sm:$0xff]
        %v414 = vld [vmem:[%s242 + $0x3f0] sm:$0xff]
        %v415 = vld [vmem:[%s242 + $0x3f8] sm:$0xff]
        %v416 = vld [vmem:[%s286] sm:$0x3f]
        %v417 = vld [vmem:[#allocation5] sm:$0xff]
        %v418 = vld [vmem:[#allocation5 + $0x8] sm:$0xff]
        %v419 = vld [vmem:[#allocation5 + $0x10] sm:$0xff]
        %v420 = vld [vmem:[#allocation5 + $0x18] sm:$0xff]
        %v421 = vld [vmem:[#allocation5 + $0x20] sm:$0xff]
        %v422 = vld [vmem:[#allocation5 + $0x28] sm:$0xff]
        %v423 = vld [vmem:[#allocation5 + $0x30] sm:$0xff]
        %v424 = vld [vmem:[#allocation5 + $0x38] sm:$0xff]
        %v425 = vld [vmem:[#allocation5 + $0x40] sm:$0xff]
        %v426 = vld [vmem:[#allocation5 + $0x48] sm:$0xff]
        %v427 = vld [vmem:[#allocation5 + $0x50] sm:$0xff]
        %v428 = vld [vmem:[#allocation5 + $0x58] sm:$0xff]
        %v429 = vld [vmem:[#allocation5 + $0x60] sm:$0xff]
        %v430 = vld [vmem:[#allocation5 + $0x68] sm:$0xff]
        %v431 = vld [vmem:[#allocation5 + $0x70] sm:$0xff]
        %v432 = vld [vmem:[#allocation5 + $0x78] sm:$0xff]
        %v433 = vperm.slane %v416, 0
        %434 = vmatpush.msra.mxu0 %v432
        %435 = vmatpush.msra.mxu0 %v431
        %436 = vmatpush.msra.mxu0 %v430
        %437 = vmatpush.msra.mxu0 %v429
        %438 = vmatpush.msra.mxu0 %v428
        %439 = vmatpush.msra.mxu0 %v427
        %440 = vmatpush.msra.mxu0 %v426
        %441 = vmatpush.msra.mxu0 %v425
        %442 = vmatpush.msra.mxu0 %v424
        %443 = vmatpush.msra.mxu0 %v423
        %444 = vmatpush.msra.mxu0 %v422
        %445 = vmatpush.msra.mxu0 %v421
        %446 = vmatpush.msra.mxu0 %v420
        %447 = vmatpush.msra.mxu0 %v419
        %448 = vmatpush.msra.mxu0 %v418
        %449 = vmatpush.msra.mxu0 %v417
        %450 = vmatmul.f32.gmra.mxu0 %v288
        %v451 = vpop.f32.mrf.mxu0
        %v452 = vadd.f32 %v433, %v451
        %453 = vmatmul.f32.gmra.mxu0 %v289
        %v454 = vpop.f32.mrf.mxu0
        %v455 = vadd.f32 %v433, %v454
        %456 = vmatmul.f32.gmra.mxu0 %v290
        %v457 = vpop.f32.mrf.mxu0
        %v458 = vadd.f32 %v433, %v457
        %459 = vmatmul.f32.gmra.mxu0 %v291
        %v460 = vpop.f32.mrf.mxu0
        %v461 = vadd.f32 %v433, %v460
        %462 = vmatmul.f32.gmra.mxu0 %v292
        %v463 = vpop.f32.mrf.mxu0
        %v464 = vadd.f32 %v433, %v463
        %465 = vmatmul.f32.gmra.mxu0 %v293
        %v466 = vpop.f32.mrf.mxu0
        %v467 = vadd.f32 %v433, %v466
        %468 = vmatmul.f32.gmra.mxu0 %v294
        %v469 = vpop.f32.mrf.mxu0
        %v470 = vadd.f32 %v433, %v469
        %471 = vmatmul.f32.gmra.mxu0 %v295
        %v472 = vpop.f32.mrf.mxu0
        %v473 = vadd.f32 %v433, %v472
        %474 = vmatmul.f32.gmra.mxu0 %v296
        %v475 = vpop.f32.mrf.mxu0
        %v476 = vadd.f32 %v433, %v475
        %477 = vmatmul.f32.gmra.mxu0 %v297
        %v478 = vpop.f32.mrf.mxu0
        %v479 = vadd.f32 %v433, %v478
        %480 = vmatmul.f32.gmra.mxu0 %v298
        %v481 = vpop.f32.mrf.mxu0
        %v482 = vadd.f32 %v433, %v481
        %483 = vmatmul.f32.gmra.mxu0 %v299
        %v484 = vpop.f32.mrf.mxu0
        %v485 = vadd.f32 %v433, %v484
        %486 = vmatmul.f32.gmra.mxu0 %v300
        %v487 = vpop.f32.mrf.mxu0
        %v488 = vadd.f32 %v433, %v487
        %489 = vmatmul.f32.gmra.mxu0 %v301
        %v490 = vpop.f32.mrf.mxu0
        %v491 = vadd.f32 %v433, %v490
        %492 = vmatmul.f32.gmra.mxu0 %v302
        %v493 = vpop.f32.mrf.mxu0
        %v494 = vadd.f32 %v433, %v493
        %495 = vmatmul.f32.gmra.mxu0 %v303
        %v496 = vpop.f32.mrf.mxu0
        %v497 = vadd.f32 %v433, %v496
        %498 = vmatmul.f32.gmra.mxu0 %v304
        %v499 = vpop.f32.mrf.mxu0
        %v500 = vadd.f32 %v433, %v499
        %501 = vmatmul.f32.gmra.mxu0 %v305
        %v502 = vpop.f32.mrf.mxu0
        %v503 = vadd.f32 %v433, %v502
        %504 = vmatmul.f32.gmra.mxu0 %v306
        %v505 = vpop.f32.mrf.mxu0
        %v506 = vadd.f32 %v433, %v505
        %507 = vmatmul.f32.gmra.mxu0 %v307
        %v508 = vpop.f32.mrf.mxu0
        %v509 = vadd.f32 %v433, %v508
        %510 = vmatmul.f32.gmra.mxu0 %v308
        %v511 = vpop.f32.mrf.mxu0
        %v512 = vadd.f32 %v433, %v511
        %513 = vmatmul.f32.gmra.mxu0 %v309
        %v514 = vpop.f32.mrf.mxu0
        %v515 = vadd.f32 %v433, %v514
        %516 = vmatmul.f32.gmra.mxu0 %v310
        %v517 = vpop.f32.mrf.mxu0
        %v518 = vadd.f32 %v433, %v517
        %519 = vmatmul.f32.gmra.mxu0 %v311
        %v520 = vpop.f32.mrf.mxu0
        %v521 = vadd.f32 %v433, %v520
        %522 = vmatmul.f32.gmra.mxu0 %v312
        %v523 = vpop.f32.mrf.mxu0
        %v524 = vadd.f32 %v433, %v523
        %525 = vmatmul.f32.gmra.mxu0 %v313
        %v526 = vpop.f32.mrf.mxu0
        %v527 = vadd.f32 %v433, %v526
        %528 = vmatmul.f32.gmra.mxu0 %v314
        %v529 = vpop.f32.mrf.mxu0
        %v530 = vadd.f32 %v433, %v529
        %531 = vmatmul.f32.gmra.mxu0 %v315
        %v532 = vpop.f32.mrf.mxu0
        %v533 = vadd.f32 %v433, %v532
        %534 = vmatmul.f32.gmra.mxu0 %v316
        %v535 = vpop.f32.mrf.mxu0
        %v536 = vadd.f32 %v433, %v535
        %537 = vmatmul.f32.gmra.mxu0 %v317
        %v538 = vpop.f32.mrf.mxu0
        %v539 = vadd.f32 %v433, %v538
        %540 = vmatmul.f32.gmra.mxu0 %v318
        %v541 = vpop.f32.mrf.mxu0
        %v542 = vadd.f32 %v433, %v541
        %543 = vmatmul.f32.gmra.mxu0 %v319
        %v544 = vpop.f32.mrf.mxu0
        %v545 = vadd.f32 %v433, %v544
        %546 = vmatmul.f32.gmra.mxu0 %v320
        %v547 = vpop.f32.mrf.mxu0
        %v548 = vadd.f32 %v433, %v547
        %549 = vmatmul.f32.gmra.mxu0 %v321
        %v550 = vpop.f32.mrf.mxu0
        %v551 = vadd.f32 %v433, %v550
        %552 = vmatmul.f32.gmra.mxu0 %v322
        %v553 = vpop.f32.mrf.mxu0
        %v554 = vadd.f32 %v433, %v553
        %555 = vmatmul.f32.gmra.mxu0 %v323
        %v556 = vpop.f32.mrf.mxu0
        %v557 = vadd.f32 %v433, %v556
        %558 = vmatmul.f32.gmra.mxu0 %v324
        %v559 = vpop.f32.mrf.mxu0
        %v560 = vadd.f32 %v433, %v559
        %561 = vmatmul.f32.gmra.mxu0 %v325
        %v562 = vpop.f32.mrf.mxu0
        %v563 = vadd.f32 %v433, %v562
        %564 = vmatmul.f32.gmra.mxu0 %v326
        %v565 = vpop.f32.mrf.mxu0
        %v566 = vadd.f32 %v433, %v565
        %567 = vmatmul.f32.gmra.mxu0 %v327
        %v568 = vpop.f32.mrf.mxu0
        %v569 = vadd.f32 %v433, %v568
        %570 = vmatmul.f32.gmra.mxu0 %v328
        %v571 = vpop.f32.mrf.mxu0
        %v572 = vadd.f32 %v433, %v571
        %573 = vmatmul.f32.gmra.mxu0 %v329
        %v574 = vpop.f32.mrf.mxu0
        %v575 = vadd.f32 %v433, %v574
        %576 = vmatmul.f32.gmra.mxu0 %v330
        %v577 = vpop.f32.mrf.mxu0
        %v578 = vadd.f32 %v433, %v577
        %579 = vmatmul.f32.gmra.mxu0 %v331
        %v580 = vpop.f32.mrf.mxu0
        %v581 = vadd.f32 %v433, %v580
        %582 = vmatmul.f32.gmra.mxu0 %v332
        %v583 = vpop.f32.mrf.mxu0
        %v584 = vadd.f32 %v433, %v583
        %585 = vmatmul.f32.gmra.mxu0 %v333
        %v586 = vpop.f32.mrf.mxu0
        %v587 = vadd.f32 %v433, %v586
        %588 = vmatmul.f32.gmra.mxu0 %v334
        %v589 = vpop.f32.mrf.mxu0
        %v590 = vadd.f32 %v433, %v589
        %591 = vmatmul.f32.gmra.mxu0 %v335
        %v592 = vpop.f32.mrf.mxu0
        %v593 = vadd.f32 %v433, %v592
        %594 = vmatmul.f32.gmra.mxu0 %v336
        %v595 = vpop.f32.mrf.mxu0
        %v596 = vadd.f32 %v433, %v595
        %597 = vmatmul.f32.gmra.mxu0 %v337
        %v598 = vpop.f32.mrf.mxu0
        %v599 = vadd.f32 %v433, %v598
        %600 = vmatmul.f32.gmra.mxu0 %v338
        %v601 = vpop.f32.mrf.mxu0
        %v602 = vadd.f32 %v433, %v601
        %603 = vmatmul.f32.gmra.mxu0 %v339
        %v604 = vpop.f32.mrf.mxu0
        %v605 = vadd.f32 %v433, %v604
        %606 = vmatmul.f32.gmra.mxu0 %v340
        %v607 = vpop.f32.mrf.mxu0
        %v608 = vadd.f32 %v433, %v607
        %609 = vmatmul.f32.gmra.mxu0 %v341
        %v610 = vpop.f32.mrf.mxu0
        %v611 = vadd.f32 %v433, %v610
        %612 = vmatmul.f32.gmra.mxu0 %v342
        %v613 = vpop.f32.mrf.mxu0
        %v614 = vadd.f32 %v433, %v613
        %615 = vmatmul.f32.gmra.mxu0 %v343
        %v616 = vpop.f32.mrf.mxu0
        %v617 = vadd.f32 %v433, %v616
        %618 = vmatmul.f32.gmra.mxu0 %v344
        %v619 = vpop.f32.mrf.mxu0
        %v620 = vadd.f32 %v433, %v619
        %621 = vmatmul.f32.gmra.mxu0 %v345
        %v622 = vpop.f32.mrf.mxu0
        %v623 = vadd.f32 %v433, %v622
        %624 = vmatmul.f32.gmra.mxu0 %v346
        %v625 = vpop.f32.mrf.mxu0
        %v626 = vadd.f32 %v433, %v625
        %627 = vmatmul.f32.gmra.mxu0 %v347
        %v628 = vpop.f32.mrf.mxu0
        %v629 = vadd.f32 %v433, %v628
        %630 = vmatmul.f32.gmra.mxu0 %v348
        %v631 = vpop.f32.mrf.mxu0
        %v632 = vadd.f32 %v433, %v631
        %633 = vmatmul.f32.gmra.mxu0 %v349
        %v634 = vpop.f32.mrf.mxu0
        %v635 = vadd.f32 %v433, %v634
        %636 = vmatmul.f32.gmra.mxu0 %v350
        %v637 = vpop.f32.mrf.mxu0
        %v638 = vadd.f32 %v433, %v637
        %639 = vmatmul.f32.gmra.mxu0 %v351
        %v640 = vpop.f32.mrf.mxu0
        %v641 = vadd.f32 %v433, %v640
        %642 = vmatmul.f32.gmra.mxu0 %v352
        %v643 = vpop.f32.mrf.mxu0
        %v644 = vadd.f32 %v433, %v643
        %645 = vmatmul.f32.gmra.mxu0 %v353
        %v646 = vpop.f32.mrf.mxu0
        %v647 = vadd.f32 %v433, %v646
        %648 = vmatmul.f32.gmra.mxu0 %v354
        %v649 = vpop.f32.mrf.mxu0
        %v650 = vadd.f32 %v433, %v649
        %651 = vmatmul.f32.gmra.mxu0 %v355
        %v652 = vpop.f32.mrf.mxu0
        %v653 = vadd.f32 %v433, %v652
        %654 = vmatmul.f32.gmra.mxu0 %v356
        %v655 = vpop.f32.mrf.mxu0
        %v656 = vadd.f32 %v433, %v655
        %657 = vmatmul.f32.gmra.mxu0 %v357
        %v658 = vpop.f32.mrf.mxu0
        %v659 = vadd.f32 %v433, %v658
        %660 = vmatmul.f32.gmra.mxu0 %v358
        %v661 = vpop.f32.mrf.mxu0
        %v662 = vadd.f32 %v433, %v661
        %663 = vmatmul.f32.gmra.mxu0 %v359
        %v664 = vpop.f32.mrf.mxu0
        %v665 = vadd.f32 %v433, %v664
        %666 = vmatmul.f32.gmra.mxu0 %v360
        %v667 = vpop.f32.mrf.mxu0
        %v668 = vadd.f32 %v433, %v667
        %669 = vmatmul.f32.gmra.mxu0 %v361
        %v670 = vpop.f32.mrf.mxu0
        %v671 = vadd.f32 %v433, %v670
        %672 = vmatmul.f32.gmra.mxu0 %v362
        %v673 = vpop.f32.mrf.mxu0
        %v674 = vadd.f32 %v433, %v673
        %675 = vmatmul.f32.gmra.mxu0 %v363
        %v676 = vpop.f32.mrf.mxu0
        %v677 = vadd.f32 %v433, %v676
        %678 = vmatmul.f32.gmra.mxu0 %v364
        %v679 = vpop.f32.mrf.mxu0
        %v680 = vadd.f32 %v433, %v679
        %681 = vmatmul.f32.gmra.mxu0 %v365
        %v682 = vpop.f32.mrf.mxu0
        %v683 = vadd.f32 %v433, %v682
        %684 = vmatmul.f32.gmra.mxu0 %v366
        %v685 = vpop.f32.mrf.mxu0
        %v686 = vadd.f32 %v433, %v685
        %687 = vmatmul.f32.gmra.mxu0 %v367
        %v688 = vpop.f32.mrf.mxu0
        %v689 = vadd.f32 %v433, %v688
        %690 = vmatmul.f32.gmra.mxu0 %v368
        %v691 = vpop.f32.mrf.mxu0
        %v692 = vadd.f32 %v433, %v691
        %693 = vmatmul.f32.gmra.mxu0 %v369
        %v694 = vpop.f32.mrf.mxu0
        %v695 = vadd.f32 %v433, %v694
        %696 = vmatmul.f32.gmra.mxu0 %v370
        %v697 = vpop.f32.mrf.mxu0
        %v698 = vadd.f32 %v433, %v697
        %699 = vmatmul.f32.gmra.mxu0 %v371
        %v700 = vpop.f32.mrf.mxu0
        %v701 = vadd.f32 %v433, %v700
        %702 = vmatmul.f32.gmra.mxu0 %v372
        %v703 = vpop.f32.mrf.mxu0
        %v704 = vadd.f32 %v433, %v703
        %705 = vmatmul.f32.gmra.mxu0 %v373
        %v706 = vpop.f32.mrf.mxu0
        %v707 = vadd.f32 %v433, %v706
        %708 = vmatmul.f32.gmra.mxu0 %v374
        %v709 = vpop.f32.mrf.mxu0
        %v710 = vadd.f32 %v433, %v709
        %711 = vmatmul.f32.gmra.mxu0 %v375
        %v712 = vpop.f32.mrf.mxu0
        %v713 = vadd.f32 %v433, %v712
        %714 = vmatmul.f32.gmra.mxu0 %v376
        %v715 = vpop.f32.mrf.mxu0
        %v716 = vadd.f32 %v433, %v715
        %717 = vmatmul.f32.gmra.mxu0 %v377
        %v718 = vpop.f32.mrf.mxu0
        %v719 = vadd.f32 %v433, %v718
        %720 = vmatmul.f32.gmra.mxu0 %v378
        %v721 = vpop.f32.mrf.mxu0
        %v722 = vadd.f32 %v433, %v721
        %723 = vmatmul.f32.gmra.mxu0 %v379
        %v724 = vpop.f32.mrf.mxu0
        %v725 = vadd.f32 %v433, %v724
        %726 = vmatmul.f32.gmra.mxu0 %v380
        %v727 = vpop.f32.mrf.mxu0
        %v728 = vadd.f32 %v433, %v727
        %729 = vmatmul.f32.gmra.mxu0 %v381
        %v730 = vpop.f32.mrf.mxu0
        %v731 = vadd.f32 %v433, %v730
        %732 = vmatmul.f32.gmra.mxu0 %v382
        %v733 = vpop.f32.mrf.mxu0
        %v734 = vadd.f32 %v433, %v733
        %735 = vmatmul.f32.gmra.mxu0 %v383
        %v736 = vpop.f32.mrf.mxu0
        %v737 = vadd.f32 %v433, %v736
        %738 = vmatmul.f32.gmra.mxu0 %v384
        %v739 = vpop.f32.mrf.mxu0
        %v740 = vadd.f32 %v433, %v739
        %741 = vmatmul.f32.gmra.mxu0 %v385
        %v742 = vpop.f32.mrf.mxu0
        %v743 = vadd.f32 %v433, %v742
        %744 = vmatmul.f32.gmra.mxu0 %v386
        %v745 = vpop.f32.mrf.mxu0
        %v746 = vadd.f32 %v433, %v745
        %747 = vmatmul.f32.gmra.mxu0 %v387
        %v748 = vpop.f32.mrf.mxu0
        %v749 = vadd.f32 %v433, %v748
        %750 = vmatmul.f32.gmra.mxu0 %v388
        %v751 = vpop.f32.mrf.mxu0
        %v752 = vadd.f32 %v433, %v751
        %753 = vmatmul.f32.gmra.mxu0 %v389
        %v754 = vpop.f32.mrf.mxu0
        %v755 = vadd.f32 %v433, %v754
        %756 = vmatmul.f32.gmra.mxu0 %v390
        %v757 = vpop.f32.mrf.mxu0
        %v758 = vadd.f32 %v433, %v757
        %759 = vmatmul.f32.gmra.mxu0 %v391
        %v760 = vpop.f32.mrf.mxu0
        %v761 = vadd.f32 %v433, %v760
        %762 = vmatmul.f32.gmra.mxu0 %v392
        %v763 = vpop.f32.mrf.mxu0
        %v764 = vadd.f32 %v433, %v763
        %765 = vmatmul.f32.gmra.mxu0 %v393
        %v766 = vpop.f32.mrf.mxu0
        %v767 = vadd.f32 %v433, %v766
        %768 = vmatmul.f32.gmra.mxu0 %v394
        %v769 = vpop.f32.mrf.mxu0
        %v770 = vadd.f32 %v433, %v769
        %771 = vmatmul.f32.gmra.mxu0 %v395
        %v772 = vpop.f32.mrf.mxu0
        %v773 = vadd.f32 %v433, %v772
        %774 = vmatmul.f32.gmra.mxu0 %v396
        %v775 = vpop.f32.mrf.mxu0
        %v776 = vadd.f32 %v433, %v775
        %777 = vmatmul.f32.gmra.mxu0 %v397
        %v778 = vpop.f32.mrf.mxu0
        %v779 = vadd.f32 %v433, %v778
        %780 = vmatmul.f32.gmra.mxu0 %v398
        %v781 = vpop.f32.mrf.mxu0
        %v782 = vadd.f32 %v433, %v781
        %783 = vmatmul.f32.gmra.mxu0 %v399
        %v784 = vpop.f32.mrf.mxu0
        %v785 = vadd.f32 %v433, %v784
        %786 = vmatmul.f32.gmra.mxu0 %v400
        %v787 = vpop.f32.mrf.mxu0
        %v788 = vadd.f32 %v433, %v787
        %789 = vmatmul.f32.gmra.mxu0 %v401
        %v790 = vpop.f32.mrf.mxu0
        %v791 = vadd.f32 %v433, %v790
        %792 = vmatmul.f32.gmra.mxu0 %v402
        %v793 = vpop.f32.mrf.mxu0
        %v794 = vadd.f32 %v433, %v793
        %795 = vmatmul.f32.gmra.mxu0 %v403
        %v796 = vpop.f32.mrf.mxu0
        %v797 = vadd.f32 %v433, %v796
        %798 = vmatmul.f32.gmra.mxu0 %v404
        %v799 = vpop.f32.mrf.mxu0
        %v800 = vadd.f32 %v433, %v799
        %801 = vmatmul.f32.gmra.mxu0 %v405
        %v802 = vpop.f32.mrf.mxu0
        %v803 = vadd.f32 %v433, %v802
        %804 = vmatmul.f32.gmra.mxu0 %v406
        %v805 = vpop.f32.mrf.mxu0
        %v806 = vadd.f32 %v433, %v805
        %807 = vmatmul.f32.gmra.mxu0 %v407
        %v808 = vpop.f32.mrf.mxu0
        %v809 = vadd.f32 %v433, %v808
        %810 = vmatmul.f32.gmra.mxu0 %v408
        %v811 = vpop.f32.mrf.mxu0
        %v812 = vadd.f32 %v433, %v811
        %813 = vmatmul.f32.gmra.mxu0 %v409
        %v814 = vpop.f32.mrf.mxu0
        %v815 = vadd.f32 %v433, %v814
        %816 = vmatmul.f32.gmra.mxu0 %v410
        %v817 = vpop.f32.mrf.mxu0
        %v818 = vadd.f32 %v433, %v817
        %819 = vmatmul.f32.gmra.mxu0 %v411
        %v820 = vpop.f32.mrf.mxu0
        %v821 = vadd.f32 %v433, %v820
        %822 = vmatmul.f32.gmra.mxu0 %v412
        %v823 = vpop.f32.mrf.mxu0
        %v824 = vadd.f32 %v433, %v823
        %825 = vmatmul.f32.gmra.mxu0 %v413
        %v826 = vpop.f32.mrf.mxu0
        %v827 = vadd.f32 %v433, %v826
        %828 = vmatmul.f32.gmra.mxu0 %v414
        %v829 = vpop.f32.mrf.mxu0
        %v830 = vadd.f32 %v433, %v829
        %831 = vmatmul.f32.gmra.mxu0 %v415
        %v832 = vpop.f32.mrf.mxu0
        %v833 = vadd.f32 %v433, %v832
        %834 = vdwg.mxu0
        %835 = vadd.xlane.f32.xlu0 %v452
        %v836 = vpop.xlane.xlu0 %835
        %837 = vadd.xlane.f32.xlu0 %v455
        %v838 = vpop.xlane.xlu0 %837
        %839 = vadd.xlane.f32.xlu0 %v458
        %v840 = vpop.xlane.xlu0 %839
        %841 = vadd.xlane.f32.xlu0 %v461
        %v842 = vpop.xlane.xlu0 %841
        %843 = vadd.xlane.f32.xlu0 %v464
        %v844 = vpop.xlane.xlu0 %843
        %845 = vadd.xlane.f32.xlu0 %v467
        %v846 = vpop.xlane.xlu0 %845
        %847 = vadd.xlane.f32.xlu0 %v470
        %v848 = vpop.xlane.xlu0 %847
        %849 = vadd.xlane.f32.xlu0 %v473
        %v850 = vpop.xlane.xlu0 %849
        %851 = vadd.xlane.f32.xlu0 %v476
        %v852 = vpop.xlane.xlu0 %851
        %853 = vadd.xlane.f32.xlu0 %v479
        %v854 = vpop.xlane.xlu0 %853
        %855 = vadd.xlane.f32.xlu0 %v482
        %v856 = vpop.xlane.xlu0 %855
        %857 = vadd.xlane.f32.xlu0 %v485
        %v858 = vpop.xlane.xlu0 %857
        %859 = vadd.xlane.f32.xlu0 %v488
        %v860 = vpop.xlane.xlu0 %859
        %861 = vadd.xlane.f32.xlu0 %v491
        %v862 = vpop.xlane.xlu0 %861
        %863 = vadd.xlane.f32.xlu0 %v494
        %v864 = vpop.xlane.xlu0 %863
        %865 = vadd.xlane.f32.xlu0 %v497
        %v866 = vpop.xlane.xlu0 %865
        %867 = vadd.xlane.f32.xlu0 %v500
        %v868 = vpop.xlane.xlu0 %867
        %869 = vadd.xlane.f32.xlu0 %v503
        %v870 = vpop.xlane.xlu0 %869
        %871 = vadd.xlane.f32.xlu0 %v506
        %v872 = vpop.xlane.xlu0 %871
        %873 = vadd.xlane.f32.xlu0 %v509
        %v874 = vpop.xlane.xlu0 %873
        %875 = vadd.xlane.f32.xlu0 %v512
        %v876 = vpop.xlane.xlu0 %875
        %877 = vadd.xlane.f32.xlu0 %v515
        %v878 = vpop.xlane.xlu0 %877
        %879 = vadd.xlane.f32.xlu0 %v518
        %v880 = vpop.xlane.xlu0 %879
        %881 = vadd.xlane.f32.xlu0 %v521
        %v882 = vpop.xlane.xlu0 %881
        %883 = vadd.xlane.f32.xlu0 %v524
        %v884 = vpop.xlane.xlu0 %883
        %885 = vadd.xlane.f32.xlu0 %v527
        %v886 = vpop.xlane.xlu0 %885
        %887 = vadd.xlane.f32.xlu0 %v530
        %v888 = vpop.xlane.xlu0 %887
        %889 = vadd.xlane.f32.xlu0 %v533
        %v890 = vpop.xlane.xlu0 %889
        %891 = vadd.xlane.f32.xlu0 %v536
        %v892 = vpop.xlane.xlu0 %891
        %893 = vadd.xlane.f32.xlu0 %v539
        %v894 = vpop.xlane.xlu0 %893
        %895 = vadd.xlane.f32.xlu0 %v542
        %v896 = vpop.xlane.xlu0 %895
        %897 = vadd.xlane.f32.xlu0 %v545
        %v898 = vpop.xlane.xlu0 %897
        %899 = vadd.xlane.f32.xlu0 %v548
        %v900 = vpop.xlane.xlu0 %899
        %901 = vadd.xlane.f32.xlu0 %v551
        %v902 = vpop.xlane.xlu0 %901
        %903 = vadd.xlane.f32.xlu0 %v554
        %v904 = vpop.xlane.xlu0 %903
        %905 = vadd.xlane.f32.xlu0 %v557
        %v906 = vpop.xlane.xlu0 %905
        %907 = vadd.xlane.f32.xlu0 %v560
        %v908 = vpop.xlane.xlu0 %907
        %909 = vadd.xlane.f32.xlu0 %v563
        %v910 = vpop.xlane.xlu0 %909
        %911 = vadd.xlane.f32.xlu0 %v566
        %v912 = vpop.xlane.xlu0 %911
        %913 = vadd.xlane.f32.xlu0 %v569
        %v914 = vpop.xlane.xlu0 %913
        %915 = vadd.xlane.f32.xlu0 %v572
        %v916 = vpop.xlane.xlu0 %915
        %917 = vadd.xlane.f32.xlu0 %v575
        %v918 = vpop.xlane.xlu0 %917
        %919 = vadd.xlane.f32.xlu0 %v578
        %v920 = vpop.xlane.xlu0 %919
        %921 = vadd.xlane.f32.xlu0 %v581
        %v922 = vpop.xlane.xlu0 %921
        %923 = vadd.xlane.f32.xlu0 %v584
        %v924 = vpop.xlane.xlu0 %923
        %925 = vadd.xlane.f32.xlu0 %v587
        %v926 = vpop.xlane.xlu0 %925
        %927 = vadd.xlane.f32.xlu0 %v590
        %v928 = vpop.xlane.xlu0 %927
        %929 = vadd.xlane.f32.xlu0 %v593
        %v930 = vpop.xlane.xlu0 %929
        %931 = vadd.xlane.f32.xlu0 %v596
        %v932 = vpop.xlane.xlu0 %931
        %933 = vadd.xlane.f32.xlu0 %v599
        %v934 = vpop.xlane.xlu0 %933
        %935 = vadd.xlane.f32.xlu0 %v602
        %v936 = vpop.xlane.xlu0 %935
        %937 = vadd.xlane.f32.xlu0 %v605
        %v938 = vpop.xlane.xlu0 %937
        %939 = vadd.xlane.f32.xlu0 %v608
        %v940 = vpop.xlane.xlu0 %939
        %941 = vadd.xlane.f32.xlu0 %v611
        %v942 = vpop.xlane.xlu0 %941
        %943 = vadd.xlane.f32.xlu0 %v614
        %v944 = vpop.xlane.xlu0 %943
        %945 = vadd.xlane.f32.xlu0 %v617
        %v946 = vpop.xlane.xlu0 %945
        %947 = vadd.xlane.f32.xlu0 %v620
        %v948 = vpop.xlane.xlu0 %947
        %949 = vadd.xlane.f32.xlu0 %v623
        %v950 = vpop.xlane.xlu0 %949
        %951 = vadd.xlane.f32.xlu0 %v626
        %v952 = vpop.xlane.xlu0 %951
        %953 = vadd.xlane.f32.xlu0 %v629
        %v954 = vpop.xlane.xlu0 %953
        %955 = vadd.xlane.f32.xlu0 %v632
        %v956 = vpop.xlane.xlu0 %955
        %957 = vadd.xlane.f32.xlu0 %v635
        %v958 = vpop.xlane.xlu0 %957
        %959 = vadd.xlane.f32.xlu0 %v638
        %v960 = vpop.xlane.xlu0 %959
        %961 = vadd.xlane.f32.xlu0 %v641
        %v962 = vpop.xlane.xlu0 %961
        %963 = vadd.xlane.f32.xlu0 %v644
        %v964 = vpop.xlane.xlu0 %963
        %965 = vadd.xlane.f32.xlu0 %v647
        %v966 = vpop.xlane.xlu0 %965
        %967 = vadd.xlane.f32.xlu0 %v650
        %v968 = vpop.xlane.xlu0 %967
        %969 = vadd.xlane.f32.xlu0 %v653
        %v970 = vpop.xlane.xlu0 %969
        %971 = vadd.xlane.f32.xlu0 %v656
        %v972 = vpop.xlane.xlu0 %971
        %973 = vadd.xlane.f32.xlu0 %v659
        %v974 = vpop.xlane.xlu0 %973
        %975 = vadd.xlane.f32.xlu0 %v662
        %v976 = vpop.xlane.xlu0 %975
        %977 = vadd.xlane.f32.xlu0 %v665
        %v978 = vpop.xlane.xlu0 %977
        %979 = vadd.xlane.f32.xlu0 %v668
        %v980 = vpop.xlane.xlu0 %979
        %981 = vadd.xlane.f32.xlu0 %v671
        %v982 = vpop.xlane.xlu0 %981
        %983 = vadd.xlane.f32.xlu0 %v674
        %v984 = vpop.xlane.xlu0 %983
        %985 = vadd.xlane.f32.xlu0 %v677
        %v986 = vpop.xlane.xlu0 %985
        %987 = vadd.xlane.f32.xlu0 %v680
        %v988 = vpop.xlane.xlu0 %987
        %989 = vadd.xlane.f32.xlu0 %v683
        %v990 = vpop.xlane.xlu0 %989
        %991 = vadd.xlane.f32.xlu0 %v686
        %v992 = vpop.xlane.xlu0 %991
        %993 = vadd.xlane.f32.xlu0 %v689
        %v994 = vpop.xlane.xlu0 %993
        %995 = vadd.xlane.f32.xlu0 %v692
        %v996 = vpop.xlane.xlu0 %995
        %997 = vadd.xlane.f32.xlu0 %v695
        %v998 = vpop.xlane.xlu0 %997
        %999 = vadd.xlane.f32.xlu0 %v698
        %v1000 = vpop.xlane.xlu0 %999
        %1001 = vadd.xlane.f32.xlu0 %v701
        %v1002 = vpop.xlane.xlu0 %1001
        %1003 = vadd.xlane.f32.xlu0 %v704
        %v1004 = vpop.xlane.xlu0 %1003
        %1005 = vadd.xlane.f32.xlu0 %v707
        %v1006 = vpop.xlane.xlu0 %1005
        %1007 = vadd.xlane.f32.xlu0 %v710
        %v1008 = vpop.xlane.xlu0 %1007
        %1009 = vadd.xlane.f32.xlu0 %v713
        %v1010 = vpop.xlane.xlu0 %1009
        %1011 = vadd.xlane.f32.xlu0 %v716
        %v1012 = vpop.xlane.xlu0 %1011
        %1013 = vadd.xlane.f32.xlu0 %v719
        %v1014 = vpop.xlane.xlu0 %1013
        %1015 = vadd.xlane.f32.xlu0 %v722
        %v1016 = vpop.xlane.xlu0 %1015
        %1017 = vadd.xlane.f32.xlu0 %v725
        %v1018 = vpop.xlane.xlu0 %1017
        %1019 = vadd.xlane.f32.xlu0 %v728
        %v1020 = vpop.xlane.xlu0 %1019
        %1021 = vadd.xlane.f32.xlu0 %v731
        %v1022 = vpop.xlane.xlu0 %1021
        %1023 = vadd.xlane.f32.xlu0 %v734
        %v1024 = vpop.xlane.xlu0 %1023
        %1025 = vadd.xlane.f32.xlu0 %v737
        %v1026 = vpop.xlane.xlu0 %1025
        %1027 = vadd.xlane.f32.xlu0 %v740
        %v1028 = vpop.xlane.xlu0 %1027
        %1029 = vadd.xlane.f32.xlu0 %v743
        %v1030 = vpop.xlane.xlu0 %1029
        %1031 = vadd.xlane.f32.xlu0 %v746
        %v1032 = vpop.xlane.xlu0 %1031
        %1033 = vadd.xlane.f32.xlu0 %v749
        %v1034 = vpop.xlane.xlu0 %1033
        %1035 = vadd.xlane.f32.xlu0 %v752
        %v1036 = vpop.xlane.xlu0 %1035
        %1037 = vadd.xlane.f32.xlu0 %v755
        %v1038 = vpop.xlane.xlu0 %1037
        %1039 = vadd.xlane.f32.xlu0 %v758
        %v1040 = vpop.xlane.xlu0 %1039
        %1041 = vadd.xlane.f32.xlu0 %v761
        %v1042 = vpop.xlane.xlu0 %1041
        %1043 = vadd.xlane.f32.xlu0 %v764
        %v1044 = vpop.xlane.xlu0 %1043
        %1045 = vadd.xlane.f32.xlu0 %v767
        %v1046 = vpop.xlane.xlu0 %1045
        %1047 = vadd.xlane.f32.xlu0 %v770
        %v1048 = vpop.xlane.xlu0 %1047
        %1049 = vadd.xlane.f32.xlu0 %v773
        %v1050 = vpop.xlane.xlu0 %1049
        %1051 = vadd.xlane.f32.xlu0 %v776
        %v1052 = vpop.xlane.xlu0 %1051
        %1053 = vadd.xlane.f32.xlu0 %v779
        %v1054 = vpop.xlane.xlu0 %1053
        %1055 = vadd.xlane.f32.xlu0 %v782
        %v1056 = vpop.xlane.xlu0 %1055
        %1057 = vadd.xlane.f32.xlu0 %v785
        %v1058 = vpop.xlane.xlu0 %1057
        %1059 = vadd.xlane.f32.xlu0 %v788
        %v1060 = vpop.xlane.xlu0 %1059
        %1061 = vadd.xlane.f32.xlu0 %v791
        %v1062 = vpop.xlane.xlu0 %1061
        %1063 = vadd.xlane.f32.xlu0 %v794
        %v1064 = vpop.xlane.xlu0 %1063
        %1065 = vadd.xlane.f32.xlu0 %v797
        %v1066 = vpop.xlane.xlu0 %1065
        %1067 = vadd.xlane.f32.xlu0 %v800
        %v1068 = vpop.xlane.xlu0 %1067
        %1069 = vadd.xlane.f32.xlu0 %v803
        %v1070 = vpop.xlane.xlu0 %1069
        %1071 = vadd.xlane.f32.xlu0 %v806
        %v1072 = vpop.xlane.xlu0 %1071
        %1073 = vadd.xlane.f32.xlu0 %v809
        %v1074 = vpop.xlane.xlu0 %1073
        %1075 = vadd.xlane.f32.xlu0 %v812
        %v1076 = vpop.xlane.xlu0 %1075
        %1077 = vadd.xlane.f32.xlu0 %v815
        %v1078 = vpop.xlane.xlu0 %1077
        %1079 = vadd.xlane.f32.xlu0 %v818
        %v1080 = vpop.xlane.xlu0 %1079
        %1081 = vadd.xlane.f32.xlu0 %v821
        %v1082 = vpop.xlane.xlu0 %1081
        %1083 = vadd.xlane.f32.xlu0 %v824
        %v1084 = vpop.xlane.xlu0 %1083
        %1085 = vadd.xlane.f32.xlu0 %v827
        %v1086 = vpop.xlane.xlu0 %1085
        %1087 = vadd.xlane.f32.xlu0 %v830
        %v1088 = vpop.xlane.xlu0 %1087
        %1089 = vadd.xlane.f32.xlu0 %v833
        %v1090 = vpop.xlane.xlu0 %1089
        %v1091 = vrcp.pop 128.0
        %v1092 = vmul.f32 128.0, %v1091
        %v1093 = vsub.f32 1.0, %v1092
        %v1094 = vmul.f32 %v1091, %v1093
        %v1095 = vadd.f32 %v1091, %v1094
        %vm1096 = vweird.f32 %v1091
        %v1097 = vsel %vm1096, %v1091, %v1095
        %v1098 = vmul.f32 %v836, %v1097
        %v1099 = vmul.f32 %v838, %v1097
        %v1100 = vmul.f32 %v840, %v1097
        %v1101 = vmul.f32 %v842, %v1097
        %v1102 = vmul.f32 %v844, %v1097
        %v1103 = vmul.f32 %v846, %v1097
        %v1104 = vmul.f32 %v848, %v1097
        %v1105 = vmul.f32 %v850, %v1097
        %v1106 = vmul.f32 %v852, %v1097
        %v1107 = vmul.f32 %v854, %v1097
        %v1108 = vmul.f32 %v856, %v1097
        %v1109 = vmul.f32 %v858, %v1097
        %v1110 = vmul.f32 %v860, %v1097
        %v1111 = vmul.f32 %v862, %v1097
        %v1112 = vmul.f32 %v864, %v1097
        %v1113 = vmul.f32 %v866, %v1097
        %v1114 = vmul.f32 %v868, %v1097
        %v1115 = vmul.f32 %v870, %v1097
        %v1116 = vmul.f32 %v872, %v1097
        %v1117 = vmul.f32 %v874, %v1097
        %v1118 = vmul.f32 %v876, %v1097
        %v1119 = vmul.f32 %v878, %v1097
        %v1120 = vmul.f32 %v880, %v1097
        %v1121 = vmul.f32 %v882, %v1097
        %v1122 = vmul.f32 %v884, %v1097
        %v1123 = vmul.f32 %v886, %v1097
        %v1124 = vmul.f32 %v888, %v1097
        %v1125 = vmul.f32 %v890, %v1097
        %v1126 = vmul.f32 %v892, %v1097
        %v1127 = vmul.f32 %v894, %v1097
        %v1128 = vmul.f32 %v896, %v1097
        %v1129 = vmul.f32 %v898, %v1097
        %v1130 = vmul.f32 %v900, %v1097
        %v1131 = vmul.f32 %v902, %v1097
        %v1132 = vmul.f32 %v904, %v1097
        %v1133 = vmul.f32 %v906, %v1097
        %v1134 = vmul.f32 %v908, %v1097
        %v1135 = vmul.f32 %v910, %v1097
        %v1136 = vmul.f32 %v912, %v1097
        %v1137 = vmul.f32 %v914, %v1097
        %v1138 = vmul.f32 %v916, %v1097
        %v1139 = vmul.f32 %v918, %v1097
        %v1140 = vmul.f32 %v920, %v1097
        %v1141 = vmul.f32 %v922, %v1097
        %v1142 = vmul.f32 %v924, %v1097
        %v1143 = vmul.f32 %v926, %v1097
        %v1144 = vmul.f32 %v928, %v1097
        %v1145 = vmul.f32 %v930, %v1097
        %v1146 = vmul.f32 %v932, %v1097
        %v1147 = vmul.f32 %v934, %v1097
        %v1148 = vmul.f32 %v936, %v1097
        %v1149 = vmul.f32 %v938, %v1097
        %v1150 = vmul.f32 %v940, %v1097
        %v1151 = vmul.f32 %v942, %v1097
        %v1152 = vmul.f32 %v944, %v1097
        %v1153 = vmul.f32 %v946, %v1097
        %v1154 = vmul.f32 %v948, %v1097
        %v1155 = vmul.f32 %v950, %v1097
        %v1156 = vmul.f32 %v952, %v1097
        %v1157 = vmul.f32 %v954, %v1097
        %v1158 = vmul.f32 %v956, %v1097
        %v1159 = vmul.f32 %v958, %v1097
        %v1160 = vmul.f32 %v960, %v1097
        %v1161 = vmul.f32 %v962, %v1097
        %v1162 = vmul.f32 %v964, %v1097
        %v1163 = vmul.f32 %v966, %v1097
        %v1164 = vmul.f32 %v968, %v1097
        %v1165 = vmul.f32 %v970, %v1097
        %v1166 = vmul.f32 %v972, %v1097
        %v1167 = vmul.f32 %v974, %v1097
        %v1168 = vmul.f32 %v976, %v1097
        %v1169 = vmul.f32 %v978, %v1097
        %v1170 = vmul.f32 %v980, %v1097
        %v1171 = vmul.f32 %v982, %v1097
        %v1172 = vmul.f32 %v984, %v1097
        %v1173 = vmul.f32 %v986, %v1097
        %v1174 = vmul.f32 %v988, %v1097
        %v1175 = vmul.f32 %v990, %v1097
        %v1176 = vmul.f32 %v992, %v1097
        %v1177 = vmul.f32 %v994, %v1097
        %v1178 = vmul.f32 %v996, %v1097
        %v1179 = vmul.f32 %v998, %v1097
        %v1180 = vmul.f32 %v1000, %v1097
        %v1181 = vmul.f32 %v1002, %v1097
        %v1182 = vmul.f32 %v1004, %v1097
        %v1183 = vmul.f32 %v1006, %v1097
        %v1184 = vmul.f32 %v1008, %v1097
        %v1185 = vmul.f32 %v1010, %v1097
        %v1186 = vmul.f32 %v1012, %v1097
        %v1187 = vmul.f32 %v1014, %v1097
        %v1188 = vmul.f32 %v1016, %v1097
        %v1189 = vmul.f32 %v1018, %v1097
        %v1190 = vmul.f32 %v1020, %v1097
        %v1191 = vmul.f32 %v1022, %v1097
        %v1192 = vmul.f32 %v1024, %v1097
        %v1193 = vmul.f32 %v1026, %v1097
        %v1194 = vmul.f32 %v1028, %v1097
        %v1195 = vmul.f32 %v1030, %v1097
        %v1196 = vmul.f32 %v1032, %v1097
        %v1197 = vmul.f32 %v1034, %v1097
        %v1198 = vmul.f32 %v1036, %v1097
        %v1199 = vmul.f32 %v1038, %v1097
        %v1200 = vmul.f32 %v1040, %v1097
        %v1201 = vmul.f32 %v1042, %v1097
        %v1202 = vmul.f32 %v1044, %v1097
        %v1203 = vmul.f32 %v1046, %v1097
        %v1204 = vmul.f32 %v1048, %v1097
        %v1205 = vmul.f32 %v1050, %v1097
        %v1206 = vmul.f32 %v1052, %v1097
        %v1207 = vmul.f32 %v1054, %v1097
        %v1208 = vmul.f32 %v1056, %v1097
        %v1209 = vmul.f32 %v1058, %v1097
        %v1210 = vmul.f32 %v1060, %v1097
        %v1211 = vmul.f32 %v1062, %v1097
        %v1212 = vmul.f32 %v1064, %v1097
        %v1213 = vmul.f32 %v1066, %v1097
        %v1214 = vmul.f32 %v1068, %v1097
        %v1215 = vmul.f32 %v1070, %v1097
        %v1216 = vmul.f32 %v1072, %v1097
        %v1217 = vmul.f32 %v1074, %v1097
        %v1218 = vmul.f32 %v1076, %v1097
        %v1219 = vmul.f32 %v1078, %v1097
        %v1220 = vmul.f32 %v1080, %v1097
        %v1221 = vmul.f32 %v1082, %v1097
        %v1222 = vmul.f32 %v1084, %v1097
        %v1223 = vmul.f32 %v1086, %v1097
        %v1224 = vmul.f32 %v1088, %v1097
        %v1225 = vmul.f32 %v1090, %v1097
        %v1226 = vmul.f32 %v452, %v452
        %v1227 = vmul.f32 %v455, %v455
        %v1228 = vmul.f32 %v458, %v458
        %v1229 = vmul.f32 %v461, %v461
        %v1230 = vmul.f32 %v464, %v464
        %v1231 = vmul.f32 %v467, %v467
        %v1232 = vmul.f32 %v470, %v470
        %v1233 = vmul.f32 %v473, %v473
        %v1234 = vmul.f32 %v476, %v476
        %v1235 = vmul.f32 %v479, %v479
        %v1236 = vmul.f32 %v482, %v482
        %v1237 = vmul.f32 %v485, %v485
        %v1238 = vmul.f32 %v488, %v488
        %v1239 = vmul.f32 %v491, %v491
        %v1240 = vmul.f32 %v494, %v494
        %v1241 = vmul.f32 %v497, %v497
        %v1242 = vmul.f32 %v500, %v500
        %v1243 = vmul.f32 %v503, %v503
        %v1244 = vmul.f32 %v506, %v506
        %v1245 = vmul.f32 %v509, %v509
        %v1246 = vmul.f32 %v512, %v512
        %v1247 = vmul.f32 %v515, %v515
        %v1248 = vmul.f32 %v518, %v518
        %v1249 = vmul.f32 %v521, %v521
        %v1250 = vmul.f32 %v524, %v524
        %v1251 = vmul.f32 %v527, %v527
        %v1252 = vmul.f32 %v530, %v530
        %v1253 = vmul.f32 %v533, %v533
        %v1254 = vmul.f32 %v536, %v536
        %v1255 = vmul.f32 %v539, %v539
        %v1256 = vmul.f32 %v542, %v542
        %v1257 = vmul.f32 %v545, %v545
        %v1258 = vmul.f32 %v548, %v548
        %v1259 = vmul.f32 %v551, %v551
        %v1260 = vmul.f32 %v554, %v554
        %v1261 = vmul.f32 %v557, %v557
        %v1262 = vmul.f32 %v560, %v560
        %v1263 = vmul.f32 %v563, %v563
        %v1264 = vmul.f32 %v566, %v566
        %v1265 = vmul.f32 %v569, %v569
        %v1266 = vmul.f32 %v572, %v572
        %v1267 = vmul.f32 %v575, %v575
        %v1268 = vmul.f32 %v578, %v578
        %v1269 = vmul.f32 %v581, %v581
        %v1270 = vmul.f32 %v584, %v584
        %v1271 = vmul.f32 %v587, %v587
        %v1272 = vmul.f32 %v590, %v590
        %v1273 = vmul.f32 %v593, %v593
        %v1274 = vmul.f32 %v596, %v596
        %v1275 = vmul.f32 %v599, %v599
        %v1276 = vmul.f32 %v602, %v602
        %v1277 = vmul.f32 %v605, %v605
        %v1278 = vmul.f32 %v608, %v608
        %v1279 = vmul.f32 %v611, %v611
        %v1280 = vmul.f32 %v614, %v614
        %v1281 = vmul.f32 %v617, %v617
        %v1282 = vmul.f32 %v620, %v620
        %v1283 = vmul.f32 %v623, %v623
        %v1284 = vmul.f32 %v626, %v626
        %v1285 = vmul.f32 %v629, %v629
        %v1286 = vmul.f32 %v632, %v632
        %v1287 = vmul.f32 %v635, %v635
        %v1288 = vmul.f32 %v638, %v638
        %v1289 = vmul.f32 %v641, %v641
        %v1290 = vmul.f32 %v644, %v644
        %v1291 = vmul.f32 %v647, %v647
        %v1292 = vmul.f32 %v650, %v650
        %v1293 = vmul.f32 %v653, %v653
        %v1294 = vmul.f32 %v656, %v656
        %v1295 = vmul.f32 %v659, %v659
        %v1296 = vmul.f32 %v662, %v662
        %v1297 = vmul.f32 %v665, %v665
        %v1298 = vmul.f32 %v668, %v668
        %v1299 = vmul.f32 %v671, %v671
        %v1300 = vmul.f32 %v674, %v674
        %v1301 = vmul.f32 %v677, %v677
        %v1302 = vmul.f32 %v680, %v680
        %v1303 = vmul.f32 %v683, %v683
        %v1304 = vmul.f32 %v686, %v686
        %v1305 = vmul.f32 %v689, %v689
        %v1306 = vmul.f32 %v692, %v692
        %v1307 = vmul.f32 %v695, %v695
        %v1308 = vmul.f32 %v698, %v698
        %v1309 = vmul.f32 %v701, %v701
        %v1310 = vmul.f32 %v704, %v704
        %v1311 = vmul.f32 %v707, %v707
        %v1312 = vmul.f32 %v710, %v710
        %v1313 = vmul.f32 %v713, %v713
        %v1314 = vmul.f32 %v716, %v716
        %v1315 = vmul.f32 %v719, %v719
        %v1316 = vmul.f32 %v722, %v722
        %v1317 = vmul.f32 %v725, %v725
        %v1318 = vmul.f32 %v728, %v728
        %v1319 = vmul.f32 %v731, %v731
        %v1320 = vmul.f32 %v734, %v734
        %v1321 = vmul.f32 %v737, %v737
        %v1322 = vmul.f32 %v740, %v740
        %v1323 = vmul.f32 %v743, %v743
        %v1324 = vmul.f32 %v746, %v746
        %v1325 = vmul.f32 %v749, %v749
        %v1326 = vmul.f32 %v752, %v752
        %v1327 = vmul.f32 %v755, %v755
        %v1328 = vmul.f32 %v758, %v758
        %v1329 = vmul.f32 %v761, %v761
        %v1330 = vmul.f32 %v764, %v764
        %v1331 = vmul.f32 %v767, %v767
        %v1332 = vmul.f32 %v770, %v770
        %v1333 = vmul.f32 %v773, %v773
        %v1334 = vmul.f32 %v776, %v776
        %v1335 = vmul.f32 %v779, %v779
        %v1336 = vmul.f32 %v782, %v782
        %v1337 = vmul.f32 %v785, %v785
        %v1338 = vmul.f32 %v788, %v788
        %v1339 = vmul.f32 %v791, %v791
        %v1340 = vmul.f32 %v794, %v794
        %v1341 = vmul.f32 %v797, %v797
        %v1342 = vmul.f32 %v800, %v800
        %v1343 = vmul.f32 %v803, %v803
        %v1344 = vmul.f32 %v806, %v806
        %v1345 = vmul.f32 %v809, %v809
        %v1346 = vmul.f32 %v812, %v812
        %v1347 = vmul.f32 %v815, %v815
        %v1348 = vmul.f32 %v818, %v818
        %v1349 = vmul.f32 %v821, %v821
        %v1350 = vmul.f32 %v824, %v824
        %v1351 = vmul.f32 %v827, %v827
        %v1352 = vmul.f32 %v830, %v830
        %v1353 = vmul.f32 %v833, %v833
        %1354 = vadd.xlane.f32.xlu0 %v1226
        %v1355 = vpop.xlane.xlu0 %1354
        %1356 = vadd.xlane.f32.xlu0 %v1227
        %v1357 = vpop.xlane.xlu0 %1356
        %1358 = vadd.xlane.f32.xlu0 %v1228
        %v1359 = vpop.xlane.xlu0 %1358
        %1360 = vadd.xlane.f32.xlu0 %v1229
        %v1361 = vpop.xlane.xlu0 %1360
        %1362 = vadd.xlane.f32.xlu0 %v1230
        %v1363 = vpop.xlane.xlu0 %1362
        %1364 = vadd.xlane.f32.xlu0 %v1231
        %v1365 = vpop.xlane.xlu0 %1364
        %1366 = vadd.xlane.f32.xlu0 %v1232
        %v1367 = vpop.xlane.xlu0 %1366
        %1368 = vadd.xlane.f32.xlu0 %v1233
        %v1369 = vpop.xlane.xlu0 %1368
        %1370 = vadd.xlane.f32.xlu0 %v1234
        %v1371 = vpop.xlane.xlu0 %1370
        %1372 = vadd.xlane.f32.xlu0 %v1235
        %v1373 = vpop.xlane.xlu0 %1372
        %1374 = vadd.xlane.f32.xlu0 %v1236
        %v1375 = vpop.xlane.xlu0 %1374
        %1376 = vadd.xlane.f32.xlu0 %v1237
        %v1377 = vpop.xlane.xlu0 %1376
        %1378 = vadd.xlane.f32.xlu0 %v1238
        %v1379 = vpop.xlane.xlu0 %1378
        %1380 = vadd.xlane.f32.xlu0 %v1239
        %v1381 = vpop.xlane.xlu0 %1380
        %1382 = vadd.xlane.f32.xlu0 %v1240
        %v1383 = vpop.xlane.xlu0 %1382
        %1384 = vadd.xlane.f32.xlu0 %v1241
        %v1385 = vpop.xlane.xlu0 %1384
        %1386 = vadd.xlane.f32.xlu0 %v1242
        %v1387 = vpop.xlane.xlu0 %1386
        %1388 = vadd.xlane.f32.xlu0 %v1243
        %v1389 = vpop.xlane.xlu0 %1388
        %1390 = vadd.xlane.f32.xlu0 %v1244
        %v1391 = vpop.xlane.xlu0 %1390
        %1392 = vadd.xlane.f32.xlu0 %v1245
        %v1393 = vpop.xlane.xlu0 %1392
        %1394 = vadd.xlane.f32.xlu0 %v1246
        %v1395 = vpop.xlane.xlu0 %1394
        %1396 = vadd.xlane.f32.xlu0 %v1247
        %v1397 = vpop.xlane.xlu0 %1396
        %1398 = vadd.xlane.f32.xlu0 %v1248
        %v1399 = vpop.xlane.xlu0 %1398
        %1400 = vadd.xlane.f32.xlu0 %v1249
        %v1401 = vpop.xlane.xlu0 %1400
        %1402 = vadd.xlane.f32.xlu0 %v1250
        %v1403 = vpop.xlane.xlu0 %1402
        %1404 = vadd.xlane.f32.xlu0 %v1251
        %v1405 = vpop.xlane.xlu0 %1404
        %1406 = vadd.xlane.f32.xlu0 %v1252
        %v1407 = vpop.xlane.xlu0 %1406
        %1408 = vadd.xlane.f32.xlu0 %v1253
        %v1409 = vpop.xlane.xlu0 %1408
        %1410 = vadd.xlane.f32.xlu0 %v1254
        %v1411 = vpop.xlane.xlu0 %1410
        %1412 = vadd.xlane.f32.xlu0 %v1255
        %v1413 = vpop.xlane.xlu0 %1412
        %1414 = vadd.xlane.f32.xlu0 %v1256
        %v1415 = vpop.xlane.xlu0 %1414
        %1416 = vadd.xlane.f32.xlu0 %v1257
        %v1417 = vpop.xlane.xlu0 %1416
        %1418 = vadd.xlane.f32.xlu0 %v1258
        %v1419 = vpop.xlane.xlu0 %1418
        %1420 = vadd.xlane.f32.xlu0 %v1259
        %v1421 = vpop.xlane.xlu0 %1420
        %1422 = vadd.xlane.f32.xlu0 %v1260
        %v1423 = vpop.xlane.xlu0 %1422
        %1424 = vadd.xlane.f32.xlu0 %v1261
        %v1425 = vpop.xlane.xlu0 %1424
        %1426 = vadd.xlane.f32.xlu0 %v1262
        %v1427 = vpop.xlane.xlu0 %1426
        %1428 = vadd.xlane.f32.xlu0 %v1263
        %v1429 = vpop.xlane.xlu0 %1428
        %1430 = vadd.xlane.f32.xlu0 %v1264
        %v1431 = vpop.xlane.xlu0 %1430
        %1432 = vadd.xlane.f32.xlu0 %v1265
        %v1433 = vpop.xlane.xlu0 %1432
        %1434 = vadd.xlane.f32.xlu0 %v1266
        %v1435 = vpop.xlane.xlu0 %1434
        %1436 = vadd.xlane.f32.xlu0 %v1267
        %v1437 = vpop.xlane.xlu0 %1436
        %1438 = vadd.xlane.f32.xlu0 %v1268
        %v1439 = vpop.xlane.xlu0 %1438
        %1440 = vadd.xlane.f32.xlu0 %v1269
        %v1441 = vpop.xlane.xlu0 %1440
        %1442 = vadd.xlane.f32.xlu0 %v1270
        %v1443 = vpop.xlane.xlu0 %1442
        %1444 = vadd.xlane.f32.xlu0 %v1271
        %v1445 = vpop.xlane.xlu0 %1444
        %1446 = vadd.xlane.f32.xlu0 %v1272
        %v1447 = vpop.xlane.xlu0 %1446
        %1448 = vadd.xlane.f32.xlu0 %v1273
        %v1449 = vpop.xlane.xlu0 %1448
        %1450 = vadd.xlane.f32.xlu0 %v1274
        %v1451 = vpop.xlane.xlu0 %1450
        %1452 = vadd.xlane.f32.xlu0 %v1275
        %v1453 = vpop.xlane.xlu0 %1452
        %1454 = vadd.xlane.f32.xlu0 %v1276
        %v1455 = vpop.xlane.xlu0 %1454
        %1456 = vadd.xlane.f32.xlu0 %v1277
        %v1457 = vpop.xlane.xlu0 %1456
        %1458 = vadd.xlane.f32.xlu0 %v1278
        %v1459 = vpop.xlane.xlu0 %1458
        %1460 = vadd.xlane.f32.xlu0 %v1279
        %v1461 = vpop.xlane.xlu0 %1460
        %1462 = vadd.xlane.f32.xlu0 %v1280
        %v1463 = vpop.xlane.xlu0 %1462
        %1464 = vadd.xlane.f32.xlu0 %v1281
        %v1465 = vpop.xlane.xlu0 %1464
        %1466 = vadd.xlane.f32.xlu0 %v1282
        %v1467 = vpop.xlane.xlu0 %1466
        %1468 = vadd.xlane.f32.xlu0 %v1283
        %v1469 = vpop.xlane.xlu0 %1468
        %1470 = vadd.xlane.f32.xlu0 %v1284
        %v1471 = vpop.xlane.xlu0 %1470
        %1472 = vadd.xlane.f32.xlu0 %v1285
        %v1473 = vpop.xlane.xlu0 %1472
        %1474 = vadd.xlane.f32.xlu0 %v1286
        %v1475 = vpop.xlane.xlu0 %1474
        %1476 = vadd.xlane.f32.xlu0 %v1287
        %v1477 = vpop.xlane.xlu0 %1476
        %1478 = vadd.xlane.f32.xlu0 %v1288
        %v1479 = vpop.xlane.xlu0 %1478
        %1480 = vadd.xlane.f32.xlu0 %v1289
        %v1481 = vpop.xlane.xlu0 %1480
        %1482 = vadd.xlane.f32.xlu0 %v1290
        %v1483 = vpop.xlane.xlu0 %1482
        %1484 = vadd.xlane.f32.xlu0 %v1291
        %v1485 = vpop.xlane.xlu0 %1484
        %1486 = vadd.xlane.f32.xlu0 %v1292
        %v1487 = vpop.xlane.xlu0 %1486
        %1488 = vadd.xlane.f32.xlu0 %v1293
        %v1489 = vpop.xlane.xlu0 %1488
        %1490 = vadd.xlane.f32.xlu0 %v1294
        %v1491 = vpop.xlane.xlu0 %1490
        %1492 = vadd.xlane.f32.xlu0 %v1295
        %v1493 = vpop.xlane.xlu0 %1492
        %1494 = vadd.xlane.f32.xlu0 %v1296
        %v1495 = vpop.xlane.xlu0 %1494
        %1496 = vadd.xlane.f32.xlu0 %v1297
        %v1497 = vpop.xlane.xlu0 %1496
        %1498 = vadd.xlane.f32.xlu0 %v1298
        %v1499 = vpop.xlane.xlu0 %1498
        %1500 = vadd.xlane.f32.xlu0 %v1299
        %v1501 = vpop.xlane.xlu0 %1500
        %1502 = vadd.xlane.f32.xlu0 %v1300
        %v1503 = vpop.xlane.xlu0 %1502
        %1504 = vadd.xlane.f32.xlu0 %v1301
        %v1505 = vpop.xlane.xlu0 %1504
        %1506 = vadd.xlane.f32.xlu0 %v1302
        %v1507 = vpop.xlane.xlu0 %1506
        %1508 = vadd.xlane.f32.xlu0 %v1303
        %v1509 = vpop.xlane.xlu0 %1508
        %1510 = vadd.xlane.f32.xlu0 %v1304
        %v1511 = vpop.xlane.xlu0 %1510
        %1512 = vadd.xlane.f32.xlu0 %v1305
        %v1513 = vpop.xlane.xlu0 %1512
        %1514 = vadd.xlane.f32.xlu0 %v1306
        %v1515 = vpop.xlane.xlu0 %1514
        %1516 = vadd.xlane.f32.xlu0 %v1307
        %v1517 = vpop.xlane.xlu0 %1516
        %1518 = vadd.xlane.f32.xlu0 %v1308
        %v1519 = vpop.xlane.xlu0 %1518
        %1520 = vadd.xlane.f32.xlu0 %v1309
        %v1521 = vpop.xlane.xlu0 %1520
        %1522 = vadd.xlane.f32.xlu0 %v1310
        %v1523 = vpop.xlane.xlu0 %1522
        %1524 = vadd.xlane.f32.xlu0 %v1311
        %v1525 = vpop.xlane.xlu0 %1524
        %1526 = vadd.xlane.f32.xlu0 %v1312
        %v1527 = vpop.xlane.xlu0 %1526
        %1528 = vadd.xlane.f32.xlu0 %v1313
        %v1529 = vpop.xlane.xlu0 %1528
        %1530 = vadd.xlane.f32.xlu0 %v1314
        %v1531 = vpop.xlane.xlu0 %1530
        %1532 = vadd.xlane.f32.xlu0 %v1315
        %v1533 = vpop.xlane.xlu0 %1532
        %1534 = vadd.xlane.f32.xlu0 %v1316
        %v1535 = vpop.xlane.xlu0 %1534
        %1536 = vadd.xlane.f32.xlu0 %v1317
        %v1537 = vpop.xlane.xlu0 %1536
        %1538 = vadd.xlane.f32.xlu0 %v1318
        %v1539 = vpop.xlane.xlu0 %1538
        %1540 = vadd.xlane.f32.xlu0 %v1319
        %v1541 = vpop.xlane.xlu0 %1540
        %1542 = vadd.xlane.f32.xlu0 %v1320
        %v1543 = vpop.xlane.xlu0 %1542
        %1544 = vadd.xlane.f32.xlu0 %v1321
        %v1545 = vpop.xlane.xlu0 %1544
        %1546 = vadd.xlane.f32.xlu0 %v1322
        %v1547 = vpop.xlane.xlu0 %1546
        %1548 = vadd.xlane.f32.xlu0 %v1323
        %v1549 = vpop.xlane.xlu0 %1548
        %1550 = vadd.xlane.f32.xlu0 %v1324
        %v1551 = vpop.xlane.xlu0 %1550
        %1552 = vadd.xlane.f32.xlu0 %v1325
        %v1553 = vpop.xlane.xlu0 %1552
        %1554 = vadd.xlane.f32.xlu0 %v1326
        %v1555 = vpop.xlane.xlu0 %1554
        %1556 = vadd.xlane.f32.xlu0 %v1327
        %v1557 = vpop.xlane.xlu0 %1556
        %1558 = vadd.xlane.f32.xlu0 %v1328
        %v1559 = vpop.xlane.xlu0 %1558
        %1560 = vadd.xlane.f32.xlu0 %v1329
        %v1561 = vpop.xlane.xlu0 %1560
        %1562 = vadd.xlane.f32.xlu0 %v1330
        %v1563 = vpop.xlane.xlu0 %1562
        %1564 = vadd.xlane.f32.xlu0 %v1331
        %v1565 = vpop.xlane.xlu0 %1564
        %1566 = vadd.xlane.f32.xlu0 %v1332
        %v1567 = vpop.xlane.xlu0 %1566
        %1568 = vadd.xlane.f32.xlu0 %v1333
        %v1569 = vpop.xlane.xlu0 %1568
        %1570 = vadd.xlane.f32.xlu0 %v1334
        %v1571 = vpop.xlane.xlu0 %1570
        %1572 = vadd.xlane.f32.xlu0 %v1335
        %v1573 = vpop.xlane.xlu0 %1572
        %1574 = vadd.xlane.f32.xlu0 %v1336
        %v1575 = vpop.xlane.xlu0 %1574
        %1576 = vadd.xlane.f32.xlu0 %v1337
        %v1577 = vpop.xlane.xlu0 %1576
        %1578 = vadd.xlane.f32.xlu0 %v1338
        %v1579 = vpop.xlane.xlu0 %1578
        %1580 = vadd.xlane.f32.xlu0 %v1339
        %v1581 = vpop.xlane.xlu0 %1580
        %1582 = vadd.xlane.f32.xlu0 %v1340
        %v1583 = vpop.xlane.xlu0 %1582
        %1584 = vadd.xlane.f32.xlu0 %v1341
        %v1585 = vpop.xlane.xlu0 %1584
        %1586 = vadd.xlane.f32.xlu0 %v1342
        %v1587 = vpop.xlane.xlu0 %1586
        %1588 = vadd.xlane.f32.xlu0 %v1343
        %v1589 = vpop.xlane.xlu0 %1588
        %1590 = vadd.xlane.f32.xlu0 %v1344
        %v1591 = vpop.xlane.xlu0 %1590
        %1592 = vadd.xlane.f32.xlu0 %v1345
        %v1593 = vpop.xlane.xlu0 %1592
        %1594 = vadd.xlane.f32.xlu0 %v1346
        %v1595 = vpop.xlane.xlu0 %1594
        %1596 = vadd.xlane.f32.xlu0 %v1347
        %v1597 = vpop.xlane.xlu0 %1596
        %1598 = vadd.xlane.f32.xlu0 %v1348
        %v1599 = vpop.xlane.xlu0 %1598
        %1600 = vadd.xlane.f32.xlu0 %v1349
        %v1601 = vpop.xlane.xlu0 %1600
        %1602 = vadd.xlane.f32.xlu0 %v1350
        %v1603 = vpop.xlane.xlu0 %1602
        %1604 = vadd.xlane.f32.xlu0 %v1351
        %v1605 = vpop.xlane.xlu0 %1604
        %1606 = vadd.xlane.f32.xlu0 %v1352
        %v1607 = vpop.xlane.xlu0 %1606
        %1608 = vadd.xlane.f32.xlu0 %v1353
        %v1609 = vpop.xlane.xlu0 %1608
        %v1610 = vmul.f32 %v1355, %v1097
        %v1611 = vmul.f32 %v1357, %v1097
        %v1612 = vmul.f32 %v1359, %v1097
        %v1613 = vmul.f32 %v1361, %v1097
        %v1614 = vmul.f32 %v1363, %v1097
        %v1615 = vmul.f32 %v1365, %v1097
        %v1616 = vmul.f32 %v1367, %v1097
        %v1617 = vmul.f32 %v1369, %v1097
        %v1618 = vmul.f32 %v1371, %v1097
        %v1619 = vmul.f32 %v1373, %v1097
        %v1620 = vmul.f32 %v1375, %v1097
        %v1621 = vmul.f32 %v1377, %v1097
        %v1622 = vmul.f32 %v1379, %v1097
        %v1623 = vmul.f32 %v1381, %v1097
        %v1624 = vmul.f32 %v1383, %v1097
        %v1625 = vmul.f32 %v1385, %v1097
        %v1626 = vmul.f32 %v1387, %v1097
        %v1627 = vmul.f32 %v1389, %v1097
        %v1628 = vmul.f32 %v1391, %v1097
        %v1629 = vmul.f32 %v1393, %v1097
        %v1630 = vmul.f32 %v1395, %v1097
        %v1631 = vmul.f32 %v1397, %v1097
        %v1632 = vmul.f32 %v1399, %v1097
        %v1633 = vmul.f32 %v1401, %v1097
        %v1634 = vmul.f32 %v1403, %v1097
        %v1635 = vmul.f32 %v1405, %v1097
        %v1636 = vmul.f32 %v1407, %v1097
        %v1637 = vmul.f32 %v1409, %v1097
        %v1638 = vmul.f32 %v1411, %v1097
        %v1639 = vmul.f32 %v1413, %v1097
        %v1640 = vmul.f32 %v1415, %v1097
        %v1641 = vmul.f32 %v1417, %v1097
        %v1642 = vmul.f32 %v1419, %v1097
        %v1643 = vmul.f32 %v1421, %v1097
        %v1644 = vmul.f32 %v1423, %v1097
        %v1645 = vmul.f32 %v1425, %v1097
        %v1646 = vmul.f32 %v1427, %v1097
        %v1647 = vmul.f32 %v1429, %v1097
        %v1648 = vmul.f32 %v1431, %v1097
        %v1649 = vmul.f32 %v1433, %v1097
        %v1650 = vmul.f32 %v1435, %v1097
        %v1651 = vmul.f32 %v1437, %v1097
        %v1652 = vmul.f32 %v1439, %v1097
        %v1653 = vmul.f32 %v1441, %v1097
        %v1654 = vmul.f32 %v1443, %v1097
        %v1655 = vmul.f32 %v1445, %v1097
        %v1656 = vmul.f32 %v1447, %v1097
        %v1657 = vmul.f32 %v1449, %v1097
        %v1658 = vmul.f32 %v1451, %v1097
        %v1659 = vmul.f32 %v1453, %v1097
        %v1660 = vmul.f32 %v1455, %v1097
        %v1661 = vmul.f32 %v1457, %v1097
        %v1662 = vmul.f32 %v1459, %v1097
        %v1663 = vmul.f32 %v1461, %v1097
        %v1664 = vmul.f32 %v1463, %v1097
        %v1665 = vmul.f32 %v1465, %v1097
        %v1666 = vmul.f32 %v1467, %v1097
        %v1667 = vmul.f32 %v1469, %v1097
        %v1668 = vmul.f32 %v1471, %v1097
        %v1669 = vmul.f32 %v1473, %v1097
        %v1670 = vmul.f32 %v1475, %v1097
        %v1671 = vmul.f32 %v1477, %v1097
        %v1672 = vmul.f32 %v1479, %v1097
        %v1673 = vmul.f32 %v1481, %v1097
        %v1674 = vmul.f32 %v1483, %v1097
        %v1675 = vmul.f32 %v1485, %v1097
        %v1676 = vmul.f32 %v1487, %v1097
        %v1677 = vmul.f32 %v1489, %v1097
        %v1678 = vmul.f32 %v1491, %v1097
        %v1679 = vmul.f32 %v1493, %v1097
        %v1680 = vmul.f32 %v1495, %v1097
        %v1681 = vmul.f32 %v1497, %v1097
        %v1682 = vmul.f32 %v1499, %v1097
        %v1683 = vmul.f32 %v1501, %v1097
        %v1684 = vmul.f32 %v1503, %v1097
        %v1685 = vmul.f32 %v1505, %v1097
        %v1686 = vmul.f32 %v1507, %v1097
        %v1687 = vmul.f32 %v1509, %v1097
        %v1688 = vmul.f32 %v1511, %v1097
        %v1689 = vmul.f32 %v1513, %v1097
        %v1690 = vmul.f32 %v1515, %v1097
        %v1691 = vmul.f32 %v1517, %v1097
        %v1692 = vmul.f32 %v1519, %v1097
        %v1693 = vmul.f32 %v1521, %v1097
        %v1694 = vmul.f32 %v1523, %v1097
        %v1695 = vmul.f32 %v1525, %v1097
        %v1696 = vmul.f32 %v1527, %v1097
        %v1697 = vmul.f32 %v1529, %v1097
        %v1698 = vmul.f32 %v1531, %v1097
        %v1699 = vmul.f32 %v1533, %v1097
        %v1700 = vmul.f32 %v1535, %v1097
        %v1701 = vmul.f32 %v1537, %v1097
        %v1702 = vmul.f32 %v1539, %v1097
        %v1703 = vmul.f32 %v1541, %v1097
        %v1704 = vmul.f32 %v1543, %v1097
        %v1705 = vmul.f32 %v1545, %v1097
        %v1706 = vmul.f32 %v1547, %v1097
        %v1707 = vmul.f32 %v1549, %v1097
        %v1708 = vmul.f32 %v1551, %v1097
        %v1709 = vmul.f32 %v1553, %v1097
        %v1710 = vmul.f32 %v1555, %v1097
        %v1711 = vmul.f32 %v1557, %v1097
        %v1712 = vmul.f32 %v1559, %v1097
        %v1713 = vmul.f32 %v1561, %v1097
        %v1714 = vmul.f32 %v1563, %v1097
        %v1715 = vmul.f32 %v1565, %v1097
        %v1716 = vmul.f32 %v1567, %v1097
        %v1717 = vmul.f32 %v1569, %v1097
        %v1718 = vmul.f32 %v1571, %v1097
        %v1719 = vmul.f32 %v1573, %v1097
        %v1720 = vmul.f32 %v1575, %v1097
        %v1721 = vmul.f32 %v1577, %v1097
        %v1722 = vmul.f32 %v1579, %v1097
        %v1723 = vmul.f32 %v1581, %v1097
        %v1724 = vmul.f32 %v1583, %v1097
        %v1725 = vmul.f32 %v1585, %v1097
        %v1726 = vmul.f32 %v1587, %v1097
        %v1727 = vmul.f32 %v1589, %v1097
        %v1728 = vmul.f32 %v1591, %v1097
        %v1729 = vmul.f32 %v1593, %v1097
        %v1730 = vmul.f32 %v1595, %v1097
        %v1731 = vmul.f32 %v1597, %v1097
        %v1732 = vmul.f32 %v1599, %v1097
        %v1733 = vmul.f32 %v1601, %v1097
        %v1734 = vmul.f32 %v1603, %v1097
        %v1735 = vmul.f32 %v1605, %v1097
        %v1736 = vmul.f32 %v1607, %v1097
        %v1737 = vmul.f32 %v1609, %v1097
        %v1738 = vmul.f32 %v1098, %v1098
        %v1739 = vmul.f32 %v1099, %v1099
        %v1740 = vmul.f32 %v1100, %v1100
        %v1741 = vmul.f32 %v1101, %v1101
        %v1742 = vmul.f32 %v1102, %v1102
        %v1743 = vmul.f32 %v1103, %v1103
        %v1744 = vmul.f32 %v1104, %v1104
        %v1745 = vmul.f32 %v1105, %v1105
        %v1746 = vmul.f32 %v1106, %v1106
        %v1747 = vmul.f32 %v1107, %v1107
        %v1748 = vmul.f32 %v1108, %v1108
        %v1749 = vmul.f32 %v1109, %v1109
        %v1750 = vmul.f32 %v1110, %v1110
        %v1751 = vmul.f32 %v1111, %v1111
        %v1752 = vmul.f32 %v1112, %v1112
        %v1753 = vmul.f32 %v1113, %v1113
        %v1754 = vmul.f32 %v1114, %v1114
        %v1755 = vmul.f32 %v1115, %v1115
        %v1756 = vmul.f32 %v1116, %v1116
        %v1757 = vmul.f32 %v1117, %v1117
        %v1758 = vmul.f32 %v1118, %v1118
        %v1759 = vmul.f32 %v1119, %v1119
        %v1760 = vmul.f32 %v1120, %v1120
        %v1761 = vmul.f32 %v1121, %v1121
        %v1762 = vmul.f32 %v1122, %v1122
        %v1763 = vmul.f32 %v1123, %v1123
        %v1764 = vmul.f32 %v1124, %v1124
        %v1765 = vmul.f32 %v1125, %v1125
        %v1766 = vmul.f32 %v1126, %v1126
        %v1767 = vmul.f32 %v1127, %v1127
        %v1768 = vmul.f32 %v1128, %v1128
        %v1769 = vmul.f32 %v1129, %v1129
        %v1770 = vmul.f32 %v1130, %v1130
        %v1771 = vmul.f32 %v1131, %v1131
        %v1772 = vmul.f32 %v1132, %v1132
        %v1773 = vmul.f32 %v1133, %v1133
        %v1774 = vmul.f32 %v1134, %v1134
        %v1775 = vmul.f32 %v1135, %v1135
        %v1776 = vmul.f32 %v1136, %v1136
        %v1777 = vmul.f32 %v1137, %v1137
        %v1778 = vmul.f32 %v1138, %v1138
        %v1779 = vmul.f32 %v1139, %v1139
        %v1780 = vmul.f32 %v1140, %v1140
        %v1781 = vmul.f32 %v1141, %v1141
        %v1782 = vmul.f32 %v1142, %v1142
        %v1783 = vmul.f32 %v1143, %v1143
        %v1784 = vmul.f32 %v1144, %v1144
        %v1785 = vmul.f32 %v1145, %v1145
        %v1786 = vmul.f32 %v1146, %v1146
        %v1787 = vmul.f32 %v1147, %v1147
        %v1788 = vmul.f32 %v1148, %v1148
        %v1789 = vmul.f32 %v1149, %v1149
        %v1790 = vmul.f32 %v1150, %v1150
        %v1791 = vmul.f32 %v1151, %v1151
        %v1792 = vmul.f32 %v1152, %v1152
        %v1793 = vmul.f32 %v1153, %v1153
        %v1794 = vmul.f32 %v1154, %v1154
        %v1795 = vmul.f32 %v1155, %v1155
        %v1796 = vmul.f32 %v1156, %v1156
        %v1797 = vmul.f32 %v1157, %v1157
        %v1798 = vmul.f32 %v1158, %v1158
        %v1799 = vmul.f32 %v1159, %v1159
        %v1800 = vmul.f32 %v1160, %v1160
        %v1801 = vmul.f32 %v1161, %v1161
        %v1802 = vmul.f32 %v1162, %v1162
        %v1803 = vmul.f32 %v1163, %v1163
        %v1804 = vmul.f32 %v1164, %v1164
        %v1805 = vmul.f32 %v1165, %v1165
        %v1806 = vmul.f32 %v1166, %v1166
        %v1807 = vmul.f32 %v1167, %v1167
        %v1808 = vmul.f32 %v1168, %v1168
        %v1809 = vmul.f32 %v1169, %v1169
        %v1810 = vmul.f32 %v1170, %v1170
        %v1811 = vmul.f32 %v1171, %v1171
        %v1812 = vmul.f32 %v1172, %v1172
        %v1813 = vmul.f32 %v1173, %v1173
        %v1814 = vmul.f32 %v1174, %v1174
        %v1815 = vmul.f32 %v1175, %v1175
        %v1816 = vmul.f32 %v1176, %v1176
        %v1817 = vmul.f32 %v1177, %v1177
        %v1818 = vmul.f32 %v1178, %v1178
        %v1819 = vmul.f32 %v1179, %v1179
        %v1820 = vmul.f32 %v1180, %v1180
        %v1821 = vmul.f32 %v1181, %v1181
        %v1822 = vmul.f32 %v1182, %v1182
        %v1823 = vmul.f32 %v1183, %v1183
        %v1824 = vmul.f32 %v1184, %v1184
        %v1825 = vmul.f32 %v1185, %v1185
        %v1826 = vmul.f32 %v1186, %v1186
        %v1827 = vmul.f32 %v1187, %v1187
        %v1828 = vmul.f32 %v1188, %v1188
        %v1829 = vmul.f32 %v1189, %v1189
        %v1830 = vmul.f32 %v1190, %v1190
        %v1831 = vmul.f32 %v1191, %v1191
        %v1832 = vmul.f32 %v1192, %v1192
        %v1833 = vmul.f32 %v1193, %v1193
        %v1834 = vmul.f32 %v1194, %v1194
        %v1835 = vmul.f32 %v1195, %v1195
        %v1836 = vmul.f32 %v1196, %v1196
        %v1837 = vmul.f32 %v1197, %v1197
        %v1838 = vmul.f32 %v1198, %v1198
        %v1839 = vmul.f32 %v1199, %v1199
        %v1840 = vmul.f32 %v1200, %v1200
        %v1841 = vmul.f32 %v1201, %v1201
        %v1842 = vmul.f32 %v1202, %v1202
        %v1843 = vmul.f32 %v1203, %v1203
        %v1844 = vmul.f32 %v1204, %v1204
        %v1845 = vmul.f32 %v1205, %v1205
        %v1846 = vmul.f32 %v1206, %v1206
        %v1847 = vmul.f32 %v1207, %v1207
        %v1848 = vmul.f32 %v1208, %v1208
        %v1849 = vmul.f32 %v1209, %v1209
        %v1850 = vmul.f32 %v1210, %v1210
        %v1851 = vmul.f32 %v1211, %v1211
        %v1852 = vmul.f32 %v1212, %v1212
        %v1853 = vmul.f32 %v1213, %v1213
        %v1854 = vmul.f32 %v1214, %v1214
        %v1855 = vmul.f32 %v1215, %v1215
        %v1856 = vmul.f32 %v1216, %v1216
        %v1857 = vmul.f32 %v1217, %v1217
        %v1858 = vmul.f32 %v1218, %v1218
        %v1859 = vmul.f32 %v1219, %v1219
        %v1860 = vmul.f32 %v1220, %v1220
        %v1861 = vmul.f32 %v1221, %v1221
        %v1862 = vmul.f32 %v1222, %v1222
        %v1863 = vmul.f32 %v1223, %v1223
        %v1864 = vmul.f32 %v1224, %v1224
        %v1865 = vmul.f32 %v1225, %v1225
        %v1866 = vsub.f32 %v1610, %v1738
        %v1867 = vsub.f32 %v1611, %v1739
        %v1868 = vsub.f32 %v1612, %v1740
        %v1869 = vsub.f32 %v1613, %v1741
        %v1870 = vsub.f32 %v1614, %v1742
        %v1871 = vsub.f32 %v1615, %v1743
        %v1872 = vsub.f32 %v1616, %v1744
        %v1873 = vsub.f32 %v1617, %v1745
        %v1874 = vsub.f32 %v1618, %v1746
        %v1875 = vsub.f32 %v1619, %v1747
        %v1876 = vsub.f32 %v1620, %v1748
        %v1877 = vsub.f32 %v1621, %v1749
        %v1878 = vsub.f32 %v1622, %v1750
        %v1879 = vsub.f32 %v1623, %v1751
        %v1880 = vsub.f32 %v1624, %v1752
        %v1881 = vsub.f32 %v1625, %v1753
        %v1882 = vsub.f32 %v1626, %v1754
        %v1883 = vsub.f32 %v1627, %v1755
        %v1884 = vsub.f32 %v1628, %v1756
        %v1885 = vsub.f32 %v1629, %v1757
        %v1886 = vsub.f32 %v1630, %v1758
        %v1887 = vsub.f32 %v1631, %v1759
        %v1888 = vsub.f32 %v1632, %v1760
        %v1889 = vsub.f32 %v1633, %v1761
        %v1890 = vsub.f32 %v1634, %v1762
        %v1891 = vsub.f32 %v1635, %v1763
        %v1892 = vsub.f32 %v1636, %v1764
        %v1893 = vsub.f32 %v1637, %v1765
        %v1894 = vsub.f32 %v1638, %v1766
        %v1895 = vsub.f32 %v1639, %v1767
        %v1896 = vsub.f32 %v1640, %v1768
        %v1897 = vsub.f32 %v1641, %v1769
        %v1898 = vsub.f32 %v1642, %v1770
        %v1899 = vsub.f32 %v1643, %v1771
        %v1900 = vsub.f32 %v1644, %v1772
        %v1901 = vsub.f32 %v1645, %v1773
        %v1902 = vsub.f32 %v1646, %v1774
        %v1903 = vsub.f32 %v1647, %v1775
        %v1904 = vsub.f32 %v1648, %v1776
        %v1905 = vsub.f32 %v1649, %v1777
        %v1906 = vsub.f32 %v1650, %v1778
        %v1907 = vsub.f32 %v1651, %v1779
        %v1908 = vsub.f32 %v1652, %v1780
        %v1909 = vsub.f32 %v1653, %v1781
        %v1910 = vsub.f32 %v1654, %v1782
        %v1911 = vsub.f32 %v1655, %v1783
        %v1912 = vsub.f32 %v1656, %v1784
        %v1913 = vsub.f32 %v1657, %v1785
        %v1914 = vsub.f32 %v1658, %v1786
        %v1915 = vsub.f32 %v1659, %v1787
        %v1916 = vsub.f32 %v1660, %v1788
        %v1917 = vsub.f32 %v1661, %v1789
        %v1918 = vsub.f32 %v1662, %v1790
        %v1919 = vsub.f32 %v1663, %v1791
        %v1920 = vsub.f32 %v1664, %v1792
        %v1921 = vsub.f32 %v1665, %v1793
        %v1922 = vsub.f32 %v1666, %v1794
        %v1923 = vsub.f32 %v1667, %v1795
        %v1924 = vsub.f32 %v1668, %v1796
        %v1925 = vsub.f32 %v1669, %v1797
        %v1926 = vsub.f32 %v1670, %v1798
        %v1927 = vsub.f32 %v1671, %v1799
        %v1928 = vsub.f32 %v1672, %v1800
        %v1929 = vsub.f32 %v1673, %v1801
        %v1930 = vsub.f32 %v1674, %v1802
        %v1931 = vsub.f32 %v1675, %v1803
        %v1932 = vsub.f32 %v1676, %v1804
        %v1933 = vsub.f32 %v1677, %v1805
        %v1934 = vsub.f32 %v1678, %v1806
        %v1935 = vsub.f32 %v1679, %v1807
        %v1936 = vsub.f32 %v1680, %v1808
        %v1937 = vsub.f32 %v1681, %v1809
        %v1938 = vsub.f32 %v1682, %v1810
        %v1939 = vsub.f32 %v1683, %v1811
        %v1940 = vsub.f32 %v1684, %v1812
        %v1941 = vsub.f32 %v1685, %v1813
        %v1942 = vsub.f32 %v1686, %v1814
        %v1943 = vsub.f32 %v1687, %v1815
        %v1944 = vsub.f32 %v1688, %v1816
        %v1945 = vsub.f32 %v1689, %v1817
        %v1946 = vsub.f32 %v1690, %v1818
        %v1947 = vsub.f32 %v1691, %v1819
        %v1948 = vsub.f32 %v1692, %v1820
        %v1949 = vsub.f32 %v1693, %v1821
        %v1950 = vsub.f32 %v1694, %v1822
        %v1951 = vsub.f32 %v1695, %v1823
        %v1952 = vsub.f32 %v1696, %v1824
        %v1953 = vsub.f32 %v1697, %v1825
        %v1954 = vsub.f32 %v1698, %v1826
        %v1955 = vsub.f32 %v1699, %v1827
        %v1956 = vsub.f32 %v1700, %v1828
        %v1957 = vsub.f32 %v1701, %v1829
        %v1958 = vsub.f32 %v1702, %v1830
        %v1959 = vsub.f32 %v1703, %v1831
        %v1960 = vsub.f32 %v1704, %v1832
        %v1961 = vsub.f32 %v1705, %v1833
        %v1962 = vsub.f32 %v1706, %v1834
        %v1963 = vsub.f32 %v1707, %v1835
        %v1964 = vsub.f32 %v1708, %v1836
        %v1965 = vsub.f32 %v1709, %v1837
        %v1966 = vsub.f32 %v1710, %v1838
        %v1967 = vsub.f32 %v1711, %v1839
        %v1968 = vsub.f32 %v1712, %v1840
        %v1969 = vsub.f32 %v1713, %v1841
        %v1970 = vsub.f32 %v1714, %v1842
        %v1971 = vsub.f32 %v1715, %v1843
        %v1972 = vsub.f32 %v1716, %v1844
        %v1973 = vsub.f32 %v1717, %v1845
        %v1974 = vsub.f32 %v1718, %v1846
        %v1975 = vsub.f32 %v1719, %v1847
        %v1976 = vsub.f32 %v1720, %v1848
        %v1977 = vsub.f32 %v1721, %v1849
        %v1978 = vsub.f32 %v1722, %v1850
        %v1979 = vsub.f32 %v1723, %v1851
        %v1980 = vsub.f32 %v1724, %v1852
        %v1981 = vsub.f32 %v1725, %v1853
        %v1982 = vsub.f32 %v1726, %v1854
        %v1983 = vsub.f32 %v1727, %v1855
        %v1984 = vsub.f32 %v1728, %v1856
        %v1985 = vsub.f32 %v1729, %v1857
        %v1986 = vsub.f32 %v1730, %v1858
        %v1987 = vsub.f32 %v1731, %v1859
        %v1988 = vsub.f32 %v1732, %v1860
        %v1989 = vsub.f32 %v1733, %v1861
        %v1990 = vsub.f32 %v1734, %v1862
        %v1991 = vsub.f32 %v1735, %v1863
        %v1992 = vsub.f32 %v1736, %v1864
        %v1993 = vsub.f32 %v1737, %v1865
        %v1994 = vmax.f32 %v1866, 0.0
        %v1995 = vmax.f32 %v1867, 0.0
        %v1996 = vmax.f32 %v1868, 0.0
        %v1997 = vmax.f32 %v1869, 0.0
        %v1998 = vmax.f32 %v1870, 0.0
        %v1999 = vmax.f32 %v1871, 0.0
        %v2000 = vmax.f32 %v1872, 0.0
        %v2001 = vmax.f32 %v1873, 0.0
        %v2002 = vmax.f32 %v1874, 0.0
        %v2003 = vmax.f32 %v1875, 0.0
        %v2004 = vmax.f32 %v1876, 0.0
        %v2005 = vmax.f32 %v1877, 0.0
        %v2006 = vmax.f32 %v1878, 0.0
        %v2007 = vmax.f32 %v1879, 0.0
        %v2008 = vmax.f32 %v1880, 0.0
        %v2009 = vmax.f32 %v1881, 0.0
        %v2010 = vmax.f32 %v1882, 0.0
        %v2011 = vmax.f32 %v1883, 0.0
        %v2012 = vmax.f32 %v1884, 0.0
        %v2013 = vmax.f32 %v1885, 0.0
        %v2014 = vmax.f32 %v1886, 0.0
        %v2015 = vmax.f32 %v1887, 0.0
        %v2016 = vmax.f32 %v1888, 0.0
        %v2017 = vmax.f32 %v1889, 0.0
        %v2018 = vmax.f32 %v1890, 0.0
        %v2019 = vmax.f32 %v1891, 0.0
        %v2020 = vmax.f32 %v1892, 0.0
        %v2021 = vmax.f32 %v1893, 0.0
        %v2022 = vmax.f32 %v1894, 0.0
        %v2023 = vmax.f32 %v1895, 0.0
        %v2024 = vmax.f32 %v1896, 0.0
        %v2025 = vmax.f32 %v1897, 0.0
        %v2026 = vmax.f32 %v1898, 0.0
        %v2027 = vmax.f32 %v1899, 0.0
        %v2028 = vmax.f32 %v1900, 0.0
        %v2029 = vmax.f32 %v1901, 0.0
        %v2030 = vmax.f32 %v1902, 0.0
        %v2031 = vmax.f32 %v1903, 0.0
        %v2032 = vmax.f32 %v1904, 0.0
        %v2033 = vmax.f32 %v1905, 0.0
        %v2034 = vmax.f32 %v1906, 0.0
        %v2035 = vmax.f32 %v1907, 0.0
        %v2036 = vmax.f32 %v1908, 0.0
        %v2037 = vmax.f32 %v1909, 0.0
        %v2038 = vmax.f32 %v1910, 0.0
        %v2039 = vmax.f32 %v1911, 0.0
        %v2040 = vmax.f32 %v1912, 0.0
        %v2041 = vmax.f32 %v1913, 0.0
        %v2042 = vmax.f32 %v1914, 0.0
        %v2043 = vmax.f32 %v1915, 0.0
        %v2044 = vmax.f32 %v1916, 0.0
        %v2045 = vmax.f32 %v1917, 0.0
        %v2046 = vmax.f32 %v1918, 0.0
        %v2047 = vmax.f32 %v1919, 0.0
        %v2048 = vmax.f32 %v1920, 0.0
        %v2049 = vmax.f32 %v1921, 0.0
        %v2050 = vmax.f32 %v1922, 0.0
        %v2051 = vmax.f32 %v1923, 0.0
        %v2052 = vmax.f32 %v1924, 0.0
        %v2053 = vmax.f32 %v1925, 0.0
        %v2054 = vmax.f32 %v1926, 0.0
        %v2055 = vmax.f32 %v1927, 0.0
        %v2056 = vmax.f32 %v1928, 0.0
        %v2057 = vmax.f32 %v1929, 0.0
        %v2058 = vmax.f32 %v1930, 0.0
        %v2059 = vmax.f32 %v1931, 0.0
        %v2060 = vmax.f32 %v1932, 0.0
        %v2061 = vmax.f32 %v1933, 0.0
        %v2062 = vmax.f32 %v1934, 0.0
        %v2063 = vmax.f32 %v1935, 0.0
        %v2064 = vmax.f32 %v1936, 0.0
        %v2065 = vmax.f32 %v1937, 0.0
        %v2066 = vmax.f32 %v1938, 0.0
        %v2067 = vmax.f32 %v1939, 0.0
        %v2068 = vmax.f32 %v1940, 0.0
        %v2069 = vmax.f32 %v1941, 0.0
        %v2070 = vmax.f32 %v1942, 0.0
        %v2071 = vmax.f32 %v1943, 0.0
        %v2072 = vmax.f32 %v1944, 0.0
        %v2073 = vmax.f32 %v1945, 0.0
        %v2074 = vmax.f32 %v1946, 0.0
        %v2075 = vmax.f32 %v1947, 0.0
        %v2076 = vmax.f32 %v1948, 0.0
        %v2077 = vmax.f32 %v1949, 0.0
        %v2078 = vmax.f32 %v1950, 0.0
        %v2079 = vmax.f32 %v1951, 0.0
        %v2080 = vmax.f32 %v1952, 0.0
        %v2081 = vmax.f32 %v1953, 0.0
        %v2082 = vmax.f32 %v1954, 0.0
        %v2083 = vmax.f32 %v1955, 0.0
        %v2084 = vmax.f32 %v1956, 0.0
        %v2085 = vmax.f32 %v1957, 0.0
        %v2086 = vmax.f32 %v1958, 0.0
        %v2087 = vmax.f32 %v1959, 0.0
        %v2088 = vmax.f32 %v1960, 0.0
        %v2089 = vmax.f32 %v1961, 0.0
        %v2090 = vmax.f32 %v1962, 0.0
        %v2091 = vmax.f32 %v1963, 0.0
        %v2092 = vmax.f32 %v1964, 0.0
        %v2093 = vmax.f32 %v1965, 0.0
        %v2094 = vmax.f32 %v1966, 0.0
        %v2095 = vmax.f32 %v1967, 0.0
        %v2096 = vmax.f32 %v1968, 0.0
        %v2097 = vmax.f32 %v1969, 0.0
        %v2098 = vmax.f32 %v1970, 0.0
        %v2099 = vmax.f32 %v1971, 0.0
        %v2100 = vmax.f32 %v1972, 0.0
        %v2101 = vmax.f32 %v1973, 0.0
        %v2102 = vmax.f32 %v1974, 0.0
        %v2103 = vmax.f32 %v1975, 0.0
        %v2104 = vmax.f32 %v1976, 0.0
        %v2105 = vmax.f32 %v1977, 0.0
        %v2106 = vmax.f32 %v1978, 0.0
        %v2107 = vmax.f32 %v1979, 0.0
        %v2108 = vmax.f32 %v1980, 0.0
        %v2109 = vmax.f32 %v1981, 0.0
        %v2110 = vmax.f32 %v1982, 0.0
        %v2111 = vmax.f32 %v1983, 0.0
        %v2112 = vmax.f32 %v1984, 0.0
        %v2113 = vmax.f32 %v1985, 0.0
        %v2114 = vmax.f32 %v1986, 0.0
        %v2115 = vmax.f32 %v1987, 0.0
        %v2116 = vmax.f32 %v1988, 0.0
        %v2117 = vmax.f32 %v1989, 0.0
        %v2118 = vmax.f32 %v1990, 0.0
        %v2119 = vmax.f32 %v1991, 0.0
        %v2120 = vmax.f32 %v1992, 0.0
        %v2121 = vmax.f32 %v1993, 0.0
        %v2122 = vsub.f32 %v452, %v1098
        %v2123 = vsub.f32 %v455, %v1099
        %v2124 = vsub.f32 %v458, %v1100
        %v2125 = vsub.f32 %v461, %v1101
        %v2126 = vsub.f32 %v464, %v1102
        %v2127 = vsub.f32 %v467, %v1103
        %v2128 = vsub.f32 %v470, %v1104
        %v2129 = vsub.f32 %v473, %v1105
        %v2130 = vsub.f32 %v476, %v1106
        %v2131 = vsub.f32 %v479, %v1107
        %v2132 = vsub.f32 %v482, %v1108
        %v2133 = vsub.f32 %v485, %v1109
        %v2134 = vsub.f32 %v488, %v1110
        %v2135 = vsub.f32 %v491, %v1111
        %v2136 = vsub.f32 %v494, %v1112
        %v2137 = vsub.f32 %v497, %v1113
        %v2138 = vsub.f32 %v500, %v1114
        %v2139 = vsub.f32 %v503, %v1115
        %v2140 = vsub.f32 %v506, %v1116
        %v2141 = vsub.f32 %v509, %v1117
        %v2142 = vsub.f32 %v512, %v1118
        %v2143 = vsub.f32 %v515, %v1119
        %v2144 = vsub.f32 %v518, %v1120
        %v2145 = vsub.f32 %v521, %v1121
        %v2146 = vsub.f32 %v524, %v1122
        %v2147 = vsub.f32 %v527, %v1123
        %v2148 = vsub.f32 %v530, %v1124
        %v2149 = vsub.f32 %v533, %v1125
        %v2150 = vsub.f32 %v536, %v1126
        %v2151 = vsub.f32 %v539, %v1127
        %v2152 = vsub.f32 %v542, %v1128
        %v2153 = vsub.f32 %v545, %v1129
        %v2154 = vsub.f32 %v548, %v1130
        %v2155 = vsub.f32 %v551, %v1131
        %v2156 = vsub.f32 %v554, %v1132
        %v2157 = vsub.f32 %v557, %v1133
        %v2158 = vsub.f32 %v560, %v1134
        %v2159 = vsub.f32 %v563, %v1135
        %v2160 = vsub.f32 %v566, %v1136
        %v2161 = vsub.f32 %v569, %v1137
        %v2162 = vsub.f32 %v572, %v1138
        %v2163 = vsub.f32 %v575, %v1139
        %v2164 = vsub.f32 %v578, %v1140
        %v2165 = vsub.f32 %v581, %v1141
        %v2166 = vsub.f32 %v584, %v1142
        %v2167 = vsub.f32 %v587, %v1143
        %v2168 = vsub.f32 %v590, %v1144
        %v2169 = vsub.f32 %v593, %v1145
        %v2170 = vsub.f32 %v596, %v1146
        %v2171 = vsub.f32 %v599, %v1147
        %v2172 = vsub.f32 %v602, %v1148
        %v2173 = vsub.f32 %v605, %v1149
        %v2174 = vsub.f32 %v608, %v1150
        %v2175 = vsub.f32 %v611, %v1151
        %v2176 = vsub.f32 %v614, %v1152
        %v2177 = vsub.f32 %v617, %v1153
        %v2178 = vsub.f32 %v620, %v1154
        %v2179 = vsub.f32 %v623, %v1155
        %v2180 = vsub.f32 %v626, %v1156
        %v2181 = vsub.f32 %v629, %v1157
        %v2182 = vsub.f32 %v632, %v1158
        %v2183 = vsub.f32 %v635, %v1159
        %v2184 = vsub.f32 %v638, %v1160
        %v2185 = vsub.f32 %v641, %v1161
        %v2186 = vsub.f32 %v644, %v1162
        %v2187 = vsub.f32 %v647, %v1163
        %v2188 = vsub.f32 %v650, %v1164
        %v2189 = vsub.f32 %v653, %v1165
        %v2190 = vsub.f32 %v656, %v1166
        %v2191 = vsub.f32 %v659, %v1167
        %v2192 = vsub.f32 %v662, %v1168
        %v2193 = vsub.f32 %v665, %v1169
        %v2194 = vsub.f32 %v668, %v1170
        %v2195 = vsub.f32 %v671, %v1171
        %v2196 = vsub.f32 %v674, %v1172
        %v2197 = vsub.f32 %v677, %v1173
        %v2198 = vsub.f32 %v680, %v1174
        %v2199 = vsub.f32 %v683, %v1175
        %v2200 = vsub.f32 %v686, %v1176
        %v2201 = vsub.f32 %v689, %v1177
        %v2202 = vsub.f32 %v692, %v1178
        %v2203 = vsub.f32 %v695, %v1179
        %v2204 = vsub.f32 %v698, %v1180
        %v2205 = vsub.f32 %v701, %v1181
        %v2206 = vsub.f32 %v704, %v1182
        %v2207 = vsub.f32 %v707, %v1183
        %v2208 = vsub.f32 %v710, %v1184
        %v2209 = vsub.f32 %v713, %v1185
        %v2210 = vsub.f32 %v716, %v1186
        %v2211 = vsub.f32 %v719, %v1187
        %v2212 = vsub.f32 %v722, %v1188
        %v2213 = vsub.f32 %v725, %v1189
        %v2214 = vsub.f32 %v728, %v1190
        %v2215 = vsub.f32 %v731, %v1191
        %v2216 = vsub.f32 %v734, %v1192
        %v2217 = vsub.f32 %v737, %v1193
        %v2218 = vsub.f32 %v740, %v1194
        %v2219 = vsub.f32 %v743, %v1195
        %v2220 = vsub.f32 %v746, %v1196
        %v2221 = vsub.f32 %v749, %v1197
        %v2222 = vsub.f32 %v752, %v1198
        %v2223 = vsub.f32 %v755, %v1199
        %v2224 = vsub.f32 %v758, %v1200
        %v2225 = vsub.f32 %v761, %v1201
        %v2226 = vsub.f32 %v764, %v1202
        %v2227 = vsub.f32 %v767, %v1203
        %v2228 = vsub.f32 %v770, %v1204
        %v2229 = vsub.f32 %v773, %v1205
        %v2230 = vsub.f32 %v776, %v1206
        %v2231 = vsub.f32 %v779, %v1207
        %v2232 = vsub.f32 %v782, %v1208
        %v2233 = vsub.f32 %v785, %v1209
        %v2234 = vsub.f32 %v788, %v1210
        %v2235 = vsub.f32 %v791, %v1211
        %v2236 = vsub.f32 %v794, %v1212
        %v2237 = vsub.f32 %v797, %v1213
        %v2238 = vsub.f32 %v800, %v1214
        %v2239 = vsub.f32 %v803, %v1215
        %v2240 = vsub.f32 %v806, %v1216
        %v2241 = vsub.f32 %v809, %v1217
        %v2242 = vsub.f32 %v812, %v1218
        %v2243 = vsub.f32 %v815, %v1219
        %v2244 = vsub.f32 %v818, %v1220
        %v2245 = vsub.f32 %v821, %v1221
        %v2246 = vsub.f32 %v824, %v1222
        %v2247 = vsub.f32 %v827, %v1223
        %v2248 = vsub.f32 %v830, %v1224
        %v2249 = vsub.f32 %v833, %v1225
        %v2250 = vadd.f32 %v1994, 1e-05
        %v2251 = vadd.f32 %v1995, 1e-05
        %v2252 = vadd.f32 %v1996, 1e-05
        %v2253 = vadd.f32 %v1997, 1e-05
        %v2254 = vadd.f32 %v1998, 1e-05
        %v2255 = vadd.f32 %v1999, 1e-05
        %v2256 = vadd.f32 %v2000, 1e-05
        %v2257 = vadd.f32 %v2001, 1e-05
        %v2258 = vadd.f32 %v2002, 1e-05
        %v2259 = vadd.f32 %v2003, 1e-05
        %v2260 = vadd.f32 %v2004, 1e-05
        %v2261 = vadd.f32 %v2005, 1e-05
        %v2262 = vadd.f32 %v2006, 1e-05
        %v2263 = vadd.f32 %v2007, 1e-05
        %v2264 = vadd.f32 %v2008, 1e-05
        %v2265 = vadd.f32 %v2009, 1e-05
        %v2266 = vadd.f32 %v2010, 1e-05
        %v2267 = vadd.f32 %v2011, 1e-05
        %v2268 = vadd.f32 %v2012, 1e-05
        %v2269 = vadd.f32 %v2013, 1e-05
        %v2270 = vadd.f32 %v2014, 1e-05
        %v2271 = vadd.f32 %v2015, 1e-05
        %v2272 = vadd.f32 %v2016, 1e-05
        %v2273 = vadd.f32 %v2017, 1e-05
        %v2274 = vadd.f32 %v2018, 1e-05
        %v2275 = vadd.f32 %v2019, 1e-05
        %v2276 = vadd.f32 %v2020, 1e-05
        %v2277 = vadd.f32 %v2021, 1e-05
        %v2278 = vadd.f32 %v2022, 1e-05
        %v2279 = vadd.f32 %v2023, 1e-05
        %v2280 = vadd.f32 %v2024, 1e-05
        %v2281 = vadd.f32 %v2025, 1e-05
        %v2282 = vadd.f32 %v2026, 1e-05
        %v2283 = vadd.f32 %v2027, 1e-05
        %v2284 = vadd.f32 %v2028, 1e-05
        %v2285 = vadd.f32 %v2029, 1e-05
        %v2286 = vadd.f32 %v2030, 1e-05
        %v2287 = vadd.f32 %v2031, 1e-05
        %v2288 = vadd.f32 %v2032, 1e-05
        %v2289 = vadd.f32 %v2033, 1e-05
        %v2290 = vadd.f32 %v2034, 1e-05
        %v2291 = vadd.f32 %v2035, 1e-05
        %v2292 = vadd.f32 %v2036, 1e-05
        %v2293 = vadd.f32 %v2037, 1e-05
        %v2294 = vadd.f32 %v2038, 1e-05
        %v2295 = vadd.f32 %v2039, 1e-05
        %v2296 = vadd.f32 %v2040, 1e-05
        %v2297 = vadd.f32 %v2041, 1e-05
        %v2298 = vadd.f32 %v2042, 1e-05
        %v2299 = vadd.f32 %v2043, 1e-05
        %v2300 = vadd.f32 %v2044, 1e-05
        %v2301 = vadd.f32 %v2045, 1e-05
        %v2302 = vadd.f32 %v2046, 1e-05
        %v2303 = vadd.f32 %v2047, 1e-05
        %v2304 = vadd.f32 %v2048, 1e-05
        %v2305 = vadd.f32 %v2049, 1e-05
        %v2306 = vadd.f32 %v2050, 1e-05
        %v2307 = vadd.f32 %v2051, 1e-05
        %v2308 = vadd.f32 %v2052, 1e-05
        %v2309 = vadd.f32 %v2053, 1e-05
        %v2310 = vadd.f32 %v2054, 1e-05
        %v2311 = vadd.f32 %v2055, 1e-05
        %v2312 = vadd.f32 %v2056, 1e-05
        %v2313 = vadd.f32 %v2057, 1e-05
        %v2314 = vadd.f32 %v2058, 1e-05
        %v2315 = vadd.f32 %v2059, 1e-05
        %v2316 = vadd.f32 %v2060, 1e-05
        %v2317 = vadd.f32 %v2061, 1e-05
        %v2318 = vadd.f32 %v2062, 1e-05
        %v2319 = vadd.f32 %v2063, 1e-05
        %v2320 = vadd.f32 %v2064, 1e-05
        %v2321 = vadd.f32 %v2065, 1e-05
        %v2322 = vadd.f32 %v2066, 1e-05
        %v2323 = vadd.f32 %v2067, 1e-05
        %v2324 = vadd.f32 %v2068, 1e-05
        %v2325 = vadd.f32 %v2069, 1e-05
        %v2326 = vadd.f32 %v2070, 1e-05
        %v2327 = vadd.f32 %v2071, 1e-05
        %v2328 = vadd.f32 %v2072, 1e-05
        %v2329 = vadd.f32 %v2073, 1e-05
        %v2330 = vadd.f32 %v2074, 1e-05
        %v2331 = vadd.f32 %v2075, 1e-05
        %v2332 = vadd.f32 %v2076, 1e-05
        %v2333 = vadd.f32 %v2077, 1e-05
        %v2334 = vadd.f32 %v2078, 1e-05
        %v2335 = vadd.f32 %v2079, 1e-05
        %v2336 = vadd.f32 %v2080, 1e-05
        %v2337 = vadd.f32 %v2081, 1e-05
        %v2338 = vadd.f32 %v2082, 1e-05
        %v2339 = vadd.f32 %v2083, 1e-05
        %v2340 = vadd.f32 %v2084, 1e-05
        %v2341 = vadd.f32 %v2085, 1e-05
        %v2342 = vadd.f32 %v2086, 1e-05
        %v2343 = vadd.f32 %v2087, 1e-05
        %v2344 = vadd.f32 %v2088, 1e-05
        %v2345 = vadd.f32 %v2089, 1e-05
        %v2346 = vadd.f32 %v2090, 1e-05
        %v2347 = vadd.f32 %v2091, 1e-05
        %v2348 = vadd.f32 %v2092, 1e-05
        %v2349 = vadd.f32 %v2093, 1e-05
        %v2350 = vadd.f32 %v2094, 1e-05
        %v2351 = vadd.f32 %v2095, 1e-05
        %v2352 = vadd.f32 %v2096, 1e-05
        %v2353 = vadd.f32 %v2097, 1e-05
        %v2354 = vadd.f32 %v2098, 1e-05
        %v2355 = vadd.f32 %v2099, 1e-05
        %v2356 = vadd.f32 %v2100, 1e-05
        %v2357 = vadd.f32 %v2101, 1e-05
        %v2358 = vadd.f32 %v2102, 1e-05
        %v2359 = vadd.f32 %v2103, 1e-05
        %v2360 = vadd.f32 %v2104, 1e-05
        %v2361 = vadd.f32 %v2105, 1e-05
        %v2362 = vadd.f32 %v2106, 1e-05
        %v2363 = vadd.f32 %v2107, 1e-05
        %v2364 = vadd.f32 %v2108, 1e-05
        %v2365 = vadd.f32 %v2109, 1e-05
        %v2366 = vadd.f32 %v2110, 1e-05
        %v2367 = vadd.f32 %v2111, 1e-05
        %v2368 = vadd.f32 %v2112, 1e-05
        %v2369 = vadd.f32 %v2113, 1e-05
        %v2370 = vadd.f32 %v2114, 1e-05
        %v2371 = vadd.f32 %v2115, 1e-05
        %v2372 = vadd.f32 %v2116, 1e-05
        %v2373 = vadd.f32 %v2117, 1e-05
        %v2374 = vadd.f32 %v2118, 1e-05
        %v2375 = vadd.f32 %v2119, 1e-05
        %v2376 = vadd.f32 %v2120, 1e-05
        %v2377 = vadd.f32 %v2121, 1e-05
        %v2378 = vrsqrt.pop %v2250
        %v2379 = vmul.f32 %v2378, %v2250
        %v2380 = vmul.f32 %v2379, %v2378
        %v2381 = vmul.f32 0.5, %v2380
        %v2382 = vsub.f32 1.5, %v2381
        %v2383 = vmul.f32 %v2378, %v2382
        %vm2384 = vweird.f32 %v2250
        %vm2385 = vweird.f32 %v2378
        %vm2386 = vmor %vm2384, %vm2385
        %v2387 = vsel %vm2386, %v2378, %v2383
        %v2388 = vrsqrt.pop %v2251
        %v2389 = vmul.f32 %v2388, %v2251
        %v2390 = vmul.f32 %v2389, %v2388
        %v2391 = vmul.f32 0.5, %v2390
        %v2392 = vsub.f32 1.5, %v2391
        %v2393 = vmul.f32 %v2388, %v2392
        %vm2394 = vweird.f32 %v2251
        %vm2395 = vweird.f32 %v2388
        %vm2396 = vmor %vm2394, %vm2395
        %v2397 = vsel %vm2396, %v2388, %v2393
        %v2398 = vrsqrt.pop %v2252
        %v2399 = vmul.f32 %v2398, %v2252
        %v2400 = vmul.f32 %v2399, %v2398
        %v2401 = vmul.f32 0.5, %v2400
        %v2402 = vsub.f32 1.5, %v2401
        %v2403 = vmul.f32 %v2398, %v2402
        %vm2404 = vweird.f32 %v2252
        %vm2405 = vweird.f32 %v2398
        %vm2406 = vmor %vm2404, %vm2405
        %v2407 = vsel %vm2406, %v2398, %v2403
        %v2408 = vrsqrt.pop %v2253
        %v2409 = vmul.f32 %v2408, %v2253
        %v2410 = vmul.f32 %v2409, %v2408
        %v2411 = vmul.f32 0.5, %v2410
        %v2412 = vsub.f32 1.5, %v2411
        %v2413 = vmul.f32 %v2408, %v2412
        %vm2414 = vweird.f32 %v2253
        %vm2415 = vweird.f32 %v2408
        %vm2416 = vmor %vm2414, %vm2415
        %v2417 = vsel %vm2416, %v2408, %v2413
        %v2418 = vrsqrt.pop %v2254
        %v2419 = vmul.f32 %v2418, %v2254
        %v2420 = vmul.f32 %v2419, %v2418
        %v2421 = vmul.f32 0.5, %v2420
        %v2422 = vsub.f32 1.5, %v2421
        %v2423 = vmul.f32 %v2418, %v2422
        %vm2424 = vweird.f32 %v2254
        %vm2425 = vweird.f32 %v2418
        %vm2426 = vmor %vm2424, %vm2425
        %v2427 = vsel %vm2426, %v2418, %v2423
        %v2428 = vrsqrt.pop %v2255
        %v2429 = vmul.f32 %v2428, %v2255
        %v2430 = vmul.f32 %v2429, %v2428
        %v2431 = vmul.f32 0.5, %v2430
        %v2432 = vsub.f32 1.5, %v2431
        %v2433 = vmul.f32 %v2428, %v2432
        %vm2434 = vweird.f32 %v2255
        %vm2435 = vweird.f32 %v2428
        %vm2436 = vmor %vm2434, %vm2435
        %v2437 = vsel %vm2436, %v2428, %v2433
        %v2438 = vrsqrt.pop %v2256
        %v2439 = vmul.f32 %v2438, %v2256
        %v2440 = vmul.f32 %v2439, %v2438
        %v2441 = vmul.f32 0.5, %v2440
        %v2442 = vsub.f32 1.5, %v2441
        %v2443 = vmul.f32 %v2438, %v2442
        %vm2444 = vweird.f32 %v2256
        %vm2445 = vweird.f32 %v2438
        %vm2446 = vmor %vm2444, %vm2445
        %v2447 = vsel %vm2446, %v2438, %v2443
        %v2448 = vrsqrt.pop %v2257
        %v2449 = vmul.f32 %v2448, %v2257
        %v2450 = vmul.f32 %v2449, %v2448
        %v2451 = vmul.f32 0.5, %v2450
        %v2452 = vsub.f32 1.5, %v2451
        %v2453 = vmul.f32 %v2448, %v2452
        %vm2454 = vweird.f32 %v2257
        %vm2455 = vweird.f32 %v2448
        %vm2456 = vmor %vm2454, %vm2455
        %v2457 = vsel %vm2456, %v2448, %v2453
        %v2458 = vrsqrt.pop %v2258
        %v2459 = vmul.f32 %v2458, %v2258
        %v2460 = vmul.f32 %v2459, %v2458
        %v2461 = vmul.f32 0.5, %v2460
        %v2462 = vsub.f32 1.5, %v2461
        %v2463 = vmul.f32 %v2458, %v2462
        %vm2464 = vweird.f32 %v2258
        %vm2465 = vweird.f32 %v2458
        %vm2466 = vmor %vm2464, %vm2465
        %v2467 = vsel %vm2466, %v2458, %v2463
        %v2468 = vrsqrt.pop %v2259
        %v2469 = vmul.f32 %v2468, %v2259
        %v2470 = vmul.f32 %v2469, %v2468
        %v2471 = vmul.f32 0.5, %v2470
        %v2472 = vsub.f32 1.5, %v2471
        %v2473 = vmul.f32 %v2468, %v2472
        %vm2474 = vweird.f32 %v2259
        %vm2475 = vweird.f32 %v2468
        %vm2476 = vmor %vm2474, %vm2475
        %v2477 = vsel %vm2476, %v2468, %v2473
        %v2478 = vrsqrt.pop %v2260
        %v2479 = vmul.f32 %v2478, %v2260
        %v2480 = vmul.f32 %v2479, %v2478
        %v2481 = vmul.f32 0.5, %v2480
        %v2482 = vsub.f32 1.5, %v2481
        %v2483 = vmul.f32 %v2478, %v2482
        %vm2484 = vweird.f32 %v2260
        %vm2485 = vweird.f32 %v2478
        %vm2486 = vmor %vm2484, %vm2485
        %v2487 = vsel %vm2486, %v2478, %v2483
        %v2488 = vrsqrt.pop %v2261
        %v2489 = vmul.f32 %v2488, %v2261
        %v2490 = vmul.f32 %v2489, %v2488
        %v2491 = vmul.f32 0.5, %v2490
        %v2492 = vsub.f32 1.5, %v2491
        %v2493 = vmul.f32 %v2488, %v2492
        %vm2494 = vweird.f32 %v2261
        %vm2495 = vweird.f32 %v2488
        %vm2496 = vmor %vm2494, %vm2495
        %v2497 = vsel %vm2496, %v2488, %v2493
        %v2498 = vrsqrt.pop %v2262
        %v2499 = vmul.f32 %v2498, %v2262
        %v2500 = vmul.f32 %v2499, %v2498
        %v2501 = vmul.f32 0.5, %v2500
        %v2502 = vsub.f32 1.5, %v2501
        %v2503 = vmul.f32 %v2498, %v2502
        %vm2504 = vweird.f32 %v2262
        %vm2505 = vweird.f32 %v2498
        %vm2506 = vmor %vm2504, %vm2505
        %v2507 = vsel %vm2506, %v2498, %v2503
        %v2508 = vrsqrt.pop %v2263
        %v2509 = vmul.f32 %v2508, %v2263
        %v2510 = vmul.f32 %v2509, %v2508
        %v2511 = vmul.f32 0.5, %v2510
        %v2512 = vsub.f32 1.5, %v2511
        %v2513 = vmul.f32 %v2508, %v2512
        %vm2514 = vweird.f32 %v2263
        %vm2515 = vweird.f32 %v2508
        %vm2516 = vmor %vm2514, %vm2515
        %v2517 = vsel %vm2516, %v2508, %v2513
        %v2518 = vrsqrt.pop %v2264
        %v2519 = vmul.f32 %v2518, %v2264
        %v2520 = vmul.f32 %v2519, %v2518
        %v2521 = vmul.f32 0.5, %v2520
        %v2522 = vsub.f32 1.5, %v2521
        %v2523 = vmul.f32 %v2518, %v2522
        %vm2524 = vweird.f32 %v2264
        %vm2525 = vweird.f32 %v2518
        %vm2526 = vmor %vm2524, %vm2525
        %v2527 = vsel %vm2526, %v2518, %v2523
        %v2528 = vrsqrt.pop %v2265
        %v2529 = vmul.f32 %v2528, %v2265
        %v2530 = vmul.f32 %v2529, %v2528
        %v2531 = vmul.f32 0.5, %v2530
        %v2532 = vsub.f32 1.5, %v2531
        %v2533 = vmul.f32 %v2528, %v2532
        %vm2534 = vweird.f32 %v2265
        %vm2535 = vweird.f32 %v2528
        %vm2536 = vmor %vm2534, %vm2535
        %v2537 = vsel %vm2536, %v2528, %v2533
        %v2538 = vrsqrt.pop %v2266
        %v2539 = vmul.f32 %v2538, %v2266
        %v2540 = vmul.f32 %v2539, %v2538
        %v2541 = vmul.f32 0.5, %v2540
        %v2542 = vsub.f32 1.5, %v2541
        %v2543 = vmul.f32 %v2538, %v2542
        %vm2544 = vweird.f32 %v2266
        %vm2545 = vweird.f32 %v2538
        %vm2546 = vmor %vm2544, %vm2545
        %v2547 = vsel %vm2546, %v2538, %v2543
        %v2548 = vrsqrt.pop %v2267
        %v2549 = vmul.f32 %v2548, %v2267
        %v2550 = vmul.f32 %v2549, %v2548
        %v2551 = vmul.f32 0.5, %v2550
        %v2552 = vsub.f32 1.5, %v2551
        %v2553 = vmul.f32 %v2548, %v2552
        %vm2554 = vweird.f32 %v2267
        %vm2555 = vweird.f32 %v2548
        %vm2556 = vmor %vm2554, %vm2555
        %v2557 = vsel %vm2556, %v2548, %v2553
        %v2558 = vrsqrt.pop %v2268
        %v2559 = vmul.f32 %v2558, %v2268
        %v2560 = vmul.f32 %v2559, %v2558
        %v2561 = vmul.f32 0.5, %v2560
        %v2562 = vsub.f32 1.5, %v2561
        %v2563 = vmul.f32 %v2558, %v2562
        %vm2564 = vweird.f32 %v2268
        %vm2565 = vweird.f32 %v2558
        %vm2566 = vmor %vm2564, %vm2565
        %v2567 = vsel %vm2566, %v2558, %v2563
        %v2568 = vrsqrt.pop %v2269
        %v2569 = vmul.f32 %v2568, %v2269
        %v2570 = vmul.f32 %v2569, %v2568
        %v2571 = vmul.f32 0.5, %v2570
        %v2572 = vsub.f32 1.5, %v2571
        %v2573 = vmul.f32 %v2568, %v2572
        %vm2574 = vweird.f32 %v2269
        %vm2575 = vweird.f32 %v2568
        %vm2576 = vmor %vm2574, %vm2575
        %v2577 = vsel %vm2576, %v2568, %v2573
        %v2578 = vrsqrt.pop %v2270
        %v2579 = vmul.f32 %v2578, %v2270
        %v2580 = vmul.f32 %v2579, %v2578
        %v2581 = vmul.f32 0.5, %v2580
        %v2582 = vsub.f32 1.5, %v2581
        %v2583 = vmul.f32 %v2578, %v2582
        %vm2584 = vweird.f32 %v2270
        %vm2585 = vweird.f32 %v2578
        %vm2586 = vmor %vm2584, %vm2585
        %v2587 = vsel %vm2586, %v2578, %v2583
        %v2588 = vrsqrt.pop %v2271
        %v2589 = vmul.f32 %v2588, %v2271
        %v2590 = vmul.f32 %v2589, %v2588
        %v2591 = vmul.f32 0.5, %v2590
        %v2592 = vsub.f32 1.5, %v2591
        %v2593 = vmul.f32 %v2588, %v2592
        %vm2594 = vweird.f32 %v2271
        %vm2595 = vweird.f32 %v2588
        %vm2596 = vmor %vm2594, %vm2595
        %v2597 = vsel %vm2596, %v2588, %v2593
        %v2598 = vrsqrt.pop %v2272
        %v2599 = vmul.f32 %v2598, %v2272
        %v2600 = vmul.f32 %v2599, %v2598
        %v2601 = vmul.f32 0.5, %v2600
        %v2602 = vsub.f32 1.5, %v2601
        %v2603 = vmul.f32 %v2598, %v2602
        %vm2604 = vweird.f32 %v2272
        %vm2605 = vweird.f32 %v2598
        %vm2606 = vmor %vm2604, %vm2605
        %v2607 = vsel %vm2606, %v2598, %v2603
        %v2608 = vrsqrt.pop %v2273
        %v2609 = vmul.f32 %v2608, %v2273
        %v2610 = vmul.f32 %v2609, %v2608
        %v2611 = vmul.f32 0.5, %v2610
        %v2612 = vsub.f32 1.5, %v2611
        %v2613 = vmul.f32 %v2608, %v2612
        %vm2614 = vweird.f32 %v2273
        %vm2615 = vweird.f32 %v2608
        %vm2616 = vmor %vm2614, %vm2615
        %v2617 = vsel %vm2616, %v2608, %v2613
        %v2618 = vrsqrt.pop %v2274
        %v2619 = vmul.f32 %v2618, %v2274
        %v2620 = vmul.f32 %v2619, %v2618
        %v2621 = vmul.f32 0.5, %v2620
        %v2622 = vsub.f32 1.5, %v2621
        %v2623 = vmul.f32 %v2618, %v2622
        %vm2624 = vweird.f32 %v2274
        %vm2625 = vweird.f32 %v2618
        %vm2626 = vmor %vm2624, %vm2625
        %v2627 = vsel %vm2626, %v2618, %v2623
        %v2628 = vrsqrt.pop %v2275
        %v2629 = vmul.f32 %v2628, %v2275
        %v2630 = vmul.f32 %v2629, %v2628
        %v2631 = vmul.f32 0.5, %v2630
        %v2632 = vsub.f32 1.5, %v2631
        %v2633 = vmul.f32 %v2628, %v2632
        %vm2634 = vweird.f32 %v2275
        %vm2635 = vweird.f32 %v2628
        %vm2636 = vmor %vm2634, %vm2635
        %v2637 = vsel %vm2636, %v2628, %v2633
        %v2638 = vrsqrt.pop %v2276
        %v2639 = vmul.f32 %v2638, %v2276
        %v2640 = vmul.f32 %v2639, %v2638
        %v2641 = vmul.f32 0.5, %v2640
        %v2642 = vsub.f32 1.5, %v2641
        %v2643 = vmul.f32 %v2638, %v2642
        %vm2644 = vweird.f32 %v2276
        %vm2645 = vweird.f32 %v2638
        %vm2646 = vmor %vm2644, %vm2645
        %v2647 = vsel %vm2646, %v2638, %v2643
        %v2648 = vrsqrt.pop %v2277
        %v2649 = vmul.f32 %v2648, %v2277
        %v2650 = vmul.f32 %v2649, %v2648
        %v2651 = vmul.f32 0.5, %v2650
        %v2652 = vsub.f32 1.5, %v2651
        %v2653 = vmul.f32 %v2648, %v2652
        %vm2654 = vweird.f32 %v2277
        %vm2655 = vweird.f32 %v2648
        %vm2656 = vmor %vm2654, %vm2655
        %v2657 = vsel %vm2656, %v2648, %v2653
        %v2658 = vrsqrt.pop %v2278
        %v2659 = vmul.f32 %v2658, %v2278
        %v2660 = vmul.f32 %v2659, %v2658
        %v2661 = vmul.f32 0.5, %v2660
        %v2662 = vsub.f32 1.5, %v2661
        %v2663 = vmul.f32 %v2658, %v2662
        %vm2664 = vweird.f32 %v2278
        %vm2665 = vweird.f32 %v2658
        %vm2666 = vmor %vm2664, %vm2665
        %v2667 = vsel %vm2666, %v2658, %v2663
        %v2668 = vrsqrt.pop %v2279
        %v2669 = vmul.f32 %v2668, %v2279
        %v2670 = vmul.f32 %v2669, %v2668
        %v2671 = vmul.f32 0.5, %v2670
        %v2672 = vsub.f32 1.5, %v2671
        %v2673 = vmul.f32 %v2668, %v2672
        %vm2674 = vweird.f32 %v2279
        %vm2675 = vweird.f32 %v2668
        %vm2676 = vmor %vm2674, %vm2675
        %v2677 = vsel %vm2676, %v2668, %v2673
        %v2678 = vrsqrt.pop %v2280
        %v2679 = vmul.f32 %v2678, %v2280
        %v2680 = vmul.f32 %v2679, %v2678
        %v2681 = vmul.f32 0.5, %v2680
        %v2682 = vsub.f32 1.5, %v2681
        %v2683 = vmul.f32 %v2678, %v2682
        %vm2684 = vweird.f32 %v2280
        %vm2685 = vweird.f32 %v2678
        %vm2686 = vmor %vm2684, %vm2685
        %v2687 = vsel %vm2686, %v2678, %v2683
        %v2688 = vrsqrt.pop %v2281
        %v2689 = vmul.f32 %v2688, %v2281
        %v2690 = vmul.f32 %v2689, %v2688
        %v2691 = vmul.f32 0.5, %v2690
        %v2692 = vsub.f32 1.5, %v2691
        %v2693 = vmul.f32 %v2688, %v2692
        %vm2694 = vweird.f32 %v2281
        %vm2695 = vweird.f32 %v2688
        %vm2696 = vmor %vm2694, %vm2695
        %v2697 = vsel %vm2696, %v2688, %v2693
        %v2698 = vrsqrt.pop %v2282
        %v2699 = vmul.f32 %v2698, %v2282
        %v2700 = vmul.f32 %v2699, %v2698
        %v2701 = vmul.f32 0.5, %v2700
        %v2702 = vsub.f32 1.5, %v2701
        %v2703 = vmul.f32 %v2698, %v2702
        %vm2704 = vweird.f32 %v2282
        %vm2705 = vweird.f32 %v2698
        %vm2706 = vmor %vm2704, %vm2705
        %v2707 = vsel %vm2706, %v2698, %v2703
        %v2708 = vrsqrt.pop %v2283
        %v2709 = vmul.f32 %v2708, %v2283
        %v2710 = vmul.f32 %v2709, %v2708
        %v2711 = vmul.f32 0.5, %v2710
        %v2712 = vsub.f32 1.5, %v2711
        %v2713 = vmul.f32 %v2708, %v2712
        %vm2714 = vweird.f32 %v2283
        %vm2715 = vweird.f32 %v2708
        %vm2716 = vmor %vm2714, %vm2715
        %v2717 = vsel %vm2716, %v2708, %v2713
        %v2718 = vrsqrt.pop %v2284
        %v2719 = vmul.f32 %v2718, %v2284
        %v2720 = vmul.f32 %v2719, %v2718
        %v2721 = vmul.f32 0.5, %v2720
        %v2722 = vsub.f32 1.5, %v2721
        %v2723 = vmul.f32 %v2718, %v2722
        %vm2724 = vweird.f32 %v2284
        %vm2725 = vweird.f32 %v2718
        %vm2726 = vmor %vm2724, %vm2725
        %v2727 = vsel %vm2726, %v2718, %v2723
        %v2728 = vrsqrt.pop %v2285
        %v2729 = vmul.f32 %v2728, %v2285
        %v2730 = vmul.f32 %v2729, %v2728
        %v2731 = vmul.f32 0.5, %v2730
        %v2732 = vsub.f32 1.5, %v2731
        %v2733 = vmul.f32 %v2728, %v2732
        %vm2734 = vweird.f32 %v2285
        %vm2735 = vweird.f32 %v2728
        %vm2736 = vmor %vm2734, %vm2735
        %v2737 = vsel %vm2736, %v2728, %v2733
        %v2738 = vrsqrt.pop %v2286
        %v2739 = vmul.f32 %v2738, %v2286
        %v2740 = vmul.f32 %v2739, %v2738
        %v2741 = vmul.f32 0.5, %v2740
        %v2742 = vsub.f32 1.5, %v2741
        %v2743 = vmul.f32 %v2738, %v2742
        %vm2744 = vweird.f32 %v2286
        %vm2745 = vweird.f32 %v2738
        %vm2746 = vmor %vm2744, %vm2745
        %v2747 = vsel %vm2746, %v2738, %v2743
        %v2748 = vrsqrt.pop %v2287
        %v2749 = vmul.f32 %v2748, %v2287
        %v2750 = vmul.f32 %v2749, %v2748
        %v2751 = vmul.f32 0.5, %v2750
        %v2752 = vsub.f32 1.5, %v2751
        %v2753 = vmul.f32 %v2748, %v2752
        %vm2754 = vweird.f32 %v2287
        %vm2755 = vweird.f32 %v2748
        %vm2756 = vmor %vm2754, %vm2755
        %v2757 = vsel %vm2756, %v2748, %v2753
        %v2758 = vrsqrt.pop %v2288
        %v2759 = vmul.f32 %v2758, %v2288
        %v2760 = vmul.f32 %v2759, %v2758
        %v2761 = vmul.f32 0.5, %v2760
        %v2762 = vsub.f32 1.5, %v2761
        %v2763 = vmul.f32 %v2758, %v2762
        %vm2764 = vweird.f32 %v2288
        %vm2765 = vweird.f32 %v2758
        %vm2766 = vmor %vm2764, %vm2765
        %v2767 = vsel %vm2766, %v2758, %v2763
        %v2768 = vrsqrt.pop %v2289
        %v2769 = vmul.f32 %v2768, %v2289
        %v2770 = vmul.f32 %v2769, %v2768
        %v2771 = vmul.f32 0.5, %v2770
        %v2772 = vsub.f32 1.5, %v2771
        %v2773 = vmul.f32 %v2768, %v2772
        %vm2774 = vweird.f32 %v2289
        %vm2775 = vweird.f32 %v2768
        %vm2776 = vmor %vm2774, %vm2775
        %v2777 = vsel %vm2776, %v2768, %v2773
        %v2778 = vrsqrt.pop %v2290
        %v2779 = vmul.f32 %v2778, %v2290
        %v2780 = vmul.f32 %v2779, %v2778
        %v2781 = vmul.f32 0.5, %v2780
        %v2782 = vsub.f32 1.5, %v2781
        %v2783 = vmul.f32 %v2778, %v2782
        %vm2784 = vweird.f32 %v2290
        %vm2785 = vweird.f32 %v2778
        %vm2786 = vmor %vm2784, %vm2785
        %v2787 = vsel %vm2786, %v2778, %v2783
        %v2788 = vrsqrt.pop %v2291
        %v2789 = vmul.f32 %v2788, %v2291
        %v2790 = vmul.f32 %v2789, %v2788
        %v2791 = vmul.f32 0.5, %v2790
        %v2792 = vsub.f32 1.5, %v2791
        %v2793 = vmul.f32 %v2788, %v2792
        %vm2794 = vweird.f32 %v2291
        %vm2795 = vweird.f32 %v2788
        %vm2796 = vmor %vm2794, %vm2795
        %v2797 = vsel %vm2796, %v2788, %v2793
        %v2798 = vrsqrt.pop %v2292
        %v2799 = vmul.f32 %v2798, %v2292
        %v2800 = vmul.f32 %v2799, %v2798
        %v2801 = vmul.f32 0.5, %v2800
        %v2802 = vsub.f32 1.5, %v2801
        %v2803 = vmul.f32 %v2798, %v2802
        %vm2804 = vweird.f32 %v2292
        %vm2805 = vweird.f32 %v2798
        %vm2806 = vmor %vm2804, %vm2805
        %v2807 = vsel %vm2806, %v2798, %v2803
        %v2808 = vrsqrt.pop %v2293
        %v2809 = vmul.f32 %v2808, %v2293
        %v2810 = vmul.f32 %v2809, %v2808
        %v2811 = vmul.f32 0.5, %v2810
        %v2812 = vsub.f32 1.5, %v2811
        %v2813 = vmul.f32 %v2808, %v2812
        %vm2814 = vweird.f32 %v2293
        %vm2815 = vweird.f32 %v2808
        %vm2816 = vmor %vm2814, %vm2815
        %v2817 = vsel %vm2816, %v2808, %v2813
        %v2818 = vrsqrt.pop %v2294
        %v2819 = vmul.f32 %v2818, %v2294
        %v2820 = vmul.f32 %v2819, %v2818
        %v2821 = vmul.f32 0.5, %v2820
        %v2822 = vsub.f32 1.5, %v2821
        %v2823 = vmul.f32 %v2818, %v2822
        %vm2824 = vweird.f32 %v2294
        %vm2825 = vweird.f32 %v2818
        %vm2826 = vmor %vm2824, %vm2825
        %v2827 = vsel %vm2826, %v2818, %v2823
        %v2828 = vrsqrt.pop %v2295
        %v2829 = vmul.f32 %v2828, %v2295
        %v2830 = vmul.f32 %v2829, %v2828
        %v2831 = vmul.f32 0.5, %v2830
        %v2832 = vsub.f32 1.5, %v2831
        %v2833 = vmul.f32 %v2828, %v2832
        %vm2834 = vweird.f32 %v2295
        %vm2835 = vweird.f32 %v2828
        %vm2836 = vmor %vm2834, %vm2835
        %v2837 = vsel %vm2836, %v2828, %v2833
        %v2838 = vrsqrt.pop %v2296
        %v2839 = vmul.f32 %v2838, %v2296
        %v2840 = vmul.f32 %v2839, %v2838
        %v2841 = vmul.f32 0.5, %v2840
        %v2842 = vsub.f32 1.5, %v2841
        %v2843 = vmul.f32 %v2838, %v2842
        %vm2844 = vweird.f32 %v2296
        %vm2845 = vweird.f32 %v2838
        %vm2846 = vmor %vm2844, %vm2845
        %v2847 = vsel %vm2846, %v2838, %v2843
        %v2848 = vrsqrt.pop %v2297
        %v2849 = vmul.f32 %v2848, %v2297
        %v2850 = vmul.f32 %v2849, %v2848
        %v2851 = vmul.f32 0.5, %v2850
        %v2852 = vsub.f32 1.5, %v2851
        %v2853 = vmul.f32 %v2848, %v2852
        %vm2854 = vweird.f32 %v2297
        %vm2855 = vweird.f32 %v2848
        %vm2856 = vmor %vm2854, %vm2855
        %v2857 = vsel %vm2856, %v2848, %v2853
        %v2858 = vrsqrt.pop %v2298
        %v2859 = vmul.f32 %v2858, %v2298
        %v2860 = vmul.f32 %v2859, %v2858
        %v2861 = vmul.f32 0.5, %v2860
        %v2862 = vsub.f32 1.5, %v2861
        %v2863 = vmul.f32 %v2858, %v2862
        %vm2864 = vweird.f32 %v2298
        %vm2865 = vweird.f32 %v2858
        %vm2866 = vmor %vm2864, %vm2865
        %v2867 = vsel %vm2866, %v2858, %v2863
        %v2868 = vrsqrt.pop %v2299
        %v2869 = vmul.f32 %v2868, %v2299
        %v2870 = vmul.f32 %v2869, %v2868
        %v2871 = vmul.f32 0.5, %v2870
        %v2872 = vsub.f32 1.5, %v2871
        %v2873 = vmul.f32 %v2868, %v2872
        %vm2874 = vweird.f32 %v2299
        %vm2875 = vweird.f32 %v2868
        %vm2876 = vmor %vm2874, %vm2875
        %v2877 = vsel %vm2876, %v2868, %v2873
        %v2878 = vrsqrt.pop %v2300
        %v2879 = vmul.f32 %v2878, %v2300
        %v2880 = vmul.f32 %v2879, %v2878
        %v2881 = vmul.f32 0.5, %v2880
        %v2882 = vsub.f32 1.5, %v2881
        %v2883 = vmul.f32 %v2878, %v2882
        %vm2884 = vweird.f32 %v2300
        %vm2885 = vweird.f32 %v2878
        %vm2886 = vmor %vm2884, %vm2885
        %v2887 = vsel %vm2886, %v2878, %v2883
        %v2888 = vrsqrt.pop %v2301
        %v2889 = vmul.f32 %v2888, %v2301
        %v2890 = vmul.f32 %v2889, %v2888
        %v2891 = vmul.f32 0.5, %v2890
        %v2892 = vsub.f32 1.5, %v2891
        %v2893 = vmul.f32 %v2888, %v2892
        %vm2894 = vweird.f32 %v2301
        %vm2895 = vweird.f32 %v2888
        %vm2896 = vmor %vm2894, %vm2895
        %v2897 = vsel %vm2896, %v2888, %v2893
        %v2898 = vrsqrt.pop %v2302
        %v2899 = vmul.f32 %v2898, %v2302
        %v2900 = vmul.f32 %v2899, %v2898
        %v2901 = vmul.f32 0.5, %v2900
        %v2902 = vsub.f32 1.5, %v2901
        %v2903 = vmul.f32 %v2898, %v2902
        %vm2904 = vweird.f32 %v2302
        %vm2905 = vweird.f32 %v2898
        %vm2906 = vmor %vm2904, %vm2905
        %v2907 = vsel %vm2906, %v2898, %v2903
        %v2908 = vrsqrt.pop %v2303
        %v2909 = vmul.f32 %v2908, %v2303
        %v2910 = vmul.f32 %v2909, %v2908
        %v2911 = vmul.f32 0.5, %v2910
        %v2912 = vsub.f32 1.5, %v2911
        %v2913 = vmul.f32 %v2908, %v2912
        %vm2914 = vweird.f32 %v2303
        %vm2915 = vweird.f32 %v2908
        %vm2916 = vmor %vm2914, %vm2915
        %v2917 = vsel %vm2916, %v2908, %v2913
        %v2918 = vrsqrt.pop %v2304
        %v2919 = vmul.f32 %v2918, %v2304
        %v2920 = vmul.f32 %v2919, %v2918
        %v2921 = vmul.f32 0.5, %v2920
        %v2922 = vsub.f32 1.5, %v2921
        %v2923 = vmul.f32 %v2918, %v2922
        %vm2924 = vweird.f32 %v2304
        %vm2925 = vweird.f32 %v2918
        %vm2926 = vmor %vm2924, %vm2925
        %v2927 = vsel %vm2926, %v2918, %v2923
        %v2928 = vrsqrt.pop %v2305
        %v2929 = vmul.f32 %v2928, %v2305
        %v2930 = vmul.f32 %v2929, %v2928
        %v2931 = vmul.f32 0.5, %v2930
        %v2932 = vsub.f32 1.5, %v2931
        %v2933 = vmul.f32 %v2928, %v2932
        %vm2934 = vweird.f32 %v2305
        %vm2935 = vweird.f32 %v2928
        %vm2936 = vmor %vm2934, %vm2935
        %v2937 = vsel %vm2936, %v2928, %v2933
        %v2938 = vrsqrt.pop %v2306
        %v2939 = vmul.f32 %v2938, %v2306
        %v2940 = vmul.f32 %v2939, %v2938
        %v2941 = vmul.f32 0.5, %v2940
        %v2942 = vsub.f32 1.5, %v2941
        %v2943 = vmul.f32 %v2938, %v2942
        %vm2944 = vweird.f32 %v2306
        %vm2945 = vweird.f32 %v2938
        %vm2946 = vmor %vm2944, %vm2945
        %v2947 = vsel %vm2946, %v2938, %v2943
        %v2948 = vrsqrt.pop %v2307
        %v2949 = vmul.f32 %v2948, %v2307
        %v2950 = vmul.f32 %v2949, %v2948
        %v2951 = vmul.f32 0.5, %v2950
        %v2952 = vsub.f32 1.5, %v2951
        %v2953 = vmul.f32 %v2948, %v2952
        %vm2954 = vweird.f32 %v2307
        %vm2955 = vweird.f32 %v2948
        %vm2956 = vmor %vm2954, %vm2955
        %v2957 = vsel %vm2956, %v2948, %v2953
        %v2958 = vrsqrt.pop %v2308
        %v2959 = vmul.f32 %v2958, %v2308
        %v2960 = vmul.f32 %v2959, %v2958
        %v2961 = vmul.f32 0.5, %v2960
        %v2962 = vsub.f32 1.5, %v2961
        %v2963 = vmul.f32 %v2958, %v2962
        %vm2964 = vweird.f32 %v2308
        %vm2965 = vweird.f32 %v2958
        %vm2966 = vmor %vm2964, %vm2965
        %v2967 = vsel %vm2966, %v2958, %v2963
        %v2968 = vrsqrt.pop %v2309
        %v2969 = vmul.f32 %v2968, %v2309
        %v2970 = vmul.f32 %v2969, %v2968
        %v2971 = vmul.f32 0.5, %v2970
        %v2972 = vsub.f32 1.5, %v2971
        %v2973 = vmul.f32 %v2968, %v2972
        %vm2974 = vweird.f32 %v2309
        %vm2975 = vweird.f32 %v2968
        %vm2976 = vmor %vm2974, %vm2975
        %v2977 = vsel %vm2976, %v2968, %v2973
        %v2978 = vrsqrt.pop %v2310
        %v2979 = vmul.f32 %v2978, %v2310
        %v2980 = vmul.f32 %v2979, %v2978
        %v2981 = vmul.f32 0.5, %v2980
        %v2982 = vsub.f32 1.5, %v2981
        %v2983 = vmul.f32 %v2978, %v2982
        %vm2984 = vweird.f32 %v2310
        %vm2985 = vweird.f32 %v2978
        %vm2986 = vmor %vm2984, %vm2985
        %v2987 = vsel %vm2986, %v2978, %v2983
        %v2988 = vrsqrt.pop %v2311
        %v2989 = vmul.f32 %v2988, %v2311
        %v2990 = vmul.f32 %v2989, %v2988
        %v2991 = vmul.f32 0.5, %v2990
        %v2992 = vsub.f32 1.5, %v2991
        %v2993 = vmul.f32 %v2988, %v2992
        %vm2994 = vweird.f32 %v2311
        %vm2995 = vweird.f32 %v2988
        %vm2996 = vmor %vm2994, %vm2995
        %v2997 = vsel %vm2996, %v2988, %v2993
        %v2998 = vrsqrt.pop %v2312
        %v2999 = vmul.f32 %v2998, %v2312
        %v3000 = vmul.f32 %v2999, %v2998
        %v3001 = vmul.f32 0.5, %v3000
        %v3002 = vsub.f32 1.5, %v3001
        %v3003 = vmul.f32 %v2998, %v3002
        %vm3004 = vweird.f32 %v2312
        %vm3005 = vweird.f32 %v2998
        %vm3006 = vmor %vm3004, %vm3005
        %v3007 = vsel %vm3006, %v2998, %v3003
        %v3008 = vrsqrt.pop %v2313
        %v3009 = vmul.f32 %v3008, %v2313
        %v3010 = vmul.f32 %v3009, %v3008
        %v3011 = vmul.f32 0.5, %v3010
        %v3012 = vsub.f32 1.5, %v3011
        %v3013 = vmul.f32 %v3008, %v3012
        %vm3014 = vweird.f32 %v2313
        %vm3015 = vweird.f32 %v3008
        %vm3016 = vmor %vm3014, %vm3015
        %v3017 = vsel %vm3016, %v3008, %v3013
        %v3018 = vrsqrt.pop %v2314
        %v3019 = vmul.f32 %v3018, %v2314
        %v3020 = vmul.f32 %v3019, %v3018
        %v3021 = vmul.f32 0.5, %v3020
        %v3022 = vsub.f32 1.5, %v3021
        %v3023 = vmul.f32 %v3018, %v3022
        %vm3024 = vweird.f32 %v2314
        %vm3025 = vweird.f32 %v3018
        %vm3026 = vmor %vm3024, %vm3025
        %v3027 = vsel %vm3026, %v3018, %v3023
        %v3028 = vrsqrt.pop %v2315
        %v3029 = vmul.f32 %v3028, %v2315
        %v3030 = vmul.f32 %v3029, %v3028
        %v3031 = vmul.f32 0.5, %v3030
        %v3032 = vsub.f32 1.5, %v3031
        %v3033 = vmul.f32 %v3028, %v3032
        %vm3034 = vweird.f32 %v2315
        %vm3035 = vweird.f32 %v3028
        %vm3036 = vmor %vm3034, %vm3035
        %v3037 = vsel %vm3036, %v3028, %v3033
        %v3038 = vrsqrt.pop %v2316
        %v3039 = vmul.f32 %v3038, %v2316
        %v3040 = vmul.f32 %v3039, %v3038
        %v3041 = vmul.f32 0.5, %v3040
        %v3042 = vsub.f32 1.5, %v3041
        %v3043 = vmul.f32 %v3038, %v3042
        %vm3044 = vweird.f32 %v2316
        %vm3045 = vweird.f32 %v3038
        %vm3046 = vmor %vm3044, %vm3045
        %v3047 = vsel %vm3046, %v3038, %v3043
        %v3048 = vrsqrt.pop %v2317
        %v3049 = vmul.f32 %v3048, %v2317
        %v3050 = vmul.f32 %v3049, %v3048
        %v3051 = vmul.f32 0.5, %v3050
        %v3052 = vsub.f32 1.5, %v3051
        %v3053 = vmul.f32 %v3048, %v3052
        %vm3054 = vweird.f32 %v2317
        %vm3055 = vweird.f32 %v3048
        %vm3056 = vmor %vm3054, %vm3055
        %v3057 = vsel %vm3056, %v3048, %v3053
        %v3058 = vrsqrt.pop %v2318
        %v3059 = vmul.f32 %v3058, %v2318
        %v3060 = vmul.f32 %v3059, %v3058
        %v3061 = vmul.f32 0.5, %v3060
        %v3062 = vsub.f32 1.5, %v3061
        %v3063 = vmul.f32 %v3058, %v3062
        %vm3064 = vweird.f32 %v2318
        %vm3065 = vweird.f32 %v3058
        %vm3066 = vmor %vm3064, %vm3065
        %v3067 = vsel %vm3066, %v3058, %v3063
        %v3068 = vrsqrt.pop %v2319
        %v3069 = vmul.f32 %v3068, %v2319
        %v3070 = vmul.f32 %v3069, %v3068
        %v3071 = vmul.f32 0.5, %v3070
        %v3072 = vsub.f32 1.5, %v3071
        %v3073 = vmul.f32 %v3068, %v3072
        %vm3074 = vweird.f32 %v2319
        %vm3075 = vweird.f32 %v3068
        %vm3076 = vmor %vm3074, %vm3075
        %v3077 = vsel %vm3076, %v3068, %v3073
        %v3078 = vrsqrt.pop %v2320
        %v3079 = vmul.f32 %v3078, %v2320
        %v3080 = vmul.f32 %v3079, %v3078
        %v3081 = vmul.f32 0.5, %v3080
        %v3082 = vsub.f32 1.5, %v3081
        %v3083 = vmul.f32 %v3078, %v3082
        %vm3084 = vweird.f32 %v2320
        %vm3085 = vweird.f32 %v3078
        %vm3086 = vmor %vm3084, %vm3085
        %v3087 = vsel %vm3086, %v3078, %v3083
        %v3088 = vrsqrt.pop %v2321
        %v3089 = vmul.f32 %v3088, %v2321
        %v3090 = vmul.f32 %v3089, %v3088
        %v3091 = vmul.f32 0.5, %v3090
        %v3092 = vsub.f32 1.5, %v3091
        %v3093 = vmul.f32 %v3088, %v3092
        %vm3094 = vweird.f32 %v2321
        %vm3095 = vweird.f32 %v3088
        %vm3096 = vmor %vm3094, %vm3095
        %v3097 = vsel %vm3096, %v3088, %v3093
        %v3098 = vrsqrt.pop %v2322
        %v3099 = vmul.f32 %v3098, %v2322
        %v3100 = vmul.f32 %v3099, %v3098
        %v3101 = vmul.f32 0.5, %v3100
        %v3102 = vsub.f32 1.5, %v3101
        %v3103 = vmul.f32 %v3098, %v3102
        %vm3104 = vweird.f32 %v2322
        %vm3105 = vweird.f32 %v3098
        %vm3106 = vmor %vm3104, %vm3105
        %v3107 = vsel %vm3106, %v3098, %v3103
        %v3108 = vrsqrt.pop %v2323
        %v3109 = vmul.f32 %v3108, %v2323
        %v3110 = vmul.f32 %v3109, %v3108
        %v3111 = vmul.f32 0.5, %v3110
        %v3112 = vsub.f32 1.5, %v3111
        %v3113 = vmul.f32 %v3108, %v3112
        %vm3114 = vweird.f32 %v2323
        %vm3115 = vweird.f32 %v3108
        %vm3116 = vmor %vm3114, %vm3115
        %v3117 = vsel %vm3116, %v3108, %v3113
        %v3118 = vrsqrt.pop %v2324
        %v3119 = vmul.f32 %v3118, %v2324
        %v3120 = vmul.f32 %v3119, %v3118
        %v3121 = vmul.f32 0.5, %v3120
        %v3122 = vsub.f32 1.5, %v3121
        %v3123 = vmul.f32 %v3118, %v3122
        %vm3124 = vweird.f32 %v2324
        %vm3125 = vweird.f32 %v3118
        %vm3126 = vmor %vm3124, %vm3125
        %v3127 = vsel %vm3126, %v3118, %v3123
        %v3128 = vrsqrt.pop %v2325
        %v3129 = vmul.f32 %v3128, %v2325
        %v3130 = vmul.f32 %v3129, %v3128
        %v3131 = vmul.f32 0.5, %v3130
        %v3132 = vsub.f32 1.5, %v3131
        %v3133 = vmul.f32 %v3128, %v3132
        %vm3134 = vweird.f32 %v2325
        %vm3135 = vweird.f32 %v3128
        %vm3136 = vmor %vm3134, %vm3135
        %v3137 = vsel %vm3136, %v3128, %v3133
        %v3138 = vrsqrt.pop %v2326
        %v3139 = vmul.f32 %v3138, %v2326
        %v3140 = vmul.f32 %v3139, %v3138
        %v3141 = vmul.f32 0.5, %v3140
        %v3142 = vsub.f32 1.5, %v3141
        %v3143 = vmul.f32 %v3138, %v3142
        %vm3144 = vweird.f32 %v2326
        %vm3145 = vweird.f32 %v3138
        %vm3146 = vmor %vm3144, %vm3145
        %v3147 = vsel %vm3146, %v3138, %v3143
        %v3148 = vrsqrt.pop %v2327
        %v3149 = vmul.f32 %v3148, %v2327
        %v3150 = vmul.f32 %v3149, %v3148
        %v3151 = vmul.f32 0.5, %v3150
        %v3152 = vsub.f32 1.5, %v3151
        %v3153 = vmul.f32 %v3148, %v3152
        %vm3154 = vweird.f32 %v2327
        %vm3155 = vweird.f32 %v3148
        %vm3156 = vmor %vm3154, %vm3155
        %v3157 = vsel %vm3156, %v3148, %v3153
        %v3158 = vrsqrt.pop %v2328
        %v3159 = vmul.f32 %v3158, %v2328
        %v3160 = vmul.f32 %v3159, %v3158
        %v3161 = vmul.f32 0.5, %v3160
        %v3162 = vsub.f32 1.5, %v3161
        %v3163 = vmul.f32 %v3158, %v3162
        %vm3164 = vweird.f32 %v2328
        %vm3165 = vweird.f32 %v3158
        %vm3166 = vmor %vm3164, %vm3165
        %v3167 = vsel %vm3166, %v3158, %v3163
        %v3168 = vrsqrt.pop %v2329
        %v3169 = vmul.f32 %v3168, %v2329
        %v3170 = vmul.f32 %v3169, %v3168
        %v3171 = vmul.f32 0.5, %v3170
        %v3172 = vsub.f32 1.5, %v3171
        %v3173 = vmul.f32 %v3168, %v3172
        %vm3174 = vweird.f32 %v2329
        %vm3175 = vweird.f32 %v3168
        %vm3176 = vmor %vm3174, %vm3175
        %v3177 = vsel %vm3176, %v3168, %v3173
        %v3178 = vrsqrt.pop %v2330
        %v3179 = vmul.f32 %v3178, %v2330
        %v3180 = vmul.f32 %v3179, %v3178
        %v3181 = vmul.f32 0.5, %v3180
        %v3182 = vsub.f32 1.5, %v3181
        %v3183 = vmul.f32 %v3178, %v3182
        %vm3184 = vweird.f32 %v2330
        %vm3185 = vweird.f32 %v3178
        %vm3186 = vmor %vm3184, %vm3185
        %v3187 = vsel %vm3186, %v3178, %v3183
        %v3188 = vrsqrt.pop %v2331
        %v3189 = vmul.f32 %v3188, %v2331
        %v3190 = vmul.f32 %v3189, %v3188
        %v3191 = vmul.f32 0.5, %v3190
        %v3192 = vsub.f32 1.5, %v3191
        %v3193 = vmul.f32 %v3188, %v3192
        %vm3194 = vweird.f32 %v2331
        %vm3195 = vweird.f32 %v3188
        %vm3196 = vmor %vm3194, %vm3195
        %v3197 = vsel %vm3196, %v3188, %v3193
        %v3198 = vrsqrt.pop %v2332
        %v3199 = vmul.f32 %v3198, %v2332
        %v3200 = vmul.f32 %v3199, %v3198
        %v3201 = vmul.f32 0.5, %v3200
        %v3202 = vsub.f32 1.5, %v3201
        %v3203 = vmul.f32 %v3198, %v3202
        %vm3204 = vweird.f32 %v2332
        %vm3205 = vweird.f32 %v3198
        %vm3206 = vmor %vm3204, %vm3205
        %v3207 = vsel %vm3206, %v3198, %v3203
        %v3208 = vrsqrt.pop %v2333
        %v3209 = vmul.f32 %v3208, %v2333
        %v3210 = vmul.f32 %v3209, %v3208
        %v3211 = vmul.f32 0.5, %v3210
        %v3212 = vsub.f32 1.5, %v3211
        %v3213 = vmul.f32 %v3208, %v3212
        %vm3214 = vweird.f32 %v2333
        %vm3215 = vweird.f32 %v3208
        %vm3216 = vmor %vm3214, %vm3215
        %v3217 = vsel %vm3216, %v3208, %v3213
        %v3218 = vrsqrt.pop %v2334
        %v3219 = vmul.f32 %v3218, %v2334
        %v3220 = vmul.f32 %v3219, %v3218
        %v3221 = vmul.f32 0.5, %v3220
        %v3222 = vsub.f32 1.5, %v3221
        %v3223 = vmul.f32 %v3218, %v3222
        %vm3224 = vweird.f32 %v2334
        %vm3225 = vweird.f32 %v3218
        %vm3226 = vmor %vm3224, %vm3225
        %v3227 = vsel %vm3226, %v3218, %v3223
        %v3228 = vrsqrt.pop %v2335
        %v3229 = vmul.f32 %v3228, %v2335
        %v3230 = vmul.f32 %v3229, %v3228
        %v3231 = vmul.f32 0.5, %v3230
        %v3232 = vsub.f32 1.5, %v3231
        %v3233 = vmul.f32 %v3228, %v3232
        %vm3234 = vweird.f32 %v2335
        %vm3235 = vweird.f32 %v3228
        %vm3236 = vmor %vm3234, %vm3235
        %v3237 = vsel %vm3236, %v3228, %v3233
        %v3238 = vrsqrt.pop %v2336
        %v3239 = vmul.f32 %v3238, %v2336
        %v3240 = vmul.f32 %v3239, %v3238
        %v3241 = vmul.f32 0.5, %v3240
        %v3242 = vsub.f32 1.5, %v3241
        %v3243 = vmul.f32 %v3238, %v3242
        %vm3244 = vweird.f32 %v2336
        %vm3245 = vweird.f32 %v3238
        %vm3246 = vmor %vm3244, %vm3245
        %v3247 = vsel %vm3246, %v3238, %v3243
        %v3248 = vrsqrt.pop %v2337
        %v3249 = vmul.f32 %v3248, %v2337
        %v3250 = vmul.f32 %v3249, %v3248
        %v3251 = vmul.f32 0.5, %v3250
        %v3252 = vsub.f32 1.5, %v3251
        %v3253 = vmul.f32 %v3248, %v3252
        %vm3254 = vweird.f32 %v2337
        %vm3255 = vweird.f32 %v3248
        %vm3256 = vmor %vm3254, %vm3255
        %v3257 = vsel %vm3256, %v3248, %v3253
        %v3258 = vrsqrt.pop %v2338
        %v3259 = vmul.f32 %v3258, %v2338
        %v3260 = vmul.f32 %v3259, %v3258
        %v3261 = vmul.f32 0.5, %v3260
        %v3262 = vsub.f32 1.5, %v3261
        %v3263 = vmul.f32 %v3258, %v3262
        %vm3264 = vweird.f32 %v2338
        %vm3265 = vweird.f32 %v3258
        %vm3266 = vmor %vm3264, %vm3265
        %v3267 = vsel %vm3266, %v3258, %v3263
        %v3268 = vrsqrt.pop %v2339
        %v3269 = vmul.f32 %v3268, %v2339
        %v3270 = vmul.f32 %v3269, %v3268
        %v3271 = vmul.f32 0.5, %v3270
        %v3272 = vsub.f32 1.5, %v3271
        %v3273 = vmul.f32 %v3268, %v3272
        %vm3274 = vweird.f32 %v2339
        %vm3275 = vweird.f32 %v3268
        %vm3276 = vmor %vm3274, %vm3275
        %v3277 = vsel %vm3276, %v3268, %v3273
        %v3278 = vrsqrt.pop %v2340
        %v3279 = vmul.f32 %v3278, %v2340
        %v3280 = vmul.f32 %v3279, %v3278
        %v3281 = vmul.f32 0.5, %v3280
        %v3282 = vsub.f32 1.5, %v3281
        %v3283 = vmul.f32 %v3278, %v3282
        %vm3284 = vweird.f32 %v2340
        %vm3285 = vweird.f32 %v3278
        %vm3286 = vmor %vm3284, %vm3285
        %v3287 = vsel %vm3286, %v3278, %v3283
        %v3288 = vrsqrt.pop %v2341
        %v3289 = vmul.f32 %v3288, %v2341
        %v3290 = vmul.f32 %v3289, %v3288
        %v3291 = vmul.f32 0.5, %v3290
        %v3292 = vsub.f32 1.5, %v3291
        %v3293 = vmul.f32 %v3288, %v3292
        %vm3294 = vweird.f32 %v2341
        %vm3295 = vweird.f32 %v3288
        %vm3296 = vmor %vm3294, %vm3295
        %v3297 = vsel %vm3296, %v3288, %v3293
        %v3298 = vrsqrt.pop %v2342
        %v3299 = vmul.f32 %v3298, %v2342
        %v3300 = vmul.f32 %v3299, %v3298
        %v3301 = vmul.f32 0.5, %v3300
        %v3302 = vsub.f32 1.5, %v3301
        %v3303 = vmul.f32 %v3298, %v3302
        %vm3304 = vweird.f32 %v2342
        %vm3305 = vweird.f32 %v3298
        %vm3306 = vmor %vm3304, %vm3305
        %v3307 = vsel %vm3306, %v3298, %v3303
        %v3308 = vrsqrt.pop %v2343
        %v3309 = vmul.f32 %v3308, %v2343
        %v3310 = vmul.f32 %v3309, %v3308
        %v3311 = vmul.f32 0.5, %v3310
        %v3312 = vsub.f32 1.5, %v3311
        %v3313 = vmul.f32 %v3308, %v3312
        %vm3314 = vweird.f32 %v2343
        %vm3315 = vweird.f32 %v3308
        %vm3316 = vmor %vm3314, %vm3315
        %v3317 = vsel %vm3316, %v3308, %v3313
        %v3318 = vrsqrt.pop %v2344
        %v3319 = vmul.f32 %v3318, %v2344
        %v3320 = vmul.f32 %v3319, %v3318
        %v3321 = vmul.f32 0.5, %v3320
        %v3322 = vsub.f32 1.5, %v3321
        %v3323 = vmul.f32 %v3318, %v3322
        %vm3324 = vweird.f32 %v2344
        %vm3325 = vweird.f32 %v3318
        %vm3326 = vmor %vm3324, %vm3325
        %v3327 = vsel %vm3326, %v3318, %v3323
        %v3328 = vrsqrt.pop %v2345
        %v3329 = vmul.f32 %v3328, %v2345
        %v3330 = vmul.f32 %v3329, %v3328
        %v3331 = vmul.f32 0.5, %v3330
        %v3332 = vsub.f32 1.5, %v3331
        %v3333 = vmul.f32 %v3328, %v3332
        %vm3334 = vweird.f32 %v2345
        %vm3335 = vweird.f32 %v3328
        %vm3336 = vmor %vm3334, %vm3335
        %v3337 = vsel %vm3336, %v3328, %v3333
        %v3338 = vrsqrt.pop %v2346
        %v3339 = vmul.f32 %v3338, %v2346
        %v3340 = vmul.f32 %v3339, %v3338
        %v3341 = vmul.f32 0.5, %v3340
        %v3342 = vsub.f32 1.5, %v3341
        %v3343 = vmul.f32 %v3338, %v3342
        %vm3344 = vweird.f32 %v2346
        %vm3345 = vweird.f32 %v3338
        %vm3346 = vmor %vm3344, %vm3345
        %v3347 = vsel %vm3346, %v3338, %v3343
        %v3348 = vrsqrt.pop %v2347
        %v3349 = vmul.f32 %v3348, %v2347
        %v3350 = vmul.f32 %v3349, %v3348
        %v3351 = vmul.f32 0.5, %v3350
        %v3352 = vsub.f32 1.5, %v3351
        %v3353 = vmul.f32 %v3348, %v3352
        %vm3354 = vweird.f32 %v2347
        %vm3355 = vweird.f32 %v3348
        %vm3356 = vmor %vm3354, %vm3355
        %v3357 = vsel %vm3356, %v3348, %v3353
        %v3358 = vrsqrt.pop %v2348
        %v3359 = vmul.f32 %v3358, %v2348
        %v3360 = vmul.f32 %v3359, %v3358
        %v3361 = vmul.f32 0.5, %v3360
        %v3362 = vsub.f32 1.5, %v3361
        %v3363 = vmul.f32 %v3358, %v3362
        %vm3364 = vweird.f32 %v2348
        %vm3365 = vweird.f32 %v3358
        %vm3366 = vmor %vm3364, %vm3365
        %v3367 = vsel %vm3366, %v3358, %v3363
        %v3368 = vrsqrt.pop %v2349
        %v3369 = vmul.f32 %v3368, %v2349
        %v3370 = vmul.f32 %v3369, %v3368
        %v3371 = vmul.f32 0.5, %v3370
        %v3372 = vsub.f32 1.5, %v3371
        %v3373 = vmul.f32 %v3368, %v3372
        %vm3374 = vweird.f32 %v2349
        %vm3375 = vweird.f32 %v3368
        %vm3376 = vmor %vm3374, %vm3375
        %v3377 = vsel %vm3376, %v3368, %v3373
        %v3378 = vrsqrt.pop %v2350
        %v3379 = vmul.f32 %v3378, %v2350
        %v3380 = vmul.f32 %v3379, %v3378
        %v3381 = vmul.f32 0.5, %v3380
        %v3382 = vsub.f32 1.5, %v3381
        %v3383 = vmul.f32 %v3378, %v3382
        %vm3384 = vweird.f32 %v2350
        %vm3385 = vweird.f32 %v3378
        %vm3386 = vmor %vm3384, %vm3385
        %v3387 = vsel %vm3386, %v3378, %v3383
        %v3388 = vrsqrt.pop %v2351
        %v3389 = vmul.f32 %v3388, %v2351
        %v3390 = vmul.f32 %v3389, %v3388
        %v3391 = vmul.f32 0.5, %v3390
        %v3392 = vsub.f32 1.5, %v3391
        %v3393 = vmul.f32 %v3388, %v3392
        %vm3394 = vweird.f32 %v2351
        %vm3395 = vweird.f32 %v3388
        %vm3396 = vmor %vm3394, %vm3395
        %v3397 = vsel %vm3396, %v3388, %v3393
        %v3398 = vrsqrt.pop %v2352
        %v3399 = vmul.f32 %v3398, %v2352
        %v3400 = vmul.f32 %v3399, %v3398
        %v3401 = vmul.f32 0.5, %v3400
        %v3402 = vsub.f32 1.5, %v3401
        %v3403 = vmul.f32 %v3398, %v3402
        %vm3404 = vweird.f32 %v2352
        %vm3405 = vweird.f32 %v3398
        %vm3406 = vmor %vm3404, %vm3405
        %v3407 = vsel %vm3406, %v3398, %v3403
        %v3408 = vrsqrt.pop %v2353
        %v3409 = vmul.f32 %v3408, %v2353
        %v3410 = vmul.f32 %v3409, %v3408
        %v3411 = vmul.f32 0.5, %v3410
        %v3412 = vsub.f32 1.5, %v3411
        %v3413 = vmul.f32 %v3408, %v3412
        %vm3414 = vweird.f32 %v2353
        %vm3415 = vweird.f32 %v3408
        %vm3416 = vmor %vm3414, %vm3415
        %v3417 = vsel %vm3416, %v3408, %v3413
        %v3418 = vrsqrt.pop %v2354
        %v3419 = vmul.f32 %v3418, %v2354
        %v3420 = vmul.f32 %v3419, %v3418
        %v3421 = vmul.f32 0.5, %v3420
        %v3422 = vsub.f32 1.5, %v3421
        %v3423 = vmul.f32 %v3418, %v3422
        %vm3424 = vweird.f32 %v2354
        %vm3425 = vweird.f32 %v3418
        %vm3426 = vmor %vm3424, %vm3425
        %v3427 = vsel %vm3426, %v3418, %v3423
        %v3428 = vrsqrt.pop %v2355
        %v3429 = vmul.f32 %v3428, %v2355
        %v3430 = vmul.f32 %v3429, %v3428
        %v3431 = vmul.f32 0.5, %v3430
        %v3432 = vsub.f32 1.5, %v3431
        %v3433 = vmul.f32 %v3428, %v3432
        %vm3434 = vweird.f32 %v2355
        %vm3435 = vweird.f32 %v3428
        %vm3436 = vmor %vm3434, %vm3435
        %v3437 = vsel %vm3436, %v3428, %v3433
        %v3438 = vrsqrt.pop %v2356
        %v3439 = vmul.f32 %v3438, %v2356
        %v3440 = vmul.f32 %v3439, %v3438
        %v3441 = vmul.f32 0.5, %v3440
        %v3442 = vsub.f32 1.5, %v3441
        %v3443 = vmul.f32 %v3438, %v3442
        %vm3444 = vweird.f32 %v2356
        %vm3445 = vweird.f32 %v3438
        %vm3446 = vmor %vm3444, %vm3445
        %v3447 = vsel %vm3446, %v3438, %v3443
        %v3448 = vrsqrt.pop %v2357
        %v3449 = vmul.f32 %v3448, %v2357
        %v3450 = vmul.f32 %v3449, %v3448
        %v3451 = vmul.f32 0.5, %v3450
        %v3452 = vsub.f32 1.5, %v3451
        %v3453 = vmul.f32 %v3448, %v3452
        %vm3454 = vweird.f32 %v2357
        %vm3455 = vweird.f32 %v3448
        %vm3456 = vmor %vm3454, %vm3455
        %v3457 = vsel %vm3456, %v3448, %v3453
        %v3458 = vrsqrt.pop %v2358
        %v3459 = vmul.f32 %v3458, %v2358
        %v3460 = vmul.f32 %v3459, %v3458
        %v3461 = vmul.f32 0.5, %v3460
        %v3462 = vsub.f32 1.5, %v3461
        %v3463 = vmul.f32 %v3458, %v3462
        %vm3464 = vweird.f32 %v2358
        %vm3465 = vweird.f32 %v3458
        %vm3466 = vmor %vm3464, %vm3465
        %v3467 = vsel %vm3466, %v3458, %v3463
        %v3468 = vrsqrt.pop %v2359
        %v3469 = vmul.f32 %v3468, %v2359
        %v3470 = vmul.f32 %v3469, %v3468
        %v3471 = vmul.f32 0.5, %v3470
        %v3472 = vsub.f32 1.5, %v3471
        %v3473 = vmul.f32 %v3468, %v3472
        %vm3474 = vweird.f32 %v2359
        %vm3475 = vweird.f32 %v3468
        %vm3476 = vmor %vm3474, %vm3475
        %v3477 = vsel %vm3476, %v3468, %v3473
        %v3478 = vrsqrt.pop %v2360
        %v3479 = vmul.f32 %v3478, %v2360
        %v3480 = vmul.f32 %v3479, %v3478
        %v3481 = vmul.f32 0.5, %v3480
        %v3482 = vsub.f32 1.5, %v3481
        %v3483 = vmul.f32 %v3478, %v3482
        %vm3484 = vweird.f32 %v2360
        %vm3485 = vweird.f32 %v3478
        %vm3486 = vmor %vm3484, %vm3485
        %v3487 = vsel %vm3486, %v3478, %v3483
        %v3488 = vrsqrt.pop %v2361
        %v3489 = vmul.f32 %v3488, %v2361
        %v3490 = vmul.f32 %v3489, %v3488
        %v3491 = vmul.f32 0.5, %v3490
        %v3492 = vsub.f32 1.5, %v3491
        %v3493 = vmul.f32 %v3488, %v3492
        %vm3494 = vweird.f32 %v2361
        %vm3495 = vweird.f32 %v3488
        %vm3496 = vmor %vm3494, %vm3495
        %v3497 = vsel %vm3496, %v3488, %v3493
        %v3498 = vrsqrt.pop %v2362
        %v3499 = vmul.f32 %v3498, %v2362
        %v3500 = vmul.f32 %v3499, %v3498
        %v3501 = vmul.f32 0.5, %v3500
        %v3502 = vsub.f32 1.5, %v3501
        %v3503 = vmul.f32 %v3498, %v3502
        %vm3504 = vweird.f32 %v2362
        %vm3505 = vweird.f32 %v3498
        %vm3506 = vmor %vm3504, %vm3505
        %v3507 = vsel %vm3506, %v3498, %v3503
        %v3508 = vrsqrt.pop %v2363
        %v3509 = vmul.f32 %v3508, %v2363
        %v3510 = vmul.f32 %v3509, %v3508
        %v3511 = vmul.f32 0.5, %v3510
        %v3512 = vsub.f32 1.5, %v3511
        %v3513 = vmul.f32 %v3508, %v3512
        %vm3514 = vweird.f32 %v2363
        %vm3515 = vweird.f32 %v3508
        %vm3516 = vmor %vm3514, %vm3515
        %v3517 = vsel %vm3516, %v3508, %v3513
        %v3518 = vrsqrt.pop %v2364
        %v3519 = vmul.f32 %v3518, %v2364
        %v3520 = vmul.f32 %v3519, %v3518
        %v3521 = vmul.f32 0.5, %v3520
        %v3522 = vsub.f32 1.5, %v3521
        %v3523 = vmul.f32 %v3518, %v3522
        %vm3524 = vweird.f32 %v2364
        %vm3525 = vweird.f32 %v3518
        %vm3526 = vmor %vm3524, %vm3525
        %v3527 = vsel %vm3526, %v3518, %v3523
        %v3528 = vrsqrt.pop %v2365
        %v3529 = vmul.f32 %v3528, %v2365
        %v3530 = vmul.f32 %v3529, %v3528
        %v3531 = vmul.f32 0.5, %v3530
        %v3532 = vsub.f32 1.5, %v3531
        %v3533 = vmul.f32 %v3528, %v3532
        %vm3534 = vweird.f32 %v2365
        %vm3535 = vweird.f32 %v3528
        %vm3536 = vmor %vm3534, %vm3535
        %v3537 = vsel %vm3536, %v3528, %v3533
        %v3538 = vrsqrt.pop %v2366
        %v3539 = vmul.f32 %v3538, %v2366
        %v3540 = vmul.f32 %v3539, %v3538
        %v3541 = vmul.f32 0.5, %v3540
        %v3542 = vsub.f32 1.5, %v3541
        %v3543 = vmul.f32 %v3538, %v3542
        %vm3544 = vweird.f32 %v2366
        %vm3545 = vweird.f32 %v3538
        %vm3546 = vmor %vm3544, %vm3545
        %v3547 = vsel %vm3546, %v3538, %v3543
        %v3548 = vrsqrt.pop %v2367
        %v3549 = vmul.f32 %v3548, %v2367
        %v3550 = vmul.f32 %v3549, %v3548
        %v3551 = vmul.f32 0.5, %v3550
        %v3552 = vsub.f32 1.5, %v3551
        %v3553 = vmul.f32 %v3548, %v3552
        %vm3554 = vweird.f32 %v2367
        %vm3555 = vweird.f32 %v3548
        %vm3556 = vmor %vm3554, %vm3555
        %v3557 = vsel %vm3556, %v3548, %v3553
        %v3558 = vrsqrt.pop %v2368
        %v3559 = vmul.f32 %v3558, %v2368
        %v3560 = vmul.f32 %v3559, %v3558
        %v3561 = vmul.f32 0.5, %v3560
        %v3562 = vsub.f32 1.5, %v3561
        %v3563 = vmul.f32 %v3558, %v3562
        %vm3564 = vweird.f32 %v2368
        %vm3565 = vweird.f32 %v3558
        %vm3566 = vmor %vm3564, %vm3565
        %v3567 = vsel %vm3566, %v3558, %v3563
        %v3568 = vrsqrt.pop %v2369
        %v3569 = vmul.f32 %v3568, %v2369
        %v3570 = vmul.f32 %v3569, %v3568
        %v3571 = vmul.f32 0.5, %v3570
        %v3572 = vsub.f32 1.5, %v3571
        %v3573 = vmul.f32 %v3568, %v3572
        %vm3574 = vweird.f32 %v2369
        %vm3575 = vweird.f32 %v3568
        %vm3576 = vmor %vm3574, %vm3575
        %v3577 = vsel %vm3576, %v3568, %v3573
        %v3578 = vrsqrt.pop %v2370
        %v3579 = vmul.f32 %v3578, %v2370
        %v3580 = vmul.f32 %v3579, %v3578
        %v3581 = vmul.f32 0.5, %v3580
        %v3582 = vsub.f32 1.5, %v3581
        %v3583 = vmul.f32 %v3578, %v3582
        %vm3584 = vweird.f32 %v2370
        %vm3585 = vweird.f32 %v3578
        %vm3586 = vmor %vm3584, %vm3585
        %v3587 = vsel %vm3586, %v3578, %v3583
        %v3588 = vrsqrt.pop %v2371
        %v3589 = vmul.f32 %v3588, %v2371
        %v3590 = vmul.f32 %v3589, %v3588
        %v3591 = vmul.f32 0.5, %v3590
        %v3592 = vsub.f32 1.5, %v3591
        %v3593 = vmul.f32 %v3588, %v3592
        %vm3594 = vweird.f32 %v2371
        %vm3595 = vweird.f32 %v3588
        %vm3596 = vmor %vm3594, %vm3595
        %v3597 = vsel %vm3596, %v3588, %v3593
        %v3598 = vrsqrt.pop %v2372
        %v3599 = vmul.f32 %v3598, %v2372
        %v3600 = vmul.f32 %v3599, %v3598
        %v3601 = vmul.f32 0.5, %v3600
        %v3602 = vsub.f32 1.5, %v3601
        %v3603 = vmul.f32 %v3598, %v3602
        %vm3604 = vweird.f32 %v2372
        %vm3605 = vweird.f32 %v3598
        %vm3606 = vmor %vm3604, %vm3605
        %v3607 = vsel %vm3606, %v3598, %v3603
        %v3608 = vrsqrt.pop %v2373
        %v3609 = vmul.f32 %v3608, %v2373
        %v3610 = vmul.f32 %v3609, %v3608
        %v3611 = vmul.f32 0.5, %v3610
        %v3612 = vsub.f32 1.5, %v3611
        %v3613 = vmul.f32 %v3608, %v3612
        %vm3614 = vweird.f32 %v2373
        %vm3615 = vweird.f32 %v3608
        %vm3616 = vmor %vm3614, %vm3615
        %v3617 = vsel %vm3616, %v3608, %v3613
        %v3618 = vrsqrt.pop %v2374
        %v3619 = vmul.f32 %v3618, %v2374
        %v3620 = vmul.f32 %v3619, %v3618
        %v3621 = vmul.f32 0.5, %v3620
        %v3622 = vsub.f32 1.5, %v3621
        %v3623 = vmul.f32 %v3618, %v3622
        %vm3624 = vweird.f32 %v2374
        %vm3625 = vweird.f32 %v3618
        %vm3626 = vmor %vm3624, %vm3625
        %v3627 = vsel %vm3626, %v3618, %v3623
        %v3628 = vrsqrt.pop %v2375
        %v3629 = vmul.f32 %v3628, %v2375
        %v3630 = vmul.f32 %v3629, %v3628
        %v3631 = vmul.f32 0.5, %v3630
        %v3632 = vsub.f32 1.5, %v3631
        %v3633 = vmul.f32 %v3628, %v3632
        %vm3634 = vweird.f32 %v2375
        %vm3635 = vweird.f32 %v3628
        %vm3636 = vmor %vm3634, %vm3635
        %v3637 = vsel %vm3636, %v3628, %v3633
        %v3638 = vrsqrt.pop %v2376
        %v3639 = vmul.f32 %v3638, %v2376
        %v3640 = vmul.f32 %v3639, %v3638
        %v3641 = vmul.f32 0.5, %v3640
        %v3642 = vsub.f32 1.5, %v3641
        %v3643 = vmul.f32 %v3638, %v3642
        %vm3644 = vweird.f32 %v2376
        %vm3645 = vweird.f32 %v3638
        %vm3646 = vmor %vm3644, %vm3645
        %v3647 = vsel %vm3646, %v3638, %v3643
        %v3648 = vrsqrt.pop %v2377
        %v3649 = vmul.f32 %v3648, %v2377
        %v3650 = vmul.f32 %v3649, %v3648
        %v3651 = vmul.f32 0.5, %v3650
        %v3652 = vsub.f32 1.5, %v3651
        %v3653 = vmul.f32 %v3648, %v3652
        %vm3654 = vweird.f32 %v2377
        %vm3655 = vweird.f32 %v3648
        %vm3656 = vmor %vm3654, %vm3655
        %v3657 = vsel %vm3656, %v3648, %v3653
        %v3658 = vmul.f32 %v2122, %v2387
        %v3659 = vmul.f32 %v2123, %v2397
        %v3660 = vmul.f32 %v2124, %v2407
        %v3661 = vmul.f32 %v2125, %v2417
        %v3662 = vmul.f32 %v2126, %v2427
        %v3663 = vmul.f32 %v2127, %v2437
        %v3664 = vmul.f32 %v2128, %v2447
        %v3665 = vmul.f32 %v2129, %v2457
        %v3666 = vmul.f32 %v2130, %v2467
        %v3667 = vmul.f32 %v2131, %v2477
        %v3668 = vmul.f32 %v2132, %v2487
        %v3669 = vmul.f32 %v2133, %v2497
        %v3670 = vmul.f32 %v2134, %v2507
        %v3671 = vmul.f32 %v2135, %v2517
        %v3672 = vmul.f32 %v2136, %v2527
        %v3673 = vmul.f32 %v2137, %v2537
        %v3674 = vmul.f32 %v2138, %v2547
        %v3675 = vmul.f32 %v2139, %v2557
        %v3676 = vmul.f32 %v2140, %v2567
        %v3677 = vmul.f32 %v2141, %v2577
        %v3678 = vmul.f32 %v2142, %v2587
        %v3679 = vmul.f32 %v2143, %v2597
        %v3680 = vmul.f32 %v2144, %v2607
        %v3681 = vmul.f32 %v2145, %v2617
        %v3682 = vmul.f32 %v2146, %v2627
        %v3683 = vmul.f32 %v2147, %v2637
        %v3684 = vmul.f32 %v2148, %v2647
        %v3685 = vmul.f32 %v2149, %v2657
        %v3686 = vmul.f32 %v2150, %v2667
        %v3687 = vmul.f32 %v2151, %v2677
        %v3688 = vmul.f32 %v2152, %v2687
        %v3689 = vmul.f32 %v2153, %v2697
        %v3690 = vmul.f32 %v2154, %v2707
        %v3691 = vmul.f32 %v2155, %v2717
        %v3692 = vmul.f32 %v2156, %v2727
        %v3693 = vmul.f32 %v2157, %v2737
        %v3694 = vmul.f32 %v2158, %v2747
        %v3695 = vmul.f32 %v2159, %v2757
        %v3696 = vmul.f32 %v2160, %v2767
        %v3697 = vmul.f32 %v2161, %v2777
        %v3698 = vmul.f32 %v2162, %v2787
        %v3699 = vmul.f32 %v2163, %v2797
        %v3700 = vmul.f32 %v2164, %v2807
        %v3701 = vmul.f32 %v2165, %v2817
        %v3702 = vmul.f32 %v2166, %v2827
        %v3703 = vmul.f32 %v2167, %v2837
        %v3704 = vmul.f32 %v2168, %v2847
        %v3705 = vmul.f32 %v2169, %v2857
        %v3706 = vmul.f32 %v2170, %v2867
        %v3707 = vmul.f32 %v2171, %v2877
        %v3708 = vmul.f32 %v2172, %v2887
        %v3709 = vmul.f32 %v2173, %v2897
        %v3710 = vmul.f32 %v2174, %v2907
        %v3711 = vmul.f32 %v2175, %v2917
        %v3712 = vmul.f32 %v2176, %v2927
        %v3713 = vmul.f32 %v2177, %v2937
        %v3714 = vmul.f32 %v2178, %v2947
        %v3715 = vmul.f32 %v2179, %v2957
        %v3716 = vmul.f32 %v2180, %v2967
        %v3717 = vmul.f32 %v2181, %v2977
        %v3718 = vmul.f32 %v2182, %v2987
        %v3719 = vmul.f32 %v2183, %v2997
        %v3720 = vmul.f32 %v2184, %v3007
        %v3721 = vmul.f32 %v2185, %v3017
        %v3722 = vmul.f32 %v2186, %v3027
        %v3723 = vmul.f32 %v2187, %v3037
        %v3724 = vmul.f32 %v2188, %v3047
        %v3725 = vmul.f32 %v2189, %v3057
        %v3726 = vmul.f32 %v2190, %v3067
        %v3727 = vmul.f32 %v2191, %v3077
        %v3728 = vmul.f32 %v2192, %v3087
        %v3729 = vmul.f32 %v2193, %v3097
        %v3730 = vmul.f32 %v2194, %v3107
        %v3731 = vmul.f32 %v2195, %v3117
        %v3732 = vmul.f32 %v2196, %v3127
        %v3733 = vmul.f32 %v2197, %v3137
        %v3734 = vmul.f32 %v2198, %v3147
        %v3735 = vmul.f32 %v2199, %v3157
        %v3736 = vmul.f32 %v2200, %v3167
        %v3737 = vmul.f32 %v2201, %v3177
        %v3738 = vmul.f32 %v2202, %v3187
        %v3739 = vmul.f32 %v2203, %v3197
        %v3740 = vmul.f32 %v2204, %v3207
        %v3741 = vmul.f32 %v2205, %v3217
        %v3742 = vmul.f32 %v2206, %v3227
        %v3743 = vmul.f32 %v2207, %v3237
        %v3744 = vmul.f32 %v2208, %v3247
        %v3745 = vmul.f32 %v2209, %v3257
        %v3746 = vmul.f32 %v2210, %v3267
        %v3747 = vmul.f32 %v2211, %v3277
        %v3748 = vmul.f32 %v2212, %v3287
        %v3749 = vmul.f32 %v2213, %v3297
        %v3750 = vmul.f32 %v2214, %v3307
        %v3751 = vmul.f32 %v2215, %v3317
        %v3752 = vmul.f32 %v2216, %v3327
        %v3753 = vmul.f32 %v2217, %v3337
        %v3754 = vmul.f32 %v2218, %v3347
        %v3755 = vmul.f32 %v2219, %v3357
        %v3756 = vmul.f32 %v2220, %v3367
        %v3757 = vmul.f32 %v2221, %v3377
        %v3758 = vmul.f32 %v2222, %v3387
        %v3759 = vmul.f32 %v2223, %v3397
        %v3760 = vmul.f32 %v2224, %v3407
        %v3761 = vmul.f32 %v2225, %v3417
        %v3762 = vmul.f32 %v2226, %v3427
        %v3763 = vmul.f32 %v2227, %v3437
        %v3764 = vmul.f32 %v2228, %v3447
        %v3765 = vmul.f32 %v2229, %v3457
        %v3766 = vmul.f32 %v2230, %v3467
        %v3767 = vmul.f32 %v2231, %v3477
        %v3768 = vmul.f32 %v2232, %v3487
        %v3769 = vmul.f32 %v2233, %v3497
        %v3770 = vmul.f32 %v2234, %v3507
        %v3771 = vmul.f32 %v2235, %v3517
        %v3772 = vmul.f32 %v2236, %v3527
        %v3773 = vmul.f32 %v2237, %v3537
        %v3774 = vmul.f32 %v2238, %v3547
        %v3775 = vmul.f32 %v2239, %v3557
        %v3776 = vmul.f32 %v2240, %v3567
        %v3777 = vmul.f32 %v2241, %v3577
        %v3778 = vmul.f32 %v2242, %v3587
        %v3779 = vmul.f32 %v2243, %v3597
        %v3780 = vmul.f32 %v2244, %v3607
        %v3781 = vmul.f32 %v2245, %v3617
        %v3782 = vmul.f32 %v2246, %v3627
        %v3783 = vmul.f32 %v2247, %v3637
        %v3784 = vmul.f32 %v2248, %v3647
        %v3785 = vmul.f32 %v2249, %v3657
        %v3786 = vperm.slane %v416, 1
        %v3787 = vmul.f32 %v3658, %v3786
        %v3788 = vmul.f32 %v3659, %v3786
        %v3789 = vmul.f32 %v3660, %v3786
        %v3790 = vmul.f32 %v3661, %v3786
        %v3791 = vmul.f32 %v3662, %v3786
        %v3792 = vmul.f32 %v3663, %v3786
        %v3793 = vmul.f32 %v3664, %v3786
        %v3794 = vmul.f32 %v3665, %v3786
        %v3795 = vmul.f32 %v3666, %v3786
        %v3796 = vmul.f32 %v3667, %v3786
        %v3797 = vmul.f32 %v3668, %v3786
        %v3798 = vmul.f32 %v3669, %v3786
        %v3799 = vmul.f32 %v3670, %v3786
        %v3800 = vmul.f32 %v3671, %v3786
        %v3801 = vmul.f32 %v3672, %v3786
        %v3802 = vmul.f32 %v3673, %v3786
        %v3803 = vmul.f32 %v3674, %v3786
        %v3804 = vmul.f32 %v3675, %v3786
        %v3805 = vmul.f32 %v3676, %v3786
        %v3806 = vmul.f32 %v3677, %v3786
        %v3807 = vmul.f32 %v3678, %v3786
        %v3808 = vmul.f32 %v3679, %v3786
        %v3809 = vmul.f32 %v3680, %v3786
        %v3810 = vmul.f32 %v3681, %v3786
        %v3811 = vmul.f32 %v3682, %v3786
        %v3812 = vmul.f32 %v3683, %v3786
        %v3813 = vmul.f32 %v3684, %v3786
        %v3814 = vmul.f32 %v3685, %v3786
        %v3815 = vmul.f32 %v3686, %v3786
        %v3816 = vmul.f32 %v3687, %v3786
        %v3817 = vmul.f32 %v3688, %v3786
        %v3818 = vmul.f32 %v3689, %v3786
        %v3819 = vmul.f32 %v3690, %v3786
        %v3820 = vmul.f32 %v3691, %v3786
        %v3821 = vmul.f32 %v3692, %v3786
        %v3822 = vmul.f32 %v3693, %v3786
        %v3823 = vmul.f32 %v3694, %v3786
        %v3824 = vmul.f32 %v3695, %v3786
        %v3825 = vmul.f32 %v3696, %v3786
        %v3826 = vmul.f32 %v3697, %v3786
        %v3827 = vmul.f32 %v3698, %v3786
        %v3828 = vmul.f32 %v3699, %v3786
        %v3829 = vmul.f32 %v3700, %v3786
        %v3830 = vmul.f32 %v3701, %v3786
        %v3831 = vmul.f32 %v3702, %v3786
        %v3832 = vmul.f32 %v3703, %v3786
        %v3833 = vmul.f32 %v3704, %v3786
        %v3834 = vmul.f32 %v3705, %v3786
        %v3835 = vmul.f32 %v3706, %v3786
        %v3836 = vmul.f32 %v3707, %v3786
        %v3837 = vmul.f32 %v3708, %v3786
        %v3838 = vmul.f32 %v3709, %v3786
        %v3839 = vmul.f32 %v3710, %v3786
        %v3840 = vmul.f32 %v3711, %v3786
        %v3841 = vmul.f32 %v3712, %v3786
        %v3842 = vmul.f32 %v3713, %v3786
        %v3843 = vmul.f32 %v3714, %v3786
        %v3844 = vmul.f32 %v3715, %v3786
        %v3845 = vmul.f32 %v3716, %v3786
        %v3846 = vmul.f32 %v3717, %v3786
        %v3847 = vmul.f32 %v3718, %v3786
        %v3848 = vmul.f32 %v3719, %v3786
        %v3849 = vmul.f32 %v3720, %v3786
        %v3850 = vmul.f32 %v3721, %v3786
        %v3851 = vmul.f32 %v3722, %v3786
        %v3852 = vmul.f32 %v3723, %v3786
        %v3853 = vmul.f32 %v3724, %v3786
        %v3854 = vmul.f32 %v3725, %v3786
        %v3855 = vmul.f32 %v3726, %v3786
        %v3856 = vmul.f32 %v3727, %v3786
        %v3857 = vmul.f32 %v3728, %v3786
        %v3858 = vmul.f32 %v3729, %v3786
        %v3859 = vmul.f32 %v3730, %v3786
        %v3860 = vmul.f32 %v3731, %v3786
        %v3861 = vmul.f32 %v3732, %v3786
        %v3862 = vmul.f32 %v3733, %v3786
        %v3863 = vmul.f32 %v3734, %v3786
        %v3864 = vmul.f32 %v3735, %v3786
        %v3865 = vmul.f32 %v3736, %v3786
        %v3866 = vmul.f32 %v3737, %v3786
        %v3867 = vmul.f32 %v3738, %v3786
        %v3868 = vmul.f32 %v3739, %v3786
        %v3869 = vmul.f32 %v3740, %v3786
        %v3870 = vmul.f32 %v3741, %v3786
        %v3871 = vmul.f32 %v3742, %v3786
        %v3872 = vmul.f32 %v3743, %v3786
        %v3873 = vmul.f32 %v3744, %v3786
        %v3874 = vmul.f32 %v3745, %v3786
        %v3875 = vmul.f32 %v3746, %v3786
        %v3876 = vmul.f32 %v3747, %v3786
        %v3877 = vmul.f32 %v3748, %v3786
        %v3878 = vmul.f32 %v3749, %v3786
        %v3879 = vmul.f32 %v3750, %v3786
        %v3880 = vmul.f32 %v3751, %v3786
        %v3881 = vmul.f32 %v3752, %v3786
        %v3882 = vmul.f32 %v3753, %v3786
        %v3883 = vmul.f32 %v3754, %v3786
        %v3884 = vmul.f32 %v3755, %v3786
        %v3885 = vmul.f32 %v3756, %v3786
        %v3886 = vmul.f32 %v3757, %v3786
        %v3887 = vmul.f32 %v3758, %v3786
        %v3888 = vmul.f32 %v3759, %v3786
        %v3889 = vmul.f32 %v3760, %v3786
        %v3890 = vmul.f32 %v3761, %v3786
        %v3891 = vmul.f32 %v3762, %v3786
        %v3892 = vmul.f32 %v3763, %v3786
        %v3893 = vmul.f32 %v3764, %v3786
        %v3894 = vmul.f32 %v3765, %v3786
        %v3895 = vmul.f32 %v3766, %v3786
        %v3896 = vmul.f32 %v3767, %v3786
        %v3897 = vmul.f32 %v3768, %v3786
        %v3898 = vmul.f32 %v3769, %v3786
        %v3899 = vmul.f32 %v3770, %v3786
        %v3900 = vmul.f32 %v3771, %v3786
        %v3901 = vmul.f32 %v3772, %v3786
        %v3902 = vmul.f32 %v3773, %v3786
        %v3903 = vmul.f32 %v3774, %v3786
        %v3904 = vmul.f32 %v3775, %v3786
        %v3905 = vmul.f32 %v3776, %v3786
        %v3906 = vmul.f32 %v3777, %v3786
        %v3907 = vmul.f32 %v3778, %v3786
        %v3908 = vmul.f32 %v3779, %v3786
        %v3909 = vmul.f32 %v3780, %v3786
        %v3910 = vmul.f32 %v3781, %v3786
        %v3911 = vmul.f32 %v3782, %v3786
        %v3912 = vmul.f32 %v3783, %v3786
        %v3913 = vmul.f32 %v3784, %v3786
        %v3914 = vmul.f32 %v3785, %v3786
        %v3915 = vperm.slane %v416, 2
        %v3916 = vadd.f32 %v3787, %v3915
        %v3917 = vadd.f32 %v3788, %v3915
        %v3918 = vadd.f32 %v3789, %v3915
        %v3919 = vadd.f32 %v3790, %v3915
        %v3920 = vadd.f32 %v3791, %v3915
        %v3921 = vadd.f32 %v3792, %v3915
        %v3922 = vadd.f32 %v3793, %v3915
        %v3923 = vadd.f32 %v3794, %v3915
        %v3924 = vadd.f32 %v3795, %v3915
        %v3925 = vadd.f32 %v3796, %v3915
        %v3926 = vadd.f32 %v3797, %v3915
        %v3927 = vadd.f32 %v3798, %v3915
        %v3928 = vadd.f32 %v3799, %v3915
        %v3929 = vadd.f32 %v3800, %v3915
        %v3930 = vadd.f32 %v3801, %v3915
        %v3931 = vadd.f32 %v3802, %v3915
        %v3932 = vadd.f32 %v3803, %v3915
        %v3933 = vadd.f32 %v3804, %v3915
        %v3934 = vadd.f32 %v3805, %v3915
        %v3935 = vadd.f32 %v3806, %v3915
        %v3936 = vadd.f32 %v3807, %v3915
        %v3937 = vadd.f32 %v3808, %v3915
        %v3938 = vadd.f32 %v3809, %v3915
        %v3939 = vadd.f32 %v3810, %v3915
        %v3940 = vadd.f32 %v3811, %v3915
        %v3941 = vadd.f32 %v3812, %v3915
        %v3942 = vadd.f32 %v3813, %v3915
        %v3943 = vadd.f32 %v3814, %v3915
        %v3944 = vadd.f32 %v3815, %v3915
        %v3945 = vadd.f32 %v3816, %v3915
        %v3946 = vadd.f32 %v3817, %v3915
        %v3947 = vadd.f32 %v3818, %v3915
        %v3948 = vadd.f32 %v3819, %v3915
        %v3949 = vadd.f32 %v3820, %v3915
        %v3950 = vadd.f32 %v3821, %v3915
        %v3951 = vadd.f32 %v3822, %v3915
        %v3952 = vadd.f32 %v3823, %v3915
        %v3953 = vadd.f32 %v3824, %v3915
        %v3954 = vadd.f32 %v3825, %v3915
        %v3955 = vadd.f32 %v3826, %v3915
        %v3956 = vadd.f32 %v3827, %v3915
        %v3957 = vadd.f32 %v3828, %v3915
        %v3958 = vadd.f32 %v3829, %v3915
        %v3959 = vadd.f32 %v3830, %v3915
        %v3960 = vadd.f32 %v3831, %v3915
        %v3961 = vadd.f32 %v3832, %v3915
        %v3962 = vadd.f32 %v3833, %v3915
        %v3963 = vadd.f32 %v3834, %v3915
        %v3964 = vadd.f32 %v3835, %v3915
        %v3965 = vadd.f32 %v3836, %v3915
        %v3966 = vadd.f32 %v3837, %v3915
        %v3967 = vadd.f32 %v3838, %v3915
        %v3968 = vadd.f32 %v3839, %v3915
        %v3969 = vadd.f32 %v3840, %v3915
        %v3970 = vadd.f32 %v3841, %v3915
        %v3971 = vadd.f32 %v3842, %v3915
        %v3972 = vadd.f32 %v3843, %v3915
        %v3973 = vadd.f32 %v3844, %v3915
        %v3974 = vadd.f32 %v3845, %v3915
        %v3975 = vadd.f32 %v3846, %v3915
        %v3976 = vadd.f32 %v3847, %v3915
        %v3977 = vadd.f32 %v3848, %v3915
        %v3978 = vadd.f32 %v3849, %v3915
        %v3979 = vadd.f32 %v3850, %v3915
        %v3980 = vadd.f32 %v3851, %v3915
        %v3981 = vadd.f32 %v3852, %v3915
        %v3982 = vadd.f32 %v3853, %v3915
        %v3983 = vadd.f32 %v3854, %v3915
        %v3984 = vadd.f32 %v3855, %v3915
        %v3985 = vadd.f32 %v3856, %v3915
        %v3986 = vadd.f32 %v3857, %v3915
        %v3987 = vadd.f32 %v3858, %v3915
        %v3988 = vadd.f32 %v3859, %v3915
        %v3989 = vadd.f32 %v3860, %v3915
        %v3990 = vadd.f32 %v3861, %v3915
        %v3991 = vadd.f32 %v3862, %v3915
        %v3992 = vadd.f32 %v3863, %v3915
        %v3993 = vadd.f32 %v3864, %v3915
        %v3994 = vadd.f32 %v3865, %v3915
        %v3995 = vadd.f32 %v3866, %v3915
        %v3996 = vadd.f32 %v3867, %v3915
        %v3997 = vadd.f32 %v3868, %v3915
        %v3998 = vadd.f32 %v3869, %v3915
        %v3999 = vadd.f32 %v3870, %v3915
        %v4000 = vadd.f32 %v3871, %v3915
        %v4001 = vadd.f32 %v3872, %v3915
        %v4002 = vadd.f32 %v3873, %v3915
        %v4003 = vadd.f32 %v3874, %v3915
        %v4004 = vadd.f32 %v3875, %v3915
        %v4005 = vadd.f32 %v3876, %v3915
        %v4006 = vadd.f32 %v3877, %v3915
        %v4007 = vadd.f32 %v3878, %v3915
        %v4008 = vadd.f32 %v3879, %v3915
        %v4009 = vadd.f32 %v3880, %v3915
        %v4010 = vadd.f32 %v3881, %v3915
        %v4011 = vadd.f32 %v3882, %v3915
        %v4012 = vadd.f32 %v3883, %v3915
        %v4013 = vadd.f32 %v3884, %v3915
        %v4014 = vadd.f32 %v3885, %v3915
        %v4015 = vadd.f32 %v3886, %v3915
        %v4016 = vadd.f32 %v3887, %v3915
        %v4017 = vadd.f32 %v3888, %v3915
        %v4018 = vadd.f32 %v3889, %v3915
        %v4019 = vadd.f32 %v3890, %v3915
        %v4020 = vadd.f32 %v3891, %v3915
        %v4021 = vadd.f32 %v3892, %v3915
        %v4022 = vadd.f32 %v3893, %v3915
        %v4023 = vadd.f32 %v3894, %v3915
        %v4024 = vadd.f32 %v3895, %v3915
        %v4025 = vadd.f32 %v3896, %v3915
        %v4026 = vadd.f32 %v3897, %v3915
        %v4027 = vadd.f32 %v3898, %v3915
        %v4028 = vadd.f32 %v3899, %v3915
        %v4029 = vadd.f32 %v3900, %v3915
        %v4030 = vadd.f32 %v3901, %v3915
        %v4031 = vadd.f32 %v3902, %v3915
        %v4032 = vadd.f32 %v3903, %v3915
        %v4033 = vadd.f32 %v3904, %v3915
        %v4034 = vadd.f32 %v3905, %v3915
        %v4035 = vadd.f32 %v3906, %v3915
        %v4036 = vadd.f32 %v3907, %v3915
        %v4037 = vadd.f32 %v3908, %v3915
        %v4038 = vadd.f32 %v3909, %v3915
        %v4039 = vadd.f32 %v3910, %v3915
        %v4040 = vadd.f32 %v3911, %v3915
        %v4041 = vadd.f32 %v3912, %v3915
        %v4042 = vadd.f32 %v3913, %v3915
        %v4043 = vadd.f32 %v3914, %v3915
        %vm4044 = vcmp.ge.f32.partialorder %v3916, 0.0
        %vm4045 = vcmp.ge.f32.partialorder %v3917, 0.0
        %vm4046 = vcmp.ge.f32.partialorder %v3918, 0.0
        %vm4047 = vcmp.ge.f32.partialorder %v3919, 0.0
        %vm4048 = vcmp.ge.f32.partialorder %v3920, 0.0
        %vm4049 = vcmp.ge.f32.partialorder %v3921, 0.0
        %vm4050 = vcmp.ge.f32.partialorder %v3922, 0.0
        %vm4051 = vcmp.ge.f32.partialorder %v3923, 0.0
        %vm4052 = vcmp.ge.f32.partialorder %v3924, 0.0
        %vm4053 = vcmp.ge.f32.partialorder %v3925, 0.0
        %vm4054 = vcmp.ge.f32.partialorder %v3926, 0.0
        %vm4055 = vcmp.ge.f32.partialorder %v3927, 0.0
        %vm4056 = vcmp.ge.f32.partialorder %v3928, 0.0
        %vm4057 = vcmp.ge.f32.partialorder %v3929, 0.0
        %vm4058 = vcmp.ge.f32.partialorder %v3930, 0.0
        %vm4059 = vcmp.ge.f32.partialorder %v3931, 0.0
        %vm4060 = vcmp.ge.f32.partialorder %v3932, 0.0
        %vm4061 = vcmp.ge.f32.partialorder %v3933, 0.0
        %vm4062 = vcmp.ge.f32.partialorder %v3934, 0.0
        %vm4063 = vcmp.ge.f32.partialorder %v3935, 0.0
        %vm4064 = vcmp.ge.f32.partialorder %v3936, 0.0
        %vm4065 = vcmp.ge.f32.partialorder %v3937, 0.0
        %vm4066 = vcmp.ge.f32.partialorder %v3938, 0.0
        %vm4067 = vcmp.ge.f32.partialorder %v3939, 0.0
        %vm4068 = vcmp.ge.f32.partialorder %v3940, 0.0
        %vm4069 = vcmp.ge.f32.partialorder %v3941, 0.0
        %vm4070 = vcmp.ge.f32.partialorder %v3942, 0.0
        %vm4071 = vcmp.ge.f32.partialorder %v3943, 0.0
        %vm4072 = vcmp.ge.f32.partialorder %v3944, 0.0
        %vm4073 = vcmp.ge.f32.partialorder %v3945, 0.0
        %vm4074 = vcmp.ge.f32.partialorder %v3946, 0.0
        %vm4075 = vcmp.ge.f32.partialorder %v3947, 0.0
        %vm4076 = vcmp.ge.f32.partialorder %v3948, 0.0
        %vm4077 = vcmp.ge.f32.partialorder %v3949, 0.0
        %vm4078 = vcmp.ge.f32.partialorder %v3950, 0.0
        %vm4079 = vcmp.ge.f32.partialorder %v3951, 0.0
        %vm4080 = vcmp.ge.f32.partialorder %v3952, 0.0
        %vm4081 = vcmp.ge.f32.partialorder %v3953, 0.0
        %vm4082 = vcmp.ge.f32.partialorder %v3954, 0.0
        %vm4083 = vcmp.ge.f32.partialorder %v3955, 0.0
        %vm4084 = vcmp.ge.f32.partialorder %v3956, 0.0
        %vm4085 = vcmp.ge.f32.partialorder %v3957, 0.0
        %vm4086 = vcmp.ge.f32.partialorder %v3958, 0.0
        %vm4087 = vcmp.ge.f32.partialorder %v3959, 0.0
        %vm4088 = vcmp.ge.f32.partialorder %v3960, 0.0
        %vm4089 = vcmp.ge.f32.partialorder %v3961, 0.0
        %vm4090 = vcmp.ge.f32.partialorder %v3962, 0.0
        %vm4091 = vcmp.ge.f32.partialorder %v3963, 0.0
        %vm4092 = vcmp.ge.f32.partialorder %v3964, 0.0
        %vm4093 = vcmp.ge.f32.partialorder %v3965, 0.0
        %vm4094 = vcmp.ge.f32.partialorder %v3966, 0.0
        %vm4095 = vcmp.ge.f32.partialorder %v3967, 0.0
        %vm4096 = vcmp.ge.f32.partialorder %v3968, 0.0
        %vm4097 = vcmp.ge.f32.partialorder %v3969, 0.0
        %vm4098 = vcmp.ge.f32.partialorder %v3970, 0.0
        %vm4099 = vcmp.ge.f32.partialorder %v3971, 0.0
        %vm4100 = vcmp.ge.f32.partialorder %v3972, 0.0
        %vm4101 = vcmp.ge.f32.partialorder %v3973, 0.0
        %vm4102 = vcmp.ge.f32.partialorder %v3974, 0.0
        %vm4103 = vcmp.ge.f32.partialorder %v3975, 0.0
        %vm4104 = vcmp.ge.f32.partialorder %v3976, 0.0
        %vm4105 = vcmp.ge.f32.partialorder %v3977, 0.0
        %vm4106 = vcmp.ge.f32.partialorder %v3978, 0.0
        %vm4107 = vcmp.ge.f32.partialorder %v3979, 0.0
        %vm4108 = vcmp.ge.f32.partialorder %v3980, 0.0
        %vm4109 = vcmp.ge.f32.partialorder %v3981, 0.0
        %vm4110 = vcmp.ge.f32.partialorder %v3982, 0.0
        %vm4111 = vcmp.ge.f32.partialorder %v3983, 0.0
        %vm4112 = vcmp.ge.f32.partialorder %v3984, 0.0
        %vm4113 = vcmp.ge.f32.partialorder %v3985, 0.0
        %vm4114 = vcmp.ge.f32.partialorder %v3986, 0.0
        %vm4115 = vcmp.ge.f32.partialorder %v3987, 0.0
        %vm4116 = vcmp.ge.f32.partialorder %v3988, 0.0
        %vm4117 = vcmp.ge.f32.partialorder %v3989, 0.0
        %vm4118 = vcmp.ge.f32.partialorder %v3990, 0.0
        %vm4119 = vcmp.ge.f32.partialorder %v3991, 0.0
        %vm4120 = vcmp.ge.f32.partialorder %v3992, 0.0
        %vm4121 = vcmp.ge.f32.partialorder %v3993, 0.0
        %vm4122 = vcmp.ge.f32.partialorder %v3994, 0.0
        %vm4123 = vcmp.ge.f32.partialorder %v3995, 0.0
        %vm4124 = vcmp.ge.f32.partialorder %v3996, 0.0
        %vm4125 = vcmp.ge.f32.partialorder %v3997, 0.0
        %vm4126 = vcmp.ge.f32.partialorder %v3998, 0.0
        %vm4127 = vcmp.ge.f32.partialorder %v3999, 0.0
        %vm4128 = vcmp.ge.f32.partialorder %v4000, 0.0
        %vm4129 = vcmp.ge.f32.partialorder %v4001, 0.0
        %vm4130 = vcmp.ge.f32.partialorder %v4002, 0.0
        %vm4131 = vcmp.ge.f32.partialorder %v4003, 0.0
        %vm4132 = vcmp.ge.f32.partialorder %v4004, 0.0
        %vm4133 = vcmp.ge.f32.partialorder %v4005, 0.0
        %vm4134 = vcmp.ge.f32.partialorder %v4006, 0.0
        %vm4135 = vcmp.ge.f32.partialorder %v4007, 0.0
        %vm4136 = vcmp.ge.f32.partialorder %v4008, 0.0
        %vm4137 = vcmp.ge.f32.partialorder %v4009, 0.0
        %vm4138 = vcmp.ge.f32.partialorder %v4010, 0.0
        %vm4139 = vcmp.ge.f32.partialorder %v4011, 0.0
        %vm4140 = vcmp.ge.f32.partialorder %v4012, 0.0
        %vm4141 = vcmp.ge.f32.partialorder %v4013, 0.0
        %vm4142 = vcmp.ge.f32.partialorder %v4014, 0.0
        %vm4143 = vcmp.ge.f32.partialorder %v4015, 0.0
        %vm4144 = vcmp.ge.f32.partialorder %v4016, 0.0
        %vm4145 = vcmp.ge.f32.partialorder %v4017, 0.0
        %vm4146 = vcmp.ge.f32.partialorder %v4018, 0.0
        %vm4147 = vcmp.ge.f32.partialorder %v4019, 0.0
        %vm4148 = vcmp.ge.f32.partialorder %v4020, 0.0
        %vm4149 = vcmp.ge.f32.partialorder %v4021, 0.0
        %vm4150 = vcmp.ge.f32.partialorder %v4022, 0.0
        %vm4151 = vcmp.ge.f32.partialorder %v4023, 0.0
        %vm4152 = vcmp.ge.f32.partialorder %v4024, 0.0
        %vm4153 = vcmp.ge.f32.partialorder %v4025, 0.0
        %vm4154 = vcmp.ge.f32.partialorder %v4026, 0.0
        %vm4155 = vcmp.ge.f32.partialorder %v4027, 0.0
        %vm4156 = vcmp.ge.f32.partialorder %v4028, 0.0
        %vm4157 = vcmp.ge.f32.partialorder %v4029, 0.0
        %vm4158 = vcmp.ge.f32.partialorder %v4030, 0.0
        %vm4159 = vcmp.ge.f32.partialorder %v4031, 0.0
        %vm4160 = vcmp.ge.f32.partialorder %v4032, 0.0
        %vm4161 = vcmp.ge.f32.partialorder %v4033, 0.0
        %vm4162 = vcmp.ge.f32.partialorder %v4034, 0.0
        %vm4163 = vcmp.ge.f32.partialorder %v4035, 0.0
        %vm4164 = vcmp.ge.f32.partialorder %v4036, 0.0
        %vm4165 = vcmp.ge.f32.partialorder %v4037, 0.0
        %vm4166 = vcmp.ge.f32.partialorder %v4038, 0.0
        %vm4167 = vcmp.ge.f32.partialorder %v4039, 0.0
        %vm4168 = vcmp.ge.f32.partialorder %v4040, 0.0
        %vm4169 = vcmp.ge.f32.partialorder %v4041, 0.0
        %vm4170 = vcmp.ge.f32.partialorder %v4042, 0.0
        %vm4171 = vcmp.ge.f32.partialorder %v4043, 0.0
        %v4172 = vmul.f32 %v3916, 0.2
        %v4173 = vmul.f32 %v3917, 0.2
        %v4174 = vmul.f32 %v3918, 0.2
        %v4175 = vmul.f32 %v3919, 0.2
        %v4176 = vmul.f32 %v3920, 0.2
        %v4177 = vmul.f32 %v3921, 0.2
        %v4178 = vmul.f32 %v3922, 0.2
        %v4179 = vmul.f32 %v3923, 0.2
        %v4180 = vmul.f32 %v3924, 0.2
        %v4181 = vmul.f32 %v3925, 0.2
        %v4182 = vmul.f32 %v3926, 0.2
        %v4183 = vmul.f32 %v3927, 0.2
        %v4184 = vmul.f32 %v3928, 0.2
        %v4185 = vmul.f32 %v3929, 0.2
        %v4186 = vmul.f32 %v3930, 0.2
        %v4187 = vmul.f32 %v3931, 0.2
        %v4188 = vmul.f32 %v3932, 0.2
        %v4189 = vmul.f32 %v3933, 0.2
        %v4190 = vmul.f32 %v3934, 0.2
        %v4191 = vmul.f32 %v3935, 0.2
        %v4192 = vmul.f32 %v3936, 0.2
        %v4193 = vmul.f32 %v3937, 0.2
        %v4194 = vmul.f32 %v3938, 0.2
        %v4195 = vmul.f32 %v3939, 0.2
        %v4196 = vmul.f32 %v3940, 0.2
        %v4197 = vmul.f32 %v3941, 0.2
        %v4198 = vmul.f32 %v3942, 0.2
        %v4199 = vmul.f32 %v3943, 0.2
        %v4200 = vmul.f32 %v3944, 0.2
        %v4201 = vmul.f32 %v3945, 0.2
        %v4202 = vmul.f32 %v3946, 0.2
        %v4203 = vmul.f32 %v3947, 0.2
        %v4204 = vmul.f32 %v3948, 0.2
        %v4205 = vmul.f32 %v3949, 0.2
        %v4206 = vmul.f32 %v3950, 0.2
        %v4207 = vmul.f32 %v3951, 0.2
        %v4208 = vmul.f32 %v3952, 0.2
        %v4209 = vmul.f32 %v3953, 0.2
        %v4210 = vmul.f32 %v3954, 0.2
        %v4211 = vmul.f32 %v3955, 0.2
        %v4212 = vmul.f32 %v3956, 0.2
        %v4213 = vmul.f32 %v3957, 0.2
        %v4214 = vmul.f32 %v3958, 0.2
        %v4215 = vmul.f32 %v3959, 0.2
        %v4216 = vmul.f32 %v3960, 0.2
        %v4217 = vmul.f32 %v3961, 0.2
        %v4218 = vmul.f32 %v3962, 0.2
        %v4219 = vmul.f32 %v3963, 0.2
        %v4220 = vmul.f32 %v3964, 0.2
        %v4221 = vmul.f32 %v3965, 0.2
        %v4222 = vmul.f32 %v3966, 0.2
        %v4223 = vmul.f32 %v3967, 0.2
        %v4224 = vmul.f32 %v3968, 0.2
        %v4225 = vmul.f32 %v3969, 0.2
        %v4226 = vmul.f32 %v3970, 0.2
        %v4227 = vmul.f32 %v3971, 0.2
        %v4228 = vmul.f32 %v3972, 0.2
        %v4229 = vmul.f32 %v3973, 0.2
        %v4230 = vmul.f32 %v3974, 0.2
        %v4231 = vmul.f32 %v3975, 0.2
        %v4232 = vmul.f32 %v3976, 0.2
        %v4233 = vmul.f32 %v3977, 0.2
        %v4234 = vmul.f32 %v3978, 0.2
        %v4235 = vmul.f32 %v3979, 0.2
        %v4236 = vmul.f32 %v3980, 0.2
        %v4237 = vmul.f32 %v3981, 0.2
        %v4238 = vmul.f32 %v3982, 0.2
        %v4239 = vmul.f32 %v3983, 0.2
        %v4240 = vmul.f32 %v3984, 0.2
        %v4241 = vmul.f32 %v3985, 0.2
        %v4242 = vmul.f32 %v3986, 0.2
        %v4243 = vmul.f32 %v3987, 0.2
        %v4244 = vmul.f32 %v3988, 0.2
        %v4245 = vmul.f32 %v3989, 0.2
        %v4246 = vmul.f32 %v3990, 0.2
        %v4247 = vmul.f32 %v3991, 0.2
        %v4248 = vmul.f32 %v3992, 0.2
        %v4249 = vmul.f32 %v3993, 0.2
        %v4250 = vmul.f32 %v3994, 0.2
        %v4251 = vmul.f32 %v3995, 0.2
        %v4252 = vmul.f32 %v3996, 0.2
        %v4253 = vmul.f32 %v3997, 0.2
        %v4254 = vmul.f32 %v3998, 0.2
        %v4255 = vmul.f32 %v3999, 0.2
        %v4256 = vmul.f32 %v4000, 0.2
        %v4257 = vmul.f32 %v4001, 0.2
        %v4258 = vmul.f32 %v4002, 0.2
        %v4259 = vmul.f32 %v4003, 0.2
        %v4260 = vmul.f32 %v4004, 0.2
        %v4261 = vmul.f32 %v4005, 0.2
        %v4262 = vmul.f32 %v4006, 0.2
        %v4263 = vmul.f32 %v4007, 0.2
        %v4264 = vmul.f32 %v4008, 0.2
        %v4265 = vmul.f32 %v4009, 0.2
        %v4266 = vmul.f32 %v4010, 0.2
        %v4267 = vmul.f32 %v4011, 0.2
        %v4268 = vmul.f32 %v4012, 0.2
        %v4269 = vmul.f32 %v4013, 0.2
        %v4270 = vmul.f32 %v4014, 0.2
        %v4271 = vmul.f32 %v4015, 0.2
        %v4272 = vmul.f32 %v4016, 0.2
        %v4273 = vmul.f32 %v4017, 0.2
        %v4274 = vmul.f32 %v4018, 0.2
        %v4275 = vmul.f32 %v4019, 0.2
        %v4276 = vmul.f32 %v4020, 0.2
        %v4277 = vmul.f32 %v4021, 0.2
        %v4278 = vmul.f32 %v4022, 0.2
        %v4279 = vmul.f32 %v4023, 0.2
        %v4280 = vmul.f32 %v4024, 0.2
        %v4281 = vmul.f32 %v4025, 0.2
        %v4282 = vmul.f32 %v4026, 0.2
        %v4283 = vmul.f32 %v4027, 0.2
        %v4284 = vmul.f32 %v4028, 0.2
        %v4285 = vmul.f32 %v4029, 0.2
        %v4286 = vmul.f32 %v4030, 0.2
        %v4287 = vmul.f32 %v4031, 0.2
        %v4288 = vmul.f32 %v4032, 0.2
        %v4289 = vmul.f32 %v4033, 0.2
        %v4290 = vmul.f32 %v4034, 0.2
        %v4291 = vmul.f32 %v4035, 0.2
        %v4292 = vmul.f32 %v4036, 0.2
        %v4293 = vmul.f32 %v4037, 0.2
        %v4294 = vmul.f32 %v4038, 0.2
        %v4295 = vmul.f32 %v4039, 0.2
        %v4296 = vmul.f32 %v4040, 0.2
        %v4297 = vmul.f32 %v4041, 0.2
        %v4298 = vmul.f32 %v4042, 0.2
        %v4299 = vmul.f32 %v4043, 0.2
        %v4300 = vsel %vm4044, %v3916, %v4172
        %v4301 = vsel %vm4045, %v3917, %v4173
        %v4302 = vsel %vm4046, %v3918, %v4174
        %v4303 = vsel %vm4047, %v3919, %v4175
        %v4304 = vsel %vm4048, %v3920, %v4176
        %v4305 = vsel %vm4049, %v3921, %v4177
        %v4306 = vsel %vm4050, %v3922, %v4178
        %v4307 = vsel %vm4051, %v3923, %v4179
        %v4308 = vsel %vm4052, %v3924, %v4180
        %v4309 = vsel %vm4053, %v3925, %v4181
        %v4310 = vsel %vm4054, %v3926, %v4182
        %v4311 = vsel %vm4055, %v3927, %v4183
        %v4312 = vsel %vm4056, %v3928, %v4184
        %v4313 = vsel %vm4057, %v3929, %v4185
        %v4314 = vsel %vm4058, %v3930, %v4186
        %v4315 = vsel %vm4059, %v3931, %v4187
        %v4316 = vsel %vm4060, %v3932, %v4188
        %v4317 = vsel %vm4061, %v3933, %v4189
        %v4318 = vsel %vm4062, %v3934, %v4190
        %v4319 = vsel %vm4063, %v3935, %v4191
        %v4320 = vsel %vm4064, %v3936, %v4192
        %v4321 = vsel %vm4065, %v3937, %v4193
        %v4322 = vsel %vm4066, %v3938, %v4194
        %v4323 = vsel %vm4067, %v3939, %v4195
        %v4324 = vsel %vm4068, %v3940, %v4196
        %v4325 = vsel %vm4069, %v3941, %v4197
        %v4326 = vsel %vm4070, %v3942, %v4198
        %v4327 = vsel %vm4071, %v3943, %v4199
        %v4328 = vsel %vm4072, %v3944, %v4200
        %v4329 = vsel %vm4073, %v3945, %v4201
        %v4330 = vsel %vm4074, %v3946, %v4202
        %v4331 = vsel %vm4075, %v3947, %v4203
        %v4332 = vsel %vm4076, %v3948, %v4204
        %v4333 = vsel %vm4077, %v3949, %v4205
        %v4334 = vsel %vm4078, %v3950, %v4206
        %v4335 = vsel %vm4079, %v3951, %v4207
        %v4336 = vsel %vm4080, %v3952, %v4208
        %v4337 = vsel %vm4081, %v3953, %v4209
        %v4338 = vsel %vm4082, %v3954, %v4210
        %v4339 = vsel %vm4083, %v3955, %v4211
        %v4340 = vsel %vm4084, %v3956, %v4212
        %v4341 = vsel %vm4085, %v3957, %v4213
        %v4342 = vsel %vm4086, %v3958, %v4214
        %v4343 = vsel %vm4087, %v3959, %v4215
        %v4344 = vsel %vm4088, %v3960, %v4216
        %v4345 = vsel %vm4089, %v3961, %v4217
        %v4346 = vsel %vm4090, %v3962, %v4218
        %v4347 = vsel %vm4091, %v3963, %v4219
        %v4348 = vsel %vm4092, %v3964, %v4220
        %v4349 = vsel %vm4093, %v3965, %v4221
        %v4350 = vsel %vm4094, %v3966, %v4222
        %v4351 = vsel %vm4095, %v3967, %v4223
        %v4352 = vsel %vm4096, %v3968, %v4224
        %v4353 = vsel %vm4097, %v3969, %v4225
        %v4354 = vsel %vm4098, %v3970, %v4226
        %v4355 = vsel %vm4099, %v3971, %v4227
        %v4356 = vsel %vm4100, %v3972, %v4228
        %v4357 = vsel %vm4101, %v3973, %v4229
        %v4358 = vsel %vm4102, %v3974, %v4230
        %v4359 = vsel %vm4103, %v3975, %v4231
        %v4360 = vsel %vm4104, %v3976, %v4232
        %v4361 = vsel %vm4105, %v3977, %v4233
        %v4362 = vsel %vm4106, %v3978, %v4234
        %v4363 = vsel %vm4107, %v3979, %v4235
        %v4364 = vsel %vm4108, %v3980, %v4236
        %v4365 = vsel %vm4109, %v3981, %v4237
        %v4366 = vsel %vm4110, %v3982, %v4238
        %v4367 = vsel %vm4111, %v3983, %v4239
        %v4368 = vsel %vm4112, %v3984, %v4240
        %v4369 = vsel %vm4113, %v3985, %v4241
        %v4370 = vsel %vm4114, %v3986, %v4242
        %v4371 = vsel %vm4115, %v3987, %v4243
        %v4372 = vsel %vm4116, %v3988, %v4244
        %v4373 = vsel %vm4117, %v3989, %v4245
        %v4374 = vsel %vm4118, %v3990, %v4246
        %v4375 = vsel %vm4119, %v3991, %v4247
        %v4376 = vsel %vm4120, %v3992, %v4248
        %v4377 = vsel %vm4121, %v3993, %v4249
        %v4378 = vsel %vm4122, %v3994, %v4250
        %v4379 = vsel %vm4123, %v3995, %v4251
        %v4380 = vsel %vm4124, %v3996, %v4252
        %v4381 = vsel %vm4125, %v3997, %v4253
        %v4382 = vsel %vm4126, %v3998, %v4254
        %v4383 = vsel %vm4127, %v3999, %v4255
        %v4384 = vsel %vm4128, %v4000, %v4256
        %v4385 = vsel %vm4129, %v4001, %v4257
        %v4386 = vsel %vm4130, %v4002, %v4258
        %v4387 = vsel %vm4131, %v4003, %v4259
        %v4388 = vsel %vm4132, %v4004, %v4260
        %v4389 = vsel %vm4133, %v4005, %v4261
        %v4390 = vsel %vm4134, %v4006, %v4262
        %v4391 = vsel %vm4135, %v4007, %v4263
        %v4392 = vsel %vm4136, %v4008, %v4264
        %v4393 = vsel %vm4137, %v4009, %v4265
        %v4394 = vsel %vm4138, %v4010, %v4266
        %v4395 = vsel %vm4139, %v4011, %v4267
        %v4396 = vsel %vm4140, %v4012, %v4268
        %v4397 = vsel %vm4141, %v4013, %v4269
        %v4398 = vsel %vm4142, %v4014, %v4270
        %v4399 = vsel %vm4143, %v4015, %v4271
        %v4400 = vsel %vm4144, %v4016, %v4272
        %v4401 = vsel %vm4145, %v4017, %v4273
        %v4402 = vsel %vm4146, %v4018, %v4274
        %v4403 = vsel %vm4147, %v4019, %v4275
        %v4404 = vsel %vm4148, %v4020, %v4276
        %v4405 = vsel %vm4149, %v4021, %v4277
        %v4406 = vsel %vm4150, %v4022, %v4278
        %v4407 = vsel %vm4151, %v4023, %v4279
        %v4408 = vsel %vm4152, %v4024, %v4280
        %v4409 = vsel %vm4153, %v4025, %v4281
        %v4410 = vsel %vm4154, %v4026, %v4282
        %v4411 = vsel %vm4155, %v4027, %v4283
        %v4412 = vsel %vm4156, %v4028, %v4284
        %v4413 = vsel %vm4157, %v4029, %v4285
        %v4414 = vsel %vm4158, %v4030, %v4286
        %v4415 = vsel %vm4159, %v4031, %v4287
        %v4416 = vsel %vm4160, %v4032, %v4288
        %v4417 = vsel %vm4161, %v4033, %v4289
        %v4418 = vsel %vm4162, %v4034, %v4290
        %v4419 = vsel %vm4163, %v4035, %v4291
        %v4420 = vsel %vm4164, %v4036, %v4292
        %v4421 = vsel %vm4165, %v4037, %v4293
        %v4422 = vsel %vm4166, %v4038, %v4294
        %v4423 = vsel %vm4167, %v4039, %v4295
        %v4424 = vsel %vm4168, %v4040, %v4296
        %v4425 = vsel %vm4169, %v4041, %v4297
        %v4426 = vsel %vm4170, %v4042, %v4298
        %v4427 = vsel %vm4171, %v4043, %v4299
        %v4428 = vld [vmem:[#allocation7] sm:$0xff]
        %v4429 = vld [vmem:[#allocation7 + $0x8] sm:$0xff]
        %v4430 = vld [vmem:[#allocation7 + $0x10] sm:$0xff]
        %v4431 = vld [vmem:[#allocation7 + $0x18] sm:$0xff]
        %v4432 = vld [vmem:[#allocation7 + $0x20] sm:$0xff]
        %v4433 = vld [vmem:[#allocation7 + $0x28] sm:$0xff]
        %v4434 = vld [vmem:[#allocation7 + $0x30] sm:$0xff]
        %v4435 = vld [vmem:[#allocation7 + $0x38] sm:$0xff]
        %v4436 = vld [vmem:[#allocation7 + $0x40] sm:$0xff]
        %v4437 = vld [vmem:[#allocation7 + $0x48] sm:$0xff]
        %v4438 = vld [vmem:[#allocation7 + $0x50] sm:$0xff]
        %v4439 = vld [vmem:[#allocation7 + $0x58] sm:$0xff]
        %v4440 = vld [vmem:[#allocation7 + $0x60] sm:$0xff]
        %v4441 = vld [vmem:[#allocation7 + $0x68] sm:$0xff]
        %v4442 = vld [vmem:[#allocation7 + $0x70] sm:$0xff]
        %v4443 = vld [vmem:[#allocation7 + $0x78] sm:$0xff]
        %v4444 = vperm.slane %v416, 3
        %4445 = vmatpush.msra.mxu0 %v4443
        %4446 = vmatpush.msra.mxu0 %v4442
        %4447 = vmatpush.msra.mxu0 %v4441
        %4448 = vmatpush.msra.mxu0 %v4440
        %4449 = vmatpush.msra.mxu0 %v4439
        %4450 = vmatpush.msra.mxu0 %v4438
        %4451 = vmatpush.msra.mxu0 %v4437
        %4452 = vmatpush.msra.mxu0 %v4436
        %4453 = vmatpush.msra.mxu0 %v4435
        %4454 = vmatpush.msra.mxu0 %v4434
        %4455 = vmatpush.msra.mxu0 %v4433
        %4456 = vmatpush.msra.mxu0 %v4432
        %4457 = vmatpush.msra.mxu0 %v4431
        %4458 = vmatpush.msra.mxu0 %v4430
        %4459 = vmatpush.msra.mxu0 %v4429
        %4460 = vmatpush.msra.mxu0 %v4428
        %4461 = vmatmul.f32.gmra.mxu0 %v4300
        %v4462 = vpop.f32.mrf.mxu0
        %v4463 = vadd.f32 %v4444, %v4462
        %4464 = vmatmul.f32.gmra.mxu0 %v4301
        %v4465 = vpop.f32.mrf.mxu0
        %v4466 = vadd.f32 %v4444, %v4465
        %4467 = vmatmul.f32.gmra.mxu0 %v4302
        %v4468 = vpop.f32.mrf.mxu0
        %v4469 = vadd.f32 %v4444, %v4468
        %4470 = vmatmul.f32.gmra.mxu0 %v4303
        %v4471 = vpop.f32.mrf.mxu0
        %v4472 = vadd.f32 %v4444, %v4471
        %4473 = vmatmul.f32.gmra.mxu0 %v4304
        %v4474 = vpop.f32.mrf.mxu0
        %v4475 = vadd.f32 %v4444, %v4474
        %4476 = vmatmul.f32.gmra.mxu0 %v4305
        %v4477 = vpop.f32.mrf.mxu0
        %v4478 = vadd.f32 %v4444, %v4477
        %4479 = vmatmul.f32.gmra.mxu0 %v4306
        %v4480 = vpop.f32.mrf.mxu0
        %v4481 = vadd.f32 %v4444, %v4480
        %4482 = vmatmul.f32.gmra.mxu0 %v4307
        %v4483 = vpop.f32.mrf.mxu0
        %v4484 = vadd.f32 %v4444, %v4483
        %4485 = vmatmul.f32.gmra.mxu0 %v4308
        %v4486 = vpop.f32.mrf.mxu0
        %v4487 = vadd.f32 %v4444, %v4486
        %4488 = vmatmul.f32.gmra.mxu0 %v4309
        %v4489 = vpop.f32.mrf.mxu0
        %v4490 = vadd.f32 %v4444, %v4489
        %4491 = vmatmul.f32.gmra.mxu0 %v4310
        %v4492 = vpop.f32.mrf.mxu0
        %v4493 = vadd.f32 %v4444, %v4492
        %4494 = vmatmul.f32.gmra.mxu0 %v4311
        %v4495 = vpop.f32.mrf.mxu0
        %v4496 = vadd.f32 %v4444, %v4495
        %4497 = vmatmul.f32.gmra.mxu0 %v4312
        %v4498 = vpop.f32.mrf.mxu0
        %v4499 = vadd.f32 %v4444, %v4498
        %4500 = vmatmul.f32.gmra.mxu0 %v4313
        %v4501 = vpop.f32.mrf.mxu0
        %v4502 = vadd.f32 %v4444, %v4501
        %4503 = vmatmul.f32.gmra.mxu0 %v4314
        %v4504 = vpop.f32.mrf.mxu0
        %v4505 = vadd.f32 %v4444, %v4504
        %4506 = vmatmul.f32.gmra.mxu0 %v4315
        %v4507 = vpop.f32.mrf.mxu0
        %v4508 = vadd.f32 %v4444, %v4507
        %4509 = vmatmul.f32.gmra.mxu0 %v4316
        %v4510 = vpop.f32.mrf.mxu0
        %v4511 = vadd.f32 %v4444, %v4510
        %4512 = vmatmul.f32.gmra.mxu0 %v4317
        %v4513 = vpop.f32.mrf.mxu0
        %v4514 = vadd.f32 %v4444, %v4513
        %4515 = vmatmul.f32.gmra.mxu0 %v4318
        %v4516 = vpop.f32.mrf.mxu0
        %v4517 = vadd.f32 %v4444, %v4516
        %4518 = vmatmul.f32.gmra.mxu0 %v4319
        %v4519 = vpop.f32.mrf.mxu0
        %v4520 = vadd.f32 %v4444, %v4519
        %4521 = vmatmul.f32.gmra.mxu0 %v4320
        %v4522 = vpop.f32.mrf.mxu0
        %v4523 = vadd.f32 %v4444, %v4522
        %4524 = vmatmul.f32.gmra.mxu0 %v4321
        %v4525 = vpop.f32.mrf.mxu0
        %v4526 = vadd.f32 %v4444, %v4525
        %4527 = vmatmul.f32.gmra.mxu0 %v4322
        %v4528 = vpop.f32.mrf.mxu0
        %v4529 = vadd.f32 %v4444, %v4528
        %4530 = vmatmul.f32.gmra.mxu0 %v4323
        %v4531 = vpop.f32.mrf.mxu0
        %v4532 = vadd.f32 %v4444, %v4531
        %4533 = vmatmul.f32.gmra.mxu0 %v4324
        %v4534 = vpop.f32.mrf.mxu0
        %v4535 = vadd.f32 %v4444, %v4534
        %4536 = vmatmul.f32.gmra.mxu0 %v4325
        %v4537 = vpop.f32.mrf.mxu0
        %v4538 = vadd.f32 %v4444, %v4537
        %4539 = vmatmul.f32.gmra.mxu0 %v4326
        %v4540 = vpop.f32.mrf.mxu0
        %v4541 = vadd.f32 %v4444, %v4540
        %4542 = vmatmul.f32.gmra.mxu0 %v4327
        %v4543 = vpop.f32.mrf.mxu0
        %v4544 = vadd.f32 %v4444, %v4543
        %4545 = vmatmul.f32.gmra.mxu0 %v4328
        %v4546 = vpop.f32.mrf.mxu0
        %v4547 = vadd.f32 %v4444, %v4546
        %4548 = vmatmul.f32.gmra.mxu0 %v4329
        %v4549 = vpop.f32.mrf.mxu0
        %v4550 = vadd.f32 %v4444, %v4549
        %4551 = vmatmul.f32.gmra.mxu0 %v4330
        %v4552 = vpop.f32.mrf.mxu0
        %v4553 = vadd.f32 %v4444, %v4552
        %4554 = vmatmul.f32.gmra.mxu0 %v4331
        %v4555 = vpop.f32.mrf.mxu0
        %v4556 = vadd.f32 %v4444, %v4555
        %4557 = vmatmul.f32.gmra.mxu0 %v4332
        %v4558 = vpop.f32.mrf.mxu0
        %v4559 = vadd.f32 %v4444, %v4558
        %4560 = vmatmul.f32.gmra.mxu0 %v4333
        %v4561 = vpop.f32.mrf.mxu0
        %v4562 = vadd.f32 %v4444, %v4561
        %4563 = vmatmul.f32.gmra.mxu0 %v4334
        %v4564 = vpop.f32.mrf.mxu0
        %v4565 = vadd.f32 %v4444, %v4564
        %4566 = vmatmul.f32.gmra.mxu0 %v4335
        %v4567 = vpop.f32.mrf.mxu0
        %v4568 = vadd.f32 %v4444, %v4567
        %4569 = vmatmul.f32.gmra.mxu0 %v4336
        %v4570 = vpop.f32.mrf.mxu0
        %v4571 = vadd.f32 %v4444, %v4570
        %4572 = vmatmul.f32.gmra.mxu0 %v4337
        %v4573 = vpop.f32.mrf.mxu0
        %v4574 = vadd.f32 %v4444, %v4573
        %4575 = vmatmul.f32.gmra.mxu0 %v4338
        %v4576 = vpop.f32.mrf.mxu0
        %v4577 = vadd.f32 %v4444, %v4576
        %4578 = vmatmul.f32.gmra.mxu0 %v4339
        %v4579 = vpop.f32.mrf.mxu0
        %v4580 = vadd.f32 %v4444, %v4579
        %4581 = vmatmul.f32.gmra.mxu0 %v4340
        %v4582 = vpop.f32.mrf.mxu0
        %v4583 = vadd.f32 %v4444, %v4582
        %4584 = vmatmul.f32.gmra.mxu0 %v4341
        %v4585 = vpop.f32.mrf.mxu0
        %v4586 = vadd.f32 %v4444, %v4585
        %4587 = vmatmul.f32.gmra.mxu0 %v4342
        %v4588 = vpop.f32.mrf.mxu0
        %v4589 = vadd.f32 %v4444, %v4588
        %4590 = vmatmul.f32.gmra.mxu0 %v4343
        %v4591 = vpop.f32.mrf.mxu0
        %v4592 = vadd.f32 %v4444, %v4591
        %4593 = vmatmul.f32.gmra.mxu0 %v4344
        %v4594 = vpop.f32.mrf.mxu0
        %v4595 = vadd.f32 %v4444, %v4594
        %4596 = vmatmul.f32.gmra.mxu0 %v4345
        %v4597 = vpop.f32.mrf.mxu0
        %v4598 = vadd.f32 %v4444, %v4597
        %4599 = vmatmul.f32.gmra.mxu0 %v4346
        %v4600 = vpop.f32.mrf.mxu0
        %v4601 = vadd.f32 %v4444, %v4600
        %4602 = vmatmul.f32.gmra.mxu0 %v4347
        %v4603 = vpop.f32.mrf.mxu0
        %v4604 = vadd.f32 %v4444, %v4603
        %4605 = vmatmul.f32.gmra.mxu0 %v4348
        %v4606 = vpop.f32.mrf.mxu0
        %v4607 = vadd.f32 %v4444, %v4606
        %4608 = vmatmul.f32.gmra.mxu0 %v4349
        %v4609 = vpop.f32.mrf.mxu0
        %v4610 = vadd.f32 %v4444, %v4609
        %4611 = vmatmul.f32.gmra.mxu0 %v4350
        %v4612 = vpop.f32.mrf.mxu0
        %v4613 = vadd.f32 %v4444, %v4612
        %4614 = vmatmul.f32.gmra.mxu0 %v4351
        %v4615 = vpop.f32.mrf.mxu0
        %v4616 = vadd.f32 %v4444, %v4615
        %4617 = vmatmul.f32.gmra.mxu0 %v4352
        %v4618 = vpop.f32.mrf.mxu0
        %v4619 = vadd.f32 %v4444, %v4618
        %4620 = vmatmul.f32.gmra.mxu0 %v4353
        %v4621 = vpop.f32.mrf.mxu0
        %v4622 = vadd.f32 %v4444, %v4621
        %4623 = vmatmul.f32.gmra.mxu0 %v4354
        %v4624 = vpop.f32.mrf.mxu0
        %v4625 = vadd.f32 %v4444, %v4624
        %4626 = vmatmul.f32.gmra.mxu0 %v4355
        %v4627 = vpop.f32.mrf.mxu0
        %v4628 = vadd.f32 %v4444, %v4627
        %4629 = vmatmul.f32.gmra.mxu0 %v4356
        %v4630 = vpop.f32.mrf.mxu0
        %v4631 = vadd.f32 %v4444, %v4630
        %4632 = vmatmul.f32.gmra.mxu0 %v4357
        %v4633 = vpop.f32.mrf.mxu0
        %v4634 = vadd.f32 %v4444, %v4633
        %4635 = vmatmul.f32.gmra.mxu0 %v4358
        %v4636 = vpop.f32.mrf.mxu0
        %v4637 = vadd.f32 %v4444, %v4636
        %4638 = vmatmul.f32.gmra.mxu0 %v4359
        %v4639 = vpop.f32.mrf.mxu0
        %v4640 = vadd.f32 %v4444, %v4639
        %4641 = vmatmul.f32.gmra.mxu0 %v4360
        %v4642 = vpop.f32.mrf.mxu0
        %v4643 = vadd.f32 %v4444, %v4642
        %4644 = vmatmul.f32.gmra.mxu0 %v4361
        %v4645 = vpop.f32.mrf.mxu0
        %v4646 = vadd.f32 %v4444, %v4645
        %4647 = vmatmul.f32.gmra.mxu0 %v4362
        %v4648 = vpop.f32.mrf.mxu0
        %v4649 = vadd.f32 %v4444, %v4648
        %4650 = vmatmul.f32.gmra.mxu0 %v4363
        %v4651 = vpop.f32.mrf.mxu0
        %v4652 = vadd.f32 %v4444, %v4651
        %4653 = vmatmul.f32.gmra.mxu0 %v4364
        %v4654 = vpop.f32.mrf.mxu0
        %v4655 = vadd.f32 %v4444, %v4654
        %4656 = vmatmul.f32.gmra.mxu0 %v4365
        %v4657 = vpop.f32.mrf.mxu0
        %v4658 = vadd.f32 %v4444, %v4657
        %4659 = vmatmul.f32.gmra.mxu0 %v4366
        %v4660 = vpop.f32.mrf.mxu0
        %v4661 = vadd.f32 %v4444, %v4660
        %4662 = vmatmul.f32.gmra.mxu0 %v4367
        %v4663 = vpop.f32.mrf.mxu0
        %v4664 = vadd.f32 %v4444, %v4663
        %4665 = vmatmul.f32.gmra.mxu0 %v4368
        %v4666 = vpop.f32.mrf.mxu0
        %v4667 = vadd.f32 %v4444, %v4666
        %4668 = vmatmul.f32.gmra.mxu0 %v4369
        %v4669 = vpop.f32.mrf.mxu0
        %v4670 = vadd.f32 %v4444, %v4669
        %4671 = vmatmul.f32.gmra.mxu0 %v4370
        %v4672 = vpop.f32.mrf.mxu0
        %v4673 = vadd.f32 %v4444, %v4672
        %4674 = vmatmul.f32.gmra.mxu0 %v4371
        %v4675 = vpop.f32.mrf.mxu0
        %v4676 = vadd.f32 %v4444, %v4675
        %4677 = vmatmul.f32.gmra.mxu0 %v4372
        %v4678 = vpop.f32.mrf.mxu0
        %v4679 = vadd.f32 %v4444, %v4678
        %4680 = vmatmul.f32.gmra.mxu0 %v4373
        %v4681 = vpop.f32.mrf.mxu0
        %v4682 = vadd.f32 %v4444, %v4681
        %4683 = vmatmul.f32.gmra.mxu0 %v4374
        %v4684 = vpop.f32.mrf.mxu0
        %v4685 = vadd.f32 %v4444, %v4684
        %4686 = vmatmul.f32.gmra.mxu0 %v4375
        %v4687 = vpop.f32.mrf.mxu0
        %v4688 = vadd.f32 %v4444, %v4687
        %4689 = vmatmul.f32.gmra.mxu0 %v4376
        %v4690 = vpop.f32.mrf.mxu0
        %v4691 = vadd.f32 %v4444, %v4690
        %4692 = vmatmul.f32.gmra.mxu0 %v4377
        %v4693 = vpop.f32.mrf.mxu0
        %v4694 = vadd.f32 %v4444, %v4693
        %4695 = vmatmul.f32.gmra.mxu0 %v4378
        %v4696 = vpop.f32.mrf.mxu0
        %v4697 = vadd.f32 %v4444, %v4696
        %4698 = vmatmul.f32.gmra.mxu0 %v4379
        %v4699 = vpop.f32.mrf.mxu0
        %v4700 = vadd.f32 %v4444, %v4699
        %4701 = vmatmul.f32.gmra.mxu0 %v4380
        %v4702 = vpop.f32.mrf.mxu0
        %v4703 = vadd.f32 %v4444, %v4702
        %4704 = vmatmul.f32.gmra.mxu0 %v4381
        %v4705 = vpop.f32.mrf.mxu0
        %v4706 = vadd.f32 %v4444, %v4705
        %4707 = vmatmul.f32.gmra.mxu0 %v4382
        %v4708 = vpop.f32.mrf.mxu0
        %v4709 = vadd.f32 %v4444, %v4708
        %4710 = vmatmul.f32.gmra.mxu0 %v4383
        %v4711 = vpop.f32.mrf.mxu0
        %v4712 = vadd.f32 %v4444, %v4711
        %4713 = vmatmul.f32.gmra.mxu0 %v4384
        %v4714 = vpop.f32.mrf.mxu0
        %v4715 = vadd.f32 %v4444, %v4714
        %4716 = vmatmul.f32.gmra.mxu0 %v4385
        %v4717 = vpop.f32.mrf.mxu0
        %v4718 = vadd.f32 %v4444, %v4717
        %4719 = vmatmul.f32.gmra.mxu0 %v4386
        %v4720 = vpop.f32.mrf.mxu0
        %v4721 = vadd.f32 %v4444, %v4720
        %4722 = vmatmul.f32.gmra.mxu0 %v4387
        %v4723 = vpop.f32.mrf.mxu0
        %v4724 = vadd.f32 %v4444, %v4723
        %4725 = vmatmul.f32.gmra.mxu0 %v4388
        %v4726 = vpop.f32.mrf.mxu0
        %v4727 = vadd.f32 %v4444, %v4726
        %4728 = vmatmul.f32.gmra.mxu0 %v4389
        %v4729 = vpop.f32.mrf.mxu0
        %v4730 = vadd.f32 %v4444, %v4729
        %4731 = vmatmul.f32.gmra.mxu0 %v4390
        %v4732 = vpop.f32.mrf.mxu0
        %v4733 = vadd.f32 %v4444, %v4732
        %4734 = vmatmul.f32.gmra.mxu0 %v4391
        %v4735 = vpop.f32.mrf.mxu0
        %v4736 = vadd.f32 %v4444, %v4735
        %4737 = vmatmul.f32.gmra.mxu0 %v4392
        %v4738 = vpop.f32.mrf.mxu0
        %v4739 = vadd.f32 %v4444, %v4738
        %4740 = vmatmul.f32.gmra.mxu0 %v4393
        %v4741 = vpop.f32.mrf.mxu0
        %v4742 = vadd.f32 %v4444, %v4741
        %4743 = vmatmul.f32.gmra.mxu0 %v4394
        %v4744 = vpop.f32.mrf.mxu0
        %v4745 = vadd.f32 %v4444, %v4744
        %4746 = vmatmul.f32.gmra.mxu0 %v4395
        %v4747 = vpop.f32.mrf.mxu0
        %v4748 = vadd.f32 %v4444, %v4747
        %4749 = vmatmul.f32.gmra.mxu0 %v4396
        %v4750 = vpop.f32.mrf.mxu0
        %v4751 = vadd.f32 %v4444, %v4750
        %4752 = vmatmul.f32.gmra.mxu0 %v4397
        %v4753 = vpop.f32.mrf.mxu0
        %v4754 = vadd.f32 %v4444, %v4753
        %4755 = vmatmul.f32.gmra.mxu0 %v4398
        %v4756 = vpop.f32.mrf.mxu0
        %v4757 = vadd.f32 %v4444, %v4756
        %4758 = vmatmul.f32.gmra.mxu0 %v4399
        %v4759 = vpop.f32.mrf.mxu0
        %v4760 = vadd.f32 %v4444, %v4759
        %4761 = vmatmul.f32.gmra.mxu0 %v4400
        %v4762 = vpop.f32.mrf.mxu0
        %v4763 = vadd.f32 %v4444, %v4762
        %4764 = vmatmul.f32.gmra.mxu0 %v4401
        %v4765 = vpop.f32.mrf.mxu0
        %v4766 = vadd.f32 %v4444, %v4765
        %4767 = vmatmul.f32.gmra.mxu0 %v4402
        %v4768 = vpop.f32.mrf.mxu0
        %v4769 = vadd.f32 %v4444, %v4768
        %4770 = vmatmul.f32.gmra.mxu0 %v4403
        %v4771 = vpop.f32.mrf.mxu0
        %v4772 = vadd.f32 %v4444, %v4771
        %4773 = vmatmul.f32.gmra.mxu0 %v4404
        %v4774 = vpop.f32.mrf.mxu0
        %v4775 = vadd.f32 %v4444, %v4774
        %4776 = vmatmul.f32.gmra.mxu0 %v4405
        %v4777 = vpop.f32.mrf.mxu0
        %v4778 = vadd.f32 %v4444, %v4777
        %4779 = vmatmul.f32.gmra.mxu0 %v4406
        %v4780 = vpop.f32.mrf.mxu0
        %v4781 = vadd.f32 %v4444, %v4780
        %4782 = vmatmul.f32.gmra.mxu0 %v4407
        %v4783 = vpop.f32.mrf.mxu0
        %v4784 = vadd.f32 %v4444, %v4783
        %4785 = vmatmul.f32.gmra.mxu0 %v4408
        %v4786 = vpop.f32.mrf.mxu0
        %v4787 = vadd.f32 %v4444, %v4786
        %4788 = vmatmul.f32.gmra.mxu0 %v4409
        %v4789 = vpop.f32.mrf.mxu0
        %v4790 = vadd.f32 %v4444, %v4789
        %4791 = vmatmul.f32.gmra.mxu0 %v4410
        %v4792 = vpop.f32.mrf.mxu0
        %v4793 = vadd.f32 %v4444, %v4792
        %4794 = vmatmul.f32.gmra.mxu0 %v4411
        %v4795 = vpop.f32.mrf.mxu0
        %v4796 = vadd.f32 %v4444, %v4795
        %4797 = vmatmul.f32.gmra.mxu0 %v4412
        %v4798 = vpop.f32.mrf.mxu0
        %v4799 = vadd.f32 %v4444, %v4798
        %4800 = vmatmul.f32.gmra.mxu0 %v4413
        %v4801 = vpop.f32.mrf.mxu0
        %v4802 = vadd.f32 %v4444, %v4801
        %4803 = vmatmul.f32.gmra.mxu0 %v4414
        %v4804 = vpop.f32.mrf.mxu0
        %v4805 = vadd.f32 %v4444, %v4804
        %4806 = vmatmul.f32.gmra.mxu0 %v4415
        %v4807 = vpop.f32.mrf.mxu0
        %v4808 = vadd.f32 %v4444, %v4807
        %4809 = vmatmul.f32.gmra.mxu0 %v4416
        %v4810 = vpop.f32.mrf.mxu0
        %v4811 = vadd.f32 %v4444, %v4810
        %4812 = vmatmul.f32.gmra.mxu0 %v4417
        %v4813 = vpop.f32.mrf.mxu0
        %v4814 = vadd.f32 %v4444, %v4813
        %4815 = vmatmul.f32.gmra.mxu0 %v4418
        %v4816 = vpop.f32.mrf.mxu0
        %v4817 = vadd.f32 %v4444, %v4816
        %4818 = vmatmul.f32.gmra.mxu0 %v4419
        %v4819 = vpop.f32.mrf.mxu0
        %v4820 = vadd.f32 %v4444, %v4819
        %4821 = vmatmul.f32.gmra.mxu0 %v4420
        %v4822 = vpop.f32.mrf.mxu0
        %v4823 = vadd.f32 %v4444, %v4822
        %4824 = vmatmul.f32.gmra.mxu0 %v4421
        %v4825 = vpop.f32.mrf.mxu0
        %v4826 = vadd.f32 %v4444, %v4825
        %4827 = vmatmul.f32.gmra.mxu0 %v4422
        %v4828 = vpop.f32.mrf.mxu0
        %v4829 = vadd.f32 %v4444, %v4828
        %4830 = vmatmul.f32.gmra.mxu0 %v4423
        %v4831 = vpop.f32.mrf.mxu0
        %v4832 = vadd.f32 %v4444, %v4831
        %4833 = vmatmul.f32.gmra.mxu0 %v4424
        %v4834 = vpop.f32.mrf.mxu0
        %v4835 = vadd.f32 %v4444, %v4834
        %4836 = vmatmul.f32.gmra.mxu0 %v4425
        %v4837 = vpop.f32.mrf.mxu0
        %v4838 = vadd.f32 %v4444, %v4837
        %4839 = vmatmul.f32.gmra.mxu0 %v4426
        %v4840 = vpop.f32.mrf.mxu0
        %v4841 = vadd.f32 %v4444, %v4840
        %4842 = vmatmul.f32.gmra.mxu0 %v4427
        %v4843 = vpop.f32.mrf.mxu0
        %v4844 = vadd.f32 %v4444, %v4843
        %4845 = vdwg.mxu0
        %4846 = vadd.xlane.f32.xlu0 %v4463
        %v4847 = vpop.xlane.xlu0 %4846
        %4848 = vadd.xlane.f32.xlu0 %v4466
        %v4849 = vpop.xlane.xlu0 %4848
        %4850 = vadd.xlane.f32.xlu0 %v4469
        %v4851 = vpop.xlane.xlu0 %4850
        %4852 = vadd.xlane.f32.xlu0 %v4472
        %v4853 = vpop.xlane.xlu0 %4852
        %4854 = vadd.xlane.f32.xlu0 %v4475
        %v4855 = vpop.xlane.xlu0 %4854
        %4856 = vadd.xlane.f32.xlu0 %v4478
        %v4857 = vpop.xlane.xlu0 %4856
        %4858 = vadd.xlane.f32.xlu0 %v4481
        %v4859 = vpop.xlane.xlu0 %4858
        %4860 = vadd.xlane.f32.xlu0 %v4484
        %v4861 = vpop.xlane.xlu0 %4860
        %4862 = vadd.xlane.f32.xlu0 %v4487
        %v4863 = vpop.xlane.xlu0 %4862
        %4864 = vadd.xlane.f32.xlu0 %v4490
        %v4865 = vpop.xlane.xlu0 %4864
        %4866 = vadd.xlane.f32.xlu0 %v4493
        %v4867 = vpop.xlane.xlu0 %4866
        %4868 = vadd.xlane.f32.xlu0 %v4496
        %v4869 = vpop.xlane.xlu0 %4868
        %4870 = vadd.xlane.f32.xlu0 %v4499
        %v4871 = vpop.xlane.xlu0 %4870
        %4872 = vadd.xlane.f32.xlu0 %v4502
        %v4873 = vpop.xlane.xlu0 %4872
        %4874 = vadd.xlane.f32.xlu0 %v4505
        %v4875 = vpop.xlane.xlu0 %4874
        %4876 = vadd.xlane.f32.xlu0 %v4508
        %v4877 = vpop.xlane.xlu0 %4876
        %4878 = vadd.xlane.f32.xlu0 %v4511
        %v4879 = vpop.xlane.xlu0 %4878
        %4880 = vadd.xlane.f32.xlu0 %v4514
        %v4881 = vpop.xlane.xlu0 %4880
        %4882 = vadd.xlane.f32.xlu0 %v4517
        %v4883 = vpop.xlane.xlu0 %4882
        %4884 = vadd.xlane.f32.xlu0 %v4520
        %v4885 = vpop.xlane.xlu0 %4884
        %4886 = vadd.xlane.f32.xlu0 %v4523
        %v4887 = vpop.xlane.xlu0 %4886
        %4888 = vadd.xlane.f32.xlu0 %v4526
        %v4889 = vpop.xlane.xlu0 %4888
        %4890 = vadd.xlane.f32.xlu0 %v4529
        %v4891 = vpop.xlane.xlu0 %4890
        %4892 = vadd.xlane.f32.xlu0 %v4532
        %v4893 = vpop.xlane.xlu0 %4892
        %4894 = vadd.xlane.f32.xlu0 %v4535
        %v4895 = vpop.xlane.xlu0 %4894
        %4896 = vadd.xlane.f32.xlu0 %v4538
        %v4897 = vpop.xlane.xlu0 %4896
        %4898 = vadd.xlane.f32.xlu0 %v4541
        %v4899 = vpop.xlane.xlu0 %4898
        %4900 = vadd.xlane.f32.xlu0 %v4544
        %v4901 = vpop.xlane.xlu0 %4900
        %4902 = vadd.xlane.f32.xlu0 %v4547
        %v4903 = vpop.xlane.xlu0 %4902
        %4904 = vadd.xlane.f32.xlu0 %v4550
        %v4905 = vpop.xlane.xlu0 %4904
        %4906 = vadd.xlane.f32.xlu0 %v4553
        %v4907 = vpop.xlane.xlu0 %4906
        %4908 = vadd.xlane.f32.xlu0 %v4556
        %v4909 = vpop.xlane.xlu0 %4908
        %4910 = vadd.xlane.f32.xlu0 %v4559
        %v4911 = vpop.xlane.xlu0 %4910
        %4912 = vadd.xlane.f32.xlu0 %v4562
        %v4913 = vpop.xlane.xlu0 %4912
        %4914 = vadd.xlane.f32.xlu0 %v4565
        %v4915 = vpop.xlane.xlu0 %4914
        %4916 = vadd.xlane.f32.xlu0 %v4568
        %v4917 = vpop.xlane.xlu0 %4916
        %4918 = vadd.xlane.f32.xlu0 %v4571
        %v4919 = vpop.xlane.xlu0 %4918
        %4920 = vadd.xlane.f32.xlu0 %v4574
        %v4921 = vpop.xlane.xlu0 %4920
        %4922 = vadd.xlane.f32.xlu0 %v4577
        %v4923 = vpop.xlane.xlu0 %4922
        %4924 = vadd.xlane.f32.xlu0 %v4580
        %v4925 = vpop.xlane.xlu0 %4924
        %4926 = vadd.xlane.f32.xlu0 %v4583
        %v4927 = vpop.xlane.xlu0 %4926
        %4928 = vadd.xlane.f32.xlu0 %v4586
        %v4929 = vpop.xlane.xlu0 %4928
        %4930 = vadd.xlane.f32.xlu0 %v4589
        %v4931 = vpop.xlane.xlu0 %4930
        %4932 = vadd.xlane.f32.xlu0 %v4592
        %v4933 = vpop.xlane.xlu0 %4932
        %4934 = vadd.xlane.f32.xlu0 %v4595
        %v4935 = vpop.xlane.xlu0 %4934
        %4936 = vadd.xlane.f32.xlu0 %v4598
        %v4937 = vpop.xlane.xlu0 %4936
        %4938 = vadd.xlane.f32.xlu0 %v4601
        %v4939 = vpop.xlane.xlu0 %4938
        %4940 = vadd.xlane.f32.xlu0 %v4604
        %v4941 = vpop.xlane.xlu0 %4940
        %4942 = vadd.xlane.f32.xlu0 %v4607
        %v4943 = vpop.xlane.xlu0 %4942
        %4944 = vadd.xlane.f32.xlu0 %v4610
        %v4945 = vpop.xlane.xlu0 %4944
        %4946 = vadd.xlane.f32.xlu0 %v4613
        %v4947 = vpop.xlane.xlu0 %4946
        %4948 = vadd.xlane.f32.xlu0 %v4616
        %v4949 = vpop.xlane.xlu0 %4948
        %4950 = vadd.xlane.f32.xlu0 %v4619
        %v4951 = vpop.xlane.xlu0 %4950
        %4952 = vadd.xlane.f32.xlu0 %v4622
        %v4953 = vpop.xlane.xlu0 %4952
        %4954 = vadd.xlane.f32.xlu0 %v4625
        %v4955 = vpop.xlane.xlu0 %4954
        %4956 = vadd.xlane.f32.xlu0 %v4628
        %v4957 = vpop.xlane.xlu0 %4956
        %4958 = vadd.xlane.f32.xlu0 %v4631
        %v4959 = vpop.xlane.xlu0 %4958
        %4960 = vadd.xlane.f32.xlu0 %v4634
        %v4961 = vpop.xlane.xlu0 %4960
        %4962 = vadd.xlane.f32.xlu0 %v4637
        %v4963 = vpop.xlane.xlu0 %4962
        %4964 = vadd.xlane.f32.xlu0 %v4640
        %v4965 = vpop.xlane.xlu0 %4964
        %4966 = vadd.xlane.f32.xlu0 %v4643
        %v4967 = vpop.xlane.xlu0 %4966
        %4968 = vadd.xlane.f32.xlu0 %v4646
        %v4969 = vpop.xlane.xlu0 %4968
        %4970 = vadd.xlane.f32.xlu0 %v4649
        %v4971 = vpop.xlane.xlu0 %4970
        %4972 = vadd.xlane.f32.xlu0 %v4652
        %v4973 = vpop.xlane.xlu0 %4972
        %4974 = vadd.xlane.f32.xlu0 %v4655
        %v4975 = vpop.xlane.xlu0 %4974
        %4976 = vadd.xlane.f32.xlu0 %v4658
        %v4977 = vpop.xlane.xlu0 %4976
        %4978 = vadd.xlane.f32.xlu0 %v4661
        %v4979 = vpop.xlane.xlu0 %4978
        %4980 = vadd.xlane.f32.xlu0 %v4664
        %v4981 = vpop.xlane.xlu0 %4980
        %4982 = vadd.xlane.f32.xlu0 %v4667
        %v4983 = vpop.xlane.xlu0 %4982
        %4984 = vadd.xlane.f32.xlu0 %v4670
        %v4985 = vpop.xlane.xlu0 %4984
        %4986 = vadd.xlane.f32.xlu0 %v4673
        %v4987 = vpop.xlane.xlu0 %4986
        %4988 = vadd.xlane.f32.xlu0 %v4676
        %v4989 = vpop.xlane.xlu0 %4988
        %4990 = vadd.xlane.f32.xlu0 %v4679
        %v4991 = vpop.xlane.xlu0 %4990
        %4992 = vadd.xlane.f32.xlu0 %v4682
        %v4993 = vpop.xlane.xlu0 %4992
        %4994 = vadd.xlane.f32.xlu0 %v4685
        %v4995 = vpop.xlane.xlu0 %4994
        %4996 = vadd.xlane.f32.xlu0 %v4688
        %v4997 = vpop.xlane.xlu0 %4996
        %4998 = vadd.xlane.f32.xlu0 %v4691
        %v4999 = vpop.xlane.xlu0 %4998
        %5000 = vadd.xlane.f32.xlu0 %v4694
        %v5001 = vpop.xlane.xlu0 %5000
        %5002 = vadd.xlane.f32.xlu0 %v4697
        %v5003 = vpop.xlane.xlu0 %5002
        %5004 = vadd.xlane.f32.xlu0 %v4700
        %v5005 = vpop.xlane.xlu0 %5004
        %5006 = vadd.xlane.f32.xlu0 %v4703
        %v5007 = vpop.xlane.xlu0 %5006
        %5008 = vadd.xlane.f32.xlu0 %v4706
        %v5009 = vpop.xlane.xlu0 %5008
        %5010 = vadd.xlane.f32.xlu0 %v4709
        %v5011 = vpop.xlane.xlu0 %5010
        %5012 = vadd.xlane.f32.xlu0 %v4712
        %v5013 = vpop.xlane.xlu0 %5012
        %5014 = vadd.xlane.f32.xlu0 %v4715
        %v5015 = vpop.xlane.xlu0 %5014
        %5016 = vadd.xlane.f32.xlu0 %v4718
        %v5017 = vpop.xlane.xlu0 %5016
        %5018 = vadd.xlane.f32.xlu0 %v4721
        %v5019 = vpop.xlane.xlu0 %5018
        %5020 = vadd.xlane.f32.xlu0 %v4724
        %v5021 = vpop.xlane.xlu0 %5020
        %5022 = vadd.xlane.f32.xlu0 %v4727
        %v5023 = vpop.xlane.xlu0 %5022
        %5024 = vadd.xlane.f32.xlu0 %v4730
        %v5025 = vpop.xlane.xlu0 %5024
        %5026 = vadd.xlane.f32.xlu0 %v4733
        %v5027 = vpop.xlane.xlu0 %5026
        %5028 = vadd.xlane.f32.xlu0 %v4736
        %v5029 = vpop.xlane.xlu0 %5028
        %5030 = vadd.xlane.f32.xlu0 %v4739
        %v5031 = vpop.xlane.xlu0 %5030
        %5032 = vadd.xlane.f32.xlu0 %v4742
        %v5033 = vpop.xlane.xlu0 %5032
        %5034 = vadd.xlane.f32.xlu0 %v4745
        %v5035 = vpop.xlane.xlu0 %5034
        %5036 = vadd.xlane.f32.xlu0 %v4748
        %v5037 = vpop.xlane.xlu0 %5036
        %5038 = vadd.xlane.f32.xlu0 %v4751
        %v5039 = vpop.xlane.xlu0 %5038
        %5040 = vadd.xlane.f32.xlu0 %v4754
        %v5041 = vpop.xlane.xlu0 %5040
        %5042 = vadd.xlane.f32.xlu0 %v4757
        %v5043 = vpop.xlane.xlu0 %5042
        %5044 = vadd.xlane.f32.xlu0 %v4760
        %v5045 = vpop.xlane.xlu0 %5044
        %5046 = vadd.xlane.f32.xlu0 %v4763
        %v5047 = vpop.xlane.xlu0 %5046
        %5048 = vadd.xlane.f32.xlu0 %v4766
        %v5049 = vpop.xlane.xlu0 %5048
        %5050 = vadd.xlane.f32.xlu0 %v4769
        %v5051 = vpop.xlane.xlu0 %5050
        %5052 = vadd.xlane.f32.xlu0 %v4772
        %v5053 = vpop.xlane.xlu0 %5052
        %5054 = vadd.xlane.f32.xlu0 %v4775
        %v5055 = vpop.xlane.xlu0 %5054
        %5056 = vadd.xlane.f32.xlu0 %v4778
        %v5057 = vpop.xlane.xlu0 %5056
        %5058 = vadd.xlane.f32.xlu0 %v4781
        %v5059 = vpop.xlane.xlu0 %5058
        %5060 = vadd.xlane.f32.xlu0 %v4784
        %v5061 = vpop.xlane.xlu0 %5060
        %5062 = vadd.xlane.f32.xlu0 %v4787
        %v5063 = vpop.xlane.xlu0 %5062
        %5064 = vadd.xlane.f32.xlu0 %v4790
        %v5065 = vpop.xlane.xlu0 %5064
        %5066 = vadd.xlane.f32.xlu0 %v4793
        %v5067 = vpop.xlane.xlu0 %5066
        %5068 = vadd.xlane.f32.xlu0 %v4796
        %v5069 = vpop.xlane.xlu0 %5068
        %5070 = vadd.xlane.f32.xlu0 %v4799
        %v5071 = vpop.xlane.xlu0 %5070
        %5072 = vadd.xlane.f32.xlu0 %v4802
        %v5073 = vpop.xlane.xlu0 %5072
        %5074 = vadd.xlane.f32.xlu0 %v4805
        %v5075 = vpop.xlane.xlu0 %5074
        %5076 = vadd.xlane.f32.xlu0 %v4808
        %v5077 = vpop.xlane.xlu0 %5076
        %5078 = vadd.xlane.f32.xlu0 %v4811
        %v5079 = vpop.xlane.xlu0 %5078
        %5080 = vadd.xlane.f32.xlu0 %v4814
        %v5081 = vpop.xlane.xlu0 %5080
        %5082 = vadd.xlane.f32.xlu0 %v4817
        %v5083 = vpop.xlane.xlu0 %5082
        %5084 = vadd.xlane.f32.xlu0 %v4820
        %v5085 = vpop.xlane.xlu0 %5084
        %5086 = vadd.xlane.f32.xlu0 %v4823
        %v5087 = vpop.xlane.xlu0 %5086
        %5088 = vadd.xlane.f32.xlu0 %v4826
        %v5089 = vpop.xlane.xlu0 %5088
        %5090 = vadd.xlane.f32.xlu0 %v4829
        %v5091 = vpop.xlane.xlu0 %5090
        %5092 = vadd.xlane.f32.xlu0 %v4832
        %v5093 = vpop.xlane.xlu0 %5092
        %5094 = vadd.xlane.f32.xlu0 %v4835
        %v5095 = vpop.xlane.xlu0 %5094
        %5096 = vadd.xlane.f32.xlu0 %v4838
        %v5097 = vpop.xlane.xlu0 %5096
        %5098 = vadd.xlane.f32.xlu0 %v4841
        %v5099 = vpop.xlane.xlu0 %5098
        %5100 = vadd.xlane.f32.xlu0 %v4844
        %v5101 = vpop.xlane.xlu0 %5100
        %v5102 = vmul.f32 %v4847, %v1097
        %v5103 = vmul.f32 %v4849, %v1097
        %v5104 = vmul.f32 %v4851, %v1097
        %v5105 = vmul.f32 %v4853, %v1097
        %v5106 = vmul.f32 %v4855, %v1097
        %v5107 = vmul.f32 %v4857, %v1097
        %v5108 = vmul.f32 %v4859, %v1097
        %v5109 = vmul.f32 %v4861, %v1097
        %v5110 = vmul.f32 %v4863, %v1097
        %v5111 = vmul.f32 %v4865, %v1097
        %v5112 = vmul.f32 %v4867, %v1097
        %v5113 = vmul.f32 %v4869, %v1097
        %v5114 = vmul.f32 %v4871, %v1097
        %v5115 = vmul.f32 %v4873, %v1097
        %v5116 = vmul.f32 %v4875, %v1097
        %v5117 = vmul.f32 %v4877, %v1097
        %v5118 = vmul.f32 %v4879, %v1097
        %v5119 = vmul.f32 %v4881, %v1097
        %v5120 = vmul.f32 %v4883, %v1097
        %v5121 = vmul.f32 %v4885, %v1097
        %v5122 = vmul.f32 %v4887, %v1097
        %v5123 = vmul.f32 %v4889, %v1097
        %v5124 = vmul.f32 %v4891, %v1097
        %v5125 = vmul.f32 %v4893, %v1097
        %v5126 = vmul.f32 %v4895, %v1097
        %v5127 = vmul.f32 %v4897, %v1097
        %v5128 = vmul.f32 %v4899, %v1097
        %v5129 = vmul.f32 %v4901, %v1097
        %v5130 = vmul.f32 %v4903, %v1097
        %v5131 = vmul.f32 %v4905, %v1097
        %v5132 = vmul.f32 %v4907, %v1097
        %v5133 = vmul.f32 %v4909, %v1097
        %v5134 = vmul.f32 %v4911, %v1097
        %v5135 = vmul.f32 %v4913, %v1097
        %v5136 = vmul.f32 %v4915, %v1097
        %v5137 = vmul.f32 %v4917, %v1097
        %v5138 = vmul.f32 %v4919, %v1097
        %v5139 = vmul.f32 %v4921, %v1097
        %v5140 = vmul.f32 %v4923, %v1097
        %v5141 = vmul.f32 %v4925, %v1097
        %v5142 = vmul.f32 %v4927, %v1097
        %v5143 = vmul.f32 %v4929, %v1097
        %v5144 = vmul.f32 %v4931, %v1097
        %v5145 = vmul.f32 %v4933, %v1097
        %v5146 = vmul.f32 %v4935, %v1097
        %v5147 = vmul.f32 %v4937, %v1097
        %v5148 = vmul.f32 %v4939, %v1097
        %v5149 = vmul.f32 %v4941, %v1097
        %v5150 = vmul.f32 %v4943, %v1097
        %v5151 = vmul.f32 %v4945, %v1097
        %v5152 = vmul.f32 %v4947, %v1097
        %v5153 = vmul.f32 %v4949, %v1097
        %v5154 = vmul.f32 %v4951, %v1097
        %v5155 = vmul.f32 %v4953, %v1097
        %v5156 = vmul.f32 %v4955, %v1097
        %v5157 = vmul.f32 %v4957, %v1097
        %v5158 = vmul.f32 %v4959, %v1097
        %v5159 = vmul.f32 %v4961, %v1097
        %v5160 = vmul.f32 %v4963, %v1097
        %v5161 = vmul.f32 %v4965, %v1097
        %v5162 = vmul.f32 %v4967, %v1097
        %v5163 = vmul.f32 %v4969, %v1097
        %v5164 = vmul.f32 %v4971, %v1097
        %v5165 = vmul.f32 %v4973, %v1097
        %v5166 = vmul.f32 %v4975, %v1097
        %v5167 = vmul.f32 %v4977, %v1097
        %v5168 = vmul.f32 %v4979, %v1097
        %v5169 = vmul.f32 %v4981, %v1097
        %v5170 = vmul.f32 %v4983, %v1097
        %v5171 = vmul.f32 %v4985, %v1097
        %v5172 = vmul.f32 %v4987, %v1097
        %v5173 = vmul.f32 %v4989, %v1097
        %v5174 = vmul.f32 %v4991, %v1097
        %v5175 = vmul.f32 %v4993, %v1097
        %v5176 = vmul.f32 %v4995, %v1097
        %v5177 = vmul.f32 %v4997, %v1097
        %v5178 = vmul.f32 %v4999, %v1097
        %v5179 = vmul.f32 %v5001, %v1097
        %v5180 = vmul.f32 %v5003, %v1097
        %v5181 = vmul.f32 %v5005, %v1097
        %v5182 = vmul.f32 %v5007, %v1097
        %v5183 = vmul.f32 %v5009, %v1097
        %v5184 = vmul.f32 %v5011, %v1097
        %v5185 = vmul.f32 %v5013, %v1097
        %v5186 = vmul.f32 %v5015, %v1097
        %v5187 = vmul.f32 %v5017, %v1097
        %v5188 = vmul.f32 %v5019, %v1097
        %v5189 = vmul.f32 %v5021, %v1097
        %v5190 = vmul.f32 %v5023, %v1097
        %v5191 = vmul.f32 %v5025, %v1097
        %v5192 = vmul.f32 %v5027, %v1097
        %v5193 = vmul.f32 %v5029, %v1097
        %v5194 = vmul.f32 %v5031, %v1097
        %v5195 = vmul.f32 %v5033, %v1097
        %v5196 = vmul.f32 %v5035, %v1097
        %v5197 = vmul.f32 %v5037, %v1097
        %v5198 = vmul.f32 %v5039, %v1097
        %v5199 = vmul.f32 %v5041, %v1097
        %v5200 = vmul.f32 %v5043, %v1097
        %v5201 = vmul.f32 %v5045, %v1097
        %v5202 = vmul.f32 %v5047, %v1097
        %v5203 = vmul.f32 %v5049, %v1097
        %v5204 = vmul.f32 %v5051, %v1097
        %v5205 = vmul.f32 %v5053, %v1097
        %v5206 = vmul.f32 %v5055, %v1097
        %v5207 = vmul.f32 %v5057, %v1097
        %v5208 = vmul.f32 %v5059, %v1097
        %v5209 = vmul.f32 %v5061, %v1097
        %v5210 = vmul.f32 %v5063, %v1097
        %v5211 = vmul.f32 %v5065, %v1097
        %v5212 = vmul.f32 %v5067, %v1097
        %v5213 = vmul.f32 %v5069, %v1097
        %v5214 = vmul.f32 %v5071, %v1097
        %v5215 = vmul.f32 %v5073, %v1097
        %v5216 = vmul.f32 %v5075, %v1097
        %v5217 = vmul.f32 %v5077, %v1097
        %v5218 = vmul.f32 %v5079, %v1097
        %v5219 = vmul.f32 %v5081, %v1097
        %v5220 = vmul.f32 %v5083, %v1097
        %v5221 = vmul.f32 %v5085, %v1097
        %v5222 = vmul.f32 %v5087, %v1097
        %v5223 = vmul.f32 %v5089, %v1097
        %v5224 = vmul.f32 %v5091, %v1097
        %v5225 = vmul.f32 %v5093, %v1097
        %v5226 = vmul.f32 %v5095, %v1097
        %v5227 = vmul.f32 %v5097, %v1097
        %v5228 = vmul.f32 %v5099, %v1097
        %v5229 = vmul.f32 %v5101, %v1097
        %v5230 = vmul.f32 %v4463, %v4463
        %v5231 = vmul.f32 %v4466, %v4466
        %v5232 = vmul.f32 %v4469, %v4469
        %v5233 = vmul.f32 %v4472, %v4472
        %v5234 = vmul.f32 %v4475, %v4475
        %v5235 = vmul.f32 %v4478, %v4478
        %v5236 = vmul.f32 %v4481, %v4481
        %v5237 = vmul.f32 %v4484, %v4484
        %v5238 = vmul.f32 %v4487, %v4487
        %v5239 = vmul.f32 %v4490, %v4490
        %v5240 = vmul.f32 %v4493, %v4493
        %v5241 = vmul.f32 %v4496, %v4496
        %v5242 = vmul.f32 %v4499, %v4499
        %v5243 = vmul.f32 %v4502, %v4502
        %v5244 = vmul.f32 %v4505, %v4505
        %v5245 = vmul.f32 %v4508, %v4508
        %v5246 = vmul.f32 %v4511, %v4511
        %v5247 = vmul.f32 %v4514, %v4514
        %v5248 = vmul.f32 %v4517, %v4517
        %v5249 = vmul.f32 %v4520, %v4520
        %v5250 = vmul.f32 %v4523, %v4523
        %v5251 = vmul.f32 %v4526, %v4526
        %v5252 = vmul.f32 %v4529, %v4529
        %v5253 = vmul.f32 %v4532, %v4532
        %v5254 = vmul.f32 %v4535, %v4535
        %v5255 = vmul.f32 %v4538, %v4538
        %v5256 = vmul.f32 %v4541, %v4541
        %v5257 = vmul.f32 %v4544, %v4544
        %v5258 = vmul.f32 %v4547, %v4547
        %v5259 = vmul.f32 %v4550, %v4550
        %v5260 = vmul.f32 %v4553, %v4553
        %v5261 = vmul.f32 %v4556, %v4556
        %v5262 = vmul.f32 %v4559, %v4559
        %v5263 = vmul.f32 %v4562, %v4562
        %v5264 = vmul.f32 %v4565, %v4565
        %v5265 = vmul.f32 %v4568, %v4568
        %v5266 = vmul.f32 %v4571, %v4571
        %v5267 = vmul.f32 %v4574, %v4574
        %v5268 = vmul.f32 %v4577, %v4577
        %v5269 = vmul.f32 %v4580, %v4580
        %v5270 = vmul.f32 %v4583, %v4583
        %v5271 = vmul.f32 %v4586, %v4586
        %v5272 = vmul.f32 %v4589, %v4589
        %v5273 = vmul.f32 %v4592, %v4592
        %v5274 = vmul.f32 %v4595, %v4595
        %v5275 = vmul.f32 %v4598, %v4598
        %v5276 = vmul.f32 %v4601, %v4601
        %v5277 = vmul.f32 %v4604, %v4604
        %v5278 = vmul.f32 %v4607, %v4607
        %v5279 = vmul.f32 %v4610, %v4610
        %v5280 = vmul.f32 %v4613, %v4613
        %v5281 = vmul.f32 %v4616, %v4616
        %v5282 = vmul.f32 %v4619, %v4619
        %v5283 = vmul.f32 %v4622, %v4622
        %v5284 = vmul.f32 %v4625, %v4625
        %v5285 = vmul.f32 %v4628, %v4628
        %v5286 = vmul.f32 %v4631, %v4631
        %v5287 = vmul.f32 %v4634, %v4634
        %v5288 = vmul.f32 %v4637, %v4637
        %v5289 = vmul.f32 %v4640, %v4640
        %v5290 = vmul.f32 %v4643, %v4643
        %v5291 = vmul.f32 %v4646, %v4646
        %v5292 = vmul.f32 %v4649, %v4649
        %v5293 = vmul.f32 %v4652, %v4652
        %v5294 = vmul.f32 %v4655, %v4655
        %v5295 = vmul.f32 %v4658, %v4658
        %v5296 = vmul.f32 %v4661, %v4661
        %v5297 = vmul.f32 %v4664, %v4664
        %v5298 = vmul.f32 %v4667, %v4667
        %v5299 = vmul.f32 %v4670, %v4670
        %v5300 = vmul.f32 %v4673, %v4673
        %v5301 = vmul.f32 %v4676, %v4676
        %v5302 = vmul.f32 %v4679, %v4679
        %v5303 = vmul.f32 %v4682, %v4682
        %v5304 = vmul.f32 %v4685, %v4685
        %v5305 = vmul.f32 %v4688, %v4688
        %v5306 = vmul.f32 %v4691, %v4691
        %v5307 = vmul.f32 %v4694, %v4694
        %v5308 = vmul.f32 %v4697, %v4697
        %v5309 = vmul.f32 %v4700, %v4700
        %v5310 = vmul.f32 %v4703, %v4703
        %v5311 = vmul.f32 %v4706, %v4706
        %v5312 = vmul.f32 %v4709, %v4709
        %v5313 = vmul.f32 %v4712, %v4712
        %v5314 = vmul.f32 %v4715, %v4715
        %v5315 = vmul.f32 %v4718, %v4718
        %v5316 = vmul.f32 %v4721, %v4721
        %v5317 = vmul.f32 %v4724, %v4724
        %v5318 = vmul.f32 %v4727, %v4727
        %v5319 = vmul.f32 %v4730, %v4730
        %v5320 = vmul.f32 %v4733, %v4733
        %v5321 = vmul.f32 %v4736, %v4736
        %v5322 = vmul.f32 %v4739, %v4739
        %v5323 = vmul.f32 %v4742, %v4742
        %v5324 = vmul.f32 %v4745, %v4745
        %v5325 = vmul.f32 %v4748, %v4748
        %v5326 = vmul.f32 %v4751, %v4751
        %v5327 = vmul.f32 %v4754, %v4754
        %v5328 = vmul.f32 %v4757, %v4757
        %v5329 = vmul.f32 %v4760, %v4760
        %v5330 = vmul.f32 %v4763, %v4763
        %v5331 = vmul.f32 %v4766, %v4766
        %v5332 = vmul.f32 %v4769, %v4769
        %v5333 = vmul.f32 %v4772, %v4772
        %v5334 = vmul.f32 %v4775, %v4775
        %v5335 = vmul.f32 %v4778, %v4778
        %v5336 = vmul.f32 %v4781, %v4781
        %v5337 = vmul.f32 %v4784, %v4784
        %v5338 = vmul.f32 %v4787, %v4787
        %v5339 = vmul.f32 %v4790, %v4790
        %v5340 = vmul.f32 %v4793, %v4793
        %v5341 = vmul.f32 %v4796, %v4796
        %v5342 = vmul.f32 %v4799, %v4799
        %v5343 = vmul.f32 %v4802, %v4802
        %v5344 = vmul.f32 %v4805, %v4805
        %v5345 = vmul.f32 %v4808, %v4808
        %v5346 = vmul.f32 %v4811, %v4811
        %v5347 = vmul.f32 %v4814, %v4814
        %v5348 = vmul.f32 %v4817, %v4817
        %v5349 = vmul.f32 %v4820, %v4820
        %v5350 = vmul.f32 %v4823, %v4823
        %v5351 = vmul.f32 %v4826, %v4826
        %v5352 = vmul.f32 %v4829, %v4829
        %v5353 = vmul.f32 %v4832, %v4832
        %v5354 = vmul.f32 %v4835, %v4835
        %v5355 = vmul.f32 %v4838, %v4838
        %v5356 = vmul.f32 %v4841, %v4841
        %v5357 = vmul.f32 %v4844, %v4844
        %5358 = vadd.xlane.f32.xlu0 %v5230
        %v5359 = vpop.xlane.xlu0 %5358
        %5360 = vadd.xlane.f32.xlu0 %v5231
        %v5361 = vpop.xlane.xlu0 %5360
        %5362 = vadd.xlane.f32.xlu0 %v5232
        %v5363 = vpop.xlane.xlu0 %5362
        %5364 = vadd.xlane.f32.xlu0 %v5233
        %v5365 = vpop.xlane.xlu0 %5364
        %5366 = vadd.xlane.f32.xlu0 %v5234
        %v5367 = vpop.xlane.xlu0 %5366
        %5368 = vadd.xlane.f32.xlu0 %v5235
        %v5369 = vpop.xlane.xlu0 %5368
        %5370 = vadd.xlane.f32.xlu0 %v5236
        %v5371 = vpop.xlane.xlu0 %5370
        %5372 = vadd.xlane.f32.xlu0 %v5237
        %v5373 = vpop.xlane.xlu0 %5372
        %5374 = vadd.xlane.f32.xlu0 %v5238
        %v5375 = vpop.xlane.xlu0 %5374
        %5376 = vadd.xlane.f32.xlu0 %v5239
        %v5377 = vpop.xlane.xlu0 %5376
        %5378 = vadd.xlane.f32.xlu0 %v5240
        %v5379 = vpop.xlane.xlu0 %5378
        %5380 = vadd.xlane.f32.xlu0 %v5241
        %v5381 = vpop.xlane.xlu0 %5380
        %5382 = vadd.xlane.f32.xlu0 %v5242
        %v5383 = vpop.xlane.xlu0 %5382
        %5384 = vadd.xlane.f32.xlu0 %v5243
        %v5385 = vpop.xlane.xlu0 %5384
        %5386 = vadd.xlane.f32.xlu0 %v5244
        %v5387 = vpop.xlane.xlu0 %5386
        %5388 = vadd.xlane.f32.xlu0 %v5245
        %v5389 = vpop.xlane.xlu0 %5388
        %5390 = vadd.xlane.f32.xlu0 %v5246
        %v5391 = vpop.xlane.xlu0 %5390
        %5392 = vadd.xlane.f32.xlu0 %v5247
        %v5393 = vpop.xlane.xlu0 %5392
        %5394 = vadd.xlane.f32.xlu0 %v5248
        %v5395 = vpop.xlane.xlu0 %5394
        %5396 = vadd.xlane.f32.xlu0 %v5249
        %v5397 = vpop.xlane.xlu0 %5396
        %5398 = vadd.xlane.f32.xlu0 %v5250
        %v5399 = vpop.xlane.xlu0 %5398
        %5400 = vadd.xlane.f32.xlu0 %v5251
        %v5401 = vpop.xlane.xlu0 %5400
        %5402 = vadd.xlane.f32.xlu0 %v5252
        %v5403 = vpop.xlane.xlu0 %5402
        %5404 = vadd.xlane.f32.xlu0 %v5253
        %v5405 = vpop.xlane.xlu0 %5404
        %5406 = vadd.xlane.f32.xlu0 %v5254
        %v5407 = vpop.xlane.xlu0 %5406
        %5408 = vadd.xlane.f32.xlu0 %v5255
        %v5409 = vpop.xlane.xlu0 %5408
        %5410 = vadd.xlane.f32.xlu0 %v5256
        %v5411 = vpop.xlane.xlu0 %5410
        %5412 = vadd.xlane.f32.xlu0 %v5257
        %v5413 = vpop.xlane.xlu0 %5412
        %5414 = vadd.xlane.f32.xlu0 %v5258
        %v5415 = vpop.xlane.xlu0 %5414
        %5416 = vadd.xlane.f32.xlu0 %v5259
        %v5417 = vpop.xlane.xlu0 %5416
        %5418 = vadd.xlane.f32.xlu0 %v5260
        %v5419 = vpop.xlane.xlu0 %5418
        %5420 = vadd.xlane.f32.xlu0 %v5261
        %v5421 = vpop.xlane.xlu0 %5420
        %5422 = vadd.xlane.f32.xlu0 %v5262
        %v5423 = vpop.xlane.xlu0 %5422
        %5424 = vadd.xlane.f32.xlu0 %v5263
        %v5425 = vpop.xlane.xlu0 %5424
        %5426 = vadd.xlane.f32.xlu0 %v5264
        %v5427 = vpop.xlane.xlu0 %5426
        %5428 = vadd.xlane.f32.xlu0 %v5265
        %v5429 = vpop.xlane.xlu0 %5428
        %5430 = vadd.xlane.f32.xlu0 %v5266
        %v5431 = vpop.xlane.xlu0 %5430
        %5432 = vadd.xlane.f32.xlu0 %v5267
        %v5433 = vpop.xlane.xlu0 %5432
        %5434 = vadd.xlane.f32.xlu0 %v5268
        %v5435 = vpop.xlane.xlu0 %5434
        %5436 = vadd.xlane.f32.xlu0 %v5269
        %v5437 = vpop.xlane.xlu0 %5436
        %5438 = vadd.xlane.f32.xlu0 %v5270
        %v5439 = vpop.xlane.xlu0 %5438
        %5440 = vadd.xlane.f32.xlu0 %v5271
        %v5441 = vpop.xlane.xlu0 %5440
        %5442 = vadd.xlane.f32.xlu0 %v5272
        %v5443 = vpop.xlane.xlu0 %5442
        %5444 = vadd.xlane.f32.xlu0 %v5273
        %v5445 = vpop.xlane.xlu0 %5444
        %5446 = vadd.xlane.f32.xlu0 %v5274
        %v5447 = vpop.xlane.xlu0 %5446
        %5448 = vadd.xlane.f32.xlu0 %v5275
        %v5449 = vpop.xlane.xlu0 %5448
        %5450 = vadd.xlane.f32.xlu0 %v5276
        %v5451 = vpop.xlane.xlu0 %5450
        %5452 = vadd.xlane.f32.xlu0 %v5277
        %v5453 = vpop.xlane.xlu0 %5452
        %5454 = vadd.xlane.f32.xlu0 %v5278
        %v5455 = vpop.xlane.xlu0 %5454
        %5456 = vadd.xlane.f32.xlu0 %v5279
        %v5457 = vpop.xlane.xlu0 %5456
        %5458 = vadd.xlane.f32.xlu0 %v5280
        %v5459 = vpop.xlane.xlu0 %5458
        %5460 = vadd.xlane.f32.xlu0 %v5281
        %v5461 = vpop.xlane.xlu0 %5460
        %5462 = vadd.xlane.f32.xlu0 %v5282
        %v5463 = vpop.xlane.xlu0 %5462
        %5464 = vadd.xlane.f32.xlu0 %v5283
        %v5465 = vpop.xlane.xlu0 %5464
        %5466 = vadd.xlane.f32.xlu0 %v5284
        %v5467 = vpop.xlane.xlu0 %5466
        %5468 = vadd.xlane.f32.xlu0 %v5285
        %v5469 = vpop.xlane.xlu0 %5468
        %5470 = vadd.xlane.f32.xlu0 %v5286
        %v5471 = vpop.xlane.xlu0 %5470
        %5472 = vadd.xlane.f32.xlu0 %v5287
        %v5473 = vpop.xlane.xlu0 %5472
        %5474 = vadd.xlane.f32.xlu0 %v5288
        %v5475 = vpop.xlane.xlu0 %5474
        %5476 = vadd.xlane.f32.xlu0 %v5289
        %v5477 = vpop.xlane.xlu0 %5476
        %5478 = vadd.xlane.f32.xlu0 %v5290
        %v5479 = vpop.xlane.xlu0 %5478
        %5480 = vadd.xlane.f32.xlu0 %v5291
        %v5481 = vpop.xlane.xlu0 %5480
        %5482 = vadd.xlane.f32.xlu0 %v5292
        %v5483 = vpop.xlane.xlu0 %5482
        %5484 = vadd.xlane.f32.xlu0 %v5293
        %v5485 = vpop.xlane.xlu0 %5484
        %5486 = vadd.xlane.f32.xlu0 %v5294
        %v5487 = vpop.xlane.xlu0 %5486
        %5488 = vadd.xlane.f32.xlu0 %v5295
        %v5489 = vpop.xlane.xlu0 %5488
        %5490 = vadd.xlane.f32.xlu0 %v5296
        %v5491 = vpop.xlane.xlu0 %5490
        %5492 = vadd.xlane.f32.xlu0 %v5297
        %v5493 = vpop.xlane.xlu0 %5492
        %5494 = vadd.xlane.f32.xlu0 %v5298
        %v5495 = vpop.xlane.xlu0 %5494
        %5496 = vadd.xlane.f32.xlu0 %v5299
        %v5497 = vpop.xlane.xlu0 %5496
        %5498 = vadd.xlane.f32.xlu0 %v5300
        %v5499 = vpop.xlane.xlu0 %5498
        %5500 = vadd.xlane.f32.xlu0 %v5301
        %v5501 = vpop.xlane.xlu0 %5500
        %5502 = vadd.xlane.f32.xlu0 %v5302
        %v5503 = vpop.xlane.xlu0 %5502
        %5504 = vadd.xlane.f32.xlu0 %v5303
        %v5505 = vpop.xlane.xlu0 %5504
        %5506 = vadd.xlane.f32.xlu0 %v5304
        %v5507 = vpop.xlane.xlu0 %5506
        %5508 = vadd.xlane.f32.xlu0 %v5305
        %v5509 = vpop.xlane.xlu0 %5508
        %5510 = vadd.xlane.f32.xlu0 %v5306
        %v5511 = vpop.xlane.xlu0 %5510
        %5512 = vadd.xlane.f32.xlu0 %v5307
        %v5513 = vpop.xlane.xlu0 %5512
        %5514 = vadd.xlane.f32.xlu0 %v5308
        %v5515 = vpop.xlane.xlu0 %5514
        %5516 = vadd.xlane.f32.xlu0 %v5309
        %v5517 = vpop.xlane.xlu0 %5516
        %5518 = vadd.xlane.f32.xlu0 %v5310
        %v5519 = vpop.xlane.xlu0 %5518
        %5520 = vadd.xlane.f32.xlu0 %v5311
        %v5521 = vpop.xlane.xlu0 %5520
        %5522 = vadd.xlane.f32.xlu0 %v5312
        %v5523 = vpop.xlane.xlu0 %5522
        %5524 = vadd.xlane.f32.xlu0 %v5313
        %v5525 = vpop.xlane.xlu0 %5524
        %5526 = vadd.xlane.f32.xlu0 %v5314
        %v5527 = vpop.xlane.xlu0 %5526
        %5528 = vadd.xlane.f32.xlu0 %v5315
        %v5529 = vpop.xlane.xlu0 %5528
        %5530 = vadd.xlane.f32.xlu0 %v5316
        %v5531 = vpop.xlane.xlu0 %5530
        %5532 = vadd.xlane.f32.xlu0 %v5317
        %v5533 = vpop.xlane.xlu0 %5532
        %5534 = vadd.xlane.f32.xlu0 %v5318
        %v5535 = vpop.xlane.xlu0 %5534
        %5536 = vadd.xlane.f32.xlu0 %v5319
        %v5537 = vpop.xlane.xlu0 %5536
        %5538 = vadd.xlane.f32.xlu0 %v5320
        %v5539 = vpop.xlane.xlu0 %5538
        %5540 = vadd.xlane.f32.xlu0 %v5321
        %v5541 = vpop.xlane.xlu0 %5540
        %5542 = vadd.xlane.f32.xlu0 %v5322
        %v5543 = vpop.xlane.xlu0 %5542
        %5544 = vadd.xlane.f32.xlu0 %v5323
        %v5545 = vpop.xlane.xlu0 %5544
        %5546 = vadd.xlane.f32.xlu0 %v5324
        %v5547 = vpop.xlane.xlu0 %5546
        %5548 = vadd.xlane.f32.xlu0 %v5325
        %v5549 = vpop.xlane.xlu0 %5548
        %5550 = vadd.xlane.f32.xlu0 %v5326
        %v5551 = vpop.xlane.xlu0 %5550
        %5552 = vadd.xlane.f32.xlu0 %v5327
        %v5553 = vpop.xlane.xlu0 %5552
        %5554 = vadd.xlane.f32.xlu0 %v5328
        %v5555 = vpop.xlane.xlu0 %5554
        %5556 = vadd.xlane.f32.xlu0 %v5329
        %v5557 = vpop.xlane.xlu0 %5556
        %5558 = vadd.xlane.f32.xlu0 %v5330
        %v5559 = vpop.xlane.xlu0 %5558
        %5560 = vadd.xlane.f32.xlu0 %v5331
        %v5561 = vpop.xlane.xlu0 %5560
        %5562 = vadd.xlane.f32.xlu0 %v5332
        %v5563 = vpop.xlane.xlu0 %5562
        %5564 = vadd.xlane.f32.xlu0 %v5333
        %v5565 = vpop.xlane.xlu0 %5564
        %5566 = vadd.xlane.f32.xlu0 %v5334
        %v5567 = vpop.xlane.xlu0 %5566
        %5568 = vadd.xlane.f32.xlu0 %v5335
        %v5569 = vpop.xlane.xlu0 %5568
        %5570 = vadd.xlane.f32.xlu0 %v5336
        %v5571 = vpop.xlane.xlu0 %5570
        %5572 = vadd.xlane.f32.xlu0 %v5337
        %v5573 = vpop.xlane.xlu0 %5572
        %5574 = vadd.xlane.f32.xlu0 %v5338
        %v5575 = vpop.xlane.xlu0 %5574
        %5576 = vadd.xlane.f32.xlu0 %v5339
        %v5577 = vpop.xlane.xlu0 %5576
        %5578 = vadd.xlane.f32.xlu0 %v5340
        %v5579 = vpop.xlane.xlu0 %5578
        %5580 = vadd.xlane.f32.xlu0 %v5341
        %v5581 = vpop.xlane.xlu0 %5580
        %5582 = vadd.xlane.f32.xlu0 %v5342
        %v5583 = vpop.xlane.xlu0 %5582
        %5584 = vadd.xlane.f32.xlu0 %v5343
        %v5585 = vpop.xlane.xlu0 %5584
        %5586 = vadd.xlane.f32.xlu0 %v5344
        %v5587 = vpop.xlane.xlu0 %5586
        %5588 = vadd.xlane.f32.xlu0 %v5345
        %v5589 = vpop.xlane.xlu0 %5588
        %5590 = vadd.xlane.f32.xlu0 %v5346
        %v5591 = vpop.xlane.xlu0 %5590
        %5592 = vadd.xlane.f32.xlu0 %v5347
        %v5593 = vpop.xlane.xlu0 %5592
        %5594 = vadd.xlane.f32.xlu0 %v5348
        %v5595 = vpop.xlane.xlu0 %5594
        %5596 = vadd.xlane.f32.xlu0 %v5349
        %v5597 = vpop.xlane.xlu0 %5596
        %5598 = vadd.xlane.f32.xlu0 %v5350
        %v5599 = vpop.xlane.xlu0 %5598
        %5600 = vadd.xlane.f32.xlu0 %v5351
        %v5601 = vpop.xlane.xlu0 %5600
        %5602 = vadd.xlane.f32.xlu0 %v5352
        %v5603 = vpop.xlane.xlu0 %5602
        %5604 = vadd.xlane.f32.xlu0 %v5353
        %v5605 = vpop.xlane.xlu0 %5604
        %5606 = vadd.xlane.f32.xlu0 %v5354
        %v5607 = vpop.xlane.xlu0 %5606
        %5608 = vadd.xlane.f32.xlu0 %v5355
        %v5609 = vpop.xlane.xlu0 %5608
        %5610 = vadd.xlane.f32.xlu0 %v5356
        %v5611 = vpop.xlane.xlu0 %5610
        %5612 = vadd.xlane.f32.xlu0 %v5357
        %v5613 = vpop.xlane.xlu0 %5612
        %v5614 = vmul.f32 %v5359, %v1097
        %v5615 = vmul.f32 %v5361, %v1097
        %v5616 = vmul.f32 %v5363, %v1097
        %v5617 = vmul.f32 %v5365, %v1097
        %v5618 = vmul.f32 %v5367, %v1097
        %v5619 = vmul.f32 %v5369, %v1097
        %v5620 = vmul.f32 %v5371, %v1097
        %v5621 = vmul.f32 %v5373, %v1097
        %v5622 = vmul.f32 %v5375, %v1097
        %v5623 = vmul.f32 %v5377, %v1097
        %v5624 = vmul.f32 %v5379, %v1097
        %v5625 = vmul.f32 %v5381, %v1097
        %v5626 = vmul.f32 %v5383, %v1097
        %v5627 = vmul.f32 %v5385, %v1097
        %v5628 = vmul.f32 %v5387, %v1097
        %v5629 = vmul.f32 %v5389, %v1097
        %v5630 = vmul.f32 %v5391, %v1097
        %v5631 = vmul.f32 %v5393, %v1097
        %v5632 = vmul.f32 %v5395, %v1097
        %v5633 = vmul.f32 %v5397, %v1097
        %v5634 = vmul.f32 %v5399, %v1097
        %v5635 = vmul.f32 %v5401, %v1097
        %v5636 = vmul.f32 %v5403, %v1097
        %v5637 = vmul.f32 %v5405, %v1097
        %v5638 = vmul.f32 %v5407, %v1097
        %v5639 = vmul.f32 %v5409, %v1097
        %v5640 = vmul.f32 %v5411, %v1097
        %v5641 = vmul.f32 %v5413, %v1097
        %v5642 = vmul.f32 %v5415, %v1097
        %v5643 = vmul.f32 %v5417, %v1097
        %v5644 = vmul.f32 %v5419, %v1097
        %v5645 = vmul.f32 %v5421, %v1097
        %v5646 = vmul.f32 %v5423, %v1097
        %v5647 = vmul.f32 %v5425, %v1097
        %v5648 = vmul.f32 %v5427, %v1097
        %v5649 = vmul.f32 %v5429, %v1097
        %v5650 = vmul.f32 %v5431, %v1097
        %v5651 = vmul.f32 %v5433, %v1097
        %v5652 = vmul.f32 %v5435, %v1097
        %v5653 = vmul.f32 %v5437, %v1097
        %v5654 = vmul.f32 %v5439, %v1097
        %v5655 = vmul.f32 %v5441, %v1097
        %v5656 = vmul.f32 %v5443, %v1097
        %v5657 = vmul.f32 %v5445, %v1097
        %v5658 = vmul.f32 %v5447, %v1097
        %v5659 = vmul.f32 %v5449, %v1097
        %v5660 = vmul.f32 %v5451, %v1097
        %v5661 = vmul.f32 %v5453, %v1097
        %v5662 = vmul.f32 %v5455, %v1097
        %v5663 = vmul.f32 %v5457, %v1097
        %v5664 = vmul.f32 %v5459, %v1097
        %v5665 = vmul.f32 %v5461, %v1097
        %v5666 = vmul.f32 %v5463, %v1097
        %v5667 = vmul.f32 %v5465, %v1097
        %v5668 = vmul.f32 %v5467, %v1097
        %v5669 = vmul.f32 %v5469, %v1097
        %v5670 = vmul.f32 %v5471, %v1097
        %v5671 = vmul.f32 %v5473, %v1097
        %v5672 = vmul.f32 %v5475, %v1097
        %v5673 = vmul.f32 %v5477, %v1097
        %v5674 = vmul.f32 %v5479, %v1097
        %v5675 = vmul.f32 %v5481, %v1097
        %v5676 = vmul.f32 %v5483, %v1097
        %v5677 = vmul.f32 %v5485, %v1097
        %v5678 = vmul.f32 %v5487, %v1097
        %v5679 = vmul.f32 %v5489, %v1097
        %v5680 = vmul.f32 %v5491, %v1097
        %v5681 = vmul.f32 %v5493, %v1097
        %v5682 = vmul.f32 %v5495, %v1097
        %v5683 = vmul.f32 %v5497, %v1097
        %v5684 = vmul.f32 %v5499, %v1097
        %v5685 = vmul.f32 %v5501, %v1097
        %v5686 = vmul.f32 %v5503, %v1097
        %v5687 = vmul.f32 %v5505, %v1097
        %v5688 = vmul.f32 %v5507, %v1097
        %v5689 = vmul.f32 %v5509, %v1097
        %v5690 = vmul.f32 %v5511, %v1097
        %v5691 = vmul.f32 %v5513, %v1097
        %v5692 = vmul.f32 %v5515, %v1097
        %v5693 = vmul.f32 %v5517, %v1097
        %v5694 = vmul.f32 %v5519, %v1097
        %v5695 = vmul.f32 %v5521, %v1097
        %v5696 = vmul.f32 %v5523, %v1097
        %v5697 = vmul.f32 %v5525, %v1097
        %v5698 = vmul.f32 %v5527, %v1097
        %v5699 = vmul.f32 %v5529, %v1097
        %v5700 = vmul.f32 %v5531, %v1097
        %v5701 = vmul.f32 %v5533, %v1097
        %v5702 = vmul.f32 %v5535, %v1097
        %v5703 = vmul.f32 %v5537, %v1097
        %v5704 = vmul.f32 %v5539, %v1097
        %v5705 = vmul.f32 %v5541, %v1097
        %v5706 = vmul.f32 %v5543, %v1097
        %v5707 = vmul.f32 %v5545, %v1097
        %v5708 = vmul.f32 %v5547, %v1097
        %v5709 = vmul.f32 %v5549, %v1097
        %v5710 = vmul.f32 %v5551, %v1097
        %v5711 = vmul.f32 %v5553, %v1097
        %v5712 = vmul.f32 %v5555, %v1097
        %v5713 = vmul.f32 %v5557, %v1097
        %v5714 = vmul.f32 %v5559, %v1097
        %v5715 = vmul.f32 %v5561, %v1097
        %v5716 = vmul.f32 %v5563, %v1097
        %v5717 = vmul.f32 %v5565, %v1097
        %v5718 = vmul.f32 %v5567, %v1097
        %v5719 = vmul.f32 %v5569, %v1097
        %v5720 = vmul.f32 %v5571, %v1097
        %v5721 = vmul.f32 %v5573, %v1097
        %v5722 = vmul.f32 %v5575, %v1097
        %v5723 = vmul.f32 %v5577, %v1097
        %v5724 = vmul.f32 %v5579, %v1097
        %v5725 = vmul.f32 %v5581, %v1097
        %v5726 = vmul.f32 %v5583, %v1097
        %v5727 = vmul.f32 %v5585, %v1097
        %v5728 = vmul.f32 %v5587, %v1097
        %v5729 = vmul.f32 %v5589, %v1097
        %v5730 = vmul.f32 %v5591, %v1097
        %v5731 = vmul.f32 %v5593, %v1097
        %v5732 = vmul.f32 %v5595, %v1097
        %v5733 = vmul.f32 %v5597, %v1097
        %v5734 = vmul.f32 %v5599, %v1097
        %v5735 = vmul.f32 %v5601, %v1097
        %v5736 = vmul.f32 %v5603, %v1097
        %v5737 = vmul.f32 %v5605, %v1097
        %v5738 = vmul.f32 %v5607, %v1097
        %v5739 = vmul.f32 %v5609, %v1097
        %v5740 = vmul.f32 %v5611, %v1097
        %v5741 = vmul.f32 %v5613, %v1097
        %v5742 = vmul.f32 %v5102, %v5102
        %v5743 = vmul.f32 %v5103, %v5103
        %v5744 = vmul.f32 %v5104, %v5104
        %v5745 = vmul.f32 %v5105, %v5105
        %v5746 = vmul.f32 %v5106, %v5106
        %v5747 = vmul.f32 %v5107, %v5107
        %v5748 = vmul.f32 %v5108, %v5108
        %v5749 = vmul.f32 %v5109, %v5109
        %v5750 = vmul.f32 %v5110, %v5110
        %v5751 = vmul.f32 %v5111, %v5111
        %v5752 = vmul.f32 %v5112, %v5112
        %v5753 = vmul.f32 %v5113, %v5113
        %v5754 = vmul.f32 %v5114, %v5114
        %v5755 = vmul.f32 %v5115, %v5115
        %v5756 = vmul.f32 %v5116, %v5116
        %v5757 = vmul.f32 %v5117, %v5117
        %v5758 = vmul.f32 %v5118, %v5118
        %v5759 = vmul.f32 %v5119, %v5119
        %v5760 = vmul.f32 %v5120, %v5120
        %v5761 = vmul.f32 %v5121, %v5121
        %v5762 = vmul.f32 %v5122, %v5122
        %v5763 = vmul.f32 %v5123, %v5123
        %v5764 = vmul.f32 %v5124, %v5124
        %v5765 = vmul.f32 %v5125, %v5125
        %v5766 = vmul.f32 %v5126, %v5126
        %v5767 = vmul.f32 %v5127, %v5127
        %v5768 = vmul.f32 %v5128, %v5128
        %v5769 = vmul.f32 %v5129, %v5129
        %v5770 = vmul.f32 %v5130, %v5130
        %v5771 = vmul.f32 %v5131, %v5131
        %v5772 = vmul.f32 %v5132, %v5132
        %v5773 = vmul.f32 %v5133, %v5133
        %v5774 = vmul.f32 %v5134, %v5134
        %v5775 = vmul.f32 %v5135, %v5135
        %v5776 = vmul.f32 %v5136, %v5136
        %v5777 = vmul.f32 %v5137, %v5137
        %v5778 = vmul.f32 %v5138, %v5138
        %v5779 = vmul.f32 %v5139, %v5139
        %v5780 = vmul.f32 %v5140, %v5140
        %v5781 = vmul.f32 %v5141, %v5141
        %v5782 = vmul.f32 %v5142, %v5142
        %v5783 = vmul.f32 %v5143, %v5143
        %v5784 = vmul.f32 %v5144, %v5144
        %v5785 = vmul.f32 %v5145, %v5145
        %v5786 = vmul.f32 %v5146, %v5146
        %v5787 = vmul.f32 %v5147, %v5147
        %v5788 = vmul.f32 %v5148, %v5148
        %v5789 = vmul.f32 %v5149, %v5149
        %v5790 = vmul.f32 %v5150, %v5150
        %v5791 = vmul.f32 %v5151, %v5151
        %v5792 = vmul.f32 %v5152, %v5152
        %v5793 = vmul.f32 %v5153, %v5153
        %v5794 = vmul.f32 %v5154, %v5154
        %v5795 = vmul.f32 %v5155, %v5155
        %v5796 = vmul.f32 %v5156, %v5156
        %v5797 = vmul.f32 %v5157, %v5157
        %v5798 = vmul.f32 %v5158, %v5158
        %v5799 = vmul.f32 %v5159, %v5159
        %v5800 = vmul.f32 %v5160, %v5160
        %v5801 = vmul.f32 %v5161, %v5161
        %v5802 = vmul.f32 %v5162, %v5162
        %v5803 = vmul.f32 %v5163, %v5163
        %v5804 = vmul.f32 %v5164, %v5164
        %v5805 = vmul.f32 %v5165, %v5165
        %v5806 = vmul.f32 %v5166, %v5166
        %v5807 = vmul.f32 %v5167, %v5167
        %v5808 = vmul.f32 %v5168, %v5168
        %v5809 = vmul.f32 %v5169, %v5169
        %v5810 = vmul.f32 %v5170, %v5170
        %v5811 = vmul.f32 %v5171, %v5171
        %v5812 = vmul.f32 %v5172, %v5172
        %v5813 = vmul.f32 %v5173, %v5173
        %v5814 = vmul.f32 %v5174, %v5174
        %v5815 = vmul.f32 %v5175, %v5175
        %v5816 = vmul.f32 %v5176, %v5176
        %v5817 = vmul.f32 %v5177, %v5177
        %v5818 = vmul.f32 %v5178, %v5178
        %v5819 = vmul.f32 %v5179, %v5179
        %v5820 = vmul.f32 %v5180, %v5180
        %v5821 = vmul.f32 %v5181, %v5181
        %v5822 = vmul.f32 %v5182, %v5182
        %v5823 = vmul.f32 %v5183, %v5183
        %v5824 = vmul.f32 %v5184, %v5184
        %v5825 = vmul.f32 %v5185, %v5185
        %v5826 = vmul.f32 %v5186, %v5186
        %v5827 = vmul.f32 %v5187, %v5187
        %v5828 = vmul.f32 %v5188, %v5188
        %v5829 = vmul.f32 %v5189, %v5189
        %v5830 = vmul.f32 %v5190, %v5190
        %v5831 = vmul.f32 %v5191, %v5191
        %v5832 = vmul.f32 %v5192, %v5192
        %v5833 = vmul.f32 %v5193, %v5193
        %v5834 = vmul.f32 %v5194, %v5194
        %v5835 = vmul.f32 %v5195, %v5195
        %v5836 = vmul.f32 %v5196, %v5196
        %v5837 = vmul.f32 %v5197, %v5197
        %v5838 = vmul.f32 %v5198, %v5198
        %v5839 = vmul.f32 %v5199, %v5199
        %v5840 = vmul.f32 %v5200, %v5200
        %v5841 = vmul.f32 %v5201, %v5201
        %v5842 = vmul.f32 %v5202, %v5202
        %v5843 = vmul.f32 %v5203, %v5203
        %v5844 = vmul.f32 %v5204, %v5204
        %v5845 = vmul.f32 %v5205, %v5205
        %v5846 = vmul.f32 %v5206, %v5206
        %v5847 = vmul.f32 %v5207, %v5207
        %v5848 = vmul.f32 %v5208, %v5208
        %v5849 = vmul.f32 %v5209, %v5209
        %v5850 = vmul.f32 %v5210, %v5210
        %v5851 = vmul.f32 %v5211, %v5211
        %v5852 = vmul.f32 %v5212, %v5212
        %v5853 = vmul.f32 %v5213, %v5213
        %v5854 = vmul.f32 %v5214, %v5214
        %v5855 = vmul.f32 %v5215, %v5215
        %v5856 = vmul.f32 %v5216, %v5216
        %v5857 = vmul.f32 %v5217, %v5217
        %v5858 = vmul.f32 %v5218, %v5218
        %v5859 = vmul.f32 %v5219, %v5219
        %v5860 = vmul.f32 %v5220, %v5220
        %v5861 = vmul.f32 %v5221, %v5221
        %v5862 = vmul.f32 %v5222, %v5222
        %v5863 = vmul.f32 %v5223, %v5223
        %v5864 = vmul.f32 %v5224, %v5224
        %v5865 = vmul.f32 %v5225, %v5225
        %v5866 = vmul.f32 %v5226, %v5226
        %v5867 = vmul.f32 %v5227, %v5227
        %v5868 = vmul.f32 %v5228, %v5228
        %v5869 = vmul.f32 %v5229, %v5229
        %v5870 = vsub.f32 %v5614, %v5742
        %v5871 = vsub.f32 %v5615, %v5743
        %v5872 = vsub.f32 %v5616, %v5744
        %v5873 = vsub.f32 %v5617, %v5745
        %v5874 = vsub.f32 %v5618, %v5746
        %v5875 = vsub.f32 %v5619, %v5747
        %v5876 = vsub.f32 %v5620, %v5748
        %v5877 = vsub.f32 %v5621, %v5749
        %v5878 = vsub.f32 %v5622, %v5750
        %v5879 = vsub.f32 %v5623, %v5751
        %v5880 = vsub.f32 %v5624, %v5752
        %v5881 = vsub.f32 %v5625, %v5753
        %v5882 = vsub.f32 %v5626, %v5754
        %v5883 = vsub.f32 %v5627, %v5755
        %v5884 = vsub.f32 %v5628, %v5756
        %v5885 = vsub.f32 %v5629, %v5757
        %v5886 = vsub.f32 %v5630, %v5758
        %v5887 = vsub.f32 %v5631, %v5759
        %v5888 = vsub.f32 %v5632, %v5760
        %v5889 = vsub.f32 %v5633, %v5761
        %v5890 = vsub.f32 %v5634, %v5762
        %v5891 = vsub.f32 %v5635, %v5763
        %v5892 = vsub.f32 %v5636, %v5764
        %v5893 = vsub.f32 %v5637, %v5765
        %v5894 = vsub.f32 %v5638, %v5766
        %v5895 = vsub.f32 %v5639, %v5767
        %v5896 = vsub.f32 %v5640, %v5768
        %v5897 = vsub.f32 %v5641, %v5769
        %v5898 = vsub.f32 %v5642, %v5770
        %v5899 = vsub.f32 %v5643, %v5771
        %v5900 = vsub.f32 %v5644, %v5772
        %v5901 = vsub.f32 %v5645, %v5773
        %v5902 = vsub.f32 %v5646, %v5774
        %v5903 = vsub.f32 %v5647, %v5775
        %v5904 = vsub.f32 %v5648, %v5776
        %v5905 = vsub.f32 %v5649, %v5777
        %v5906 = vsub.f32 %v5650, %v5778
        %v5907 = vsub.f32 %v5651, %v5779
        %v5908 = vsub.f32 %v5652, %v5780
        %v5909 = vsub.f32 %v5653, %v5781
        %v5910 = vsub.f32 %v5654, %v5782
        %v5911 = vsub.f32 %v5655, %v5783
        %v5912 = vsub.f32 %v5656, %v5784
        %v5913 = vsub.f32 %v5657, %v5785
        %v5914 = vsub.f32 %v5658, %v5786
        %v5915 = vsub.f32 %v5659, %v5787
        %v5916 = vsub.f32 %v5660, %v5788
        %v5917 = vsub.f32 %v5661, %v5789
        %v5918 = vsub.f32 %v5662, %v5790
        %v5919 = vsub.f32 %v5663, %v5791
        %v5920 = vsub.f32 %v5664, %v5792
        %v5921 = vsub.f32 %v5665, %v5793
        %v5922 = vsub.f32 %v5666, %v5794
        %v5923 = vsub.f32 %v5667, %v5795
        %v5924 = vsub.f32 %v5668, %v5796
        %v5925 = vsub.f32 %v5669, %v5797
        %v5926 = vsub.f32 %v5670, %v5798
        %v5927 = vsub.f32 %v5671, %v5799
        %v5928 = vsub.f32 %v5672, %v5800
        %v5929 = vsub.f32 %v5673, %v5801
        %v5930 = vsub.f32 %v5674, %v5802
        %v5931 = vsub.f32 %v5675, %v5803
        %v5932 = vsub.f32 %v5676, %v5804
        %v5933 = vsub.f32 %v5677, %v5805
        %v5934 = vsub.f32 %v5678, %v5806
        %v5935 = vsub.f32 %v5679, %v5807
        %v5936 = vsub.f32 %v5680, %v5808
        %v5937 = vsub.f32 %v5681, %v5809
        %v5938 = vsub.f32 %v5682, %v5810
        %v5939 = vsub.f32 %v5683, %v5811
        %v5940 = vsub.f32 %v5684, %v5812
        %v5941 = vsub.f32 %v5685, %v5813
        %v5942 = vsub.f32 %v5686, %v5814
        %v5943 = vsub.f32 %v5687, %v5815
        %v5944 = vsub.f32 %v5688, %v5816
        %v5945 = vsub.f32 %v5689, %v5817
        %v5946 = vsub.f32 %v5690, %v5818
        %v5947 = vsub.f32 %v5691, %v5819
        %v5948 = vsub.f32 %v5692, %v5820
        %v5949 = vsub.f32 %v5693, %v5821
        %v5950 = vsub.f32 %v5694, %v5822
        %v5951 = vsub.f32 %v5695, %v5823
        %v5952 = vsub.f32 %v5696, %v5824
        %v5953 = vsub.f32 %v5697, %v5825
        %v5954 = vsub.f32 %v5698, %v5826
        %v5955 = vsub.f32 %v5699, %v5827
        %v5956 = vsub.f32 %v5700, %v5828
        %v5957 = vsub.f32 %v5701, %v5829
        %v5958 = vsub.f32 %v5702, %v5830
        %v5959 = vsub.f32 %v5703, %v5831
        %v5960 = vsub.f32 %v5704, %v5832
        %v5961 = vsub.f32 %v5705, %v5833
        %v5962 = vsub.f32 %v5706, %v5834
        %v5963 = vsub.f32 %v5707, %v5835
        %v5964 = vsub.f32 %v5708, %v5836
        %v5965 = vsub.f32 %v5709, %v5837
        %v5966 = vsub.f32 %v5710, %v5838
        %v5967 = vsub.f32 %v5711, %v5839
        %v5968 = vsub.f32 %v5712, %v5840
        %v5969 = vsub.f32 %v5713, %v5841
        %v5970 = vsub.f32 %v5714, %v5842
        %v5971 = vsub.f32 %v5715, %v5843
        %v5972 = vsub.f32 %v5716, %v5844
        %v5973 = vsub.f32 %v5717, %v5845
        %v5974 = vsub.f32 %v5718, %v5846
        %v5975 = vsub.f32 %v5719, %v5847
        %v5976 = vsub.f32 %v5720, %v5848
        %v5977 = vsub.f32 %v5721, %v5849
        %v5978 = vsub.f32 %v5722, %v5850
        %v5979 = vsub.f32 %v5723, %v5851
        %v5980 = vsub.f32 %v5724, %v5852
        %v5981 = vsub.f32 %v5725, %v5853
        %v5982 = vsub.f32 %v5726, %v5854
        %v5983 = vsub.f32 %v5727, %v5855
        %v5984 = vsub.f32 %v5728, %v5856
        %v5985 = vsub.f32 %v5729, %v5857
        %v5986 = vsub.f32 %v5730, %v5858
        %v5987 = vsub.f32 %v5731, %v5859
        %v5988 = vsub.f32 %v5732, %v5860
        %v5989 = vsub.f32 %v5733, %v5861
        %v5990 = vsub.f32 %v5734, %v5862
        %v5991 = vsub.f32 %v5735, %v5863
        %v5992 = vsub.f32 %v5736, %v5864
        %v5993 = vsub.f32 %v5737, %v5865
        %v5994 = vsub.f32 %v5738, %v5866
        %v5995 = vsub.f32 %v5739, %v5867
        %v5996 = vsub.f32 %v5740, %v5868
        %v5997 = vsub.f32 %v5741, %v5869
        %v5998 = vmax.f32 %v5870, 0.0
        %v5999 = vmax.f32 %v5871, 0.0
        %v6000 = vmax.f32 %v5872, 0.0
        %v6001 = vmax.f32 %v5873, 0.0
        %v6002 = vmax.f32 %v5874, 0.0
        %v6003 = vmax.f32 %v5875, 0.0
        %v6004 = vmax.f32 %v5876, 0.0
        %v6005 = vmax.f32 %v5877, 0.0
        %v6006 = vmax.f32 %v5878, 0.0
        %v6007 = vmax.f32 %v5879, 0.0
        %v6008 = vmax.f32 %v5880, 0.0
        %v6009 = vmax.f32 %v5881, 0.0
        %v6010 = vmax.f32 %v5882, 0.0
        %v6011 = vmax.f32 %v5883, 0.0
        %v6012 = vmax.f32 %v5884, 0.0
        %v6013 = vmax.f32 %v5885, 0.0
        %v6014 = vmax.f32 %v5886, 0.0
        %v6015 = vmax.f32 %v5887, 0.0
        %v6016 = vmax.f32 %v5888, 0.0
        %v6017 = vmax.f32 %v5889, 0.0
        %v6018 = vmax.f32 %v5890, 0.0
        %v6019 = vmax.f32 %v5891, 0.0
        %v6020 = vmax.f32 %v5892, 0.0
        %v6021 = vmax.f32 %v5893, 0.0
        %v6022 = vmax.f32 %v5894, 0.0
        %v6023 = vmax.f32 %v5895, 0.0
        %v6024 = vmax.f32 %v5896, 0.0
        %v6025 = vmax.f32 %v5897, 0.0
        %v6026 = vmax.f32 %v5898, 0.0
        %v6027 = vmax.f32 %v5899, 0.0
        %v6028 = vmax.f32 %v5900, 0.0
        %v6029 = vmax.f32 %v5901, 0.0
        %v6030 = vmax.f32 %v5902, 0.0
        %v6031 = vmax.f32 %v5903, 0.0
        %v6032 = vmax.f32 %v5904, 0.0
        %v6033 = vmax.f32 %v5905, 0.0
        %v6034 = vmax.f32 %v5906, 0.0
        %v6035 = vmax.f32 %v5907, 0.0
        %v6036 = vmax.f32 %v5908, 0.0
        %v6037 = vmax.f32 %v5909, 0.0
        %v6038 = vmax.f32 %v5910, 0.0
        %v6039 = vmax.f32 %v5911, 0.0
        %v6040 = vmax.f32 %v5912, 0.0
        %v6041 = vmax.f32 %v5913, 0.0
        %v6042 = vmax.f32 %v5914, 0.0
        %v6043 = vmax.f32 %v5915, 0.0
        %v6044 = vmax.f32 %v5916, 0.0
        %v6045 = vmax.f32 %v5917, 0.0
        %v6046 = vmax.f32 %v5918, 0.0
        %v6047 = vmax.f32 %v5919, 0.0
        %v6048 = vmax.f32 %v5920, 0.0
        %v6049 = vmax.f32 %v5921, 0.0
        %v6050 = vmax.f32 %v5922, 0.0
        %v6051 = vmax.f32 %v5923, 0.0
        %v6052 = vmax.f32 %v5924, 0.0
        %v6053 = vmax.f32 %v5925, 0.0
        %v6054 = vmax.f32 %v5926, 0.0
        %v6055 = vmax.f32 %v5927, 0.0
        %v6056 = vmax.f32 %v5928, 0.0
        %v6057 = vmax.f32 %v5929, 0.0
        %v6058 = vmax.f32 %v5930, 0.0
        %v6059 = vmax.f32 %v5931, 0.0
        %v6060 = vmax.f32 %v5932, 0.0
        %v6061 = vmax.f32 %v5933, 0.0
        %v6062 = vmax.f32 %v5934, 0.0
        %v6063 = vmax.f32 %v5935, 0.0
        %v6064 = vmax.f32 %v5936, 0.0
        %v6065 = vmax.f32 %v5937, 0.0
        %v6066 = vmax.f32 %v5938, 0.0
        %v6067 = vmax.f32 %v5939, 0.0
        %v6068 = vmax.f32 %v5940, 0.0
        %v6069 = vmax.f32 %v5941, 0.0
        %v6070 = vmax.f32 %v5942, 0.0
        %v6071 = vmax.f32 %v5943, 0.0
        %v6072 = vmax.f32 %v5944, 0.0
        %v6073 = vmax.f32 %v5945, 0.0
        %v6074 = vmax.f32 %v5946, 0.0
        %v6075 = vmax.f32 %v5947, 0.0
        %v6076 = vmax.f32 %v5948, 0.0
        %v6077 = vmax.f32 %v5949, 0.0
        %v6078 = vmax.f32 %v5950, 0.0
        %v6079 = vmax.f32 %v5951, 0.0
        %v6080 = vmax.f32 %v5952, 0.0
        %v6081 = vmax.f32 %v5953, 0.0
        %v6082 = vmax.f32 %v5954, 0.0
        %v6083 = vmax.f32 %v5955, 0.0
        %v6084 = vmax.f32 %v5956, 0.0
        %v6085 = vmax.f32 %v5957, 0.0
        %v6086 = vmax.f32 %v5958, 0.0
        %v6087 = vmax.f32 %v5959, 0.0
        %v6088 = vmax.f32 %v5960, 0.0
        %v6089 = vmax.f32 %v5961, 0.0
        %v6090 = vmax.f32 %v5962, 0.0
        %v6091 = vmax.f32 %v5963, 0.0
        %v6092 = vmax.f32 %v5964, 0.0
        %v6093 = vmax.f32 %v5965, 0.0
        %v6094 = vmax.f32 %v5966, 0.0
        %v6095 = vmax.f32 %v5967, 0.0
        %v6096 = vmax.f32 %v5968, 0.0
        %v6097 = vmax.f32 %v5969, 0.0
        %v6098 = vmax.f32 %v5970, 0.0
        %v6099 = vmax.f32 %v5971, 0.0
        %v6100 = vmax.f32 %v5972, 0.0
        %v6101 = vmax.f32 %v5973, 0.0
        %v6102 = vmax.f32 %v5974, 0.0
        %v6103 = vmax.f32 %v5975, 0.0
        %v6104 = vmax.f32 %v5976, 0.0
        %v6105 = vmax.f32 %v5977, 0.0
        %v6106 = vmax.f32 %v5978, 0.0
        %v6107 = vmax.f32 %v5979, 0.0
        %v6108 = vmax.f32 %v5980, 0.0
        %v6109 = vmax.f32 %v5981, 0.0
        %v6110 = vmax.f32 %v5982, 0.0
        %v6111 = vmax.f32 %v5983, 0.0
        %v6112 = vmax.f32 %v5984, 0.0
        %v6113 = vmax.f32 %v5985, 0.0
        %v6114 = vmax.f32 %v5986, 0.0
        %v6115 = vmax.f32 %v5987, 0.0
        %v6116 = vmax.f32 %v5988, 0.0
        %v6117 = vmax.f32 %v5989, 0.0
        %v6118 = vmax.f32 %v5990, 0.0
        %v6119 = vmax.f32 %v5991, 0.0
        %v6120 = vmax.f32 %v5992, 0.0
        %v6121 = vmax.f32 %v5993, 0.0
        %v6122 = vmax.f32 %v5994, 0.0
        %v6123 = vmax.f32 %v5995, 0.0
        %v6124 = vmax.f32 %v5996, 0.0
        %v6125 = vmax.f32 %v5997, 0.0
        %v6126 = vsub.f32 %v4463, %v5102
        %v6127 = vsub.f32 %v4466, %v5103
        %v6128 = vsub.f32 %v4469, %v5104
        %v6129 = vsub.f32 %v4472, %v5105
        %v6130 = vsub.f32 %v4475, %v5106
        %v6131 = vsub.f32 %v4478, %v5107
        %v6132 = vsub.f32 %v4481, %v5108
        %v6133 = vsub.f32 %v4484, %v5109
        %v6134 = vsub.f32 %v4487, %v5110
        %v6135 = vsub.f32 %v4490, %v5111
        %v6136 = vsub.f32 %v4493, %v5112
        %v6137 = vsub.f32 %v4496, %v5113
        %v6138 = vsub.f32 %v4499, %v5114
        %v6139 = vsub.f32 %v4502, %v5115
        %v6140 = vsub.f32 %v4505, %v5116
        %v6141 = vsub.f32 %v4508, %v5117
        %v6142 = vsub.f32 %v4511, %v5118
        %v6143 = vsub.f32 %v4514, %v5119
        %v6144 = vsub.f32 %v4517, %v5120
        %v6145 = vsub.f32 %v4520, %v5121
        %v6146 = vsub.f32 %v4523, %v5122
        %v6147 = vsub.f32 %v4526, %v5123
        %v6148 = vsub.f32 %v4529, %v5124
        %v6149 = vsub.f32 %v4532, %v5125
        %v6150 = vsub.f32 %v4535, %v5126
        %v6151 = vsub.f32 %v4538, %v5127
        %v6152 = vsub.f32 %v4541, %v5128
        %v6153 = vsub.f32 %v4544, %v5129
        %v6154 = vsub.f32 %v4547, %v5130
        %v6155 = vsub.f32 %v4550, %v5131
        %v6156 = vsub.f32 %v4553, %v5132
        %v6157 = vsub.f32 %v4556, %v5133
        %v6158 = vsub.f32 %v4559, %v5134
        %v6159 = vsub.f32 %v4562, %v5135
        %v6160 = vsub.f32 %v4565, %v5136
        %v6161 = vsub.f32 %v4568, %v5137
        %v6162 = vsub.f32 %v4571, %v5138
        %v6163 = vsub.f32 %v4574, %v5139
        %v6164 = vsub.f32 %v4577, %v5140
        %v6165 = vsub.f32 %v4580, %v5141
        %v6166 = vsub.f32 %v4583, %v5142
        %v6167 = vsub.f32 %v4586, %v5143
        %v6168 = vsub.f32 %v4589, %v5144
        %v6169 = vsub.f32 %v4592, %v5145
        %v6170 = vsub.f32 %v4595, %v5146
        %v6171 = vsub.f32 %v4598, %v5147
        %v6172 = vsub.f32 %v4601, %v5148
        %v6173 = vsub.f32 %v4604, %v5149
        %v6174 = vsub.f32 %v4607, %v5150
        %v6175 = vsub.f32 %v4610, %v5151
        %v6176 = vsub.f32 %v4613, %v5152
        %v6177 = vsub.f32 %v4616, %v5153
        %v6178 = vsub.f32 %v4619, %v5154
        %v6179 = vsub.f32 %v4622, %v5155
        %v6180 = vsub.f32 %v4625, %v5156
        %v6181 = vsub.f32 %v4628, %v5157
        %v6182 = vsub.f32 %v4631, %v5158
        %v6183 = vsub.f32 %v4634, %v5159
        %v6184 = vsub.f32 %v4637, %v5160
        %v6185 = vsub.f32 %v4640, %v5161
        %v6186 = vsub.f32 %v4643, %v5162
        %v6187 = vsub.f32 %v4646, %v5163
        %v6188 = vsub.f32 %v4649, %v5164
        %v6189 = vsub.f32 %v4652, %v5165
        %v6190 = vsub.f32 %v4655, %v5166
        %v6191 = vsub.f32 %v4658, %v5167
        %v6192 = vsub.f32 %v4661, %v5168
        %v6193 = vsub.f32 %v4664, %v5169
        %v6194 = vsub.f32 %v4667, %v5170
        %v6195 = vsub.f32 %v4670, %v5171
        %v6196 = vsub.f32 %v4673, %v5172
        %v6197 = vsub.f32 %v4676, %v5173
        %v6198 = vsub.f32 %v4679, %v5174
        %v6199 = vsub.f32 %v4682, %v5175
        %v6200 = vsub.f32 %v4685, %v5176
        %v6201 = vsub.f32 %v4688, %v5177
        %v6202 = vsub.f32 %v4691, %v5178
        %v6203 = vsub.f32 %v4694, %v5179
        %v6204 = vsub.f32 %v4697, %v5180
        %v6205 = vsub.f32 %v4700, %v5181
        %v6206 = vsub.f32 %v4703, %v5182
        %v6207 = vsub.f32 %v4706, %v5183
        %v6208 = vsub.f32 %v4709, %v5184
        %v6209 = vsub.f32 %v4712, %v5185
        %v6210 = vsub.f32 %v4715, %v5186
        %v6211 = vsub.f32 %v4718, %v5187
        %v6212 = vsub.f32 %v4721, %v5188
        %v6213 = vsub.f32 %v4724, %v5189
        %v6214 = vsub.f32 %v4727, %v5190
        %v6215 = vsub.f32 %v4730, %v5191
        %v6216 = vsub.f32 %v4733, %v5192
        %v6217 = vsub.f32 %v4736, %v5193
        %v6218 = vsub.f32 %v4739, %v5194
        %v6219 = vsub.f32 %v4742, %v5195
        %v6220 = vsub.f32 %v4745, %v5196
        %v6221 = vsub.f32 %v4748, %v5197
        %v6222 = vsub.f32 %v4751, %v5198
        %v6223 = vsub.f32 %v4754, %v5199
        %v6224 = vsub.f32 %v4757, %v5200
        %v6225 = vsub.f32 %v4760, %v5201
        %v6226 = vsub.f32 %v4763, %v5202
        %v6227 = vsub.f32 %v4766, %v5203
        %v6228 = vsub.f32 %v4769, %v5204
        %v6229 = vsub.f32 %v4772, %v5205
        %v6230 = vsub.f32 %v4775, %v5206
        %v6231 = vsub.f32 %v4778, %v5207
        %v6232 = vsub.f32 %v4781, %v5208
        %v6233 = vsub.f32 %v4784, %v5209
        %v6234 = vsub.f32 %v4787, %v5210
        %v6235 = vsub.f32 %v4790, %v5211
        %v6236 = vsub.f32 %v4793, %v5212
        %v6237 = vsub.f32 %v4796, %v5213
        %v6238 = vsub.f32 %v4799, %v5214
        %v6239 = vsub.f32 %v4802, %v5215
        %v6240 = vsub.f32 %v4805, %v5216
        %v6241 = vsub.f32 %v4808, %v5217
        %v6242 = vsub.f32 %v4811, %v5218
        %v6243 = vsub.f32 %v4814, %v5219
        %v6244 = vsub.f32 %v4817, %v5220
        %v6245 = vsub.f32 %v4820, %v5221
        %v6246 = vsub.f32 %v4823, %v5222
        %v6247 = vsub.f32 %v4826, %v5223
        %v6248 = vsub.f32 %v4829, %v5224
        %v6249 = vsub.f32 %v4832, %v5225
        %v6250 = vsub.f32 %v4835, %v5226
        %v6251 = vsub.f32 %v4838, %v5227
        %v6252 = vsub.f32 %v4841, %v5228
        %v6253 = vsub.f32 %v4844, %v5229
        %v6254 = vadd.f32 %v5998, 1e-05
        %v6255 = vadd.f32 %v5999, 1e-05
        %v6256 = vadd.f32 %v6000, 1e-05
        %v6257 = vadd.f32 %v6001, 1e-05
        %v6258 = vadd.f32 %v6002, 1e-05
        %v6259 = vadd.f32 %v6003, 1e-05
        %v6260 = vadd.f32 %v6004, 1e-05
        %v6261 = vadd.f32 %v6005, 1e-05
        %v6262 = vadd.f32 %v6006, 1e-05
        %v6263 = vadd.f32 %v6007, 1e-05
        %v6264 = vadd.f32 %v6008, 1e-05
        %v6265 = vadd.f32 %v6009, 1e-05
        %v6266 = vadd.f32 %v6010, 1e-05
        %v6267 = vadd.f32 %v6011, 1e-05
        %v6268 = vadd.f32 %v6012, 1e-05
        %v6269 = vadd.f32 %v6013, 1e-05
        %v6270 = vadd.f32 %v6014, 1e-05
        %v6271 = vadd.f32 %v6015, 1e-05
        %v6272 = vadd.f32 %v6016, 1e-05
        %v6273 = vadd.f32 %v6017, 1e-05
        %v6274 = vadd.f32 %v6018, 1e-05
        %v6275 = vadd.f32 %v6019, 1e-05
        %v6276 = vadd.f32 %v6020, 1e-05
        %v6277 = vadd.f32 %v6021, 1e-05
        %v6278 = vadd.f32 %v6022, 1e-05
        %v6279 = vadd.f32 %v6023, 1e-05
        %v6280 = vadd.f32 %v6024, 1e-05
        %v6281 = vadd.f32 %v6025, 1e-05
        %v6282 = vadd.f32 %v6026, 1e-05
        %v6283 = vadd.f32 %v6027, 1e-05
        %v6284 = vadd.f32 %v6028, 1e-05
        %v6285 = vadd.f32 %v6029, 1e-05
        %v6286 = vadd.f32 %v6030, 1e-05
        %v6287 = vadd.f32 %v6031, 1e-05
        %v6288 = vadd.f32 %v6032, 1e-05
        %v6289 = vadd.f32 %v6033, 1e-05
        %v6290 = vadd.f32 %v6034, 1e-05
        %v6291 = vadd.f32 %v6035, 1e-05
        %v6292 = vadd.f32 %v6036, 1e-05
        %v6293 = vadd.f32 %v6037, 1e-05
        %v6294 = vadd.f32 %v6038, 1e-05
        %v6295 = vadd.f32 %v6039, 1e-05
        %v6296 = vadd.f32 %v6040, 1e-05
        %v6297 = vadd.f32 %v6041, 1e-05
        %v6298 = vadd.f32 %v6042, 1e-05
        %v6299 = vadd.f32 %v6043, 1e-05
        %v6300 = vadd.f32 %v6044, 1e-05
        %v6301 = vadd.f32 %v6045, 1e-05
        %v6302 = vadd.f32 %v6046, 1e-05
        %v6303 = vadd.f32 %v6047, 1e-05
        %v6304 = vadd.f32 %v6048, 1e-05
        %v6305 = vadd.f32 %v6049, 1e-05
        %v6306 = vadd.f32 %v6050, 1e-05
        %v6307 = vadd.f32 %v6051, 1e-05
        %v6308 = vadd.f32 %v6052, 1e-05
        %v6309 = vadd.f32 %v6053, 1e-05
        %v6310 = vadd.f32 %v6054, 1e-05
        %v6311 = vadd.f32 %v6055, 1e-05
        %v6312 = vadd.f32 %v6056, 1e-05
        %v6313 = vadd.f32 %v6057, 1e-05
        %v6314 = vadd.f32 %v6058, 1e-05
        %v6315 = vadd.f32 %v6059, 1e-05
        %v6316 = vadd.f32 %v6060, 1e-05
        %v6317 = vadd.f32 %v6061, 1e-05
        %v6318 = vadd.f32 %v6062, 1e-05
        %v6319 = vadd.f32 %v6063, 1e-05
        %v6320 = vadd.f32 %v6064, 1e-05
        %v6321 = vadd.f32 %v6065, 1e-05
        %v6322 = vadd.f32 %v6066, 1e-05
        %v6323 = vadd.f32 %v6067, 1e-05
        %v6324 = vadd.f32 %v6068, 1e-05
        %v6325 = vadd.f32 %v6069, 1e-05
        %v6326 = vadd.f32 %v6070, 1e-05
        %v6327 = vadd.f32 %v6071, 1e-05
        %v6328 = vadd.f32 %v6072, 1e-05
        %v6329 = vadd.f32 %v6073, 1e-05
        %v6330 = vadd.f32 %v6074, 1e-05
        %v6331 = vadd.f32 %v6075, 1e-05
        %v6332 = vadd.f32 %v6076, 1e-05
        %v6333 = vadd.f32 %v6077, 1e-05
        %v6334 = vadd.f32 %v6078, 1e-05
        %v6335 = vadd.f32 %v6079, 1e-05
        %v6336 = vadd.f32 %v6080, 1e-05
        %v6337 = vadd.f32 %v6081, 1e-05
        %v6338 = vadd.f32 %v6082, 1e-05
        %v6339 = vadd.f32 %v6083, 1e-05
        %v6340 = vadd.f32 %v6084, 1e-05
        %v6341 = vadd.f32 %v6085, 1e-05
        %v6342 = vadd.f32 %v6086, 1e-05
        %v6343 = vadd.f32 %v6087, 1e-05
        %v6344 = vadd.f32 %v6088, 1e-05
        %v6345 = vadd.f32 %v6089, 1e-05
        %v6346 = vadd.f32 %v6090, 1e-05
        %v6347 = vadd.f32 %v6091, 1e-05
        %v6348 = vadd.f32 %v6092, 1e-05
        %v6349 = vadd.f32 %v6093, 1e-05
        %v6350 = vadd.f32 %v6094, 1e-05
        %v6351 = vadd.f32 %v6095, 1e-05
        %v6352 = vadd.f32 %v6096, 1e-05
        %v6353 = vadd.f32 %v6097, 1e-05
        %v6354 = vadd.f32 %v6098, 1e-05
        %v6355 = vadd.f32 %v6099, 1e-05
        %v6356 = vadd.f32 %v6100, 1e-05
        %v6357 = vadd.f32 %v6101, 1e-05
        %v6358 = vadd.f32 %v6102, 1e-05
        %v6359 = vadd.f32 %v6103, 1e-05
        %v6360 = vadd.f32 %v6104, 1e-05
        %v6361 = vadd.f32 %v6105, 1e-05
        %v6362 = vadd.f32 %v6106, 1e-05
        %v6363 = vadd.f32 %v6107, 1e-05
        %v6364 = vadd.f32 %v6108, 1e-05
        %v6365 = vadd.f32 %v6109, 1e-05
        %v6366 = vadd.f32 %v6110, 1e-05
        %v6367 = vadd.f32 %v6111, 1e-05
        %v6368 = vadd.f32 %v6112, 1e-05
        %v6369 = vadd.f32 %v6113, 1e-05
        %v6370 = vadd.f32 %v6114, 1e-05
        %v6371 = vadd.f32 %v6115, 1e-05
        %v6372 = vadd.f32 %v6116, 1e-05
        %v6373 = vadd.f32 %v6117, 1e-05
        %v6374 = vadd.f32 %v6118, 1e-05
        %v6375 = vadd.f32 %v6119, 1e-05
        %v6376 = vadd.f32 %v6120, 1e-05
        %v6377 = vadd.f32 %v6121, 1e-05
        %v6378 = vadd.f32 %v6122, 1e-05
        %v6379 = vadd.f32 %v6123, 1e-05
        %v6380 = vadd.f32 %v6124, 1e-05
        %v6381 = vadd.f32 %v6125, 1e-05
        %v6382 = vrsqrt.pop %v6254
        %v6383 = vmul.f32 %v6382, %v6254
        %v6384 = vmul.f32 %v6383, %v6382
        %v6385 = vmul.f32 0.5, %v6384
        %v6386 = vsub.f32 1.5, %v6385
        %v6387 = vmul.f32 %v6382, %v6386
        %vm6388 = vweird.f32 %v6254
        %vm6389 = vweird.f32 %v6382
        %vm6390 = vmor %vm6388, %vm6389
        %v6391 = vsel %vm6390, %v6382, %v6387
        %v6392 = vrsqrt.pop %v6255
        %v6393 = vmul.f32 %v6392, %v6255
        %v6394 = vmul.f32 %v6393, %v6392
        %v6395 = vmul.f32 0.5, %v6394
        %v6396 = vsub.f32 1.5, %v6395
        %v6397 = vmul.f32 %v6392, %v6396
        %vm6398 = vweird.f32 %v6255
        %vm6399 = vweird.f32 %v6392
        %vm6400 = vmor %vm6398, %vm6399
        %v6401 = vsel %vm6400, %v6392, %v6397
        %v6402 = vrsqrt.pop %v6256
        %v6403 = vmul.f32 %v6402, %v6256
        %v6404 = vmul.f32 %v6403, %v6402
        %v6405 = vmul.f32 0.5, %v6404
        %v6406 = vsub.f32 1.5, %v6405
        %v6407 = vmul.f32 %v6402, %v6406
        %vm6408 = vweird.f32 %v6256
        %vm6409 = vweird.f32 %v6402
        %vm6410 = vmor %vm6408, %vm6409
        %v6411 = vsel %vm6410, %v6402, %v6407
        %v6412 = vrsqrt.pop %v6257
        %v6413 = vmul.f32 %v6412, %v6257
        %v6414 = vmul.f32 %v6413, %v6412
        %v6415 = vmul.f32 0.5, %v6414
        %v6416 = vsub.f32 1.5, %v6415
        %v6417 = vmul.f32 %v6412, %v6416
        %vm6418 = vweird.f32 %v6257
        %vm6419 = vweird.f32 %v6412
        %vm6420 = vmor %vm6418, %vm6419
        %v6421 = vsel %vm6420, %v6412, %v6417
        %v6422 = vrsqrt.pop %v6258
        %v6423 = vmul.f32 %v6422, %v6258
        %v6424 = vmul.f32 %v6423, %v6422
        %v6425 = vmul.f32 0.5, %v6424
        %v6426 = vsub.f32 1.5, %v6425
        %v6427 = vmul.f32 %v6422, %v6426
        %vm6428 = vweird.f32 %v6258
        %vm6429 = vweird.f32 %v6422
        %vm6430 = vmor %vm6428, %vm6429
        %v6431 = vsel %vm6430, %v6422, %v6427
        %v6432 = vrsqrt.pop %v6259
        %v6433 = vmul.f32 %v6432, %v6259
        %v6434 = vmul.f32 %v6433, %v6432
        %v6435 = vmul.f32 0.5, %v6434
        %v6436 = vsub.f32 1.5, %v6435
        %v6437 = vmul.f32 %v6432, %v6436
        %vm6438 = vweird.f32 %v6259
        %vm6439 = vweird.f32 %v6432
        %vm6440 = vmor %vm6438, %vm6439
        %v6441 = vsel %vm6440, %v6432, %v6437
        %v6442 = vrsqrt.pop %v6260
        %v6443 = vmul.f32 %v6442, %v6260
        %v6444 = vmul.f32 %v6443, %v6442
        %v6445 = vmul.f32 0.5, %v6444
        %v6446 = vsub.f32 1.5, %v6445
        %v6447 = vmul.f32 %v6442, %v6446
        %vm6448 = vweird.f32 %v6260
        %vm6449 = vweird.f32 %v6442
        %vm6450 = vmor %vm6448, %vm6449
        %v6451 = vsel %vm6450, %v6442, %v6447
        %v6452 = vrsqrt.pop %v6261
        %v6453 = vmul.f32 %v6452, %v6261
        %v6454 = vmul.f32 %v6453, %v6452
        %v6455 = vmul.f32 0.5, %v6454
        %v6456 = vsub.f32 1.5, %v6455
        %v6457 = vmul.f32 %v6452, %v6456
        %vm6458 = vweird.f32 %v6261
        %vm6459 = vweird.f32 %v6452
        %vm6460 = vmor %vm6458, %vm6459
        %v6461 = vsel %vm6460, %v6452, %v6457
        %v6462 = vrsqrt.pop %v6262
        %v6463 = vmul.f32 %v6462, %v6262
        %v6464 = vmul.f32 %v6463, %v6462
        %v6465 = vmul.f32 0.5, %v6464
        %v6466 = vsub.f32 1.5, %v6465
        %v6467 = vmul.f32 %v6462, %v6466
        %vm6468 = vweird.f32 %v6262
        %vm6469 = vweird.f32 %v6462
        %vm6470 = vmor %vm6468, %vm6469
        %v6471 = vsel %vm6470, %v6462, %v6467
        %v6472 = vrsqrt.pop %v6263
        %v6473 = vmul.f32 %v6472, %v6263
        %v6474 = vmul.f32 %v6473, %v6472
        %v6475 = vmul.f32 0.5, %v6474
        %v6476 = vsub.f32 1.5, %v6475
        %v6477 = vmul.f32 %v6472, %v6476
        %vm6478 = vweird.f32 %v6263
        %vm6479 = vweird.f32 %v6472
        %vm6480 = vmor %vm6478, %vm6479
        %v6481 = vsel %vm6480, %v6472, %v6477
        %v6482 = vrsqrt.pop %v6264
        %v6483 = vmul.f32 %v6482, %v6264
        %v6484 = vmul.f32 %v6483, %v6482
        %v6485 = vmul.f32 0.5, %v6484
        %v6486 = vsub.f32 1.5, %v6485
        %v6487 = vmul.f32 %v6482, %v6486
        %vm6488 = vweird.f32 %v6264
        %vm6489 = vweird.f32 %v6482
        %vm6490 = vmor %vm6488, %vm6489
        %v6491 = vsel %vm6490, %v6482, %v6487
        %v6492 = vrsqrt.pop %v6265
        %v6493 = vmul.f32 %v6492, %v6265
        %v6494 = vmul.f32 %v6493, %v6492
        %v6495 = vmul.f32 0.5, %v6494
        %v6496 = vsub.f32 1.5, %v6495
        %v6497 = vmul.f32 %v6492, %v6496
        %vm6498 = vweird.f32 %v6265
        %vm6499 = vweird.f32 %v6492
        %vm6500 = vmor %vm6498, %vm6499
        %v6501 = vsel %vm6500, %v6492, %v6497
        %v6502 = vrsqrt.pop %v6266
        %v6503 = vmul.f32 %v6502, %v6266
        %v6504 = vmul.f32 %v6503, %v6502
        %v6505 = vmul.f32 0.5, %v6504
        %v6506 = vsub.f32 1.5, %v6505
        %v6507 = vmul.f32 %v6502, %v6506
        %vm6508 = vweird.f32 %v6266
        %vm6509 = vweird.f32 %v6502
        %vm6510 = vmor %vm6508, %vm6509
        %v6511 = vsel %vm6510, %v6502, %v6507
        %v6512 = vrsqrt.pop %v6267
        %v6513 = vmul.f32 %v6512, %v6267
        %v6514 = vmul.f32 %v6513, %v6512
        %v6515 = vmul.f32 0.5, %v6514
        %v6516 = vsub.f32 1.5, %v6515
        %v6517 = vmul.f32 %v6512, %v6516
        %vm6518 = vweird.f32 %v6267
        %vm6519 = vweird.f32 %v6512
        %vm6520 = vmor %vm6518, %vm6519
        %v6521 = vsel %vm6520, %v6512, %v6517
        %v6522 = vrsqrt.pop %v6268
        %v6523 = vmul.f32 %v6522, %v6268
        %v6524 = vmul.f32 %v6523, %v6522
        %v6525 = vmul.f32 0.5, %v6524
        %v6526 = vsub.f32 1.5, %v6525
        %v6527 = vmul.f32 %v6522, %v6526
        %vm6528 = vweird.f32 %v6268
        %vm6529 = vweird.f32 %v6522
        %vm6530 = vmor %vm6528, %vm6529
        %v6531 = vsel %vm6530, %v6522, %v6527
        %v6532 = vrsqrt.pop %v6269
        %v6533 = vmul.f32 %v6532, %v6269
        %v6534 = vmul.f32 %v6533, %v6532
        %v6535 = vmul.f32 0.5, %v6534
        %v6536 = vsub.f32 1.5, %v6535
        %v6537 = vmul.f32 %v6532, %v6536
        %vm6538 = vweird.f32 %v6269
        %vm6539 = vweird.f32 %v6532
        %vm6540 = vmor %vm6538, %vm6539
        %v6541 = vsel %vm6540, %v6532, %v6537
        %v6542 = vrsqrt.pop %v6270
        %v6543 = vmul.f32 %v6542, %v6270
        %v6544 = vmul.f32 %v6543, %v6542
        %v6545 = vmul.f32 0.5, %v6544
        %v6546 = vsub.f32 1.5, %v6545
        %v6547 = vmul.f32 %v6542, %v6546
        %vm6548 = vweird.f32 %v6270
        %vm6549 = vweird.f32 %v6542
        %vm6550 = vmor %vm6548, %vm6549
        %v6551 = vsel %vm6550, %v6542, %v6547
        %v6552 = vrsqrt.pop %v6271
        %v6553 = vmul.f32 %v6552, %v6271
        %v6554 = vmul.f32 %v6553, %v6552
        %v6555 = vmul.f32 0.5, %v6554
        %v6556 = vsub.f32 1.5, %v6555
        %v6557 = vmul.f32 %v6552, %v6556
        %vm6558 = vweird.f32 %v6271
        %vm6559 = vweird.f32 %v6552
        %vm6560 = vmor %vm6558, %vm6559
        %v6561 = vsel %vm6560, %v6552, %v6557
        %v6562 = vrsqrt.pop %v6272
        %v6563 = vmul.f32 %v6562, %v6272
        %v6564 = vmul.f32 %v6563, %v6562
        %v6565 = vmul.f32 0.5, %v6564
        %v6566 = vsub.f32 1.5, %v6565
        %v6567 = vmul.f32 %v6562, %v6566
        %vm6568 = vweird.f32 %v6272
        %vm6569 = vweird.f32 %v6562
        %vm6570 = vmor %vm6568, %vm6569
        %v6571 = vsel %vm6570, %v6562, %v6567
        %v6572 = vrsqrt.pop %v6273
        %v6573 = vmul.f32 %v6572, %v6273
        %v6574 = vmul.f32 %v6573, %v6572
        %v6575 = vmul.f32 0.5, %v6574
        %v6576 = vsub.f32 1.5, %v6575
        %v6577 = vmul.f32 %v6572, %v6576
        %vm6578 = vweird.f32 %v6273
        %vm6579 = vweird.f32 %v6572
        %vm6580 = vmor %vm6578, %vm6579
        %v6581 = vsel %vm6580, %v6572, %v6577
        %v6582 = vrsqrt.pop %v6274
        %v6583 = vmul.f32 %v6582, %v6274
        %v6584 = vmul.f32 %v6583, %v6582
        %v6585 = vmul.f32 0.5, %v6584
        %v6586 = vsub.f32 1.5, %v6585
        %v6587 = vmul.f32 %v6582, %v6586
        %vm6588 = vweird.f32 %v6274
        %vm6589 = vweird.f32 %v6582
        %vm6590 = vmor %vm6588, %vm6589
        %v6591 = vsel %vm6590, %v6582, %v6587
        %v6592 = vrsqrt.pop %v6275
        %v6593 = vmul.f32 %v6592, %v6275
        %v6594 = vmul.f32 %v6593, %v6592
        %v6595 = vmul.f32 0.5, %v6594
        %v6596 = vsub.f32 1.5, %v6595
        %v6597 = vmul.f32 %v6592, %v6596
        %vm6598 = vweird.f32 %v6275
        %vm6599 = vweird.f32 %v6592
        %vm6600 = vmor %vm6598, %vm6599
        %v6601 = vsel %vm6600, %v6592, %v6597
        %v6602 = vrsqrt.pop %v6276
        %v6603 = vmul.f32 %v6602, %v6276
        %v6604 = vmul.f32 %v6603, %v6602
        %v6605 = vmul.f32 0.5, %v6604
        %v6606 = vsub.f32 1.5, %v6605
        %v6607 = vmul.f32 %v6602, %v6606
        %vm6608 = vweird.f32 %v6276
        %vm6609 = vweird.f32 %v6602
        %vm6610 = vmor %vm6608, %vm6609
        %v6611 = vsel %vm6610, %v6602, %v6607
        %v6612 = vrsqrt.pop %v6277
        %v6613 = vmul.f32 %v6612, %v6277
        %v6614 = vmul.f32 %v6613, %v6612
        %v6615 = vmul.f32 0.5, %v6614
        %v6616 = vsub.f32 1.5, %v6615
        %v6617 = vmul.f32 %v6612, %v6616
        %vm6618 = vweird.f32 %v6277
        %vm6619 = vweird.f32 %v6612
        %vm6620 = vmor %vm6618, %vm6619
        %v6621 = vsel %vm6620, %v6612, %v6617
        %v6622 = vrsqrt.pop %v6278
        %v6623 = vmul.f32 %v6622, %v6278
        %v6624 = vmul.f32 %v6623, %v6622
        %v6625 = vmul.f32 0.5, %v6624
        %v6626 = vsub.f32 1.5, %v6625
        %v6627 = vmul.f32 %v6622, %v6626
        %vm6628 = vweird.f32 %v6278
        %vm6629 = vweird.f32 %v6622
        %vm6630 = vmor %vm6628, %vm6629
        %v6631 = vsel %vm6630, %v6622, %v6627
        %v6632 = vrsqrt.pop %v6279
        %v6633 = vmul.f32 %v6632, %v6279
        %v6634 = vmul.f32 %v6633, %v6632
        %v6635 = vmul.f32 0.5, %v6634
        %v6636 = vsub.f32 1.5, %v6635
        %v6637 = vmul.f32 %v6632, %v6636
        %vm6638 = vweird.f32 %v6279
        %vm6639 = vweird.f32 %v6632
        %vm6640 = vmor %vm6638, %vm6639
        %v6641 = vsel %vm6640, %v6632, %v6637
        %v6642 = vrsqrt.pop %v6280
        %v6643 = vmul.f32 %v6642, %v6280
        %v6644 = vmul.f32 %v6643, %v6642
        %v6645 = vmul.f32 0.5, %v6644
        %v6646 = vsub.f32 1.5, %v6645
        %v6647 = vmul.f32 %v6642, %v6646
        %vm6648 = vweird.f32 %v6280
        %vm6649 = vweird.f32 %v6642
        %vm6650 = vmor %vm6648, %vm6649
        %v6651 = vsel %vm6650, %v6642, %v6647
        %v6652 = vrsqrt.pop %v6281
        %v6653 = vmul.f32 %v6652, %v6281
        %v6654 = vmul.f32 %v6653, %v6652
        %v6655 = vmul.f32 0.5, %v6654
        %v6656 = vsub.f32 1.5, %v6655
        %v6657 = vmul.f32 %v6652, %v6656
        %vm6658 = vweird.f32 %v6281
        %vm6659 = vweird.f32 %v6652
        %vm6660 = vmor %vm6658, %vm6659
        %v6661 = vsel %vm6660, %v6652, %v6657
        %v6662 = vrsqrt.pop %v6282
        %v6663 = vmul.f32 %v6662, %v6282
        %v6664 = vmul.f32 %v6663, %v6662
        %v6665 = vmul.f32 0.5, %v6664
        %v6666 = vsub.f32 1.5, %v6665
        %v6667 = vmul.f32 %v6662, %v6666
        %vm6668 = vweird.f32 %v6282
        %vm6669 = vweird.f32 %v6662
        %vm6670 = vmor %vm6668, %vm6669
        %v6671 = vsel %vm6670, %v6662, %v6667
        %v6672 = vrsqrt.pop %v6283
        %v6673 = vmul.f32 %v6672, %v6283
        %v6674 = vmul.f32 %v6673, %v6672
        %v6675 = vmul.f32 0.5, %v6674
        %v6676 = vsub.f32 1.5, %v6675
        %v6677 = vmul.f32 %v6672, %v6676
        %vm6678 = vweird.f32 %v6283
        %vm6679 = vweird.f32 %v6672
        %vm6680 = vmor %vm6678, %vm6679
        %v6681 = vsel %vm6680, %v6672, %v6677
        %v6682 = vrsqrt.pop %v6284
        %v6683 = vmul.f32 %v6682, %v6284
        %v6684 = vmul.f32 %v6683, %v6682
        %v6685 = vmul.f32 0.5, %v6684
        %v6686 = vsub.f32 1.5, %v6685
        %v6687 = vmul.f32 %v6682, %v6686
        %vm6688 = vweird.f32 %v6284
        %vm6689 = vweird.f32 %v6682
        %vm6690 = vmor %vm6688, %vm6689
        %v6691 = vsel %vm6690, %v6682, %v6687
        %v6692 = vrsqrt.pop %v6285
        %v6693 = vmul.f32 %v6692, %v6285
        %v6694 = vmul.f32 %v6693, %v6692
        %v6695 = vmul.f32 0.5, %v6694
        %v6696 = vsub.f32 1.5, %v6695
        %v6697 = vmul.f32 %v6692, %v6696
        %vm6698 = vweird.f32 %v6285
        %vm6699 = vweird.f32 %v6692
        %vm6700 = vmor %vm6698, %vm6699
        %v6701 = vsel %vm6700, %v6692, %v6697
        %v6702 = vrsqrt.pop %v6286
        %v6703 = vmul.f32 %v6702, %v6286
        %v6704 = vmul.f32 %v6703, %v6702
        %v6705 = vmul.f32 0.5, %v6704
        %v6706 = vsub.f32 1.5, %v6705
        %v6707 = vmul.f32 %v6702, %v6706
        %vm6708 = vweird.f32 %v6286
        %vm6709 = vweird.f32 %v6702
        %vm6710 = vmor %vm6708, %vm6709
        %v6711 = vsel %vm6710, %v6702, %v6707
        %v6712 = vrsqrt.pop %v6287
        %v6713 = vmul.f32 %v6712, %v6287
        %v6714 = vmul.f32 %v6713, %v6712
        %v6715 = vmul.f32 0.5, %v6714
        %v6716 = vsub.f32 1.5, %v6715
        %v6717 = vmul.f32 %v6712, %v6716
        %vm6718 = vweird.f32 %v6287
        %vm6719 = vweird.f32 %v6712
        %vm6720 = vmor %vm6718, %vm6719
        %v6721 = vsel %vm6720, %v6712, %v6717
        %v6722 = vrsqrt.pop %v6288
        %v6723 = vmul.f32 %v6722, %v6288
        %v6724 = vmul.f32 %v6723, %v6722
        %v6725 = vmul.f32 0.5, %v6724
        %v6726 = vsub.f32 1.5, %v6725
        %v6727 = vmul.f32 %v6722, %v6726
        %vm6728 = vweird.f32 %v6288
        %vm6729 = vweird.f32 %v6722
        %vm6730 = vmor %vm6728, %vm6729
        %v6731 = vsel %vm6730, %v6722, %v6727
        %v6732 = vrsqrt.pop %v6289
        %v6733 = vmul.f32 %v6732, %v6289
        %v6734 = vmul.f32 %v6733, %v6732
        %v6735 = vmul.f32 0.5, %v6734
        %v6736 = vsub.f32 1.5, %v6735
        %v6737 = vmul.f32 %v6732, %v6736
        %vm6738 = vweird.f32 %v6289
        %vm6739 = vweird.f32 %v6732
        %vm6740 = vmor %vm6738, %vm6739
        %v6741 = vsel %vm6740, %v6732, %v6737
        %v6742 = vrsqrt.pop %v6290
        %v6743 = vmul.f32 %v6742, %v6290
        %v6744 = vmul.f32 %v6743, %v6742
        %v6745 = vmul.f32 0.5, %v6744
        %v6746 = vsub.f32 1.5, %v6745
        %v6747 = vmul.f32 %v6742, %v6746
        %vm6748 = vweird.f32 %v6290
        %vm6749 = vweird.f32 %v6742
        %vm6750 = vmor %vm6748, %vm6749
        %v6751 = vsel %vm6750, %v6742, %v6747
        %v6752 = vrsqrt.pop %v6291
        %v6753 = vmul.f32 %v6752, %v6291
        %v6754 = vmul.f32 %v6753, %v6752
        %v6755 = vmul.f32 0.5, %v6754
        %v6756 = vsub.f32 1.5, %v6755
        %v6757 = vmul.f32 %v6752, %v6756
        %vm6758 = vweird.f32 %v6291
        %vm6759 = vweird.f32 %v6752
        %vm6760 = vmor %vm6758, %vm6759
        %v6761 = vsel %vm6760, %v6752, %v6757
        %v6762 = vrsqrt.pop %v6292
        %v6763 = vmul.f32 %v6762, %v6292
        %v6764 = vmul.f32 %v6763, %v6762
        %v6765 = vmul.f32 0.5, %v6764
        %v6766 = vsub.f32 1.5, %v6765
        %v6767 = vmul.f32 %v6762, %v6766
        %vm6768 = vweird.f32 %v6292
        %vm6769 = vweird.f32 %v6762
        %vm6770 = vmor %vm6768, %vm6769
        %v6771 = vsel %vm6770, %v6762, %v6767
        %v6772 = vrsqrt.pop %v6293
        %v6773 = vmul.f32 %v6772, %v6293
        %v6774 = vmul.f32 %v6773, %v6772
        %v6775 = vmul.f32 0.5, %v6774
        %v6776 = vsub.f32 1.5, %v6775
        %v6777 = vmul.f32 %v6772, %v6776
        %vm6778 = vweird.f32 %v6293
        %vm6779 = vweird.f32 %v6772
        %vm6780 = vmor %vm6778, %vm6779
        %v6781 = vsel %vm6780, %v6772, %v6777
        %v6782 = vrsqrt.pop %v6294
        %v6783 = vmul.f32 %v6782, %v6294
        %v6784 = vmul.f32 %v6783, %v6782
        %v6785 = vmul.f32 0.5, %v6784
        %v6786 = vsub.f32 1.5, %v6785
        %v6787 = vmul.f32 %v6782, %v6786
        %vm6788 = vweird.f32 %v6294
        %vm6789 = vweird.f32 %v6782
        %vm6790 = vmor %vm6788, %vm6789
        %v6791 = vsel %vm6790, %v6782, %v6787
        %v6792 = vrsqrt.pop %v6295
        %v6793 = vmul.f32 %v6792, %v6295
        %v6794 = vmul.f32 %v6793, %v6792
        %v6795 = vmul.f32 0.5, %v6794
        %v6796 = vsub.f32 1.5, %v6795
        %v6797 = vmul.f32 %v6792, %v6796
        %vm6798 = vweird.f32 %v6295
        %vm6799 = vweird.f32 %v6792
        %vm6800 = vmor %vm6798, %vm6799
        %v6801 = vsel %vm6800, %v6792, %v6797
        %v6802 = vrsqrt.pop %v6296
        %v6803 = vmul.f32 %v6802, %v6296
        %v6804 = vmul.f32 %v6803, %v6802
        %v6805 = vmul.f32 0.5, %v6804
        %v6806 = vsub.f32 1.5, %v6805
        %v6807 = vmul.f32 %v6802, %v6806
        %vm6808 = vweird.f32 %v6296
        %vm6809 = vweird.f32 %v6802
        %vm6810 = vmor %vm6808, %vm6809
        %v6811 = vsel %vm6810, %v6802, %v6807
        %v6812 = vrsqrt.pop %v6297
        %v6813 = vmul.f32 %v6812, %v6297
        %v6814 = vmul.f32 %v6813, %v6812
        %v6815 = vmul.f32 0.5, %v6814
        %v6816 = vsub.f32 1.5, %v6815
        %v6817 = vmul.f32 %v6812, %v6816
        %vm6818 = vweird.f32 %v6297
        %vm6819 = vweird.f32 %v6812
        %vm6820 = vmor %vm6818, %vm6819
        %v6821 = vsel %vm6820, %v6812, %v6817
        %v6822 = vrsqrt.pop %v6298
        %v6823 = vmul.f32 %v6822, %v6298
        %v6824 = vmul.f32 %v6823, %v6822
        %v6825 = vmul.f32 0.5, %v6824
        %v6826 = vsub.f32 1.5, %v6825
        %v6827 = vmul.f32 %v6822, %v6826
        %vm6828 = vweird.f32 %v6298
        %vm6829 = vweird.f32 %v6822
        %vm6830 = vmor %vm6828, %vm6829
        %v6831 = vsel %vm6830, %v6822, %v6827
        %v6832 = vrsqrt.pop %v6299
        %v6833 = vmul.f32 %v6832, %v6299
        %v6834 = vmul.f32 %v6833, %v6832
        %v6835 = vmul.f32 0.5, %v6834
        %v6836 = vsub.f32 1.5, %v6835
        %v6837 = vmul.f32 %v6832, %v6836
        %vm6838 = vweird.f32 %v6299
        %vm6839 = vweird.f32 %v6832
        %vm6840 = vmor %vm6838, %vm6839
        %v6841 = vsel %vm6840, %v6832, %v6837
        %v6842 = vrsqrt.pop %v6300
        %v6843 = vmul.f32 %v6842, %v6300
        %v6844 = vmul.f32 %v6843, %v6842
        %v6845 = vmul.f32 0.5, %v6844
        %v6846 = vsub.f32 1.5, %v6845
        %v6847 = vmul.f32 %v6842, %v6846
        %vm6848 = vweird.f32 %v6300
        %vm6849 = vweird.f32 %v6842
        %vm6850 = vmor %vm6848, %vm6849
        %v6851 = vsel %vm6850, %v6842, %v6847
        %v6852 = vrsqrt.pop %v6301
        %v6853 = vmul.f32 %v6852, %v6301
        %v6854 = vmul.f32 %v6853, %v6852
        %v6855 = vmul.f32 0.5, %v6854
        %v6856 = vsub.f32 1.5, %v6855
        %v6857 = vmul.f32 %v6852, %v6856
        %vm6858 = vweird.f32 %v6301
        %vm6859 = vweird.f32 %v6852
        %vm6860 = vmor %vm6858, %vm6859
        %v6861 = vsel %vm6860, %v6852, %v6857
        %v6862 = vrsqrt.pop %v6302
        %v6863 = vmul.f32 %v6862, %v6302
        %v6864 = vmul.f32 %v6863, %v6862
        %v6865 = vmul.f32 0.5, %v6864
        %v6866 = vsub.f32 1.5, %v6865
        %v6867 = vmul.f32 %v6862, %v6866
        %vm6868 = vweird.f32 %v6302
        %vm6869 = vweird.f32 %v6862
        %vm6870 = vmor %vm6868, %vm6869
        %v6871 = vsel %vm6870, %v6862, %v6867
        %v6872 = vrsqrt.pop %v6303
        %v6873 = vmul.f32 %v6872, %v6303
        %v6874 = vmul.f32 %v6873, %v6872
        %v6875 = vmul.f32 0.5, %v6874
        %v6876 = vsub.f32 1.5, %v6875
        %v6877 = vmul.f32 %v6872, %v6876
        %vm6878 = vweird.f32 %v6303
        %vm6879 = vweird.f32 %v6872
        %vm6880 = vmor %vm6878, %vm6879
        %v6881 = vsel %vm6880, %v6872, %v6877
        %v6882 = vrsqrt.pop %v6304
        %v6883 = vmul.f32 %v6882, %v6304
        %v6884 = vmul.f32 %v6883, %v6882
        %v6885 = vmul.f32 0.5, %v6884
        %v6886 = vsub.f32 1.5, %v6885
        %v6887 = vmul.f32 %v6882, %v6886
        %vm6888 = vweird.f32 %v6304
        %vm6889 = vweird.f32 %v6882
        %vm6890 = vmor %vm6888, %vm6889
        %v6891 = vsel %vm6890, %v6882, %v6887
        %v6892 = vrsqrt.pop %v6305
        %v6893 = vmul.f32 %v6892, %v6305
        %v6894 = vmul.f32 %v6893, %v6892
        %v6895 = vmul.f32 0.5, %v6894
        %v6896 = vsub.f32 1.5, %v6895
        %v6897 = vmul.f32 %v6892, %v6896
        %vm6898 = vweird.f32 %v6305
        %vm6899 = vweird.f32 %v6892
        %vm6900 = vmor %vm6898, %vm6899
        %v6901 = vsel %vm6900, %v6892, %v6897
        %v6902 = vrsqrt.pop %v6306
        %v6903 = vmul.f32 %v6902, %v6306
        %v6904 = vmul.f32 %v6903, %v6902
        %v6905 = vmul.f32 0.5, %v6904
        %v6906 = vsub.f32 1.5, %v6905
        %v6907 = vmul.f32 %v6902, %v6906
        %vm6908 = vweird.f32 %v6306
        %vm6909 = vweird.f32 %v6902
        %vm6910 = vmor %vm6908, %vm6909
        %v6911 = vsel %vm6910, %v6902, %v6907
        %v6912 = vrsqrt.pop %v6307
        %v6913 = vmul.f32 %v6912, %v6307
        %v6914 = vmul.f32 %v6913, %v6912
        %v6915 = vmul.f32 0.5, %v6914
        %v6916 = vsub.f32 1.5, %v6915
        %v6917 = vmul.f32 %v6912, %v6916
        %vm6918 = vweird.f32 %v6307
        %vm6919 = vweird.f32 %v6912
        %vm6920 = vmor %vm6918, %vm6919
        %v6921 = vsel %vm6920, %v6912, %v6917
        %v6922 = vrsqrt.pop %v6308
        %v6923 = vmul.f32 %v6922, %v6308
        %v6924 = vmul.f32 %v6923, %v6922
        %v6925 = vmul.f32 0.5, %v6924
        %v6926 = vsub.f32 1.5, %v6925
        %v6927 = vmul.f32 %v6922, %v6926
        %vm6928 = vweird.f32 %v6308
        %vm6929 = vweird.f32 %v6922
        %vm6930 = vmor %vm6928, %vm6929
        %v6931 = vsel %vm6930, %v6922, %v6927
        %v6932 = vrsqrt.pop %v6309
        %v6933 = vmul.f32 %v6932, %v6309
        %v6934 = vmul.f32 %v6933, %v6932
        %v6935 = vmul.f32 0.5, %v6934
        %v6936 = vsub.f32 1.5, %v6935
        %v6937 = vmul.f32 %v6932, %v6936
        %vm6938 = vweird.f32 %v6309
        %vm6939 = vweird.f32 %v6932
        %vm6940 = vmor %vm6938, %vm6939
        %v6941 = vsel %vm6940, %v6932, %v6937
        %v6942 = vrsqrt.pop %v6310
        %v6943 = vmul.f32 %v6942, %v6310
        %v6944 = vmul.f32 %v6943, %v6942
        %v6945 = vmul.f32 0.5, %v6944
        %v6946 = vsub.f32 1.5, %v6945
        %v6947 = vmul.f32 %v6942, %v6946
        %vm6948 = vweird.f32 %v6310
        %vm6949 = vweird.f32 %v6942
        %vm6950 = vmor %vm6948, %vm6949
        %v6951 = vsel %vm6950, %v6942, %v6947
        %v6952 = vrsqrt.pop %v6311
        %v6953 = vmul.f32 %v6952, %v6311
        %v6954 = vmul.f32 %v6953, %v6952
        %v6955 = vmul.f32 0.5, %v6954
        %v6956 = vsub.f32 1.5, %v6955
        %v6957 = vmul.f32 %v6952, %v6956
        %vm6958 = vweird.f32 %v6311
        %vm6959 = vweird.f32 %v6952
        %vm6960 = vmor %vm6958, %vm6959
        %v6961 = vsel %vm6960, %v6952, %v6957
        %v6962 = vrsqrt.pop %v6312
        %v6963 = vmul.f32 %v6962, %v6312
        %v6964 = vmul.f32 %v6963, %v6962
        %v6965 = vmul.f32 0.5, %v6964
        %v6966 = vsub.f32 1.5, %v6965
        %v6967 = vmul.f32 %v6962, %v6966
        %vm6968 = vweird.f32 %v6312
        %vm6969 = vweird.f32 %v6962
        %vm6970 = vmor %vm6968, %vm6969
        %v6971 = vsel %vm6970, %v6962, %v6967
        %v6972 = vrsqrt.pop %v6313
        %v6973 = vmul.f32 %v6972, %v6313
        %v6974 = vmul.f32 %v6973, %v6972
        %v6975 = vmul.f32 0.5, %v6974
        %v6976 = vsub.f32 1.5, %v6975
        %v6977 = vmul.f32 %v6972, %v6976
        %vm6978 = vweird.f32 %v6313
        %vm6979 = vweird.f32 %v6972
        %vm6980 = vmor %vm6978, %vm6979
        %v6981 = vsel %vm6980, %v6972, %v6977
        %v6982 = vrsqrt.pop %v6314
        %v6983 = vmul.f32 %v6982, %v6314
        %v6984 = vmul.f32 %v6983, %v6982
        %v6985 = vmul.f32 0.5, %v6984
        %v6986 = vsub.f32 1.5, %v6985
        %v6987 = vmul.f32 %v6982, %v6986
        %vm6988 = vweird.f32 %v6314
        %vm6989 = vweird.f32 %v6982
        %vm6990 = vmor %vm6988, %vm6989
        %v6991 = vsel %vm6990, %v6982, %v6987
        %v6992 = vrsqrt.pop %v6315
        %v6993 = vmul.f32 %v6992, %v6315
        %v6994 = vmul.f32 %v6993, %v6992
        %v6995 = vmul.f32 0.5, %v6994
        %v6996 = vsub.f32 1.5, %v6995
        %v6997 = vmul.f32 %v6992, %v6996
        %vm6998 = vweird.f32 %v6315
        %vm6999 = vweird.f32 %v6992
        %vm7000 = vmor %vm6998, %vm6999
        %v7001 = vsel %vm7000, %v6992, %v6997
        %v7002 = vrsqrt.pop %v6316
        %v7003 = vmul.f32 %v7002, %v6316
        %v7004 = vmul.f32 %v7003, %v7002
        %v7005 = vmul.f32 0.5, %v7004
        %v7006 = vsub.f32 1.5, %v7005
        %v7007 = vmul.f32 %v7002, %v7006
        %vm7008 = vweird.f32 %v6316
        %vm7009 = vweird.f32 %v7002
        %vm7010 = vmor %vm7008, %vm7009
        %v7011 = vsel %vm7010, %v7002, %v7007
        %v7012 = vrsqrt.pop %v6317
        %v7013 = vmul.f32 %v7012, %v6317
        %v7014 = vmul.f32 %v7013, %v7012
        %v7015 = vmul.f32 0.5, %v7014
        %v7016 = vsub.f32 1.5, %v7015
        %v7017 = vmul.f32 %v7012, %v7016
        %vm7018 = vweird.f32 %v6317
        %vm7019 = vweird.f32 %v7012
        %vm7020 = vmor %vm7018, %vm7019
        %v7021 = vsel %vm7020, %v7012, %v7017
        %v7022 = vrsqrt.pop %v6318
        %v7023 = vmul.f32 %v7022, %v6318
        %v7024 = vmul.f32 %v7023, %v7022
        %v7025 = vmul.f32 0.5, %v7024
        %v7026 = vsub.f32 1.5, %v7025
        %v7027 = vmul.f32 %v7022, %v7026
        %vm7028 = vweird.f32 %v6318
        %vm7029 = vweird.f32 %v7022
        %vm7030 = vmor %vm7028, %vm7029
        %v7031 = vsel %vm7030, %v7022, %v7027
        %v7032 = vrsqrt.pop %v6319
        %v7033 = vmul.f32 %v7032, %v6319
        %v7034 = vmul.f32 %v7033, %v7032
        %v7035 = vmul.f32 0.5, %v7034
        %v7036 = vsub.f32 1.5, %v7035
        %v7037 = vmul.f32 %v7032, %v7036
        %vm7038 = vweird.f32 %v6319
        %vm7039 = vweird.f32 %v7032
        %vm7040 = vmor %vm7038, %vm7039
        %v7041 = vsel %vm7040, %v7032, %v7037
        %v7042 = vrsqrt.pop %v6320
        %v7043 = vmul.f32 %v7042, %v6320
        %v7044 = vmul.f32 %v7043, %v7042
        %v7045 = vmul.f32 0.5, %v7044
        %v7046 = vsub.f32 1.5, %v7045
        %v7047 = vmul.f32 %v7042, %v7046
        %vm7048 = vweird.f32 %v6320
        %vm7049 = vweird.f32 %v7042
        %vm7050 = vmor %vm7048, %vm7049
        %v7051 = vsel %vm7050, %v7042, %v7047
        %v7052 = vrsqrt.pop %v6321
        %v7053 = vmul.f32 %v7052, %v6321
        %v7054 = vmul.f32 %v7053, %v7052
        %v7055 = vmul.f32 0.5, %v7054
        %v7056 = vsub.f32 1.5, %v7055
        %v7057 = vmul.f32 %v7052, %v7056
        %vm7058 = vweird.f32 %v6321
        %vm7059 = vweird.f32 %v7052
        %vm7060 = vmor %vm7058, %vm7059
        %v7061 = vsel %vm7060, %v7052, %v7057
        %v7062 = vrsqrt.pop %v6322
        %v7063 = vmul.f32 %v7062, %v6322
        %v7064 = vmul.f32 %v7063, %v7062
        %v7065 = vmul.f32 0.5, %v7064
        %v7066 = vsub.f32 1.5, %v7065
        %v7067 = vmul.f32 %v7062, %v7066
        %vm7068 = vweird.f32 %v6322
        %vm7069 = vweird.f32 %v7062
        %vm7070 = vmor %vm7068, %vm7069
        %v7071 = vsel %vm7070, %v7062, %v7067
        %v7072 = vrsqrt.pop %v6323
        %v7073 = vmul.f32 %v7072, %v6323
        %v7074 = vmul.f32 %v7073, %v7072
        %v7075 = vmul.f32 0.5, %v7074
        %v7076 = vsub.f32 1.5, %v7075
        %v7077 = vmul.f32 %v7072, %v7076
        %vm7078 = vweird.f32 %v6323
        %vm7079 = vweird.f32 %v7072
        %vm7080 = vmor %vm7078, %vm7079
        %v7081 = vsel %vm7080, %v7072, %v7077
        %v7082 = vrsqrt.pop %v6324
        %v7083 = vmul.f32 %v7082, %v6324
        %v7084 = vmul.f32 %v7083, %v7082
        %v7085 = vmul.f32 0.5, %v7084
        %v7086 = vsub.f32 1.5, %v7085
        %v7087 = vmul.f32 %v7082, %v7086
        %vm7088 = vweird.f32 %v6324
        %vm7089 = vweird.f32 %v7082
        %vm7090 = vmor %vm7088, %vm7089
        %v7091 = vsel %vm7090, %v7082, %v7087
        %v7092 = vrsqrt.pop %v6325
        %v7093 = vmul.f32 %v7092, %v6325
        %v7094 = vmul.f32 %v7093, %v7092
        %v7095 = vmul.f32 0.5, %v7094
        %v7096 = vsub.f32 1.5, %v7095
        %v7097 = vmul.f32 %v7092, %v7096
        %vm7098 = vweird.f32 %v6325
        %vm7099 = vweird.f32 %v7092
        %vm7100 = vmor %vm7098, %vm7099
        %v7101 = vsel %vm7100, %v7092, %v7097
        %v7102 = vrsqrt.pop %v6326
        %v7103 = vmul.f32 %v7102, %v6326
        %v7104 = vmul.f32 %v7103, %v7102
        %v7105 = vmul.f32 0.5, %v7104
        %v7106 = vsub.f32 1.5, %v7105
        %v7107 = vmul.f32 %v7102, %v7106
        %vm7108 = vweird.f32 %v6326
        %vm7109 = vweird.f32 %v7102
        %vm7110 = vmor %vm7108, %vm7109
        %v7111 = vsel %vm7110, %v7102, %v7107
        %v7112 = vrsqrt.pop %v6327
        %v7113 = vmul.f32 %v7112, %v6327
        %v7114 = vmul.f32 %v7113, %v7112
        %v7115 = vmul.f32 0.5, %v7114
        %v7116 = vsub.f32 1.5, %v7115
        %v7117 = vmul.f32 %v7112, %v7116
        %vm7118 = vweird.f32 %v6327
        %vm7119 = vweird.f32 %v7112
        %vm7120 = vmor %vm7118, %vm7119
        %v7121 = vsel %vm7120, %v7112, %v7117
        %v7122 = vrsqrt.pop %v6328
        %v7123 = vmul.f32 %v7122, %v6328
        %v7124 = vmul.f32 %v7123, %v7122
        %v7125 = vmul.f32 0.5, %v7124
        %v7126 = vsub.f32 1.5, %v7125
        %v7127 = vmul.f32 %v7122, %v7126
        %vm7128 = vweird.f32 %v6328
        %vm7129 = vweird.f32 %v7122
        %vm7130 = vmor %vm7128, %vm7129
        %v7131 = vsel %vm7130, %v7122, %v7127
        %v7132 = vrsqrt.pop %v6329
        %v7133 = vmul.f32 %v7132, %v6329
        %v7134 = vmul.f32 %v7133, %v7132
        %v7135 = vmul.f32 0.5, %v7134
        %v7136 = vsub.f32 1.5, %v7135
        %v7137 = vmul.f32 %v7132, %v7136
        %vm7138 = vweird.f32 %v6329
        %vm7139 = vweird.f32 %v7132
        %vm7140 = vmor %vm7138, %vm7139
        %v7141 = vsel %vm7140, %v7132, %v7137
        %v7142 = vrsqrt.pop %v6330
        %v7143 = vmul.f32 %v7142, %v6330
        %v7144 = vmul.f32 %v7143, %v7142
        %v7145 = vmul.f32 0.5, %v7144
        %v7146 = vsub.f32 1.5, %v7145
        %v7147 = vmul.f32 %v7142, %v7146
        %vm7148 = vweird.f32 %v6330
        %vm7149 = vweird.f32 %v7142
        %vm7150 = vmor %vm7148, %vm7149
        %v7151 = vsel %vm7150, %v7142, %v7147
        %v7152 = vrsqrt.pop %v6331
        %v7153 = vmul.f32 %v7152, %v6331
        %v7154 = vmul.f32 %v7153, %v7152
        %v7155 = vmul.f32 0.5, %v7154
        %v7156 = vsub.f32 1.5, %v7155
        %v7157 = vmul.f32 %v7152, %v7156
        %vm7158 = vweird.f32 %v6331
        %vm7159 = vweird.f32 %v7152
        %vm7160 = vmor %vm7158, %vm7159
        %v7161 = vsel %vm7160, %v7152, %v7157
        %v7162 = vrsqrt.pop %v6332
        %v7163 = vmul.f32 %v7162, %v6332
        %v7164 = vmul.f32 %v7163, %v7162
        %v7165 = vmul.f32 0.5, %v7164
        %v7166 = vsub.f32 1.5, %v7165
        %v7167 = vmul.f32 %v7162, %v7166
        %vm7168 = vweird.f32 %v6332
        %vm7169 = vweird.f32 %v7162
        %vm7170 = vmor %vm7168, %vm7169
        %v7171 = vsel %vm7170, %v7162, %v7167
        %v7172 = vrsqrt.pop %v6333
        %v7173 = vmul.f32 %v7172, %v6333
        %v7174 = vmul.f32 %v7173, %v7172
        %v7175 = vmul.f32 0.5, %v7174
        %v7176 = vsub.f32 1.5, %v7175
        %v7177 = vmul.f32 %v7172, %v7176
        %vm7178 = vweird.f32 %v6333
        %vm7179 = vweird.f32 %v7172
        %vm7180 = vmor %vm7178, %vm7179
        %v7181 = vsel %vm7180, %v7172, %v7177
        %v7182 = vrsqrt.pop %v6334
        %v7183 = vmul.f32 %v7182, %v6334
        %v7184 = vmul.f32 %v7183, %v7182
        %v7185 = vmul.f32 0.5, %v7184
        %v7186 = vsub.f32 1.5, %v7185
        %v7187 = vmul.f32 %v7182, %v7186
        %vm7188 = vweird.f32 %v6334
        %vm7189 = vweird.f32 %v7182
        %vm7190 = vmor %vm7188, %vm7189
        %v7191 = vsel %vm7190, %v7182, %v7187
        %v7192 = vrsqrt.pop %v6335
        %v7193 = vmul.f32 %v7192, %v6335
        %v7194 = vmul.f32 %v7193, %v7192
        %v7195 = vmul.f32 0.5, %v7194
        %v7196 = vsub.f32 1.5, %v7195
        %v7197 = vmul.f32 %v7192, %v7196
        %vm7198 = vweird.f32 %v6335
        %vm7199 = vweird.f32 %v7192
        %vm7200 = vmor %vm7198, %vm7199
        %v7201 = vsel %vm7200, %v7192, %v7197
        %v7202 = vrsqrt.pop %v6336
        %v7203 = vmul.f32 %v7202, %v6336
        %v7204 = vmul.f32 %v7203, %v7202
        %v7205 = vmul.f32 0.5, %v7204
        %v7206 = vsub.f32 1.5, %v7205
        %v7207 = vmul.f32 %v7202, %v7206
        %vm7208 = vweird.f32 %v6336
        %vm7209 = vweird.f32 %v7202
        %vm7210 = vmor %vm7208, %vm7209
        %v7211 = vsel %vm7210, %v7202, %v7207
        %v7212 = vrsqrt.pop %v6337
        %v7213 = vmul.f32 %v7212, %v6337
        %v7214 = vmul.f32 %v7213, %v7212
        %v7215 = vmul.f32 0.5, %v7214
        %v7216 = vsub.f32 1.5, %v7215
        %v7217 = vmul.f32 %v7212, %v7216
        %vm7218 = vweird.f32 %v6337
        %vm7219 = vweird.f32 %v7212
        %vm7220 = vmor %vm7218, %vm7219
        %v7221 = vsel %vm7220, %v7212, %v7217
        %v7222 = vrsqrt.pop %v6338
        %v7223 = vmul.f32 %v7222, %v6338
        %v7224 = vmul.f32 %v7223, %v7222
        %v7225 = vmul.f32 0.5, %v7224
        %v7226 = vsub.f32 1.5, %v7225
        %v7227 = vmul.f32 %v7222, %v7226
        %vm7228 = vweird.f32 %v6338
        %vm7229 = vweird.f32 %v7222
        %vm7230 = vmor %vm7228, %vm7229
        %v7231 = vsel %vm7230, %v7222, %v7227
        %v7232 = vrsqrt.pop %v6339
        %v7233 = vmul.f32 %v7232, %v6339
        %v7234 = vmul.f32 %v7233, %v7232
        %v7235 = vmul.f32 0.5, %v7234
        %v7236 = vsub.f32 1.5, %v7235
        %v7237 = vmul.f32 %v7232, %v7236
        %vm7238 = vweird.f32 %v6339
        %vm7239 = vweird.f32 %v7232
        %vm7240 = vmor %vm7238, %vm7239
        %v7241 = vsel %vm7240, %v7232, %v7237
        %v7242 = vrsqrt.pop %v6340
        %v7243 = vmul.f32 %v7242, %v6340
        %v7244 = vmul.f32 %v7243, %v7242
        %v7245 = vmul.f32 0.5, %v7244
        %v7246 = vsub.f32 1.5, %v7245
        %v7247 = vmul.f32 %v7242, %v7246
        %vm7248 = vweird.f32 %v6340
        %vm7249 = vweird.f32 %v7242
        %vm7250 = vmor %vm7248, %vm7249
        %v7251 = vsel %vm7250, %v7242, %v7247
        %v7252 = vrsqrt.pop %v6341
        %v7253 = vmul.f32 %v7252, %v6341
        %v7254 = vmul.f32 %v7253, %v7252
        %v7255 = vmul.f32 0.5, %v7254
        %v7256 = vsub.f32 1.5, %v7255
        %v7257 = vmul.f32 %v7252, %v7256
        %vm7258 = vweird.f32 %v6341
        %vm7259 = vweird.f32 %v7252
        %vm7260 = vmor %vm7258, %vm7259
        %v7261 = vsel %vm7260, %v7252, %v7257
        %v7262 = vrsqrt.pop %v6342
        %v7263 = vmul.f32 %v7262, %v6342
        %v7264 = vmul.f32 %v7263, %v7262
        %v7265 = vmul.f32 0.5, %v7264
        %v7266 = vsub.f32 1.5, %v7265
        %v7267 = vmul.f32 %v7262, %v7266
        %vm7268 = vweird.f32 %v6342
        %vm7269 = vweird.f32 %v7262
        %vm7270 = vmor %vm7268, %vm7269
        %v7271 = vsel %vm7270, %v7262, %v7267
        %v7272 = vrsqrt.pop %v6343
        %v7273 = vmul.f32 %v7272, %v6343
        %v7274 = vmul.f32 %v7273, %v7272
        %v7275 = vmul.f32 0.5, %v7274
        %v7276 = vsub.f32 1.5, %v7275
        %v7277 = vmul.f32 %v7272, %v7276
        %vm7278 = vweird.f32 %v6343
        %vm7279 = vweird.f32 %v7272
        %vm7280 = vmor %vm7278, %vm7279
        %v7281 = vsel %vm7280, %v7272, %v7277
        %v7282 = vrsqrt.pop %v6344
        %v7283 = vmul.f32 %v7282, %v6344
        %v7284 = vmul.f32 %v7283, %v7282
        %v7285 = vmul.f32 0.5, %v7284
        %v7286 = vsub.f32 1.5, %v7285
        %v7287 = vmul.f32 %v7282, %v7286
        %vm7288 = vweird.f32 %v6344
        %vm7289 = vweird.f32 %v7282
        %vm7290 = vmor %vm7288, %vm7289
        %v7291 = vsel %vm7290, %v7282, %v7287
        %v7292 = vrsqrt.pop %v6345
        %v7293 = vmul.f32 %v7292, %v6345
        %v7294 = vmul.f32 %v7293, %v7292
        %v7295 = vmul.f32 0.5, %v7294
        %v7296 = vsub.f32 1.5, %v7295
        %v7297 = vmul.f32 %v7292, %v7296
        %vm7298 = vweird.f32 %v6345
        %vm7299 = vweird.f32 %v7292
        %vm7300 = vmor %vm7298, %vm7299
        %v7301 = vsel %vm7300, %v7292, %v7297
        %v7302 = vrsqrt.pop %v6346
        %v7303 = vmul.f32 %v7302, %v6346
        %v7304 = vmul.f32 %v7303, %v7302
        %v7305 = vmul.f32 0.5, %v7304
        %v7306 = vsub.f32 1.5, %v7305
        %v7307 = vmul.f32 %v7302, %v7306
        %vm7308 = vweird.f32 %v6346
        %vm7309 = vweird.f32 %v7302
        %vm7310 = vmor %vm7308, %vm7309
        %v7311 = vsel %vm7310, %v7302, %v7307
        %v7312 = vrsqrt.pop %v6347
        %v7313 = vmul.f32 %v7312, %v6347
        %v7314 = vmul.f32 %v7313, %v7312
        %v7315 = vmul.f32 0.5, %v7314
        %v7316 = vsub.f32 1.5, %v7315
        %v7317 = vmul.f32 %v7312, %v7316
        %vm7318 = vweird.f32 %v6347
        %vm7319 = vweird.f32 %v7312
        %vm7320 = vmor %vm7318, %vm7319
        %v7321 = vsel %vm7320, %v7312, %v7317
        %v7322 = vrsqrt.pop %v6348
        %v7323 = vmul.f32 %v7322, %v6348
        %v7324 = vmul.f32 %v7323, %v7322
        %v7325 = vmul.f32 0.5, %v7324
        %v7326 = vsub.f32 1.5, %v7325
        %v7327 = vmul.f32 %v7322, %v7326
        %vm7328 = vweird.f32 %v6348
        %vm7329 = vweird.f32 %v7322
        %vm7330 = vmor %vm7328, %vm7329
        %v7331 = vsel %vm7330, %v7322, %v7327
        %v7332 = vrsqrt.pop %v6349
        %v7333 = vmul.f32 %v7332, %v6349
        %v7334 = vmul.f32 %v7333, %v7332
        %v7335 = vmul.f32 0.5, %v7334
        %v7336 = vsub.f32 1.5, %v7335
        %v7337 = vmul.f32 %v7332, %v7336
        %vm7338 = vweird.f32 %v6349
        %vm7339 = vweird.f32 %v7332
        %vm7340 = vmor %vm7338, %vm7339
        %v7341 = vsel %vm7340, %v7332, %v7337
        %v7342 = vrsqrt.pop %v6350
        %v7343 = vmul.f32 %v7342, %v6350
        %v7344 = vmul.f32 %v7343, %v7342
        %v7345 = vmul.f32 0.5, %v7344
        %v7346 = vsub.f32 1.5, %v7345
        %v7347 = vmul.f32 %v7342, %v7346
        %vm7348 = vweird.f32 %v6350
        %vm7349 = vweird.f32 %v7342
        %vm7350 = vmor %vm7348, %vm7349
        %v7351 = vsel %vm7350, %v7342, %v7347
        %v7352 = vrsqrt.pop %v6351
        %v7353 = vmul.f32 %v7352, %v6351
        %v7354 = vmul.f32 %v7353, %v7352
        %v7355 = vmul.f32 0.5, %v7354
        %v7356 = vsub.f32 1.5, %v7355
        %v7357 = vmul.f32 %v7352, %v7356
        %vm7358 = vweird.f32 %v6351
        %vm7359 = vweird.f32 %v7352
        %vm7360 = vmor %vm7358, %vm7359
        %v7361 = vsel %vm7360, %v7352, %v7357
        %v7362 = vrsqrt.pop %v6352
        %v7363 = vmul.f32 %v7362, %v6352
        %v7364 = vmul.f32 %v7363, %v7362
        %v7365 = vmul.f32 0.5, %v7364
        %v7366 = vsub.f32 1.5, %v7365
        %v7367 = vmul.f32 %v7362, %v7366
        %vm7368 = vweird.f32 %v6352
        %vm7369 = vweird.f32 %v7362
        %vm7370 = vmor %vm7368, %vm7369
        %v7371 = vsel %vm7370, %v7362, %v7367
        %v7372 = vrsqrt.pop %v6353
        %v7373 = vmul.f32 %v7372, %v6353
        %v7374 = vmul.f32 %v7373, %v7372
        %v7375 = vmul.f32 0.5, %v7374
        %v7376 = vsub.f32 1.5, %v7375
        %v7377 = vmul.f32 %v7372, %v7376
        %vm7378 = vweird.f32 %v6353
        %vm7379 = vweird.f32 %v7372
        %vm7380 = vmor %vm7378, %vm7379
        %v7381 = vsel %vm7380, %v7372, %v7377
        %v7382 = vrsqrt.pop %v6354
        %v7383 = vmul.f32 %v7382, %v6354
        %v7384 = vmul.f32 %v7383, %v7382
        %v7385 = vmul.f32 0.5, %v7384
        %v7386 = vsub.f32 1.5, %v7385
        %v7387 = vmul.f32 %v7382, %v7386
        %vm7388 = vweird.f32 %v6354
        %vm7389 = vweird.f32 %v7382
        %vm7390 = vmor %vm7388, %vm7389
        %v7391 = vsel %vm7390, %v7382, %v7387
        %v7392 = vrsqrt.pop %v6355
        %v7393 = vmul.f32 %v7392, %v6355
        %v7394 = vmul.f32 %v7393, %v7392
        %v7395 = vmul.f32 0.5, %v7394
        %v7396 = vsub.f32 1.5, %v7395
        %v7397 = vmul.f32 %v7392, %v7396
        %vm7398 = vweird.f32 %v6355
        %vm7399 = vweird.f32 %v7392
        %vm7400 = vmor %vm7398, %vm7399
        %v7401 = vsel %vm7400, %v7392, %v7397
        %v7402 = vrsqrt.pop %v6356
        %v7403 = vmul.f32 %v7402, %v6356
        %v7404 = vmul.f32 %v7403, %v7402
        %v7405 = vmul.f32 0.5, %v7404
        %v7406 = vsub.f32 1.5, %v7405
        %v7407 = vmul.f32 %v7402, %v7406
        %vm7408 = vweird.f32 %v6356
        %vm7409 = vweird.f32 %v7402
        %vm7410 = vmor %vm7408, %vm7409
        %v7411 = vsel %vm7410, %v7402, %v7407
        %v7412 = vrsqrt.pop %v6357
        %v7413 = vmul.f32 %v7412, %v6357
        %v7414 = vmul.f32 %v7413, %v7412
        %v7415 = vmul.f32 0.5, %v7414
        %v7416 = vsub.f32 1.5, %v7415
        %v7417 = vmul.f32 %v7412, %v7416
        %vm7418 = vweird.f32 %v6357
        %vm7419 = vweird.f32 %v7412
        %vm7420 = vmor %vm7418, %vm7419
        %v7421 = vsel %vm7420, %v7412, %v7417
        %v7422 = vrsqrt.pop %v6358
        %v7423 = vmul.f32 %v7422, %v6358
        %v7424 = vmul.f32 %v7423, %v7422
        %v7425 = vmul.f32 0.5, %v7424
        %v7426 = vsub.f32 1.5, %v7425
        %v7427 = vmul.f32 %v7422, %v7426
        %vm7428 = vweird.f32 %v6358
        %vm7429 = vweird.f32 %v7422
        %vm7430 = vmor %vm7428, %vm7429
        %v7431 = vsel %vm7430, %v7422, %v7427
        %v7432 = vrsqrt.pop %v6359
        %v7433 = vmul.f32 %v7432, %v6359
        %v7434 = vmul.f32 %v7433, %v7432
        %v7435 = vmul.f32 0.5, %v7434
        %v7436 = vsub.f32 1.5, %v7435
        %v7437 = vmul.f32 %v7432, %v7436
        %vm7438 = vweird.f32 %v6359
        %vm7439 = vweird.f32 %v7432
        %vm7440 = vmor %vm7438, %vm7439
        %v7441 = vsel %vm7440, %v7432, %v7437
        %v7442 = vrsqrt.pop %v6360
        %v7443 = vmul.f32 %v7442, %v6360
        %v7444 = vmul.f32 %v7443, %v7442
        %v7445 = vmul.f32 0.5, %v7444
        %v7446 = vsub.f32 1.5, %v7445
        %v7447 = vmul.f32 %v7442, %v7446
        %vm7448 = vweird.f32 %v6360
        %vm7449 = vweird.f32 %v7442
        %vm7450 = vmor %vm7448, %vm7449
        %v7451 = vsel %vm7450, %v7442, %v7447
        %v7452 = vrsqrt.pop %v6361
        %v7453 = vmul.f32 %v7452, %v6361
        %v7454 = vmul.f32 %v7453, %v7452
        %v7455 = vmul.f32 0.5, %v7454
        %v7456 = vsub.f32 1.5, %v7455
        %v7457 = vmul.f32 %v7452, %v7456
        %vm7458 = vweird.f32 %v6361
        %vm7459 = vweird.f32 %v7452
        %vm7460 = vmor %vm7458, %vm7459
        %v7461 = vsel %vm7460, %v7452, %v7457
        %v7462 = vrsqrt.pop %v6362
        %v7463 = vmul.f32 %v7462, %v6362
        %v7464 = vmul.f32 %v7463, %v7462
        %v7465 = vmul.f32 0.5, %v7464
        %v7466 = vsub.f32 1.5, %v7465
        %v7467 = vmul.f32 %v7462, %v7466
        %vm7468 = vweird.f32 %v6362
        %vm7469 = vweird.f32 %v7462
        %vm7470 = vmor %vm7468, %vm7469
        %v7471 = vsel %vm7470, %v7462, %v7467
        %v7472 = vrsqrt.pop %v6363
        %v7473 = vmul.f32 %v7472, %v6363
        %v7474 = vmul.f32 %v7473, %v7472
        %v7475 = vmul.f32 0.5, %v7474
        %v7476 = vsub.f32 1.5, %v7475
        %v7477 = vmul.f32 %v7472, %v7476
        %vm7478 = vweird.f32 %v6363
        %vm7479 = vweird.f32 %v7472
        %vm7480 = vmor %vm7478, %vm7479
        %v7481 = vsel %vm7480, %v7472, %v7477
        %v7482 = vrsqrt.pop %v6364
        %v7483 = vmul.f32 %v7482, %v6364
        %v7484 = vmul.f32 %v7483, %v7482
        %v7485 = vmul.f32 0.5, %v7484
        %v7486 = vsub.f32 1.5, %v7485
        %v7487 = vmul.f32 %v7482, %v7486
        %vm7488 = vweird.f32 %v6364
        %vm7489 = vweird.f32 %v7482
        %vm7490 = vmor %vm7488, %vm7489
        %v7491 = vsel %vm7490, %v7482, %v7487
        %v7492 = vrsqrt.pop %v6365
        %v7493 = vmul.f32 %v7492, %v6365
        %v7494 = vmul.f32 %v7493, %v7492
        %v7495 = vmul.f32 0.5, %v7494
        %v7496 = vsub.f32 1.5, %v7495
        %v7497 = vmul.f32 %v7492, %v7496
        %vm7498 = vweird.f32 %v6365
        %vm7499 = vweird.f32 %v7492
        %vm7500 = vmor %vm7498, %vm7499
        %v7501 = vsel %vm7500, %v7492, %v7497
        %v7502 = vrsqrt.pop %v6366
        %v7503 = vmul.f32 %v7502, %v6366
        %v7504 = vmul.f32 %v7503, %v7502
        %v7505 = vmul.f32 0.5, %v7504
        %v7506 = vsub.f32 1.5, %v7505
        %v7507 = vmul.f32 %v7502, %v7506
        %vm7508 = vweird.f32 %v6366
        %vm7509 = vweird.f32 %v7502
        %vm7510 = vmor %vm7508, %vm7509
        %v7511 = vsel %vm7510, %v7502, %v7507
        %v7512 = vrsqrt.pop %v6367
        %v7513 = vmul.f32 %v7512, %v6367
        %v7514 = vmul.f32 %v7513, %v7512
        %v7515 = vmul.f32 0.5, %v7514
        %v7516 = vsub.f32 1.5, %v7515
        %v7517 = vmul.f32 %v7512, %v7516
        %vm7518 = vweird.f32 %v6367
        %vm7519 = vweird.f32 %v7512
        %vm7520 = vmor %vm7518, %vm7519
        %v7521 = vsel %vm7520, %v7512, %v7517
        %v7522 = vrsqrt.pop %v6368
        %v7523 = vmul.f32 %v7522, %v6368
        %v7524 = vmul.f32 %v7523, %v7522
        %v7525 = vmul.f32 0.5, %v7524
        %v7526 = vsub.f32 1.5, %v7525
        %v7527 = vmul.f32 %v7522, %v7526
        %vm7528 = vweird.f32 %v6368
        %vm7529 = vweird.f32 %v7522
        %vm7530 = vmor %vm7528, %vm7529
        %v7531 = vsel %vm7530, %v7522, %v7527
        %v7532 = vrsqrt.pop %v6369
        %v7533 = vmul.f32 %v7532, %v6369
        %v7534 = vmul.f32 %v7533, %v7532
        %v7535 = vmul.f32 0.5, %v7534
        %v7536 = vsub.f32 1.5, %v7535
        %v7537 = vmul.f32 %v7532, %v7536
        %vm7538 = vweird.f32 %v6369
        %vm7539 = vweird.f32 %v7532
        %vm7540 = vmor %vm7538, %vm7539
        %v7541 = vsel %vm7540, %v7532, %v7537
        %v7542 = vrsqrt.pop %v6370
        %v7543 = vmul.f32 %v7542, %v6370
        %v7544 = vmul.f32 %v7543, %v7542
        %v7545 = vmul.f32 0.5, %v7544
        %v7546 = vsub.f32 1.5, %v7545
        %v7547 = vmul.f32 %v7542, %v7546
        %vm7548 = vweird.f32 %v6370
        %vm7549 = vweird.f32 %v7542
        %vm7550 = vmor %vm7548, %vm7549
        %v7551 = vsel %vm7550, %v7542, %v7547
        %v7552 = vrsqrt.pop %v6371
        %v7553 = vmul.f32 %v7552, %v6371
        %v7554 = vmul.f32 %v7553, %v7552
        %v7555 = vmul.f32 0.5, %v7554
        %v7556 = vsub.f32 1.5, %v7555
        %v7557 = vmul.f32 %v7552, %v7556
        %vm7558 = vweird.f32 %v6371
        %vm7559 = vweird.f32 %v7552
        %vm7560 = vmor %vm7558, %vm7559
        %v7561 = vsel %vm7560, %v7552, %v7557
        %v7562 = vrsqrt.pop %v6372
        %v7563 = vmul.f32 %v7562, %v6372
        %v7564 = vmul.f32 %v7563, %v7562
        %v7565 = vmul.f32 0.5, %v7564
        %v7566 = vsub.f32 1.5, %v7565
        %v7567 = vmul.f32 %v7562, %v7566
        %vm7568 = vweird.f32 %v6372
        %vm7569 = vweird.f32 %v7562
        %vm7570 = vmor %vm7568, %vm7569
        %v7571 = vsel %vm7570, %v7562, %v7567
        %v7572 = vrsqrt.pop %v6373
        %v7573 = vmul.f32 %v7572, %v6373
        %v7574 = vmul.f32 %v7573, %v7572
        %v7575 = vmul.f32 0.5, %v7574
        %v7576 = vsub.f32 1.5, %v7575
        %v7577 = vmul.f32 %v7572, %v7576
        %vm7578 = vweird.f32 %v6373
        %vm7579 = vweird.f32 %v7572
        %vm7580 = vmor %vm7578, %vm7579
        %v7581 = vsel %vm7580, %v7572, %v7577
        %v7582 = vrsqrt.pop %v6374
        %v7583 = vmul.f32 %v7582, %v6374
        %v7584 = vmul.f32 %v7583, %v7582
        %v7585 = vmul.f32 0.5, %v7584
        %v7586 = vsub.f32 1.5, %v7585
        %v7587 = vmul.f32 %v7582, %v7586
        %vm7588 = vweird.f32 %v6374
        %vm7589 = vweird.f32 %v7582
        %vm7590 = vmor %vm7588, %vm7589
        %v7591 = vsel %vm7590, %v7582, %v7587
        %v7592 = vrsqrt.pop %v6375
        %v7593 = vmul.f32 %v7592, %v6375
        %v7594 = vmul.f32 %v7593, %v7592
        %v7595 = vmul.f32 0.5, %v7594
        %v7596 = vsub.f32 1.5, %v7595
        %v7597 = vmul.f32 %v7592, %v7596
        %vm7598 = vweird.f32 %v6375
        %vm7599 = vweird.f32 %v7592
        %vm7600 = vmor %vm7598, %vm7599
        %v7601 = vsel %vm7600, %v7592, %v7597
        %v7602 = vrsqrt.pop %v6376
        %v7603 = vmul.f32 %v7602, %v6376
        %v7604 = vmul.f32 %v7603, %v7602
        %v7605 = vmul.f32 0.5, %v7604
        %v7606 = vsub.f32 1.5, %v7605
        %v7607 = vmul.f32 %v7602, %v7606
        %vm7608 = vweird.f32 %v6376
        %vm7609 = vweird.f32 %v7602
        %vm7610 = vmor %vm7608, %vm7609
        %v7611 = vsel %vm7610, %v7602, %v7607
        %v7612 = vrsqrt.pop %v6377
        %v7613 = vmul.f32 %v7612, %v6377
        %v7614 = vmul.f32 %v7613, %v7612
        %v7615 = vmul.f32 0.5, %v7614
        %v7616 = vsub.f32 1.5, %v7615
        %v7617 = vmul.f32 %v7612, %v7616
        %vm7618 = vweird.f32 %v6377
        %vm7619 = vweird.f32 %v7612
        %vm7620 = vmor %vm7618, %vm7619
        %v7621 = vsel %vm7620, %v7612, %v7617
        %v7622 = vrsqrt.pop %v6378
        %v7623 = vmul.f32 %v7622, %v6378
        %v7624 = vmul.f32 %v7623, %v7622
        %v7625 = vmul.f32 0.5, %v7624
        %v7626 = vsub.f32 1.5, %v7625
        %v7627 = vmul.f32 %v7622, %v7626
        %vm7628 = vweird.f32 %v6378
        %vm7629 = vweird.f32 %v7622
        %vm7630 = vmor %vm7628, %vm7629
        %v7631 = vsel %vm7630, %v7622, %v7627
        %v7632 = vrsqrt.pop %v6379
        %v7633 = vmul.f32 %v7632, %v6379
        %v7634 = vmul.f32 %v7633, %v7632
        %v7635 = vmul.f32 0.5, %v7634
        %v7636 = vsub.f32 1.5, %v7635
        %v7637 = vmul.f32 %v7632, %v7636
        %vm7638 = vweird.f32 %v6379
        %vm7639 = vweird.f32 %v7632
        %vm7640 = vmor %vm7638, %vm7639
        %v7641 = vsel %vm7640, %v7632, %v7637
        %v7642 = vrsqrt.pop %v6380
        %v7643 = vmul.f32 %v7642, %v6380
        %v7644 = vmul.f32 %v7643, %v7642
        %v7645 = vmul.f32 0.5, %v7644
        %v7646 = vsub.f32 1.5, %v7645
        %v7647 = vmul.f32 %v7642, %v7646
        %vm7648 = vweird.f32 %v6380
        %vm7649 = vweird.f32 %v7642
        %vm7650 = vmor %vm7648, %vm7649
        %v7651 = vsel %vm7650, %v7642, %v7647
        %v7652 = vrsqrt.pop %v6381
        %v7653 = vmul.f32 %v7652, %v6381
        %v7654 = vmul.f32 %v7653, %v7652
        %v7655 = vmul.f32 0.5, %v7654
        %v7656 = vsub.f32 1.5, %v7655
        %v7657 = vmul.f32 %v7652, %v7656
        %vm7658 = vweird.f32 %v6381
        %vm7659 = vweird.f32 %v7652
        %vm7660 = vmor %vm7658, %vm7659
        %v7661 = vsel %vm7660, %v7652, %v7657
        %v7662 = vmul.f32 %v6126, %v6391
        %v7663 = vmul.f32 %v6127, %v6401
        %v7664 = vmul.f32 %v6128, %v6411
        %v7665 = vmul.f32 %v6129, %v6421
        %v7666 = vmul.f32 %v6130, %v6431
        %v7667 = vmul.f32 %v6131, %v6441
        %v7668 = vmul.f32 %v6132, %v6451
        %v7669 = vmul.f32 %v6133, %v6461
        %v7670 = vmul.f32 %v6134, %v6471
        %v7671 = vmul.f32 %v6135, %v6481
        %v7672 = vmul.f32 %v6136, %v6491
        %v7673 = vmul.f32 %v6137, %v6501
        %v7674 = vmul.f32 %v6138, %v6511
        %v7675 = vmul.f32 %v6139, %v6521
        %v7676 = vmul.f32 %v6140, %v6531
        %v7677 = vmul.f32 %v6141, %v6541
        %v7678 = vmul.f32 %v6142, %v6551
        %v7679 = vmul.f32 %v6143, %v6561
        %v7680 = vmul.f32 %v6144, %v6571
        %v7681 = vmul.f32 %v6145, %v6581
        %v7682 = vmul.f32 %v6146, %v6591
        %v7683 = vmul.f32 %v6147, %v6601
        %v7684 = vmul.f32 %v6148, %v6611
        %v7685 = vmul.f32 %v6149, %v6621
        %v7686 = vmul.f32 %v6150, %v6631
        %v7687 = vmul.f32 %v6151, %v6641
        %v7688 = vmul.f32 %v6152, %v6651
        %v7689 = vmul.f32 %v6153, %v6661
        %v7690 = vmul.f32 %v6154, %v6671
        %v7691 = vmul.f32 %v6155, %v6681
        %v7692 = vmul.f32 %v6156, %v6691
        %v7693 = vmul.f32 %v6157, %v6701
        %v7694 = vmul.f32 %v6158, %v6711
        %v7695 = vmul.f32 %v6159, %v6721
        %v7696 = vmul.f32 %v6160, %v6731
        %v7697 = vmul.f32 %v6161, %v6741
        %v7698 = vmul.f32 %v6162, %v6751
        %v7699 = vmul.f32 %v6163, %v6761
        %v7700 = vmul.f32 %v6164, %v6771
        %v7701 = vmul.f32 %v6165, %v6781
        %v7702 = vmul.f32 %v6166, %v6791
        %v7703 = vmul.f32 %v6167, %v6801
        %v7704 = vmul.f32 %v6168, %v6811
        %v7705 = vmul.f32 %v6169, %v6821
        %v7706 = vmul.f32 %v6170, %v6831
        %v7707 = vmul.f32 %v6171, %v6841
        %v7708 = vmul.f32 %v6172, %v6851
        %v7709 = vmul.f32 %v6173, %v6861
        %v7710 = vmul.f32 %v6174, %v6871
        %v7711 = vmul.f32 %v6175, %v6881
        %v7712 = vmul.f32 %v6176, %v6891
        %v7713 = vmul.f32 %v6177, %v6901
        %v7714 = vmul.f32 %v6178, %v6911
        %v7715 = vmul.f32 %v6179, %v6921
        %v7716 = vmul.f32 %v6180, %v6931
        %v7717 = vmul.f32 %v6181, %v6941
        %v7718 = vmul.f32 %v6182, %v6951
        %v7719 = vmul.f32 %v6183, %v6961
        %v7720 = vmul.f32 %v6184, %v6971
        %v7721 = vmul.f32 %v6185, %v6981
        %v7722 = vmul.f32 %v6186, %v6991
        %v7723 = vmul.f32 %v6187, %v7001
        %v7724 = vmul.f32 %v6188, %v7011
        %v7725 = vmul.f32 %v6189, %v7021
        %v7726 = vmul.f32 %v6190, %v7031
        %v7727 = vmul.f32 %v6191, %v7041
        %v7728 = vmul.f32 %v6192, %v7051
        %v7729 = vmul.f32 %v6193, %v7061
        %v7730 = vmul.f32 %v6194, %v7071
        %v7731 = vmul.f32 %v6195, %v7081
        %v7732 = vmul.f32 %v6196, %v7091
        %v7733 = vmul.f32 %v6197, %v7101
        %v7734 = vmul.f32 %v6198, %v7111
        %v7735 = vmul.f32 %v6199, %v7121
        %v7736 = vmul.f32 %v6200, %v7131
        %v7737 = vmul.f32 %v6201, %v7141
        %v7738 = vmul.f32 %v6202, %v7151
        %v7739 = vmul.f32 %v6203, %v7161
        %v7740 = vmul.f32 %v6204, %v7171
        %v7741 = vmul.f32 %v6205, %v7181
        %v7742 = vmul.f32 %v6206, %v7191
        %v7743 = vmul.f32 %v6207, %v7201
        %v7744 = vmul.f32 %v6208, %v7211
        %v7745 = vmul.f32 %v6209, %v7221
        %v7746 = vmul.f32 %v6210, %v7231
        %v7747 = vmul.f32 %v6211, %v7241
        %v7748 = vmul.f32 %v6212, %v7251
        %v7749 = vmul.f32 %v6213, %v7261
        %v7750 = vmul.f32 %v6214, %v7271
        %v7751 = vmul.f32 %v6215, %v7281
        %v7752 = vmul.f32 %v6216, %v7291
        %v7753 = vmul.f32 %v6217, %v7301
        %v7754 = vmul.f32 %v6218, %v7311
        %v7755 = vmul.f32 %v6219, %v7321
        %v7756 = vmul.f32 %v6220, %v7331
        %v7757 = vmul.f32 %v6221, %v7341
        %v7758 = vmul.f32 %v6222, %v7351
        %v7759 = vmul.f32 %v6223, %v7361
        %v7760 = vmul.f32 %v6224, %v7371
        %v7761 = vmul.f32 %v6225, %v7381
        %v7762 = vmul.f32 %v6226, %v7391
        %v7763 = vmul.f32 %v6227, %v7401
        %v7764 = vmul.f32 %v6228, %v7411
        %v7765 = vmul.f32 %v6229, %v7421
        %v7766 = vmul.f32 %v6230, %v7431
        %v7767 = vmul.f32 %v6231, %v7441
        %v7768 = vmul.f32 %v6232, %v7451
        %v7769 = vmul.f32 %v6233, %v7461
        %v7770 = vmul.f32 %v6234, %v7471
        %v7771 = vmul.f32 %v6235, %v7481
        %v7772 = vmul.f32 %v6236, %v7491
        %v7773 = vmul.f32 %v6237, %v7501
        %v7774 = vmul.f32 %v6238, %v7511
        %v7775 = vmul.f32 %v6239, %v7521
        %v7776 = vmul.f32 %v6240, %v7531
        %v7777 = vmul.f32 %v6241, %v7541
        %v7778 = vmul.f32 %v6242, %v7551
        %v7779 = vmul.f32 %v6243, %v7561
        %v7780 = vmul.f32 %v6244, %v7571
        %v7781 = vmul.f32 %v6245, %v7581
        %v7782 = vmul.f32 %v6246, %v7591
        %v7783 = vmul.f32 %v6247, %v7601
        %v7784 = vmul.f32 %v6248, %v7611
        %v7785 = vmul.f32 %v6249, %v7621
        %v7786 = vmul.f32 %v6250, %v7631
        %v7787 = vmul.f32 %v6251, %v7641
        %v7788 = vmul.f32 %v6252, %v7651
        %v7789 = vmul.f32 %v6253, %v7661
        %v7790 = vperm.slane %v416, 4
        %v7791 = vmul.f32 %v7662, %v7790
        %v7792 = vmul.f32 %v7663, %v7790
        %v7793 = vmul.f32 %v7664, %v7790
        %v7794 = vmul.f32 %v7665, %v7790
        %v7795 = vmul.f32 %v7666, %v7790
        %v7796 = vmul.f32 %v7667, %v7790
        %v7797 = vmul.f32 %v7668, %v7790
        %v7798 = vmul.f32 %v7669, %v7790
        %v7799 = vmul.f32 %v7670, %v7790
        %v7800 = vmul.f32 %v7671, %v7790
        %v7801 = vmul.f32 %v7672, %v7790
        %v7802 = vmul.f32 %v7673, %v7790
        %v7803 = vmul.f32 %v7674, %v7790
        %v7804 = vmul.f32 %v7675, %v7790
        %v7805 = vmul.f32 %v7676, %v7790
        %v7806 = vmul.f32 %v7677, %v7790
        %v7807 = vmul.f32 %v7678, %v7790
        %v7808 = vmul.f32 %v7679, %v7790
        %v7809 = vmul.f32 %v7680, %v7790
        %v7810 = vmul.f32 %v7681, %v7790
        %v7811 = vmul.f32 %v7682, %v7790
        %v7812 = vmul.f32 %v7683, %v7790
        %v7813 = vmul.f32 %v7684, %v7790
        %v7814 = vmul.f32 %v7685, %v7790
        %v7815 = vmul.f32 %v7686, %v7790
        %v7816 = vmul.f32 %v7687, %v7790
        %v7817 = vmul.f32 %v7688, %v7790
        %v7818 = vmul.f32 %v7689, %v7790
        %v7819 = vmul.f32 %v7690, %v7790
        %v7820 = vmul.f32 %v7691, %v7790
        %v7821 = vmul.f32 %v7692, %v7790
        %v7822 = vmul.f32 %v7693, %v7790
        %v7823 = vmul.f32 %v7694, %v7790
        %v7824 = vmul.f32 %v7695, %v7790
        %v7825 = vmul.f32 %v7696, %v7790
        %v7826 = vmul.f32 %v7697, %v7790
        %v7827 = vmul.f32 %v7698, %v7790
        %v7828 = vmul.f32 %v7699, %v7790
        %v7829 = vmul.f32 %v7700, %v7790
        %v7830 = vmul.f32 %v7701, %v7790
        %v7831 = vmul.f32 %v7702, %v7790
        %v7832 = vmul.f32 %v7703, %v7790
        %v7833 = vmul.f32 %v7704, %v7790
        %v7834 = vmul.f32 %v7705, %v7790
        %v7835 = vmul.f32 %v7706, %v7790
        %v7836 = vmul.f32 %v7707, %v7790
        %v7837 = vmul.f32 %v7708, %v7790
        %v7838 = vmul.f32 %v7709, %v7790
        %v7839 = vmul.f32 %v7710, %v7790
        %v7840 = vmul.f32 %v7711, %v7790
        %v7841 = vmul.f32 %v7712, %v7790
        %v7842 = vmul.f32 %v7713, %v7790
        %v7843 = vmul.f32 %v7714, %v7790
        %v7844 = vmul.f32 %v7715, %v7790
        %v7845 = vmul.f32 %v7716, %v7790
        %v7846 = vmul.f32 %v7717, %v7790
        %v7847 = vmul.f32 %v7718, %v7790
        %v7848 = vmul.f32 %v7719, %v7790
        %v7849 = vmul.f32 %v7720, %v7790
        %v7850 = vmul.f32 %v7721, %v7790
        %v7851 = vmul.f32 %v7722, %v7790
        %v7852 = vmul.f32 %v7723, %v7790
        %v7853 = vmul.f32 %v7724, %v7790
        %v7854 = vmul.f32 %v7725, %v7790
        %v7855 = vmul.f32 %v7726, %v7790
        %v7856 = vmul.f32 %v7727, %v7790
        %v7857 = vmul.f32 %v7728, %v7790
        %v7858 = vmul.f32 %v7729, %v7790
        %v7859 = vmul.f32 %v7730, %v7790
        %v7860 = vmul.f32 %v7731, %v7790
        %v7861 = vmul.f32 %v7732, %v7790
        %v7862 = vmul.f32 %v7733, %v7790
        %v7863 = vmul.f32 %v7734, %v7790
        %v7864 = vmul.f32 %v7735, %v7790
        %v7865 = vmul.f32 %v7736, %v7790
        %v7866 = vmul.f32 %v7737, %v7790
        %v7867 = vmul.f32 %v7738, %v7790
        %v7868 = vmul.f32 %v7739, %v7790
        %v7869 = vmul.f32 %v7740, %v7790
        %v7870 = vmul.f32 %v7741, %v7790
        %v7871 = vmul.f32 %v7742, %v7790
        %v7872 = vmul.f32 %v7743, %v7790
        %v7873 = vmul.f32 %v7744, %v7790
        %v7874 = vmul.f32 %v7745, %v7790
        %v7875 = vmul.f32 %v7746, %v7790
        %v7876 = vmul.f32 %v7747, %v7790
        %v7877 = vmul.f32 %v7748, %v7790
        %v7878 = vmul.f32 %v7749, %v7790
        %v7879 = vmul.f32 %v7750, %v7790
        %v7880 = vmul.f32 %v7751, %v7790
        %v7881 = vmul.f32 %v7752, %v7790
        %v7882 = vmul.f32 %v7753, %v7790
        %v7883 = vmul.f32 %v7754, %v7790
        %v7884 = vmul.f32 %v7755, %v7790
        %v7885 = vmul.f32 %v7756, %v7790
        %v7886 = vmul.f32 %v7757, %v7790
        %v7887 = vmul.f32 %v7758, %v7790
        %v7888 = vmul.f32 %v7759, %v7790
        %v7889 = vmul.f32 %v7760, %v7790
        %v7890 = vmul.f32 %v7761, %v7790
        %v7891 = vmul.f32 %v7762, %v7790
        %v7892 = vmul.f32 %v7763, %v7790
        %v7893 = vmul.f32 %v7764, %v7790
        %v7894 = vmul.f32 %v7765, %v7790
        %v7895 = vmul.f32 %v7766, %v7790
        %v7896 = vmul.f32 %v7767, %v7790
        %v7897 = vmul.f32 %v7768, %v7790
        %v7898 = vmul.f32 %v7769, %v7790
        %v7899 = vmul.f32 %v7770, %v7790
        %v7900 = vmul.f32 %v7771, %v7790
        %v7901 = vmul.f32 %v7772, %v7790
        %v7902 = vmul.f32 %v7773, %v7790
        %v7903 = vmul.f32 %v7774, %v7790
        %v7904 = vmul.f32 %v7775, %v7790
        %v7905 = vmul.f32 %v7776, %v7790
        %v7906 = vmul.f32 %v7777, %v7790
        %v7907 = vmul.f32 %v7778, %v7790
        %v7908 = vmul.f32 %v7779, %v7790
        %v7909 = vmul.f32 %v7780, %v7790
        %v7910 = vmul.f32 %v7781, %v7790
        %v7911 = vmul.f32 %v7782, %v7790
        %v7912 = vmul.f32 %v7783, %v7790
        %v7913 = vmul.f32 %v7784, %v7790
        %v7914 = vmul.f32 %v7785, %v7790
        %v7915 = vmul.f32 %v7786, %v7790
        %v7916 = vmul.f32 %v7787, %v7790
        %v7917 = vmul.f32 %v7788, %v7790
        %v7918 = vmul.f32 %v7789, %v7790
        %v7919 = vperm.slane %v416, 5
        %v7920 = vadd.f32 %v7791, %v7919
        %v7921 = vadd.f32 %v7792, %v7919
        %v7922 = vadd.f32 %v7793, %v7919
        %v7923 = vadd.f32 %v7794, %v7919
        %v7924 = vadd.f32 %v7795, %v7919
        %v7925 = vadd.f32 %v7796, %v7919
        %v7926 = vadd.f32 %v7797, %v7919
        %v7927 = vadd.f32 %v7798, %v7919
        %v7928 = vadd.f32 %v7799, %v7919
        %v7929 = vadd.f32 %v7800, %v7919
        %v7930 = vadd.f32 %v7801, %v7919
        %v7931 = vadd.f32 %v7802, %v7919
        %v7932 = vadd.f32 %v7803, %v7919
        %v7933 = vadd.f32 %v7804, %v7919
        %v7934 = vadd.f32 %v7805, %v7919
        %v7935 = vadd.f32 %v7806, %v7919
        %v7936 = vadd.f32 %v7807, %v7919
        %v7937 = vadd.f32 %v7808, %v7919
        %v7938 = vadd.f32 %v7809, %v7919
        %v7939 = vadd.f32 %v7810, %v7919
        %v7940 = vadd.f32 %v7811, %v7919
        %v7941 = vadd.f32 %v7812, %v7919
        %v7942 = vadd.f32 %v7813, %v7919
        %v7943 = vadd.f32 %v7814, %v7919
        %v7944 = vadd.f32 %v7815, %v7919
        %v7945 = vadd.f32 %v7816, %v7919
        %v7946 = vadd.f32 %v7817, %v7919
        %v7947 = vadd.f32 %v7818, %v7919
        %v7948 = vadd.f32 %v7819, %v7919
        %v7949 = vadd.f32 %v7820, %v7919
        %v7950 = vadd.f32 %v7821, %v7919
        %v7951 = vadd.f32 %v7822, %v7919
        %v7952 = vadd.f32 %v7823, %v7919
        %v7953 = vadd.f32 %v7824, %v7919
        %v7954 = vadd.f32 %v7825, %v7919
        %v7955 = vadd.f32 %v7826, %v7919
        %v7956 = vadd.f32 %v7827, %v7919
        %v7957 = vadd.f32 %v7828, %v7919
        %v7958 = vadd.f32 %v7829, %v7919
        %v7959 = vadd.f32 %v7830, %v7919
        %v7960 = vadd.f32 %v7831, %v7919
        %v7961 = vadd.f32 %v7832, %v7919
        %v7962 = vadd.f32 %v7833, %v7919
        %v7963 = vadd.f32 %v7834, %v7919
        %v7964 = vadd.f32 %v7835, %v7919
        %v7965 = vadd.f32 %v7836, %v7919
        %v7966 = vadd.f32 %v7837, %v7919
        %v7967 = vadd.f32 %v7838, %v7919
        %v7968 = vadd.f32 %v7839, %v7919
        %v7969 = vadd.f32 %v7840, %v7919
        %v7970 = vadd.f32 %v7841, %v7919
        %v7971 = vadd.f32 %v7842, %v7919
        %v7972 = vadd.f32 %v7843, %v7919
        %v7973 = vadd.f32 %v7844, %v7919
        %v7974 = vadd.f32 %v7845, %v7919
        %v7975 = vadd.f32 %v7846, %v7919
        %v7976 = vadd.f32 %v7847, %v7919
        %v7977 = vadd.f32 %v7848, %v7919
        %v7978 = vadd.f32 %v7849, %v7919
        %v7979 = vadd.f32 %v7850, %v7919
        %v7980 = vadd.f32 %v7851, %v7919
        %v7981 = vadd.f32 %v7852, %v7919
        %v7982 = vadd.f32 %v7853, %v7919
        %v7983 = vadd.f32 %v7854, %v7919
        %v7984 = vadd.f32 %v7855, %v7919
        %v7985 = vadd.f32 %v7856, %v7919
        %v7986 = vadd.f32 %v7857, %v7919
        %v7987 = vadd.f32 %v7858, %v7919
        %v7988 = vadd.f32 %v7859, %v7919
        %v7989 = vadd.f32 %v7860, %v7919
        %v7990 = vadd.f32 %v7861, %v7919
        %v7991 = vadd.f32 %v7862, %v7919
        %v7992 = vadd.f32 %v7863, %v7919
        %v7993 = vadd.f32 %v7864, %v7919
        %v7994 = vadd.f32 %v7865, %v7919
        %v7995 = vadd.f32 %v7866, %v7919
        %v7996 = vadd.f32 %v7867, %v7919
        %v7997 = vadd.f32 %v7868, %v7919
        %v7998 = vadd.f32 %v7869, %v7919
        %v7999 = vadd.f32 %v7870, %v7919
        %v8000 = vadd.f32 %v7871, %v7919
        %v8001 = vadd.f32 %v7872, %v7919
        %v8002 = vadd.f32 %v7873, %v7919
        %v8003 = vadd.f32 %v7874, %v7919
        %v8004 = vadd.f32 %v7875, %v7919
        %v8005 = vadd.f32 %v7876, %v7919
        %v8006 = vadd.f32 %v7877, %v7919
        %v8007 = vadd.f32 %v7878, %v7919
        %v8008 = vadd.f32 %v7879, %v7919
        %v8009 = vadd.f32 %v7880, %v7919
        %v8010 = vadd.f32 %v7881, %v7919
        %v8011 = vadd.f32 %v7882, %v7919
        %v8012 = vadd.f32 %v7883, %v7919
        %v8013 = vadd.f32 %v7884, %v7919
        %v8014 = vadd.f32 %v7885, %v7919
        %v8015 = vadd.f32 %v7886, %v7919
        %v8016 = vadd.f32 %v7887, %v7919
        %v8017 = vadd.f32 %v7888, %v7919
        %v8018 = vadd.f32 %v7889, %v7919
        %v8019 = vadd.f32 %v7890, %v7919
        %v8020 = vadd.f32 %v7891, %v7919
        %v8021 = vadd.f32 %v7892, %v7919
        %v8022 = vadd.f32 %v7893, %v7919
        %v8023 = vadd.f32 %v7894, %v7919
        %v8024 = vadd.f32 %v7895, %v7919
        %v8025 = vadd.f32 %v7896, %v7919
        %v8026 = vadd.f32 %v7897, %v7919
        %v8027 = vadd.f32 %v7898, %v7919
        %v8028 = vadd.f32 %v7899, %v7919
        %v8029 = vadd.f32 %v7900, %v7919
        %v8030 = vadd.f32 %v7901, %v7919
        %v8031 = vadd.f32 %v7902, %v7919
        %v8032 = vadd.f32 %v7903, %v7919
        %v8033 = vadd.f32 %v7904, %v7919
        %v8034 = vadd.f32 %v7905, %v7919
        %v8035 = vadd.f32 %v7906, %v7919
        %v8036 = vadd.f32 %v7907, %v7919
        %v8037 = vadd.f32 %v7908, %v7919
        %v8038 = vadd.f32 %v7909, %v7919
        %v8039 = vadd.f32 %v7910, %v7919
        %v8040 = vadd.f32 %v7911, %v7919
        %v8041 = vadd.f32 %v7912, %v7919
        %v8042 = vadd.f32 %v7913, %v7919
        %v8043 = vadd.f32 %v7914, %v7919
        %v8044 = vadd.f32 %v7915, %v7919
        %v8045 = vadd.f32 %v7916, %v7919
        %v8046 = vadd.f32 %v7917, %v7919
        %v8047 = vadd.f32 %v7918, %v7919
        %vm8048 = vcmp.ge.f32.partialorder %v7920, 0.0
        %vm8049 = vcmp.ge.f32.partialorder %v7921, 0.0
        %vm8050 = vcmp.ge.f32.partialorder %v7922, 0.0
        %vm8051 = vcmp.ge.f32.partialorder %v7923, 0.0
        %vm8052 = vcmp.ge.f32.partialorder %v7924, 0.0
        %vm8053 = vcmp.ge.f32.partialorder %v7925, 0.0
        %vm8054 = vcmp.ge.f32.partialorder %v7926, 0.0
        %vm8055 = vcmp.ge.f32.partialorder %v7927, 0.0
        %vm8056 = vcmp.ge.f32.partialorder %v7928, 0.0
        %vm8057 = vcmp.ge.f32.partialorder %v7929, 0.0
        %vm8058 = vcmp.ge.f32.partialorder %v7930, 0.0
        %vm8059 = vcmp.ge.f32.partialorder %v7931, 0.0
        %vm8060 = vcmp.ge.f32.partialorder %v7932, 0.0
        %vm8061 = vcmp.ge.f32.partialorder %v7933, 0.0
        %vm8062 = vcmp.ge.f32.partialorder %v7934, 0.0
        %vm8063 = vcmp.ge.f32.partialorder %v7935, 0.0
        %vm8064 = vcmp.ge.f32.partialorder %v7936, 0.0
        %vm8065 = vcmp.ge.f32.partialorder %v7937, 0.0
        %vm8066 = vcmp.ge.f32.partialorder %v7938, 0.0
        %vm8067 = vcmp.ge.f32.partialorder %v7939, 0.0
        %vm8068 = vcmp.ge.f32.partialorder %v7940, 0.0
        %vm8069 = vcmp.ge.f32.partialorder %v7941, 0.0
        %vm8070 = vcmp.ge.f32.partialorder %v7942, 0.0
        %vm8071 = vcmp.ge.f32.partialorder %v7943, 0.0
        %vm8072 = vcmp.ge.f32.partialorder %v7944, 0.0
        %vm8073 = vcmp.ge.f32.partialorder %v7945, 0.0
        %vm8074 = vcmp.ge.f32.partialorder %v7946, 0.0
        %vm8075 = vcmp.ge.f32.partialorder %v7947, 0.0
        %vm8076 = vcmp.ge.f32.partialorder %v7948, 0.0
        %vm8077 = vcmp.ge.f32.partialorder %v7949, 0.0
        %vm8078 = vcmp.ge.f32.partialorder %v7950, 0.0
        %vm8079 = vcmp.ge.f32.partialorder %v7951, 0.0
        %vm8080 = vcmp.ge.f32.partialorder %v7952, 0.0
        %vm8081 = vcmp.ge.f32.partialorder %v7953, 0.0
        %vm8082 = vcmp.ge.f32.partialorder %v7954, 0.0
        %vm8083 = vcmp.ge.f32.partialorder %v7955, 0.0
        %vm8084 = vcmp.ge.f32.partialorder %v7956, 0.0
        %vm8085 = vcmp.ge.f32.partialorder %v7957, 0.0
        %vm8086 = vcmp.ge.f32.partialorder %v7958, 0.0
        %vm8087 = vcmp.ge.f32.partialorder %v7959, 0.0
        %vm8088 = vcmp.ge.f32.partialorder %v7960, 0.0
        %vm8089 = vcmp.ge.f32.partialorder %v7961, 0.0
        %vm8090 = vcmp.ge.f32.partialorder %v7962, 0.0
        %vm8091 = vcmp.ge.f32.partialorder %v7963, 0.0
        %vm8092 = vcmp.ge.f32.partialorder %v7964, 0.0
        %vm8093 = vcmp.ge.f32.partialorder %v7965, 0.0
        %vm8094 = vcmp.ge.f32.partialorder %v7966, 0.0
        %vm8095 = vcmp.ge.f32.partialorder %v7967, 0.0
        %vm8096 = vcmp.ge.f32.partialorder %v7968, 0.0
        %vm8097 = vcmp.ge.f32.partialorder %v7969, 0.0
        %vm8098 = vcmp.ge.f32.partialorder %v7970, 0.0
        %vm8099 = vcmp.ge.f32.partialorder %v7971, 0.0
        %vm8100 = vcmp.ge.f32.partialorder %v7972, 0.0
        %vm8101 = vcmp.ge.f32.partialorder %v7973, 0.0
        %vm8102 = vcmp.ge.f32.partialorder %v7974, 0.0
        %vm8103 = vcmp.ge.f32.partialorder %v7975, 0.0
        %vm8104 = vcmp.ge.f32.partialorder %v7976, 0.0
        %vm8105 = vcmp.ge.f32.partialorder %v7977, 0.0
        %vm8106 = vcmp.ge.f32.partialorder %v7978, 0.0
        %vm8107 = vcmp.ge.f32.partialorder %v7979, 0.0
        %vm8108 = vcmp.ge.f32.partialorder %v7980, 0.0
        %vm8109 = vcmp.ge.f32.partialorder %v7981, 0.0
        %vm8110 = vcmp.ge.f32.partialorder %v7982, 0.0
        %vm8111 = vcmp.ge.f32.partialorder %v7983, 0.0
        %vm8112 = vcmp.ge.f32.partialorder %v7984, 0.0
        %vm8113 = vcmp.ge.f32.partialorder %v7985, 0.0
        %vm8114 = vcmp.ge.f32.partialorder %v7986, 0.0
        %vm8115 = vcmp.ge.f32.partialorder %v7987, 0.0
        %vm8116 = vcmp.ge.f32.partialorder %v7988, 0.0
        %vm8117 = vcmp.ge.f32.partialorder %v7989, 0.0
        %vm8118 = vcmp.ge.f32.partialorder %v7990, 0.0
        %vm8119 = vcmp.ge.f32.partialorder %v7991, 0.0
        %vm8120 = vcmp.ge.f32.partialorder %v7992, 0.0
        %vm8121 = vcmp.ge.f32.partialorder %v7993, 0.0
        %vm8122 = vcmp.ge.f32.partialorder %v7994, 0.0
        %vm8123 = vcmp.ge.f32.partialorder %v7995, 0.0
        %vm8124 = vcmp.ge.f32.partialorder %v7996, 0.0
        %vm8125 = vcmp.ge.f32.partialorder %v7997, 0.0
        %vm8126 = vcmp.ge.f32.partialorder %v7998, 0.0
        %vm8127 = vcmp.ge.f32.partialorder %v7999, 0.0
        %vm8128 = vcmp.ge.f32.partialorder %v8000, 0.0
        %vm8129 = vcmp.ge.f32.partialorder %v8001, 0.0
        %vm8130 = vcmp.ge.f32.partialorder %v8002, 0.0
        %vm8131 = vcmp.ge.f32.partialorder %v8003, 0.0
        %vm8132 = vcmp.ge.f32.partialorder %v8004, 0.0
        %vm8133 = vcmp.ge.f32.partialorder %v8005, 0.0
        %vm8134 = vcmp.ge.f32.partialorder %v8006, 0.0
        %vm8135 = vcmp.ge.f32.partialorder %v8007, 0.0
        %vm8136 = vcmp.ge.f32.partialorder %v8008, 0.0
        %vm8137 = vcmp.ge.f32.partialorder %v8009, 0.0
        %vm8138 = vcmp.ge.f32.partialorder %v8010, 0.0
        %vm8139 = vcmp.ge.f32.partialorder %v8011, 0.0
        %vm8140 = vcmp.ge.f32.partialorder %v8012, 0.0
        %vm8141 = vcmp.ge.f32.partialorder %v8013, 0.0
        %vm8142 = vcmp.ge.f32.partialorder %v8014, 0.0
        %vm8143 = vcmp.ge.f32.partialorder %v8015, 0.0
        %vm8144 = vcmp.ge.f32.partialorder %v8016, 0.0
        %vm8145 = vcmp.ge.f32.partialorder %v8017, 0.0
        %vm8146 = vcmp.ge.f32.partialorder %v8018, 0.0
        %vm8147 = vcmp.ge.f32.partialorder %v8019, 0.0
        %vm8148 = vcmp.ge.f32.partialorder %v8020, 0.0
        %vm8149 = vcmp.ge.f32.partialorder %v8021, 0.0
        %vm8150 = vcmp.ge.f32.partialorder %v8022, 0.0
        %vm8151 = vcmp.ge.f32.partialorder %v8023, 0.0
        %vm8152 = vcmp.ge.f32.partialorder %v8024, 0.0
        %vm8153 = vcmp.ge.f32.partialorder %v8025, 0.0
        %vm8154 = vcmp.ge.f32.partialorder %v8026, 0.0
        %vm8155 = vcmp.ge.f32.partialorder %v8027, 0.0
        %vm8156 = vcmp.ge.f32.partialorder %v8028, 0.0
        %vm8157 = vcmp.ge.f32.partialorder %v8029, 0.0
        %vm8158 = vcmp.ge.f32.partialorder %v8030, 0.0
        %vm8159 = vcmp.ge.f32.partialorder %v8031, 0.0
        %vm8160 = vcmp.ge.f32.partialorder %v8032, 0.0
        %vm8161 = vcmp.ge.f32.partialorder %v8033, 0.0
        %vm8162 = vcmp.ge.f32.partialorder %v8034, 0.0
        %vm8163 = vcmp.ge.f32.partialorder %v8035, 0.0
        %vm8164 = vcmp.ge.f32.partialorder %v8036, 0.0
        %vm8165 = vcmp.ge.f32.partialorder %v8037, 0.0
        %vm8166 = vcmp.ge.f32.partialorder %v8038, 0.0
        %vm8167 = vcmp.ge.f32.partialorder %v8039, 0.0
        %vm8168 = vcmp.ge.f32.partialorder %v8040, 0.0
        %vm8169 = vcmp.ge.f32.partialorder %v8041, 0.0
        %vm8170 = vcmp.ge.f32.partialorder %v8042, 0.0
        %vm8171 = vcmp.ge.f32.partialorder %v8043, 0.0
        %vm8172 = vcmp.ge.f32.partialorder %v8044, 0.0
        %vm8173 = vcmp.ge.f32.partialorder %v8045, 0.0
        %vm8174 = vcmp.ge.f32.partialorder %v8046, 0.0
        %vm8175 = vcmp.ge.f32.partialorder %v8047, 0.0
        %v8176 = vmul.f32 %v7920, 0.2
        %v8177 = vmul.f32 %v7921, 0.2
        %v8178 = vmul.f32 %v7922, 0.2
        %v8179 = vmul.f32 %v7923, 0.2
        %v8180 = vmul.f32 %v7924, 0.2
        %v8181 = vmul.f32 %v7925, 0.2
        %v8182 = vmul.f32 %v7926, 0.2
        %v8183 = vmul.f32 %v7927, 0.2
        %v8184 = vmul.f32 %v7928, 0.2
        %v8185 = vmul.f32 %v7929, 0.2
        %v8186 = vmul.f32 %v7930, 0.2
        %v8187 = vmul.f32 %v7931, 0.2
        %v8188 = vmul.f32 %v7932, 0.2
        %v8189 = vmul.f32 %v7933, 0.2
        %v8190 = vmul.f32 %v7934, 0.2
        %v8191 = vmul.f32 %v7935, 0.2
        %v8192 = vmul.f32 %v7936, 0.2
        %v8193 = vmul.f32 %v7937, 0.2
        %v8194 = vmul.f32 %v7938, 0.2
        %v8195 = vmul.f32 %v7939, 0.2
        %v8196 = vmul.f32 %v7940, 0.2
        %v8197 = vmul.f32 %v7941, 0.2
        %v8198 = vmul.f32 %v7942, 0.2
        %v8199 = vmul.f32 %v7943, 0.2
        %v8200 = vmul.f32 %v7944, 0.2
        %v8201 = vmul.f32 %v7945, 0.2
        %v8202 = vmul.f32 %v7946, 0.2
        %v8203 = vmul.f32 %v7947, 0.2
        %v8204 = vmul.f32 %v7948, 0.2
        %v8205 = vmul.f32 %v7949, 0.2
        %v8206 = vmul.f32 %v7950, 0.2
        %v8207 = vmul.f32 %v7951, 0.2
        %v8208 = vmul.f32 %v7952, 0.2
        %v8209 = vmul.f32 %v7953, 0.2
        %v8210 = vmul.f32 %v7954, 0.2
        %v8211 = vmul.f32 %v7955, 0.2
        %v8212 = vmul.f32 %v7956, 0.2
        %v8213 = vmul.f32 %v7957, 0.2
        %v8214 = vmul.f32 %v7958, 0.2
        %v8215 = vmul.f32 %v7959, 0.2
        %v8216 = vmul.f32 %v7960, 0.2
        %v8217 = vmul.f32 %v7961, 0.2
        %v8218 = vmul.f32 %v7962, 0.2
        %v8219 = vmul.f32 %v7963, 0.2
        %v8220 = vmul.f32 %v7964, 0.2
        %v8221 = vmul.f32 %v7965, 0.2
        %v8222 = vmul.f32 %v7966, 0.2
        %v8223 = vmul.f32 %v7967, 0.2
        %v8224 = vmul.f32 %v7968, 0.2
        %v8225 = vmul.f32 %v7969, 0.2
        %v8226 = vmul.f32 %v7970, 0.2
        %v8227 = vmul.f32 %v7971, 0.2
        %v8228 = vmul.f32 %v7972, 0.2
        %v8229 = vmul.f32 %v7973, 0.2
        %v8230 = vmul.f32 %v7974, 0.2
        %v8231 = vmul.f32 %v7975, 0.2
        %v8232 = vmul.f32 %v7976, 0.2
        %v8233 = vmul.f32 %v7977, 0.2
        %v8234 = vmul.f32 %v7978, 0.2
        %v8235 = vmul.f32 %v7979, 0.2
        %v8236 = vmul.f32 %v7980, 0.2
        %v8237 = vmul.f32 %v7981, 0.2
        %v8238 = vmul.f32 %v7982, 0.2
        %v8239 = vmul.f32 %v7983, 0.2
        %v8240 = vmul.f32 %v7984, 0.2
        %v8241 = vmul.f32 %v7985, 0.2
        %v8242 = vmul.f32 %v7986, 0.2
        %v8243 = vmul.f32 %v7987, 0.2
        %v8244 = vmul.f32 %v7988, 0.2
        %v8245 = vmul.f32 %v7989, 0.2
        %v8246 = vmul.f32 %v7990, 0.2
        %v8247 = vmul.f32 %v7991, 0.2
        %v8248 = vmul.f32 %v7992, 0.2
        %v8249 = vmul.f32 %v7993, 0.2
        %v8250 = vmul.f32 %v7994, 0.2
        %v8251 = vmul.f32 %v7995, 0.2
        %v8252 = vmul.f32 %v7996, 0.2
        %v8253 = vmul.f32 %v7997, 0.2
        %v8254 = vmul.f32 %v7998, 0.2
        %v8255 = vmul.f32 %v7999, 0.2
        %v8256 = vmul.f32 %v8000, 0.2
        %v8257 = vmul.f32 %v8001, 0.2
        %v8258 = vmul.f32 %v8002, 0.2
        %v8259 = vmul.f32 %v8003, 0.2
        %v8260 = vmul.f32 %v8004, 0.2
        %v8261 = vmul.f32 %v8005, 0.2
        %v8262 = vmul.f32 %v8006, 0.2
        %v8263 = vmul.f32 %v8007, 0.2
        %v8264 = vmul.f32 %v8008, 0.2
        %v8265 = vmul.f32 %v8009, 0.2
        %v8266 = vmul.f32 %v8010, 0.2
        %v8267 = vmul.f32 %v8011, 0.2
        %v8268 = vmul.f32 %v8012, 0.2
        %v8269 = vmul.f32 %v8013, 0.2
        %v8270 = vmul.f32 %v8014, 0.2
        %v8271 = vmul.f32 %v8015, 0.2
        %v8272 = vmul.f32 %v8016, 0.2
        %v8273 = vmul.f32 %v8017, 0.2
        %v8274 = vmul.f32 %v8018, 0.2
        %v8275 = vmul.f32 %v8019, 0.2
        %v8276 = vmul.f32 %v8020, 0.2
        %v8277 = vmul.f32 %v8021, 0.2
        %v8278 = vmul.f32 %v8022, 0.2
        %v8279 = vmul.f32 %v8023, 0.2
        %v8280 = vmul.f32 %v8024, 0.2
        %v8281 = vmul.f32 %v8025, 0.2
        %v8282 = vmul.f32 %v8026, 0.2
        %v8283 = vmul.f32 %v8027, 0.2
        %v8284 = vmul.f32 %v8028, 0.2
        %v8285 = vmul.f32 %v8029, 0.2
        %v8286 = vmul.f32 %v8030, 0.2
        %v8287 = vmul.f32 %v8031, 0.2
        %v8288 = vmul.f32 %v8032, 0.2
        %v8289 = vmul.f32 %v8033, 0.2
        %v8290 = vmul.f32 %v8034, 0.2
        %v8291 = vmul.f32 %v8035, 0.2
        %v8292 = vmul.f32 %v8036, 0.2
        %v8293 = vmul.f32 %v8037, 0.2
        %v8294 = vmul.f32 %v8038, 0.2
        %v8295 = vmul.f32 %v8039, 0.2
        %v8296 = vmul.f32 %v8040, 0.2
        %v8297 = vmul.f32 %v8041, 0.2
        %v8298 = vmul.f32 %v8042, 0.2
        %v8299 = vmul.f32 %v8043, 0.2
        %v8300 = vmul.f32 %v8044, 0.2
        %v8301 = vmul.f32 %v8045, 0.2
        %v8302 = vmul.f32 %v8046, 0.2
        %v8303 = vmul.f32 %v8047, 0.2
        %v8304 = vsel %vm8048, %v7920, %v8176
        %v8305 = vsel %vm8049, %v7921, %v8177
        %v8306 = vsel %vm8050, %v7922, %v8178
        %v8307 = vsel %vm8051, %v7923, %v8179
        %v8308 = vsel %vm8052, %v7924, %v8180
        %v8309 = vsel %vm8053, %v7925, %v8181
        %v8310 = vsel %vm8054, %v7926, %v8182
        %v8311 = vsel %vm8055, %v7927, %v8183
        %v8312 = vsel %vm8056, %v7928, %v8184
        %v8313 = vsel %vm8057, %v7929, %v8185
        %v8314 = vsel %vm8058, %v7930, %v8186
        %v8315 = vsel %vm8059, %v7931, %v8187
        %v8316 = vsel %vm8060, %v7932, %v8188
        %v8317 = vsel %vm8061, %v7933, %v8189
        %v8318 = vsel %vm8062, %v7934, %v8190
        %v8319 = vsel %vm8063, %v7935, %v8191
        %v8320 = vsel %vm8064, %v7936, %v8192
        %v8321 = vsel %vm8065, %v7937, %v8193
        %v8322 = vsel %vm8066, %v7938, %v8194
        %v8323 = vsel %vm8067, %v7939, %v8195
        %v8324 = vsel %vm8068, %v7940, %v8196
        %v8325 = vsel %vm8069, %v7941, %v8197
        %v8326 = vsel %vm8070, %v7942, %v8198
        %v8327 = vsel %vm8071, %v7943, %v8199
        %v8328 = vsel %vm8072, %v7944, %v8200
        %v8329 = vsel %vm8073, %v7945, %v8201
        %v8330 = vsel %vm8074, %v7946, %v8202
        %v8331 = vsel %vm8075, %v7947, %v8203
        %v8332 = vsel %vm8076, %v7948, %v8204
        %v8333 = vsel %vm8077, %v7949, %v8205
        %v8334 = vsel %vm8078, %v7950, %v8206
        %v8335 = vsel %vm8079, %v7951, %v8207
        %v8336 = vsel %vm8080, %v7952, %v8208
        %v8337 = vsel %vm8081, %v7953, %v8209
        %v8338 = vsel %vm8082, %v7954, %v8210
        %v8339 = vsel %vm8083, %v7955, %v8211
        %v8340 = vsel %vm8084, %v7956, %v8212
        %v8341 = vsel %vm8085, %v7957, %v8213
        %v8342 = vsel %vm8086, %v7958, %v8214
        %v8343 = vsel %vm8087, %v7959, %v8215
        %v8344 = vsel %vm8088, %v7960, %v8216
        %v8345 = vsel %vm8089, %v7961, %v8217
        %v8346 = vsel %vm8090, %v7962, %v8218
        %v8347 = vsel %vm8091, %v7963, %v8219
        %v8348 = vsel %vm8092, %v7964, %v8220
        %v8349 = vsel %vm8093, %v7965, %v8221
        %v8350 = vsel %vm8094, %v7966, %v8222
        %v8351 = vsel %vm8095, %v7967, %v8223
        %v8352 = vsel %vm8096, %v7968, %v8224
        %v8353 = vsel %vm8097, %v7969, %v8225
        %v8354 = vsel %vm8098, %v7970, %v8226
        %v8355 = vsel %vm8099, %v7971, %v8227
        %v8356 = vsel %vm8100, %v7972, %v8228
        %v8357 = vsel %vm8101, %v7973, %v8229
        %v8358 = vsel %vm8102, %v7974, %v8230
        %v8359 = vsel %vm8103, %v7975, %v8231
        %v8360 = vsel %vm8104, %v7976, %v8232
        %v8361 = vsel %vm8105, %v7977, %v8233
        %v8362 = vsel %vm8106, %v7978, %v8234
        %v8363 = vsel %vm8107, %v7979, %v8235
        %v8364 = vsel %vm8108, %v7980, %v8236
        %v8365 = vsel %vm8109, %v7981, %v8237
        %v8366 = vsel %vm8110, %v7982, %v8238
        %v8367 = vsel %vm8111, %v7983, %v8239
        %v8368 = vsel %vm8112, %v7984, %v8240
        %v8369 = vsel %vm8113, %v7985, %v8241
        %v8370 = vsel %vm8114, %v7986, %v8242
        %v8371 = vsel %vm8115, %v7987, %v8243
        %v8372 = vsel %vm8116, %v7988, %v8244
        %v8373 = vsel %vm8117, %v7989, %v8245
        %v8374 = vsel %vm8118, %v7990, %v8246
        %v8375 = vsel %vm8119, %v7991, %v8247
        %v8376 = vsel %vm8120, %v7992, %v8248
        %v8377 = vsel %vm8121, %v7993, %v8249
        %v8378 = vsel %vm8122, %v7994, %v8250
        %v8379 = vsel %vm8123, %v7995, %v8251
        %v8380 = vsel %vm8124, %v7996, %v8252
        %v8381 = vsel %vm8125, %v7997, %v8253
        %v8382 = vsel %vm8126, %v7998, %v8254
        %v8383 = vsel %vm8127, %v7999, %v8255
        %v8384 = vsel %vm8128, %v8000, %v8256
        %v8385 = vsel %vm8129, %v8001, %v8257
        %v8386 = vsel %vm8130, %v8002, %v8258
        %v8387 = vsel %vm8131, %v8003, %v8259
        %v8388 = vsel %vm8132, %v8004, %v8260
        %v8389 = vsel %vm8133, %v8005, %v8261
        %v8390 = vsel %vm8134, %v8006, %v8262
        %v8391 = vsel %vm8135, %v8007, %v8263
        %v8392 = vsel %vm8136, %v8008, %v8264
        %v8393 = vsel %vm8137, %v8009, %v8265
        %v8394 = vsel %vm8138, %v8010, %v8266
        %v8395 = vsel %vm8139, %v8011, %v8267
        %v8396 = vsel %vm8140, %v8012, %v8268
        %v8397 = vsel %vm8141, %v8013, %v8269
        %v8398 = vsel %vm8142, %v8014, %v8270
        %v8399 = vsel %vm8143, %v8015, %v8271
        %v8400 = vsel %vm8144, %v8016, %v8272
        %v8401 = vsel %vm8145, %v8017, %v8273
        %v8402 = vsel %vm8146, %v8018, %v8274
        %v8403 = vsel %vm8147, %v8019, %v8275
        %v8404 = vsel %vm8148, %v8020, %v8276
        %v8405 = vsel %vm8149, %v8021, %v8277
        %v8406 = vsel %vm8150, %v8022, %v8278
        %v8407 = vsel %vm8151, %v8023, %v8279
        %v8408 = vsel %vm8152, %v8024, %v8280
        %v8409 = vsel %vm8153, %v8025, %v8281
        %v8410 = vsel %vm8154, %v8026, %v8282
        %v8411 = vsel %vm8155, %v8027, %v8283
        %v8412 = vsel %vm8156, %v8028, %v8284
        %v8413 = vsel %vm8157, %v8029, %v8285
        %v8414 = vsel %vm8158, %v8030, %v8286
        %v8415 = vsel %vm8159, %v8031, %v8287
        %v8416 = vsel %vm8160, %v8032, %v8288
        %v8417 = vsel %vm8161, %v8033, %v8289
        %v8418 = vsel %vm8162, %v8034, %v8290
        %v8419 = vsel %vm8163, %v8035, %v8291
        %v8420 = vsel %vm8164, %v8036, %v8292
        %v8421 = vsel %vm8165, %v8037, %v8293
        %v8422 = vsel %vm8166, %v8038, %v8294
        %v8423 = vsel %vm8167, %v8039, %v8295
        %v8424 = vsel %vm8168, %v8040, %v8296
        %v8425 = vsel %vm8169, %v8041, %v8297
        %v8426 = vsel %vm8170, %v8042, %v8298
        %v8427 = vsel %vm8171, %v8043, %v8299
        %v8428 = vsel %vm8172, %v8044, %v8300
        %v8429 = vsel %vm8173, %v8045, %v8301
        %v8430 = vsel %vm8174, %v8046, %v8302
        %v8431 = vsel %vm8175, %v8047, %v8303
        %v8432 = vadd.f32 %v8304, %v288
        %v8433 = vadd.f32 %v8305, %v289
        %v8434 = vadd.f32 %v8306, %v290
        %v8435 = vadd.f32 %v8307, %v291
        %v8436 = vadd.f32 %v8308, %v292
        %v8437 = vadd.f32 %v8309, %v293
        %v8438 = vadd.f32 %v8310, %v294
        %v8439 = vadd.f32 %v8311, %v295
        %v8440 = vadd.f32 %v8312, %v296
        %v8441 = vadd.f32 %v8313, %v297
        %v8442 = vadd.f32 %v8314, %v298
        %v8443 = vadd.f32 %v8315, %v299
        %v8444 = vadd.f32 %v8316, %v300
        %v8445 = vadd.f32 %v8317, %v301
        %v8446 = vadd.f32 %v8318, %v302
        %v8447 = vadd.f32 %v8319, %v303
        %v8448 = vadd.f32 %v8320, %v304
        %v8449 = vadd.f32 %v8321, %v305
        %v8450 = vadd.f32 %v8322, %v306
        %v8451 = vadd.f32 %v8323, %v307
        %v8452 = vadd.f32 %v8324, %v308
        %v8453 = vadd.f32 %v8325, %v309
        %v8454 = vadd.f32 %v8326, %v310
        %v8455 = vadd.f32 %v8327, %v311
        %v8456 = vadd.f32 %v8328, %v312
        %v8457 = vadd.f32 %v8329, %v313
        %v8458 = vadd.f32 %v8330, %v314
        %v8459 = vadd.f32 %v8331, %v315
        %v8460 = vadd.f32 %v8332, %v316
        %v8461 = vadd.f32 %v8333, %v317
        %v8462 = vadd.f32 %v8334, %v318
        %v8463 = vadd.f32 %v8335, %v319
        %v8464 = vadd.f32 %v8336, %v320
        %v8465 = vadd.f32 %v8337, %v321
        %v8466 = vadd.f32 %v8338, %v322
        %v8467 = vadd.f32 %v8339, %v323
        %v8468 = vadd.f32 %v8340, %v324
        %v8469 = vadd.f32 %v8341, %v325
        %v8470 = vadd.f32 %v8342, %v326
        %v8471 = vadd.f32 %v8343, %v327
        %v8472 = vadd.f32 %v8344, %v328
        %v8473 = vadd.f32 %v8345, %v329
        %v8474 = vadd.f32 %v8346, %v330
        %v8475 = vadd.f32 %v8347, %v331
        %v8476 = vadd.f32 %v8348, %v332
        %v8477 = vadd.f32 %v8349, %v333
        %v8478 = vadd.f32 %v8350, %v334
        %v8479 = vadd.f32 %v8351, %v335
        %v8480 = vadd.f32 %v8352, %v336
        %v8481 = vadd.f32 %v8353, %v337
        %v8482 = vadd.f32 %v8354, %v338
        %v8483 = vadd.f32 %v8355, %v339
        %v8484 = vadd.f32 %v8356, %v340
        %v8485 = vadd.f32 %v8357, %v341
        %v8486 = vadd.f32 %v8358, %v342
        %v8487 = vadd.f32 %v8359, %v343
        %v8488 = vadd.f32 %v8360, %v344
        %v8489 = vadd.f32 %v8361, %v345
        %v8490 = vadd.f32 %v8362, %v346
        %v8491 = vadd.f32 %v8363, %v347
        %v8492 = vadd.f32 %v8364, %v348
        %v8493 = vadd.f32 %v8365, %v349
        %v8494 = vadd.f32 %v8366, %v350
        %v8495 = vadd.f32 %v8367, %v351
        %v8496 = vadd.f32 %v8368, %v352
        %v8497 = vadd.f32 %v8369, %v353
        %v8498 = vadd.f32 %v8370, %v354
        %v8499 = vadd.f32 %v8371, %v355
        %v8500 = vadd.f32 %v8372, %v356
        %v8501 = vadd.f32 %v8373, %v357
        %v8502 = vadd.f32 %v8374, %v358
        %v8503 = vadd.f32 %v8375, %v359
        %v8504 = vadd.f32 %v8376, %v360
        %v8505 = vadd.f32 %v8377, %v361
        %v8506 = vadd.f32 %v8378, %v362
        %v8507 = vadd.f32 %v8379, %v363
        %v8508 = vadd.f32 %v8380, %v364
        %v8509 = vadd.f32 %v8381, %v365
        %v8510 = vadd.f32 %v8382, %v366
        %v8511 = vadd.f32 %v8383, %v367
        %v8512 = vadd.f32 %v8384, %v368
        %v8513 = vadd.f32 %v8385, %v369
        %v8514 = vadd.f32 %v8386, %v370
        %v8515 = vadd.f32 %v8387, %v371
        %v8516 = vadd.f32 %v8388, %v372
        %v8517 = vadd.f32 %v8389, %v373
        %v8518 = vadd.f32 %v8390, %v374
        %v8519 = vadd.f32 %v8391, %v375
        %v8520 = vadd.f32 %v8392, %v376
        %v8521 = vadd.f32 %v8393, %v377
        %v8522 = vadd.f32 %v8394, %v378
        %v8523 = vadd.f32 %v8395, %v379
        %v8524 = vadd.f32 %v8396, %v380
        %v8525 = vadd.f32 %v8397, %v381
        %v8526 = vadd.f32 %v8398, %v382
        %v8527 = vadd.f32 %v8399, %v383
        %v8528 = vadd.f32 %v8400, %v384
        %v8529 = vadd.f32 %v8401, %v385
        %v8530 = vadd.f32 %v8402, %v386
        %v8531 = vadd.f32 %v8403, %v387
        %v8532 = vadd.f32 %v8404, %v388
        %v8533 = vadd.f32 %v8405, %v389
        %v8534 = vadd.f32 %v8406, %v390
        %v8535 = vadd.f32 %v8407, %v391
        %v8536 = vadd.f32 %v8408, %v392
        %v8537 = vadd.f32 %v8409, %v393
        %v8538 = vadd.f32 %v8410, %v394
        %v8539 = vadd.f32 %v8411, %v395
        %v8540 = vadd.f32 %v8412, %v396
        %v8541 = vadd.f32 %v8413, %v397
        %v8542 = vadd.f32 %v8414, %v398
        %v8543 = vadd.f32 %v8415, %v399
        %v8544 = vadd.f32 %v8416, %v400
        %v8545 = vadd.f32 %v8417, %v401
        %v8546 = vadd.f32 %v8418, %v402
        %v8547 = vadd.f32 %v8419, %v403
        %v8548 = vadd.f32 %v8420, %v404
        %v8549 = vadd.f32 %v8421, %v405
        %v8550 = vadd.f32 %v8422, %v406
        %v8551 = vadd.f32 %v8423, %v407
        %v8552 = vadd.f32 %v8424, %v408
        %v8553 = vadd.f32 %v8425, %v409
        %v8554 = vadd.f32 %v8426, %v410
        %v8555 = vadd.f32 %v8427, %v411
        %v8556 = vadd.f32 %v8428, %v412
        %v8557 = vadd.f32 %v8429, %v413
        %v8558 = vadd.f32 %v8430, %v414
        %v8559 = vadd.f32 %v8431, %v415
        %8560 = vst [vmem:[%s281] sm:$0xff] %v8432
        %8561 = vst [vmem:[%s281 + $0x8] sm:$0xff] %v8433
        %8562 = vst [vmem:[%s281 + $0x10] sm:$0xff] %v8434
        %8563 = vst [vmem:[%s281 + $0x18] sm:$0xff] %v8435
        %8564 = vst [vmem:[%s281 + $0x20] sm:$0xff] %v8436
        %8565 = vst [vmem:[%s281 + $0x28] sm:$0xff] %v8437
        %8566 = vst [vmem:[%s281 + $0x30] sm:$0xff] %v8438
        %8567 = vst [vmem:[%s281 + $0x38] sm:$0xff] %v8439
        %8568 = vst [vmem:[%s281 + $0x40] sm:$0xff] %v8440
        %8569 = vst [vmem:[%s281 + $0x48] sm:$0xff] %v8441
        %8570 = vst [vmem:[%s281 + $0x50] sm:$0xff] %v8442
        %8571 = vst [vmem:[%s281 + $0x58] sm:$0xff] %v8443
        %8572 = vst [vmem:[%s281 + $0x60] sm:$0xff] %v8444
        %8573 = vst [vmem:[%s281 + $0x68] sm:$0xff] %v8445
        %8574 = vst [vmem:[%s281 + $0x70] sm:$0xff] %v8446
        %8575 = vst [vmem:[%s281 + $0x78] sm:$0xff] %v8447
        %8576 = vst [vmem:[%s281 + $0x80] sm:$0xff] %v8448
        %8577 = vst [vmem:[%s281 + $0x88] sm:$0xff] %v8449
        %8578 = vst [vmem:[%s281 + $0x90] sm:$0xff] %v8450
        %8579 = vst [vmem:[%s281 + $0x98] sm:$0xff] %v8451
        %8580 = vst [vmem:[%s281 + $0xa0] sm:$0xff] %v8452
        %8581 = vst [vmem:[%s281 + $0xa8] sm:$0xff] %v8453
        %8582 = vst [vmem:[%s281 + $0xb0] sm:$0xff] %v8454
        %8583 = vst [vmem:[%s281 + $0xb8] sm:$0xff] %v8455
        %8584 = vst [vmem:[%s281 + $0xc0] sm:$0xff] %v8456
        %8585 = vst [vmem:[%s281 + $0xc8] sm:$0xff] %v8457
        %8586 = vst [vmem:[%s281 + $0xd0] sm:$0xff] %v8458
        %8587 = vst [vmem:[%s281 + $0xd8] sm:$0xff] %v8459
        %8588 = vst [vmem:[%s281 + $0xe0] sm:$0xff] %v8460
        %8589 = vst [vmem:[%s281 + $0xe8] sm:$0xff] %v8461
        %8590 = vst [vmem:[%s281 + $0xf0] sm:$0xff] %v8462
        %8591 = vst [vmem:[%s281 + $0xf8] sm:$0xff] %v8463
        %8592 = vst [vmem:[%s281 + $0x100] sm:$0xff] %v8464
        %8593 = vst [vmem:[%s281 + $0x108] sm:$0xff] %v8465
        %8594 = vst [vmem:[%s281 + $0x110] sm:$0xff] %v8466
        %8595 = vst [vmem:[%s281 + $0x118] sm:$0xff] %v8467
        %8596 = vst [vmem:[%s281 + $0x120] sm:$0xff] %v8468
        %8597 = vst [vmem:[%s281 + $0x128] sm:$0xff] %v8469
        %8598 = vst [vmem:[%s281 + $0x130] sm:$0xff] %v8470
        %8599 = vst [vmem:[%s281 + $0x138] sm:$0xff] %v8471
        %8600 = vst [vmem:[%s281 + $0x140] sm:$0xff] %v8472
        %8601 = vst [vmem:[%s281 + $0x148] sm:$0xff] %v8473
        %8602 = vst [vmem:[%s281 + $0x150] sm:$0xff] %v8474
        %8603 = vst [vmem:[%s281 + $0x158] sm:$0xff] %v8475
        %8604 = vst [vmem:[%s281 + $0x160] sm:$0xff] %v8476
        %8605 = vst [vmem:[%s281 + $0x168] sm:$0xff] %v8477
        %8606 = vst [vmem:[%s281 + $0x170] sm:$0xff] %v8478
        %8607 = vst [vmem:[%s281 + $0x178] sm:$0xff] %v8479
        %8608 = vst [vmem:[%s281 + $0x180] sm:$0xff] %v8480
        %8609 = vst [vmem:[%s281 + $0x188] sm:$0xff] %v8481
        %8610 = vst [vmem:[%s281 + $0x190] sm:$0xff] %v8482
        %8611 = vst [vmem:[%s281 + $0x198] sm:$0xff] %v8483
        %8612 = vst [vmem:[%s281 + $0x1a0] sm:$0xff] %v8484
        %8613 = vst [vmem:[%s281 + $0x1a8] sm:$0xff] %v8485
        %8614 = vst [vmem:[%s281 + $0x1b0] sm:$0xff] %v8486
        %8615 = vst [vmem:[%s281 + $0x1b8] sm:$0xff] %v8487
        %8616 = vst [vmem:[%s281 + $0x1c0] sm:$0xff] %v8488
        %8617 = vst [vmem:[%s281 + $0x1c8] sm:$0xff] %v8489
        %8618 = vst [vmem:[%s281 + $0x1d0] sm:$0xff] %v8490
        %8619 = vst [vmem:[%s281 + $0x1d8] sm:$0xff] %v8491
        %8620 = vst [vmem:[%s281 + $0x1e0] sm:$0xff] %v8492
        %8621 = vst [vmem:[%s281 + $0x1e8] sm:$0xff] %v8493
        %8622 = vst [vmem:[%s281 + $0x1f0] sm:$0xff] %v8494
        %8623 = vst [vmem:[%s281 + $0x1f8] sm:$0xff] %v8495
        %8624 = vst [vmem:[%s281 + $0x200] sm:$0xff] %v8496
        %8625 = vst [vmem:[%s281 + $0x208] sm:$0xff] %v8497
        %8626 = vst [vmem:[%s281 + $0x210] sm:$0xff] %v8498
        %8627 = vst [vmem:[%s281 + $0x218] sm:$0xff] %v8499
        %8628 = vst [vmem:[%s281 + $0x220] sm:$0xff] %v8500
        %8629 = vst [vmem:[%s281 + $0x228] sm:$0xff] %v8501
        %8630 = vst [vmem:[%s281 + $0x230] sm:$0xff] %v8502
        %8631 = vst [vmem:[%s281 + $0x238] sm:$0xff] %v8503
        %8632 = vst [vmem:[%s281 + $0x240] sm:$0xff] %v8504
        %8633 = vst [vmem:[%s281 + $0x248] sm:$0xff] %v8505
        %8634 = vst [vmem:[%s281 + $0x250] sm:$0xff] %v8506
        %8635 = vst [vmem:[%s281 + $0x258] sm:$0xff] %v8507
        %8636 = vst [vmem:[%s281 + $0x260] sm:$0xff] %v8508
        %8637 = vst [vmem:[%s281 + $0x268] sm:$0xff] %v8509
        %8638 = vst [vmem:[%s281 + $0x270] sm:$0xff] %v8510
        %8639 = vst [vmem:[%s281 + $0x278] sm:$0xff] %v8511
        %8640 = vst [vmem:[%s281 + $0x280] sm:$0xff] %v8512
        %8641 = vst [vmem:[%s281 + $0x288] sm:$0xff] %v8513
        %8642 = vst [vmem:[%s281 + $0x290] sm:$0xff] %v8514
        %8643 = vst [vmem:[%s281 + $0x298] sm:$0xff] %v8515
        %8644 = vst [vmem:[%s281 + $0x2a0] sm:$0xff] %v8516
        %8645 = vst [vmem:[%s281 + $0x2a8] sm:$0xff] %v8517
        %8646 = vst [vmem:[%s281 + $0x2b0] sm:$0xff] %v8518
        %8647 = vst [vmem:[%s281 + $0x2b8] sm:$0xff] %v8519
        %8648 = vst [vmem:[%s281 + $0x2c0] sm:$0xff] %v8520
        %8649 = vst [vmem:[%s281 + $0x2c8] sm:$0xff] %v8521
        %8650 = vst [vmem:[%s281 + $0x2d0] sm:$0xff] %v8522
        %8651 = vst [vmem:[%s281 + $0x2d8] sm:$0xff] %v8523
        %8652 = vst [vmem:[%s281 + $0x2e0] sm:$0xff] %v8524
        %8653 = vst [vmem:[%s281 + $0x2e8] sm:$0xff] %v8525
        %8654 = vst [vmem:[%s281 + $0x2f0] sm:$0xff] %v8526
        %8655 = vst [vmem:[%s281 + $0x2f8] sm:$0xff] %v8527
        %8656 = vst [vmem:[%s281 + $0x300] sm:$0xff] %v8528
        %8657 = vst [vmem:[%s281 + $0x308] sm:$0xff] %v8529
        %8658 = vst [vmem:[%s281 + $0x310] sm:$0xff] %v8530
        %8659 = vst [vmem:[%s281 + $0x318] sm:$0xff] %v8531
        %8660 = vst [vmem:[%s281 + $0x320] sm:$0xff] %v8532
        %8661 = vst [vmem:[%s281 + $0x328] sm:$0xff] %v8533
        %8662 = vst [vmem:[%s281 + $0x330] sm:$0xff] %v8534
        %8663 = vst [vmem:[%s281 + $0x338] sm:$0xff] %v8535
        %8664 = vst [vmem:[%s281 + $0x340] sm:$0xff] %v8536
        %8665 = vst [vmem:[%s281 + $0x348] sm:$0xff] %v8537
        %8666 = vst [vmem:[%s281 + $0x350] sm:$0xff] %v8538
        %8667 = vst [vmem:[%s281 + $0x358] sm:$0xff] %v8539
        %8668 = vst [vmem:[%s281 + $0x360] sm:$0xff] %v8540
        %8669 = vst [vmem:[%s281 + $0x368] sm:$0xff] %v8541
        %8670 = vst [vmem:[%s281 + $0x370] sm:$0xff] %v8542
        %8671 = vst [vmem:[%s281 + $0x378] sm:$0xff] %v8543
        %8672 = vst [vmem:[%s281 + $0x380] sm:$0xff] %v8544
        %8673 = vst [vmem:[%s281 + $0x388] sm:$0xff] %v8545
        %8674 = vst [vmem:[%s281 + $0x390] sm:$0xff] %v8546
        %8675 = vst [vmem:[%s281 + $0x398] sm:$0xff] %v8547
        %8676 = vst [vmem:[%s281 + $0x3a0] sm:$0xff] %v8548
        %8677 = vst [vmem:[%s281 + $0x3a8] sm:$0xff] %v8549
        %8678 = vst [vmem:[%s281 + $0x3b0] sm:$0xff] %v8550
        %8679 = vst [vmem:[%s281 + $0x3b8] sm:$0xff] %v8551
        %8680 = vst [vmem:[%s281 + $0x3c0] sm:$0xff] %v8552
        %8681 = vst [vmem:[%s281 + $0x3c8] sm:$0xff] %v8553
        %8682 = vst [vmem:[%s281 + $0x3d0] sm:$0xff] %v8554
        %8683 = vst [vmem:[%s281 + $0x3d8] sm:$0xff] %v8555
        %8684 = vst [vmem:[%s281 + $0x3e0] sm:$0xff] %v8556
        %8685 = vst [vmem:[%s281 + $0x3e8] sm:$0xff] %v8557
        %8686 = vst [vmem:[%s281 + $0x3f0] sm:$0xff] %v8558
        %8687 = vst [vmem:[%s281 + $0x3f8] sm:$0xff] %v8559
        %s8688 = sand.u32 %s140, 1
        %s8689 = scalar_lea.sflag [#allocation4], %s8688
        %s8690 = sand.u32 %s140, 1
        %s8691 = smul.addr %s8690, 1024
        %s8692 = scalar_lea.vmem [#allocation8], %s8691
        // Predicated region
        $region49: #{tpu_custom_call.1} parent=35 // pred_check
          %p8693 = pneg %p150
        $region50: #{tpu_custom_call.1} parent=35 // pred_check_branch
          %8695 = sbr.rel (%p8693) target = $region52
        $region51: #{tpu_custom_call.1} parent=35 // pred_region
          %s8696 = smul.u32 128, %s27
          %8698 = vsyncadd %s8689, 0
          %s8699 = smul.addr %s26, 256
          %s8700 = sadd.s32 %s8696, %s8699
          %s8701 = smul.addr %s8700, 8
          %s8702 = scalar_lea.hbm %s4, %s8701
          %s8703 = sshll.u32 %s8692, 4
          %s8704 = int_to_ptr.vmem [resolvable:$true] %s8703
          %s8705 = sshll.u32 %s8702, 4
          %s8706 = int_to_ptr.hbm [resolvable:$true] %s8705
          %8711 = dma.vmem_to_hbm [thread:$0]  %s8704, 16384, %s8706, %s8689, 128, 128, 8
        $region52: #{tpu_custom_call.1} parent=35 // pred_fallthru
          _
      $region36: #{tpu_custom_call.1} parent=5 // pred_fallthru
        _
      %p8712 = scmp.le.s32.totalorder 2, %s17
      // Predicated region
      $region53: #{tpu_custom_call.1} parent=5 // pred_check
        %p8713 = pneg %p8712
      $region54: #{tpu_custom_call.1} parent=5 // pred_check_branch
        %8715 = sbr.rel (%p8713) target = $region56
      $region55: #{tpu_custom_call.1} parent=5 // pred_region
        %s8716 = ssub.s32 %s17, 2
        // Predicated region
        $region57: #{tpu_custom_call.1} parent=55 // pred_check
          %p8717 = pneg %p156
        $region58: #{tpu_custom_call.1} parent=55 // pred_check_branch
          %8719 = sbr.rel (%p8717) target = $region60
        $region59: #{tpu_custom_call.1} parent=55 // pred_region
          %s8720 = sand.u32 %s141, 1
          %s8721 = scalar_lea.sflag [#allocation4], %s8720
          %s8722 = sand.u32 %s141, 1
          %s8723 = smul.addr %s8722, 1024
          %s8724 = scalar_lea.vmem [#allocation8], %s8723
          %8726 = dma.done %s8721, 16384
        $region60: #{tpu_custom_call.1} parent=55 // pred_fallthru
          _
      $region56: #{tpu_custom_call.1} parent=5 // pred_fallthru
        _
    $region6: #{tpu_custom_call.1} parent=1 // loop_footer
      %s21 = sadd.s32 1, %s17
    $region7: #{tpu_custom_call.1} parent=1 // loop_footer_branch
      %16 = sbr.rel target = $region3
    $region8: #{tpu_custom_call.1} parent=1 // loop_exit
      _
    %8727 = vsyncpa [#allocation3], 1
    %s8728 = scalar_lea.sflag [#allocation3], 1
    %8729 = vsyncpa %s8728, 1
    %8730 = vsyncpa [#allocation6], 1
    %8731 = vsyncpa [#allocation4], 1
    %s8732 = scalar_lea.sflag [#allocation4], 1
    %8733 = vsyncpa %s8732, 1

</llo_original>
